<compile_context>
chip_gen: v6e
topology: v6e:2x2x1
jax: 0.10.0
libtpu: 0.0.40
codegen_flags: <defaults>
</compile_context>

<pallas_src>
import jax
import jax.numpy as jnp
from jax import lax
from jax.experimental import pallas as pl
from jax.experimental.pallas import tpu as pltpu

HIDDEN = 512                       # hard-coded in the PyTorch module
MLP_WEIGHT_DTYPE = jnp.bfloat16    # set to jnp.float32 for bit-closer torch parity


# ----------------------------------------------------------------------------
# Gauss-Jordan solve (returns S^{-1} B), fully unrolled, no pivoting.
# ----------------------------------------------------------------------------
def _gj_solve(s, b, row_ids_col):
    """Eliminate (S, B) in lock-step; returns S^{-1} @ B (== K^T at call site).

    Equivalent to Gauss-Jordan on the augmented matrix [S | B] but without the
    concat / final lane-slice.  Row k is folded into the same rank-1 update by
    replacing its elimination factor with (pivot - 1), which rescales it to the
    normalized pivot row.
    """
    # TODO(synk): no partial pivoting (torch.inverse uses pivoted LU); fine for
    # the SPD / diagonally dominant (P_pred + c*I) matrices produced here.
    d = s.shape[0]
    for k in range(d):                                  # d is tiny; unrolled
        prow_s = s[k:k + 1, :]                          # (1, d)
        prow_b = b[k:k + 1, :]                          # (1, d)
        pivot = prow_s[:, k:k + 1]                      # (1, 1)
        inv_pivot = 1.0 / pivot
        prow_s = prow_s * inv_pivot
        prow_b = prow_b * inv_pivot
        fcol = s[:, k:k + 1]                            # (d, 1)
        fcol = jnp.where(row_ids_col == k, pivot - 1.0, fcol)
        s = s - fcol * prow_s
        b = b - fcol * prow_b
    return b


# ----------------------------------------------------------------------------
# Fused kernel: MLP (MXU) -> serial Kalman filter (VPU/XLU/MXU), one launch.
# ----------------------------------------------------------------------------
def _stfnet_kernel(params_ref, y_ref, z_ref,
                   w1_ref, b1_ref, w2_ref, b2_ref, w3_ref, b3_ref,
                   alpha_ref, pflat_ref):
    n, d = y_ref.shape

    # ---- MLP: Linear -> ReLU x3, f32 accumulation on the MXU ---------------
    wdt = w1_ref.dtype
    h = jnp.dot(z_ref[...].astype(wdt), w1_ref[...],
                preferred_element_type=jnp.float32) + b1_ref[...]
    h = jnp.maximum(h, 0.0)
    h = jnp.dot(h.astype(wdt), w2_ref[...],
                preferred_element_type=jnp.float32) + b2_ref[...]
    h = jnp.maximum(h, 0.0)
    h = jnp.dot(h.astype(wdt), w3_ref[...],
                preferred_element_type=jnp.float32) + b3_ref[...]
    t_flat = jnp.maximum(h, 0.0)                        # (n, d*d); row t is T_t

    # ---- loop-invariant Kalman constants (hoisted out of the time loop) ----
    c_pred = params_ref[0]     # forward passes H = params[0]*I into the Q slot
    c_upd = params_ref[1]      # forward passes Q = params[1]*I into the H slot
    eye = jnp.eye(d, dtype=jnp.float32)
    q_pred = c_pred * eye
    h_upd = c_upd * eye
    row_ids_col = lax.broadcasted_iota(jnp.int32, (d, 1), 0)

    def row_to_mat(row):       # (1, d*d) -> (d, d) using only slices + concat
        return jnp.concatenate(
            [row[:, i * d:(i + 1) * d] for i in range(d)], axis=0)

    def mat_to_row(mat):       # (d, d) -> (1, d*d) using only slices + concat
        return jnp.concatenate(
            [mat[i:i + 1, :] for i in range(d)], axis=1)

    alpha_rows = [jnp.ones((1, d), jnp.float32)]        # alpha_0 = ones(1, d)
    p_rows = [mat_to_row(eye)]                          # P_0 = I
    alpha_prev = alpha_rows[0]
    p_prev = eye

    # ---- fully unrolled serial time loop ------------------------------------
    for t in range(1, n):
        t_t = row_to_mat(t_flat[t - 1:t, :])            # T[t-1], (d, d)
        tt = t_t.T                                      # computed once, used twice

        # predict: alpha_pred = T alpha ; P_pred = T P T^T + c_pred*I
        alpha_pred = jnp.dot(alpha_prev, tt, preferred_element_type=jnp.float32)
        tp = jnp.dot(t_t, p_prev, preferred_element_type=jnp.float32)
        p_pred = jnp.dot(tp, tt, preferred_element_type=jnp.float32) + q_pred

        # update: K^T = S^{-1} P_pred with S = P_pred + c_upd*I (S, P_pred SPD)
        kt = _gj_solve(p_pred + h_upd, p_pred, row_ids_col)
        y_t = y_ref[pl.ds(t, 1), :]                     # (1, d)
        alpha_upd = alpha_pred + jnp.dot(
            y_t - alpha_pred, kt, preferred_element_type=jnp.float32)
        # P_pred @ K^T == K @ P_pred (symmetry), so no extra transpose needed.
        p_upd = eye - jnp.dot(p_pred, kt, preferred_element_type=jnp.float32)

        alpha_rows.append(alpha_upd)
        p_rows.append(mat_to_row(p_upd))
        alpha_prev, p_prev = alpha_upd, p_upd

    # ---- single (lane-dense) stores at the end ------------------------------
    alpha_ref[...] = jnp.concatenate(alpha_rows, axis=0)     # (n, d)
    pflat_ref[...] = jnp.concatenate(p_rows, axis=0)         # (n, d*d)


# ----------------------------------------------------------------------------
# Wrapper: one pallas_call for the whole STFNet.forward
# ----------------------------------------------------------------------------
def stfnet_forward(Y, Z, params, output_dim):
    n, d = Y.shape
    assert d == output_dim

    vmem = lambda: pl.BlockSpec(memory_space=pltpu.MemorySpace.VMEM)
    smem = pl.BlockSpec(memory_space=pltpu.MemorySpace.SMEM)

    alpha, p_flat = pl.pallas_call(
        _stfnet_kernel,
        out_shape=(jax.ShapeDtypeStruct((n, d), jnp.float32),
                   jax.ShapeDtypeStruct((n, d * d), jnp.float32)),
        in_specs=[smem] + [vmem() for _ in range(8)],
        out_specs=(vmem(), vmem()),
    )(params["vars"], Y, Z,
      params["w1"], params["b1"], params["w2"], params["b2"],
      params["w3"], params["b3"])

    # T_flat = output.detach() is a no-op for the forward pass.
    return alpha, p_flat.reshape(n, d, d)


stfnet_forward_jit = jax.jit(stfnet_forward, static_argnums=(3,))


# ----------------------------------------------------------------------------
# Deterministic parameter init (mimics nn.Linear default init shapes)
# ----------------------------------------------------------------------------
def init_params(key, state_dim, output_dim):
    ks = jax.random.split(key, 7)

    def linear(kw, kb, fan_in, fan_out):
        bound = 1.0 / (fan_in ** 0.5)
        w = jax.random.uniform(kw, (fan_in, fan_out), jnp.float32, -bound, bound)
        b = jax.random.uniform(kb, (1, fan_out), jnp.float32, -bound, bound)
        return w.astype(MLP_WEIGHT_DTYPE), b

    w1, b1 = linear(ks[0], ks[1], state_dim, HIDDEN)
    w2, b2 = linear(ks[2], ks[3], HIDDEN, HIDDEN)
    w3, b3 = linear(ks[4], ks[5], HIDDEN, output_dim * output_dim)
    # self.vars = Parameter(randn(2)); kept deterministic and positive so that
    # (P_pred + c*I) stays SPD for the pivot-free in-kernel solve.
    vars_ = jnp.abs(jax.random.normal(ks[6], (2,), jnp.float32)) + 0.5
    return dict(w1=w1, b1=b1, w2=w2, b2=b2, w3=w3, b3=b3, vars=vars_)


if __name__ == "__main__":
    state_dim = 16
    output_dim = 8
    n_timesteps = 8

    key = jax.random.PRNGKey(0)
    kp, ky, kz = jax.random.split(key, 3)
    params = init_params(kp, state_dim, output_dim)

    Y = jax.random.normal(ky, (n_timesteps, output_dim), jnp.float32)
    Z = jax.random.normal(kz, (n_timesteps, state_dim), jnp.float32)

    alpha, P = stfnet_forward_jit(Y, Z, params, output_dim)
    jax.block_until_ready((alpha, P))

    assert alpha.shape == (n_timesteps, output_dim)
    assert P.shape == (n_timesteps, output_dim, output_dim)
    assert bool(jnp.all(jnp.isfinite(alpha))) and bool(jnp.all(jnp.isfinite(P)))
    print("KERNEL_OK")
</pallas_src>

<mosaic_0001>
module attributes {stable_mosaic.version = 11 : i64} {
  func.func @_stfnet_kernel(%arg0: memref<2xf32, #tpu.memory_space<smem>>, %arg1: memref<8x8xf32, #tpu.memory_space<vmem>>, %arg2: memref<8x16xf32, #tpu.memory_space<vmem>>, %arg3: memref<16x512xbf16, #tpu.memory_space<vmem>>, %arg4: memref<1x512xf32, #tpu.memory_space<vmem>>, %arg5: memref<512x512xbf16, #tpu.memory_space<vmem>>, %arg6: memref<1x512xf32, #tpu.memory_space<vmem>>, %arg7: memref<512x64xbf16, #tpu.memory_space<vmem>>, %arg8: memref<1x64xf32, #tpu.memory_space<vmem>>, %arg9: memref<8x8xf32, #tpu.memory_space<vmem>>, %arg10: memref<8x64xf32, #tpu.memory_space<vmem>>) attributes {dimension_semantics = [], scalar_prefetch = 0 : i64, scratch_operands = 0 : i64, tpu.core_type = #tpu.core_type<tc>} {
    %c0 = arith.constant 0 : index
    %c0_0 = arith.constant 0 : index
    %0 = vector.load %arg2[%c0, %c0_0] : memref<8x16xf32, #tpu.memory_space<vmem>>, vector<8x16xf32>
    %1 = arith.truncf %0 : vector<8x16xf32> to vector<8x16xbf16>
    %c0_1 = arith.constant 0 : index
    %c0_2 = arith.constant 0 : index
    %2 = vector.load %arg3[%c0_1, %c0_2] : memref<16x512xbf16, #tpu.memory_space<vmem>>, vector<16x512xbf16>
    %cst = arith.constant dense<0.000000e+00> : vector<8x512xf32>
    %3 = tpu.matmul %1, %2, %cst {dimension_numbers = #tpu.dot_dimension_numbers<[1], [0], [0], [1], [0, 0, 1, 1], [], []>} : vector<8x16xbf16>, vector<16x512xbf16>, vector<8x512xf32> -> vector<8x512xf32>
    %c0_3 = arith.constant 0 : index
    %c0_4 = arith.constant 0 : index
    %4 = vector.load %arg4[%c0_3, %c0_4] : memref<1x512xf32, #tpu.memory_space<vmem>>, vector<1x512xf32>
    %5 = vector.broadcast %4 : vector<1x512xf32> to vector<8x512xf32>
    %6 = arith.addf %3, %5 : vector<8x512xf32>
    %cst_5 = arith.constant 0.000000e+00 : f32
    %7 = vector.broadcast %cst_5 : f32 to vector<8x512xf32>
    %8 = arith.maximumf %6, %7 : vector<8x512xf32>
    %9 = arith.truncf %8 : vector<8x512xf32> to vector<8x512xbf16>
    %c0_6 = arith.constant 0 : index
    %c0_7 = arith.constant 0 : index
    %10 = vector.load %arg5[%c0_6, %c0_7] : memref<512x512xbf16, #tpu.memory_space<vmem>>, vector<512x512xbf16>
    %cst_8 = arith.constant dense<0.000000e+00> : vector<8x512xf32>
    %11 = tpu.matmul %9, %10, %cst_8 {dimension_numbers = #tpu.dot_dimension_numbers<[1], [0], [0], [1], [0, 0, 1, 1], [], []>} : vector<8x512xbf16>, vector<512x512xbf16>, vector<8x512xf32> -> vector<8x512xf32>
    %c0_9 = arith.constant 0 : index
    %c0_10 = arith.constant 0 : index
    %12 = vector.load %arg6[%c0_9, %c0_10] : memref<1x512xf32, #tpu.memory_space<vmem>>, vector<1x512xf32>
    %13 = vector.broadcast %12 : vector<1x512xf32> to vector<8x512xf32>
    %14 = arith.addf %11, %13 : vector<8x512xf32>
    %cst_11 = arith.constant 0.000000e+00 : f32
    %15 = vector.broadcast %cst_11 : f32 to vector<8x512xf32>
    %16 = arith.maximumf %14, %15 : vector<8x512xf32>
    %17 = arith.truncf %16 : vector<8x512xf32> to vector<8x512xbf16>
    %c0_12 = arith.constant 0 : index
    %c0_13 = arith.constant 0 : index
    %18 = vector.load %arg7[%c0_12, %c0_13] : memref<512x64xbf16, #tpu.memory_space<vmem>>, vector<512x64xbf16>
    %cst_14 = arith.constant dense<0.000000e+00> : vector<8x64xf32>
    %19 = tpu.matmul %17, %18, %cst_14 {dimension_numbers = #tpu.dot_dimension_numbers<[1], [0], [0], [1], [0, 0, 1, 1], [], []>} : vector<8x512xbf16>, vector<512x64xbf16>, vector<8x64xf32> -> vector<8x64xf32>
    %c0_15 = arith.constant 0 : index
    %c0_16 = arith.constant 0 : index
    %20 = vector.load %arg8[%c0_15, %c0_16] : memref<1x64xf32, #tpu.memory_space<vmem>>, vector<1x64xf32>
    %21 = vector.broadcast %20 : vector<1x64xf32> to vector<8x64xf32>
    %22 = arith.addf %19, %21 : vector<8x64xf32>
    %cst_17 = arith.constant 0.000000e+00 : f32
    %23 = vector.broadcast %cst_17 : f32 to vector<8x64xf32>
    %24 = arith.maximumf %22, %23 : vector<8x64xf32>
    %c0_18 = arith.constant 0 : index
    %25 = memref.load %arg0[%c0_18] : memref<2xf32, #tpu.memory_space<smem>>
    %c1 = arith.constant 1 : index
    %26 = memref.load %arg0[%c1] : memref<2xf32, #tpu.memory_space<smem>>
    %27 = tpu.iota {dimensions = array<i32: 0>} : vector<8x8xi32>
    %28 = tpu.iota {dimensions = array<i32: 1>} : vector<8x8xi32>
    %c0_i32 = arith.constant 0 : i32
    %29 = vector.broadcast %c0_i32 : i32 to vector<8x8xi32>
    %30 = arith.addi %27, %29 : vector<8x8xi32>
    %31 = arith.cmpi eq, %30, %28 : vector<8x8xi32>
    %32 = arith.extui %31 : vector<8x8xi1> to vector<8x8xi32>
    %33 = arith.sitofp %32 : vector<8x8xi32> to vector<8x8xf32>
    %34 = vector.broadcast %25 : f32 to vector<8x8xf32>
    %35 = arith.mulf %34, %33 : vector<8x8xf32>
    %36 = vector.broadcast %26 : f32 to vector<8x8xf32>
    %37 = arith.mulf %36, %33 : vector<8x8xf32>
    %38 = tpu.iota {dimensions = array<i32: 0>} : vector<8x1xi32>
    %cst_19 = arith.constant 1.000000e+00 : f32
    %39 = vector.broadcast %cst_19 : f32 to vector<1x8xf32>
    %40 = vector.extract_strided_slice %33 {offsets = [0, 0], sizes = [1, 8], strides = [1, 1]} : vector<8x8xf32> to vector<1x8xf32>
    %41 = vector.extract_strided_slice %33 {offsets = [1, 0], sizes = [1, 8], strides = [1, 1]} : vector<8x8xf32> to vector<1x8xf32>
    %42 = vector.extract_strided_slice %33 {offsets = [2, 0], sizes = [1, 8], strides = [1, 1]} : vector<8x8xf32> to vector<1x8xf32>
    %43 = vector.extract_strided_slice %33 {offsets = [3, 0], sizes = [1, 8], strides = [1, 1]} : vector<8x8xf32> to vector<1x8xf32>
    %44 = vector.extract_strided_slice %33 {offsets = [4, 0], sizes = [1, 8], strides = [1, 1]} : vector<8x8xf32> to vector<1x8xf32>
    %45 = vector.extract_strided_slice %33 {offsets = [5, 0], sizes = [1, 8], strides = [1, 1]} : vector<8x8xf32> to vector<1x8xf32>
    %46 = vector.extract_strided_slice %33 {offsets = [6, 0], sizes = [1, 8], strides = [1, 1]} : vector<8x8xf32> to vector<1x8xf32>
    %47 = vector.extract_strided_slice %33 {offsets = [7, 0], sizes = [1, 8], strides = [1, 1]} : vector<8x8xf32> to vector<1x8xf32>
    %48 = tpu.concatenate %40, %41, %42, %43, %44, %45, %46, %47 in 1 : vector<1x8xf32>, vector<1x8xf32>, vector<1x8xf32>, vector<1x8xf32>, vector<1x8xf32>, vector<1x8xf32>, vector<1x8xf32>, vector<1x8xf32> -> vector<1x64xf32>
    %49 = vector.extract_strided_slice %24 {offsets = [0, 0], sizes = [1, 64], strides = [1, 1]} : vector<8x64xf32> to vector<1x64xf32>
    %50 = vector.extract_strided_slice %49 {offsets = [0, 0], sizes = [1, 8], strides = [1, 1]} : vector<1x64xf32> to vector<1x8xf32>
    %51 = vector.extract_strided_slice %49 {offsets = [0, 8], sizes = [1, 8], strides = [1, 1]} : vector<1x64xf32> to vector<1x8xf32>
    %52 = vector.extract_strided_slice %49 {offsets = [0, 16], sizes = [1, 8], strides = [1, 1]} : vector<1x64xf32> to vector<1x8xf32>
    %53 = vector.extract_strided_slice %49 {offsets = [0, 24], sizes = [1, 8], strides = [1, 1]} : vector<1x64xf32> to vector<1x8xf32>
    %54 = vector.extract_strided_slice %49 {offsets = [0, 32], sizes = [1, 8], strides = [1, 1]} : vector<1x64xf32> to vector<1x8xf32>
    %55 = vector.extract_strided_slice %49 {offsets = [0, 40], sizes = [1, 8], strides = [1, 1]} : vector<1x64xf32> to vector<1x8xf32>
    %56 = vector.extract_strided_slice %49 {offsets = [0, 48], sizes = [1, 8], strides = [1, 1]} : vector<1x64xf32> to vector<1x8xf32>
    %57 = vector.extract_strided_slice %49 {offsets = [0, 56], sizes = [1, 8], strides = [1, 1]} : vector<1x64xf32> to vector<1x8xf32>
    %58 = tpu.concatenate %50, %51, %52, %53, %54, %55, %56, %57 in 0 : vector<1x8xf32>, vector<1x8xf32>, vector<1x8xf32>, vector<1x8xf32>, vector<1x8xf32>, vector<1x8xf32>, vector<1x8xf32>, vector<1x8xf32> -> vector<8x8xf32>
    %59 = tpu.transpose %58, [1, 0] : vector<8x8xf32> -> vector<8x8xf32>
    %cst_20 = arith.constant dense<0.000000e+00> : vector<1x8xf32>
    %60 = tpu.matmul %39, %59, %cst_20 {dimension_numbers = #tpu.dot_dimension_numbers<[1], [0], [0], [1], [0, 0, 1, 1], [], []>} : vector<1x8xf32>, vector<8x8xf32>, vector<1x8xf32> -> vector<1x8xf32>
    %cst_21 = arith.constant dense<0.000000e+00> : vector<8x8xf32>
    %61 = tpu.matmul %58, %33, %cst_21 {dimension_numbers = #tpu.dot_dimension_numbers<[1], [0], [0], [1], [0, 0, 1, 1], [], []>} : vector<8x8xf32>, vector<8x8xf32>, vector<8x8xf32> -> vector<8x8xf32>
    %cst_22 = arith.constant dense<0.000000e+00> : vector<8x8xf32>
    %62 = tpu.matmul %61, %59, %cst_22 {dimension_numbers = #tpu.dot_dimension_numbers<[1], [0], [0], [1], [0, 0, 1, 1], [], []>} : vector<8x8xf32>, vector<8x8xf32>, vector<8x8xf32> -> vector<8x8xf32>
    %63 = arith.addf %62, %35 : vector<8x8xf32>
    %64 = arith.addf %63, %37 : vector<8x8xf32>
    %65 = vector.extract_strided_slice %64 {offsets = [0, 0], sizes = [1, 8], strides = [1, 1]} : vector<8x8xf32> to vector<1x8xf32>
    %66 = vector.extract_strided_slice %63 {offsets = [0, 0], sizes = [1, 8], strides = [1, 1]} : vector<8x8xf32> to vector<1x8xf32>
    %67 = vector.extract_strided_slice %65 {offsets = [0, 0], sizes = [1, 1], strides = [1, 1]} : vector<1x8xf32> to vector<1x1xf32>
    %cst_23 = arith.constant 1.000000e+00 : f32
    %68 = vector.broadcast %cst_23 : f32 to vector<1x1xf32>
    %69 = arith.divf %68, %67 : vector<1x1xf32>
    %70 = vector.broadcast %69 : vector<1x1xf32> to vector<1x8xf32>
    %71 = arith.mulf %65, %70 : vector<1x8xf32>
    %72 = vector.broadcast %69 : vector<1x1xf32> to vector<1x8xf32>
    %73 = arith.mulf %66, %72 : vector<1x8xf32>
    %74 = vector.extract_strided_slice %64 {offsets = [0, 0], sizes = [8, 1], strides = [1, 1]} : vector<8x8xf32> to vector<8x1xf32>
    %c0_i32_24 = arith.constant 0 : i32
    %75 = vector.broadcast %c0_i32_24 : i32 to vector<8x1xi32>
    %76 = arith.cmpi eq, %38, %75 : vector<8x1xi32>
    %cst_25 = arith.constant 1.000000e+00 : f32
    %77 = vector.broadcast %cst_25 : f32 to vector<1x1xf32>
    %78 = arith.subf %67, %77 : vector<1x1xf32>
    %79 = vector.shape_cast %78 : vector<1x1xf32> to vector<1x1xf32>
    %80 = vector.broadcast %79 : vector<1x1xf32> to vector<8x1xf32>
    %81 = arith.select %76, %80, %74 : vector<8x1xi1>, vector<8x1xf32>
    %82 = vector.broadcast %81 : vector<8x1xf32> to vector<8x8xf32>
    %83 = vector.broadcast %71 : vector<1x8xf32> to vector<8x8xf32>
    %84 = arith.mulf %82, %83 : vector<8x8xf32>
    %85 = arith.subf %64, %84 : vector<8x8xf32>
    %86 = vector.broadcast %81 : vector<8x1xf32> to vector<8x8xf32>
    %87 = vector.broadcast %73 : vector<1x8xf32> to vector<8x8xf32>
    %88 = arith.mulf %86, %87 : vector<8x8xf32>
    %89 = arith.subf %63, %88 : vector<8x8xf32>
    %90 = vector.extract_strided_slice %85 {offsets = [1, 0], sizes = [1, 8], strides = [1, 1]} : vector<8x8xf32> to vector<1x8xf32>
    %91 = vector.extract_strided_slice %89 {offsets = [1, 0], sizes = [1, 8], strides = [1, 1]} : vector<8x8xf32> to vector<1x8xf32>
    %92 = vector.extract_strided_slice %90 {offsets = [0, 1], sizes = [1, 1], strides = [1, 1]} : vector<1x8xf32> to vector<1x1xf32>
    %cst_26 = arith.constant 1.000000e+00 : f32
    %93 = vector.broadcast %cst_26 : f32 to vector<1x1xf32>
    %94 = arith.divf %93, %92 : vector<1x1xf32>
    %95 = vector.broadcast %94 : vector<1x1xf32> to vector<1x8xf32>
    %96 = arith.mulf %90, %95 : vector<1x8xf32>
    %97 = vector.broadcast %94 : vector<1x1xf32> to vector<1x8xf32>
    %98 = arith.mulf %91, %97 : vector<1x8xf32>
    %99 = vector.extract_strided_slice %85 {offsets = [0, 1], sizes = [8, 1], strides = [1, 1]} : vector<8x8xf32> to vector<8x1xf32>
    %c1_i32 = arith.constant 1 : i32
    %100 = vector.broadcast %c1_i32 : i32 to vector<8x1xi32>
    %101 = arith.cmpi eq, %38, %100 : vector<8x1xi32>
    %cst_27 = arith.constant 1.000000e+00 : f32
    %102 = vector.broadcast %cst_27 : f32 to vector<1x1xf32>
    %103 = arith.subf %92, %102 : vector<1x1xf32>
    %104 = vector.shape_cast %103 : vector<1x1xf32> to vector<1x1xf32>
    %105 = vector.broadcast %104 : vector<1x1xf32> to vector<8x1xf32>
    %106 = arith.select %101, %105, %99 : vector<8x1xi1>, vector<8x1xf32>
    %107 = vector.broadcast %106 : vector<8x1xf32> to vector<8x8xf32>
    %108 = vector.broadcast %96 : vector<1x8xf32> to vector<8x8xf32>
    %109 = arith.mulf %107, %108 : vector<8x8xf32>
    %110 = arith.subf %85, %109 : vector<8x8xf32>
    %111 = vector.broadcast %106 : vector<8x1xf32> to vector<8x8xf32>
    %112 = vector.broadcast %98 : vector<1x8xf32> to vector<8x8xf32>
    %113 = arith.mulf %111, %112 : vector<8x8xf32>
    %114 = arith.subf %89, %113 : vector<8x8xf32>
    %115 = vector.extract_strided_slice %110 {offsets = [2, 0], sizes = [1, 8], strides = [1, 1]} : vector<8x8xf32> to vector<1x8xf32>
    %116 = vector.extract_strided_slice %114 {offsets = [2, 0], sizes = [1, 8], strides = [1, 1]} : vector<8x8xf32> to vector<1x8xf32>
    %117 = vector.extract_strided_slice %115 {offsets = [0, 2], sizes = [1, 1], strides = [1, 1]} : vector<1x8xf32> to vector<1x1xf32>
    %cst_28 = arith.constant 1.000000e+00 : f32
    %118 = vector.broadcast %cst_28 : f32 to vector<1x1xf32>
    %119 = arith.divf %118, %117 : vector<1x1xf32>
    %120 = vector.broadcast %119 : vector<1x1xf32> to vector<1x8xf32>
    %121 = arith.mulf %115, %120 : vector<1x8xf32>
    %122 = vector.broadcast %119 : vector<1x1xf32> to vector<1x8xf32>
    %123 = arith.mulf %116, %122 : vector<1x8xf32>
    %124 = vector.extract_strided_slice %110 {offsets = [0, 2], sizes = [8, 1], strides = [1, 1]} : vector<8x8xf32> to vector<8x1xf32>
    %c2_i32 = arith.constant 2 : i32
    %125 = vector.broadcast %c2_i32 : i32 to vector<8x1xi32>
    %126 = arith.cmpi eq, %38, %125 : vector<8x1xi32>
    %cst_29 = arith.constant 1.000000e+00 : f32
    %127 = vector.broadcast %cst_29 : f32 to vector<1x1xf32>
    %128 = arith.subf %117, %127 : vector<1x1xf32>
    %129 = vector.shape_cast %128 : vector<1x1xf32> to vector<1x1xf32>
    %130 = vector.broadcast %129 : vector<1x1xf32> to vector<8x1xf32>
    %131 = arith.select %126, %130, %124 : vector<8x1xi1>, vector<8x1xf32>
    %132 = vector.broadcast %131 : vector<8x1xf32> to vector<8x8xf32>
    %133 = vector.broadcast %121 : vector<1x8xf32> to vector<8x8xf32>
    %134 = arith.mulf %132, %133 : vector<8x8xf32>
    %135 = arith.subf %110, %134 : vector<8x8xf32>
    %136 = vector.broadcast %131 : vector<8x1xf32> to vector<8x8xf32>
    %137 = vector.broadcast %123 : vector<1x8xf32> to vector<8x8xf32>
    %138 = arith.mulf %136, %137 : vector<8x8xf32>
    %139 = arith.subf %114, %138 : vector<8x8xf32>
    %140 = vector.extract_strided_slice %135 {offsets = [3, 0], sizes = [1, 8], strides = [1, 1]} : vector<8x8xf32> to vector<1x8xf32>
    %141 = vector.extract_strided_slice %139 {offsets = [3, 0], sizes = [1, 8], strides = [1, 1]} : vector<8x8xf32> to vector<1x8xf32>
    %142 = vector.extract_strided_slice %140 {offsets = [0, 3], sizes = [1, 1], strides = [1, 1]} : vector<1x8xf32> to vector<1x1xf32>
    %cst_30 = arith.constant 1.000000e+00 : f32
    %143 = vector.broadcast %cst_30 : f32 to vector<1x1xf32>
    %144 = arith.divf %143, %142 : vector<1x1xf32>
    %145 = vector.broadcast %144 : vector<1x1xf32> to vector<1x8xf32>
    %146 = arith.mulf %140, %145 : vector<1x8xf32>
    %147 = vector.broadcast %144 : vector<1x1xf32> to vector<1x8xf32>
    %148 = arith.mulf %141, %147 : vector<1x8xf32>
    %149 = vector.extract_strided_slice %135 {offsets = [0, 3], sizes = [8, 1], strides = [1, 1]} : vector<8x8xf32> to vector<8x1xf32>
    %c3_i32 = arith.constant 3 : i32
    %150 = vector.broadcast %c3_i32 : i32 to vector<8x1xi32>
    %151 = arith.cmpi eq, %38, %150 : vector<8x1xi32>
    %cst_31 = arith.constant 1.000000e+00 : f32
    %152 = vector.broadcast %cst_31 : f32 to vector<1x1xf32>
    %153 = arith.subf %142, %152 : vector<1x1xf32>
    %154 = vector.shape_cast %153 : vector<1x1xf32> to vector<1x1xf32>
    %155 = vector.broadcast %154 : vector<1x1xf32> to vector<8x1xf32>
    %156 = arith.select %151, %155, %149 : vector<8x1xi1>, vector<8x1xf32>
    %157 = vector.broadcast %156 : vector<8x1xf32> to vector<8x8xf32>
    %158 = vector.broadcast %146 : vector<1x8xf32> to vector<8x8xf32>
    %159 = arith.mulf %157, %158 : vector<8x8xf32>
    %160 = arith.subf %135, %159 : vector<8x8xf32>
    %161 = vector.broadcast %156 : vector<8x1xf32> to vector<8x8xf32>
    %162 = vector.broadcast %148 : vector<1x8xf32> to vector<8x8xf32>
    %163 = arith.mulf %161, %162 : vector<8x8xf32>
    %164 = arith.subf %139, %163 : vector<8x8xf32>
    %165 = vector.extract_strided_slice %160 {offsets = [4, 0], sizes = [1, 8], strides = [1, 1]} : vector<8x8xf32> to vector<1x8xf32>
    %166 = vector.extract_strided_slice %164 {offsets = [4, 0], sizes = [1, 8], strides = [1, 1]} : vector<8x8xf32> to vector<1x8xf32>
    %167 = vector.extract_strided_slice %165 {offsets = [0, 4], sizes = [1, 1], strides = [1, 1]} : vector<1x8xf32> to vector<1x1xf32>
    %cst_32 = arith.constant 1.000000e+00 : f32
    %168 = vector.broadcast %cst_32 : f32 to vector<1x1xf32>
    %169 = arith.divf %168, %167 : vector<1x1xf32>
    %170 = vector.broadcast %169 : vector<1x1xf32> to vector<1x8xf32>
    %171 = arith.mulf %165, %170 : vector<1x8xf32>
    %172 = vector.broadcast %169 : vector<1x1xf32> to vector<1x8xf32>
    %173 = arith.mulf %166, %172 : vector<1x8xf32>
    %174 = vector.extract_strided_slice %160 {offsets = [0, 4], sizes = [8, 1], strides = [1, 1]} : vector<8x8xf32> to vector<8x1xf32>
    %c4_i32 = arith.constant 4 : i32
    %175 = vector.broadcast %c4_i32 : i32 to vector<8x1xi32>
    %176 = arith.cmpi eq, %38, %175 : vector<8x1xi32>
    %cst_33 = arith.constant 1.000000e+00 : f32
    %177 = vector.broadcast %cst_33 : f32 to vector<1x1xf32>
    %178 = arith.subf %167, %177 : vector<1x1xf32>
    %179 = vector.shape_cast %178 : vector<1x1xf32> to vector<1x1xf32>
    %180 = vector.broadcast %179 : vector<1x1xf32> to vector<8x1xf32>
    %181 = arith.select %176, %180, %174 : vector<8x1xi1>, vector<8x1xf32>
    %182 = vector.broadcast %181 : vector<8x1xf32> to vector<8x8xf32>
    %183 = vector.broadcast %171 : vector<1x8xf32> to vector<8x8xf32>
    %184 = arith.mulf %182, %183 : vector<8x8xf32>
    %185 = arith.subf %160, %184 : vector<8x8xf32>
    %186 = vector.broadcast %181 : vector<8x1xf32> to vector<8x8xf32>
    %187 = vector.broadcast %173 : vector<1x8xf32> to vector<8x8xf32>
    %188 = arith.mulf %186, %187 : vector<8x8xf32>
    %189 = arith.subf %164, %188 : vector<8x8xf32>
    %190 = vector.extract_strided_slice %185 {offsets = [5, 0], sizes = [1, 8], strides = [1, 1]} : vector<8x8xf32> to vector<1x8xf32>
    %191 = vector.extract_strided_slice %189 {offsets = [5, 0], sizes = [1, 8], strides = [1, 1]} : vector<8x8xf32> to vector<1x8xf32>
    %192 = vector.extract_strided_slice %190 {offsets = [0, 5], sizes = [1, 1], strides = [1, 1]} : vector<1x8xf32> to vector<1x1xf32>
    %cst_34 = arith.constant 1.000000e+00 : f32
    %193 = vector.broadcast %cst_34 : f32 to vector<1x1xf32>
    %194 = arith.divf %193, %192 : vector<1x1xf32>
    %195 = vector.broadcast %194 : vector<1x1xf32> to vector<1x8xf32>
    %196 = arith.mulf %190, %195 : vector<1x8xf32>
    %197 = vector.broadcast %194 : vector<1x1xf32> to vector<1x8xf32>
    %198 = arith.mulf %191, %197 : vector<1x8xf32>
    %199 = vector.extract_strided_slice %185 {offsets = [0, 5], sizes = [8, 1], strides = [1, 1]} : vector<8x8xf32> to vector<8x1xf32>
    %c5_i32 = arith.constant 5 : i32
    %200 = vector.broadcast %c5_i32 : i32 to vector<8x1xi32>
    %201 = arith.cmpi eq, %38, %200 : vector<8x1xi32>
    %cst_35 = arith.constant 1.000000e+00 : f32
    %202 = vector.broadcast %cst_35 : f32 to vector<1x1xf32>
    %203 = arith.subf %192, %202 : vector<1x1xf32>
    %204 = vector.shape_cast %203 : vector<1x1xf32> to vector<1x1xf32>
    %205 = vector.broadcast %204 : vector<1x1xf32> to vector<8x1xf32>
    %206 = arith.select %201, %205, %199 : vector<8x1xi1>, vector<8x1xf32>
    %207 = vector.broadcast %206 : vector<8x1xf32> to vector<8x8xf32>
    %208 = vector.broadcast %196 : vector<1x8xf32> to vector<8x8xf32>
    %209 = arith.mulf %207, %208 : vector<8x8xf32>
    %210 = arith.subf %185, %209 : vector<8x8xf32>
    %211 = vector.broadcast %206 : vector<8x1xf32> to vector<8x8xf32>
    %212 = vector.broadcast %198 : vector<1x8xf32> to vector<8x8xf32>
    %213 = arith.mulf %211, %212 : vector<8x8xf32>
    %214 = arith.subf %189, %213 : vector<8x8xf32>
    %215 = vector.extract_strided_slice %210 {offsets = [6, 0], sizes = [1, 8], strides = [1, 1]} : vector<8x8xf32> to vector<1x8xf32>
    %216 = vector.extract_strided_slice %214 {offsets = [6, 0], sizes = [1, 8], strides = [1, 1]} : vector<8x8xf32> to vector<1x8xf32>
    %217 = vector.extract_strided_slice %215 {offsets = [0, 6], sizes = [1, 1], strides = [1, 1]} : vector<1x8xf32> to vector<1x1xf32>
    %cst_36 = arith.constant 1.000000e+00 : f32
    %218 = vector.broadcast %cst_36 : f32 to vector<1x1xf32>
    %219 = arith.divf %218, %217 : vector<1x1xf32>
    %220 = vector.broadcast %219 : vector<1x1xf32> to vector<1x8xf32>
    %221 = arith.mulf %215, %220 : vector<1x8xf32>
    %222 = vector.broadcast %219 : vector<1x1xf32> to vector<1x8xf32>
    %223 = arith.mulf %216, %222 : vector<1x8xf32>
    %224 = vector.extract_strided_slice %210 {offsets = [0, 6], sizes = [8, 1], strides = [1, 1]} : vector<8x8xf32> to vector<8x1xf32>
    %c6_i32 = arith.constant 6 : i32
    %225 = vector.broadcast %c6_i32 : i32 to vector<8x1xi32>
    %226 = arith.cmpi eq, %38, %225 : vector<8x1xi32>
    %cst_37 = arith.constant 1.000000e+00 : f32
    %227 = vector.broadcast %cst_37 : f32 to vector<1x1xf32>
    %228 = arith.subf %217, %227 : vector<1x1xf32>
    %229 = vector.shape_cast %228 : vector<1x1xf32> to vector<1x1xf32>
    %230 = vector.broadcast %229 : vector<1x1xf32> to vector<8x1xf32>
    %231 = arith.select %226, %230, %224 : vector<8x1xi1>, vector<8x1xf32>
    %232 = vector.broadcast %231 : vector<8x1xf32> to vector<8x8xf32>
    %233 = vector.broadcast %221 : vector<1x8xf32> to vector<8x8xf32>
    %234 = arith.mulf %232, %233 : vector<8x8xf32>
    %235 = arith.subf %210, %234 : vector<8x8xf32>
    %236 = vector.broadcast %231 : vector<8x1xf32> to vector<8x8xf32>
    %237 = vector.broadcast %223 : vector<1x8xf32> to vector<8x8xf32>
    %238 = arith.mulf %236, %237 : vector<8x8xf32>
    %239 = arith.subf %214, %238 : vector<8x8xf32>
    %240 = vector.extract_strided_slice %235 {offsets = [7, 0], sizes = [1, 8], strides = [1, 1]} : vector<8x8xf32> to vector<1x8xf32>
    %241 = vector.extract_strided_slice %239 {offsets = [7, 0], sizes = [1, 8], strides = [1, 1]} : vector<8x8xf32> to vector<1x8xf32>
    %242 = vector.extract_strided_slice %240 {offsets = [0, 7], sizes = [1, 1], strides = [1, 1]} : vector<1x8xf32> to vector<1x1xf32>
    %cst_38 = arith.constant 1.000000e+00 : f32
    %243 = vector.broadcast %cst_38 : f32 to vector<1x1xf32>
    %244 = arith.divf %243, %242 : vector<1x1xf32>
    %245 = vector.broadcast %244 : vector<1x1xf32> to vector<1x8xf32>
    %246 = arith.mulf %241, %245 : vector<1x8xf32>
    %247 = vector.extract_strided_slice %235 {offsets = [0, 7], sizes = [8, 1], strides = [1, 1]} : vector<8x8xf32> to vector<8x1xf32>
    %c7_i32 = arith.constant 7 : i32
    %248 = vector.broadcast %c7_i32 : i32 to vector<8x1xi32>
    %249 = arith.cmpi eq, %38, %248 : vector<8x1xi32>
    %cst_39 = arith.constant 1.000000e+00 : f32
    %250 = vector.broadcast %cst_39 : f32 to vector<1x1xf32>
    %251 = arith.subf %242, %250 : vector<1x1xf32>
    %252 = vector.shape_cast %251 : vector<1x1xf32> to vector<1x1xf32>
    %253 = vector.broadcast %252 : vector<1x1xf32> to vector<8x1xf32>
    %254 = arith.select %249, %253, %247 : vector<8x1xi1>, vector<8x1xf32>
    %255 = vector.broadcast %254 : vector<8x1xf32> to vector<8x8xf32>
    %256 = vector.broadcast %246 : vector<1x8xf32> to vector<8x8xf32>
    %257 = arith.mulf %255, %256 : vector<8x8xf32>
    %258 = arith.subf %239, %257 : vector<8x8xf32>
    %c1_40 = arith.constant 1 : index
    %c0_41 = arith.constant 0 : index
    %259 = vector.load %arg1[%c1_40, %c0_41] : memref<8x8xf32, #tpu.memory_space<vmem>>, vector<1x8xf32>
    %260 = arith.subf %259, %60 : vector<1x8xf32>
    %cst_42 = arith.constant dense<0.000000e+00> : vector<1x8xf32>
    %261 = tpu.matmul %260, %258, %cst_42 {dimension_numbers = #tpu.dot_dimension_numbers<[1], [0], [0], [1], [0, 0, 1, 1], [], []>} : vector<1x8xf32>, vector<8x8xf32>, vector<1x8xf32> -> vector<1x8xf32>
    %262 = arith.addf %60, %261 : vector<1x8xf32>
    %cst_43 = arith.constant dense<0.000000e+00> : vector<8x8xf32>
    %263 = tpu.matmul %63, %258, %cst_43 {dimension_numbers = #tpu.dot_dimension_numbers<[1], [0], [0], [1], [0, 0, 1, 1], [], []>} : vector<8x8xf32>, vector<8x8xf32>, vector<8x8xf32> -> vector<8x8xf32>
    %264 = arith.subf %33, %263 : vector<8x8xf32>
    %265 = vector.extract_strided_slice %264 {offsets = [0, 0], sizes = [1, 8], strides = [1, 1]} : vector<8x8xf32> to vector<1x8xf32>
    %266 = vector.extract_strided_slice %264 {offsets = [1, 0], sizes = [1, 8], strides = [1, 1]} : vector<8x8xf32> to vector<1x8xf32>
    %267 = vector.extract_strided_slice %264 {offsets = [2, 0], sizes = [1, 8], strides = [1, 1]} : vector<8x8xf32> to vector<1x8xf32>
    %268 = vector.extract_strided_slice %264 {offsets = [3, 0], sizes = [1, 8], strides = [1, 1]} : vector<8x8xf32> to vector<1x8xf32>
    %269 = vector.extract_strided_slice %264 {offsets = [4, 0], sizes = [1, 8], strides = [1, 1]} : vector<8x8xf32> to vector<1x8xf32>
    %270 = vector.extract_strided_slice %264 {offsets = [5, 0], sizes = [1, 8], strides = [1, 1]} : vector<8x8xf32> to vector<1x8xf32>
    %271 = vector.extract_strided_slice %264 {offsets = [6, 0], sizes = [1, 8], strides = [1, 1]} : vector<8x8xf32> to vector<1x8xf32>
    %272 = vector.extract_strided_slice %264 {offsets = [7, 0], sizes = [1, 8], strides = [1, 1]} : vector<8x8xf32> to vector<1x8xf32>
    %273 = tpu.concatenate %265, %266, %267, %268, %269, %270, %271, %272 in 1 : vector<1x8xf32>, vector<1x8xf32>, vector<1x8xf32>, vector<1x8xf32>, vector<1x8xf32>, vector<1x8xf32>, vector<1x8xf32>, vector<1x8xf32> -> vector<1x64xf32>
    %274 = vector.extract_strided_slice %24 {offsets = [1, 0], sizes = [1, 64], strides = [1, 1]} : vector<8x64xf32> to vector<1x64xf32>
    %275 = vector.extract_strided_slice %274 {offsets = [0, 0], sizes = [1, 8], strides = [1, 1]} : vector<1x64xf32> to vector<1x8xf32>
    %276 = vector.extract_strided_slice %274 {offsets = [0, 8], sizes = [1, 8], strides = [1, 1]} : vector<1x64xf32> to vector<1x8xf32>
    %277 = vector.extract_strided_slice %274 {offsets = [0, 16], sizes = [1, 8], strides = [1, 1]} : vector<1x64xf32> to vector<1x8xf32>
    %278 = vector.extract_strided_slice %274 {offsets = [0, 24], sizes = [1, 8], strides = [1, 1]} : vector<1x64xf32> to vector<1x8xf32>
    %279 = vector.extract_strided_slice %274 {offsets = [0, 32], sizes = [1, 8], strides = [1, 1]} : vector<1x64xf32> to vector<1x8xf32>
    %280 = vector.extract_strided_slice %274 {offsets = [0, 40], sizes = [1, 8], strides = [1, 1]} : vector<1x64xf32> to vector<1x8xf32>
    %281 = vector.extract_strided_slice %274 {offsets = [0, 48], sizes = [1, 8], strides = [1, 1]} : vector<1x64xf32> to vector<1x8xf32>
    %282 = vector.extract_strided_slice %274 {offsets = [0, 56], sizes = [1, 8], strides = [1, 1]} : vector<1x64xf32> to vector<1x8xf32>
    %283 = tpu.concatenate %275, %276, %277, %278, %279, %280, %281, %282 in 0 : vector<1x8xf32>, vector<1x8xf32>, vector<1x8xf32>, vector<1x8xf32>, vector<1x8xf32>, vector<1x8xf32>, vector<1x8xf32>, vector<1x8xf32> -> vector<8x8xf32>
    %284 = tpu.transpose %283, [1, 0] : vector<8x8xf32> -> vector<8x8xf32>
    %cst_44 = arith.constant dense<0.000000e+00> : vector<1x8xf32>
    %285 = tpu.matmul %262, %284, %cst_44 {dimension_numbers = #tpu.dot_dimension_numbers<[1], [0], [0], [1], [0, 0, 1, 1], [], []>} : vector<1x8xf32>, vector<8x8xf32>, vector<1x8xf32> -> vector<1x8xf32>
    %cst_45 = arith.constant dense<0.000000e+00> : vector<8x8xf32>
    %286 = tpu.matmul %283, %264, %cst_45 {dimension_numbers = #tpu.dot_dimension_numbers<[1], [0], [0], [1], [0, 0, 1, 1], [], []>} : vector<8x8xf32>, vector<8x8xf32>, vector<8x8xf32> -> vector<8x8xf32>
    %cst_46 = arith.constant dense<0.000000e+00> : vector<8x8xf32>
    %287 = tpu.matmul %286, %284, %cst_46 {dimension_numbers = #tpu.dot_dimension_numbers<[1], [0], [0], [1], [0, 0, 1, 1], [], []>} : vector<8x8xf32>, vector<8x8xf32>, vector<8x8xf32> -> vector<8x8xf32>
    %288 = arith.addf %287, %35 : vector<8x8xf32>
    %289 = arith.addf %288, %37 : vector<8x8xf32>
    %290 = vector.extract_strided_slice %289 {offsets = [0, 0], sizes = [1, 8], strides = [1, 1]} : vector<8x8xf32> to vector<1x8xf32>
    %291 = vector.extract_strided_slice %288 {offsets = [0, 0], sizes = [1, 8], strides = [1, 1]} : vector<8x8xf32> to vector<1x8xf32>
    %292 = vector.extract_strided_slice %290 {offsets = [0, 0], sizes = [1, 1], strides = [1, 1]} : vector<1x8xf32> to vector<1x1xf32>
    %cst_47 = arith.constant 1.000000e+00 : f32
    %293 = vector.broadcast %cst_47 : f32 to vector<1x1xf32>
    %294 = arith.divf %293, %292 : vector<1x1xf32>
    %295 = vector.broadcast %294 : vector<1x1xf32> to vector<1x8xf32>
    %296 = arith.mulf %290, %295 : vector<1x8xf32>
    %297 = vector.broadcast %294 : vector<1x1xf32> to vector<1x8xf32>
    %298 = arith.mulf %291, %297 : vector<1x8xf32>
    %299 = vector.extract_strided_slice %289 {offsets = [0, 0], sizes = [8, 1], strides = [1, 1]} : vector<8x8xf32> to vector<8x1xf32>
    %c0_i32_48 = arith.constant 0 : i32
    %300 = vector.broadcast %c0_i32_48 : i32 to vector<8x1xi32>
    %301 = arith.cmpi eq, %38, %300 : vector<8x1xi32>
    %cst_49 = arith.constant 1.000000e+00 : f32
    %302 = vector.broadcast %cst_49 : f32 to vector<1x1xf32>
    %303 = arith.subf %292, %302 : vector<1x1xf32>
    %304 = vector.shape_cast %303 : vector<1x1xf32> to vector<1x1xf32>
    %305 = vector.broadcast %304 : vector<1x1xf32> to vector<8x1xf32>
    %306 = arith.select %301, %305, %299 : vector<8x1xi1>, vector<8x1xf32>
    %307 = vector.broadcast %306 : vector<8x1xf32> to vector<8x8xf32>
    %308 = vector.broadcast %296 : vector<1x8xf32> to vector<8x8xf32>
    %309 = arith.mulf %307, %308 : vector<8x8xf32>
    %310 = arith.subf %289, %309 : vector<8x8xf32>
    %311 = vector.broadcast %306 : vector<8x1xf32> to vector<8x8xf32>
    %312 = vector.broadcast %298 : vector<1x8xf32> to vector<8x8xf32>
    %313 = arith.mulf %311, %312 : vector<8x8xf32>
    %314 = arith.subf %288, %313 : vector<8x8xf32>
    %315 = vector.extract_strided_slice %310 {offsets = [1, 0], sizes = [1, 8], strides = [1, 1]} : vector<8x8xf32> to vector<1x8xf32>
    %316 = vector.extract_strided_slice %314 {offsets = [1, 0], sizes = [1, 8], strides = [1, 1]} : vector<8x8xf32> to vector<1x8xf32>
    %317 = vector.extract_strided_slice %315 {offsets = [0, 1], sizes = [1, 1], strides = [1, 1]} : vector<1x8xf32> to vector<1x1xf32>
    %cst_50 = arith.constant 1.000000e+00 : f32
    %318 = vector.broadcast %cst_50 : f32 to vector<1x1xf32>
    %319 = arith.divf %318, %317 : vector<1x1xf32>
    %320 = vector.broadcast %319 : vector<1x1xf32> to vector<1x8xf32>
    %321 = arith.mulf %315, %320 : vector<1x8xf32>
    %322 = vector.broadcast %319 : vector<1x1xf32> to vector<1x8xf32>
    %323 = arith.mulf %316, %322 : vector<1x8xf32>
    %324 = vector.extract_strided_slice %310 {offsets = [0, 1], sizes = [8, 1], strides = [1, 1]} : vector<8x8xf32> to vector<8x1xf32>
    %c1_i32_51 = arith.constant 1 : i32
    %325 = vector.broadcast %c1_i32_51 : i32 to vector<8x1xi32>
    %326 = arith.cmpi eq, %38, %325 : vector<8x1xi32>
    %cst_52 = arith.constant 1.000000e+00 : f32
    %327 = vector.broadcast %cst_52 : f32 to vector<1x1xf32>
    %328 = arith.subf %317, %327 : vector<1x1xf32>
    %329 = vector.shape_cast %328 : vector<1x1xf32> to vector<1x1xf32>
    %330 = vector.broadcast %329 : vector<1x1xf32> to vector<8x1xf32>
    %331 = arith.select %326, %330, %324 : vector<8x1xi1>, vector<8x1xf32>
    %332 = vector.broadcast %331 : vector<8x1xf32> to vector<8x8xf32>
    %333 = vector.broadcast %321 : vector<1x8xf32> to vector<8x8xf32>
    %334 = arith.mulf %332, %333 : vector<8x8xf32>
    %335 = arith.subf %310, %334 : vector<8x8xf32>
    %336 = vector.broadcast %331 : vector<8x1xf32> to vector<8x8xf32>
    %337 = vector.broadcast %323 : vector<1x8xf32> to vector<8x8xf32>
    %338 = arith.mulf %336, %337 : vector<8x8xf32>
    %339 = arith.subf %314, %338 : vector<8x8xf32>
    %340 = vector.extract_strided_slice %335 {offsets = [2, 0], sizes = [1, 8], strides = [1, 1]} : vector<8x8xf32> to vector<1x8xf32>
    %341 = vector.extract_strided_slice %339 {offsets = [2, 0], sizes = [1, 8], strides = [1, 1]} : vector<8x8xf32> to vector<1x8xf32>
    %342 = vector.extract_strided_slice %340 {offsets = [0, 2], sizes = [1, 1], strides = [1, 1]} : vector<1x8xf32> to vector<1x1xf32>
    %cst_53 = arith.constant 1.000000e+00 : f32
    %343 = vector.broadcast %cst_53 : f32 to vector<1x1xf32>
    %344 = arith.divf %343, %342 : vector<1x1xf32>
    %345 = vector.broadcast %344 : vector<1x1xf32> to vector<1x8xf32>
    %346 = arith.mulf %340, %345 : vector<1x8xf32>
    %347 = vector.broadcast %344 : vector<1x1xf32> to vector<1x8xf32>
    %348 = arith.mulf %341, %347 : vector<1x8xf32>
    %349 = vector.extract_strided_slice %335 {offsets = [0, 2], sizes = [8, 1], strides = [1, 1]} : vector<8x8xf32> to vector<8x1xf32>
    %c2_i32_54 = arith.constant 2 : i32
    %350 = vector.broadcast %c2_i32_54 : i32 to vector<8x1xi32>
    %351 = arith.cmpi eq, %38, %350 : vector<8x1xi32>
    %cst_55 = arith.constant 1.000000e+00 : f32
    %352 = vector.broadcast %cst_55 : f32 to vector<1x1xf32>
    %353 = arith.subf %342, %352 : vector<1x1xf32>
    %354 = vector.shape_cast %353 : vector<1x1xf32> to vector<1x1xf32>
    %355 = vector.broadcast %354 : vector<1x1xf32> to vector<8x1xf32>
    %356 = arith.select %351, %355, %349 : vector<8x1xi1>, vector<8x1xf32>
    %357 = vector.broadcast %356 : vector<8x1xf32> to vector<8x8xf32>
    %358 = vector.broadcast %346 : vector<1x8xf32> to vector<8x8xf32>
    %359 = arith.mulf %357, %358 : vector<8x8xf32>
    %360 = arith.subf %335, %359 : vector<8x8xf32>
    %361 = vector.broadcast %356 : vector<8x1xf32> to vector<8x8xf32>
    %362 = vector.broadcast %348 : vector<1x8xf32> to vector<8x8xf32>
    %363 = arith.mulf %361, %362 : vector<8x8xf32>
    %364 = arith.subf %339, %363 : vector<8x8xf32>
    %365 = vector.extract_strided_slice %360 {offsets = [3, 0], sizes = [1, 8], strides = [1, 1]} : vector<8x8xf32> to vector<1x8xf32>
    %366 = vector.extract_strided_slice %364 {offsets = [3, 0], sizes = [1, 8], strides = [1, 1]} : vector<8x8xf32> to vector<1x8xf32>
    %367 = vector.extract_strided_slice %365 {offsets = [0, 3], sizes = [1, 1], strides = [1, 1]} : vector<1x8xf32> to vector<1x1xf32>
    %cst_56 = arith.constant 1.000000e+00 : f32
    %368 = vector.broadcast %cst_56 : f32 to vector<1x1xf32>
    %369 = arith.divf %368, %367 : vector<1x1xf32>
    %370 = vector.broadcast %369 : vector<1x1xf32> to vector<1x8xf32>
    %371 = arith.mulf %365, %370 : vector<1x8xf32>
    %372 = vector.broadcast %369 : vector<1x1xf32> to vector<1x8xf32>
    %373 = arith.mulf %366, %372 : vector<1x8xf32>
    %374 = vector.extract_strided_slice %360 {offsets = [0, 3], sizes = [8, 1], strides = [1, 1]} : vector<8x8xf32> to vector<8x1xf32>
    %c3_i32_57 = arith.constant 3 : i32
    %375 = vector.broadcast %c3_i32_57 : i32 to vector<8x1xi32>
    %376 = arith.cmpi eq, %38, %375 : vector<8x1xi32>
    %cst_58 = arith.constant 1.000000e+00 : f32
    %377 = vector.broadcast %cst_58 : f32 to vector<1x1xf32>
    %378 = arith.subf %367, %377 : vector<1x1xf32>
    %379 = vector.shape_cast %378 : vector<1x1xf32> to vector<1x1xf32>
    %380 = vector.broadcast %379 : vector<1x1xf32> to vector<8x1xf32>
    %381 = arith.select %376, %380, %374 : vector<8x1xi1>, vector<8x1xf32>
    %382 = vector.broadcast %381 : vector<8x1xf32> to vector<8x8xf32>
    %383 = vector.broadcast %371 : vector<1x8xf32> to vector<8x8xf32>
    %384 = arith.mulf %382, %383 : vector<8x8xf32>
    %385 = arith.subf %360, %384 : vector<8x8xf32>
    %386 = vector.broadcast %381 : vector<8x1xf32> to vector<8x8xf32>
    %387 = vector.broadcast %373 : vector<1x8xf32> to vector<8x8xf32>
    %388 = arith.mulf %386, %387 : vector<8x8xf32>
    %389 = arith.subf %364, %388 : vector<8x8xf32>
    %390 = vector.extract_strided_slice %385 {offsets = [4, 0], sizes = [1, 8], strides = [1, 1]} : vector<8x8xf32> to vector<1x8xf32>
    %391 = vector.extract_strided_slice %389 {offsets = [4, 0], sizes = [1, 8], strides = [1, 1]} : vector<8x8xf32> to vector<1x8xf32>
    %392 = vector.extract_strided_slice %390 {offsets = [0, 4], sizes = [1, 1], strides = [1, 1]} : vector<1x8xf32> to vector<1x1xf32>
    %cst_59 = arith.constant 1.000000e+00 : f32
    %393 = vector.broadcast %cst_59 : f32 to vector<1x1xf32>
    %394 = arith.divf %393, %392 : vector<1x1xf32>
    %395 = vector.broadcast %394 : vector<1x1xf32> to vector<1x8xf32>
    %396 = arith.mulf %390, %395 : vector<1x8xf32>
    %397 = vector.broadcast %394 : vector<1x1xf32> to vector<1x8xf32>
    %398 = arith.mulf %391, %397 : vector<1x8xf32>
    %399 = vector.extract_strided_slice %385 {offsets = [0, 4], sizes = [8, 1], strides = [1, 1]} : vector<8x8xf32> to vector<8x1xf32>
    %c4_i32_60 = arith.constant 4 : i32
    %400 = vector.broadcast %c4_i32_60 : i32 to vector<8x1xi32>
    %401 = arith.cmpi eq, %38, %400 : vector<8x1xi32>
    %cst_61 = arith.constant 1.000000e+00 : f32
    %402 = vector.broadcast %cst_61 : f32 to vector<1x1xf32>
    %403 = arith.subf %392, %402 : vector<1x1xf32>
    %404 = vector.shape_cast %403 : vector<1x1xf32> to vector<1x1xf32>
    %405 = vector.broadcast %404 : vector<1x1xf32> to vector<8x1xf32>
    %406 = arith.select %401, %405, %399 : vector<8x1xi1>, vector<8x1xf32>
    %407 = vector.broadcast %406 : vector<8x1xf32> to vector<8x8xf32>
    %408 = vector.broadcast %396 : vector<1x8xf32> to vector<8x8xf32>
    %409 = arith.mulf %407, %408 : vector<8x8xf32>
    %410 = arith.subf %385, %409 : vector<8x8xf32>
    %411 = vector.broadcast %406 : vector<8x1xf32> to vector<8x8xf32>
    %412 = vector.broadcast %398 : vector<1x8xf32> to vector<8x8xf32>
    %413 = arith.mulf %411, %412 : vector<8x8xf32>
    %414 = arith.subf %389, %413 : vector<8x8xf32>
    %415 = vector.extract_strided_slice %410 {offsets = [5, 0], sizes = [1, 8], strides = [1, 1]} : vector<8x8xf32> to vector<1x8xf32>
    %416 = vector.extract_strided_slice %414 {offsets = [5, 0], sizes = [1, 8], strides = [1, 1]} : vector<8x8xf32> to vector<1x8xf32>
    %417 = vector.extract_strided_slice %415 {offsets = [0, 5], sizes = [1, 1], strides = [1, 1]} : vector<1x8xf32> to vector<1x1xf32>
    %cst_62 = arith.constant 1.000000e+00 : f32
    %418 = vector.broadcast %cst_62 : f32 to vector<1x1xf32>
    %419 = arith.divf %418, %417 : vector<1x1xf32>
    %420 = vector.broadcast %419 : vector<1x1xf32> to vector<1x8xf32>
    %421 = arith.mulf %415, %420 : vector<1x8xf32>
    %422 = vector.broadcast %419 : vector<1x1xf32> to vector<1x8xf32>
    %423 = arith.mulf %416, %422 : vector<1x8xf32>
    %424 = vector.extract_strided_slice %410 {offsets = [0, 5], sizes = [8, 1], strides = [1, 1]} : vector<8x8xf32> to vector<8x1xf32>
    %c5_i32_63 = arith.constant 5 : i32
    %425 = vector.broadcast %c5_i32_63 : i32 to vector<8x1xi32>
    %426 = arith.cmpi eq, %38, %425 : vector<8x1xi32>
    %cst_64 = arith.constant 1.000000e+00 : f32
    %427 = vector.broadcast %cst_64 : f32 to vector<1x1xf32>
    %428 = arith.subf %417, %427 : vector<1x1xf32>
    %429 = vector.shape_cast %428 : vector<1x1xf32> to vector<1x1xf32>
    %430 = vector.broadcast %429 : vector<1x1xf32> to vector<8x1xf32>
    %431 = arith.select %426, %430, %424 : vector<8x1xi1>, vector<8x1xf32>
    %432 = vector.broadcast %431 : vector<8x1xf32> to vector<8x8xf32>
    %433 = vector.broadcast %421 : vector<1x8xf32> to vector<8x8xf32>
    %434 = arith.mulf %432, %433 : vector<8x8xf32>
    %435 = arith.subf %410, %434 : vector<8x8xf32>
    %436 = vector.broadcast %431 : vector<8x1xf32> to vector<8x8xf32>
    %437 = vector.broadcast %423 : vector<1x8xf32> to vector<8x8xf32>
    %438 = arith.mulf %436, %437 : vector<8x8xf32>
    %439 = arith.subf %414, %438 : vector<8x8xf32>
    %440 = vector.extract_strided_slice %435 {offsets = [6, 0], sizes = [1, 8], strides = [1, 1]} : vector<8x8xf32> to vector<1x8xf32>
    %441 = vector.extract_strided_slice %439 {offsets = [6, 0], sizes = [1, 8], strides = [1, 1]} : vector<8x8xf32> to vector<1x8xf32>
    %442 = vector.extract_strided_slice %440 {offsets = [0, 6], sizes = [1, 1], strides = [1, 1]} : vector<1x8xf32> to vector<1x1xf32>
    %cst_65 = arith.constant 1.000000e+00 : f32
    %443 = vector.broadcast %cst_65 : f32 to vector<1x1xf32>
    %444 = arith.divf %443, %442 : vector<1x1xf32>
    %445 = vector.broadcast %444 : vector<1x1xf32> to vector<1x8xf32>
    %446 = arith.mulf %440, %445 : vector<1x8xf32>
    %447 = vector.broadcast %444 : vector<1x1xf32> to vector<1x8xf32>
    %448 = arith.mulf %441, %447 : vector<1x8xf32>
    %449 = vector.extract_strided_slice %435 {offsets = [0, 6], sizes = [8, 1], strides = [1, 1]} : vector<8x8xf32> to vector<8x1xf32>
    %c6_i32_66 = arith.constant 6 : i32
    %450 = vector.broadcast %c6_i32_66 : i32 to vector<8x1xi32>
    %451 = arith.cmpi eq, %38, %450 : vector<8x1xi32>
    %cst_67 = arith.constant 1.000000e+00 : f32
    %452 = vector.broadcast %cst_67 : f32 to vector<1x1xf32>
    %453 = arith.subf %442, %452 : vector<1x1xf32>
    %454 = vector.shape_cast %453 : vector<1x1xf32> to vector<1x1xf32>
    %455 = vector.broadcast %454 : vector<1x1xf32> to vector<8x1xf32>
    %456 = arith.select %451, %455, %449 : vector<8x1xi1>, vector<8x1xf32>
    %457 = vector.broadcast %456 : vector<8x1xf32> to vector<8x8xf32>
    %458 = vector.broadcast %446 : vector<1x8xf32> to vector<8x8xf32>
    %459 = arith.mulf %457, %458 : vector<8x8xf32>
    %460 = arith.subf %435, %459 : vector<8x8xf32>
    %461 = vector.broadcast %456 : vector<8x1xf32> to vector<8x8xf32>
    %462 = vector.broadcast %448 : vector<1x8xf32> to vector<8x8xf32>
    %463 = arith.mulf %461, %462 : vector<8x8xf32>
    %464 = arith.subf %439, %463 : vector<8x8xf32>
    %465 = vector.extract_strided_slice %460 {offsets = [7, 0], sizes = [1, 8], strides = [1, 1]} : vector<8x8xf32> to vector<1x8xf32>
    %466 = vector.extract_strided_slice %464 {offsets = [7, 0], sizes = [1, 8], strides = [1, 1]} : vector<8x8xf32> to vector<1x8xf32>
    %467 = vector.extract_strided_slice %465 {offsets = [0, 7], sizes = [1, 1], strides = [1, 1]} : vector<1x8xf32> to vector<1x1xf32>
    %cst_68 = arith.constant 1.000000e+00 : f32
    %468 = vector.broadcast %cst_68 : f32 to vector<1x1xf32>
    %469 = arith.divf %468, %467 : vector<1x1xf32>
    %470 = vector.broadcast %469 : vector<1x1xf32> to vector<1x8xf32>
    %471 = arith.mulf %466, %470 : vector<1x8xf32>
    %472 = vector.extract_strided_slice %460 {offsets = [0, 7], sizes = [8, 1], strides = [1, 1]} : vector<8x8xf32> to vector<8x1xf32>
    %c7_i32_69 = arith.constant 7 : i32
    %473 = vector.broadcast %c7_i32_69 : i32 to vector<8x1xi32>
    %474 = arith.cmpi eq, %38, %473 : vector<8x1xi32>
    %cst_70 = arith.constant 1.000000e+00 : f32
    %475 = vector.broadcast %cst_70 : f32 to vector<1x1xf32>
    %476 = arith.subf %467, %475 : vector<1x1xf32>
    %477 = vector.shape_cast %476 : vector<1x1xf32> to vector<1x1xf32>
    %478 = vector.broadcast %477 : vector<1x1xf32> to vector<8x1xf32>
    %479 = arith.select %474, %478, %472 : vector<8x1xi1>, vector<8x1xf32>
    %480 = vector.broadcast %479 : vector<8x1xf32> to vector<8x8xf32>
    %481 = vector.broadcast %471 : vector<1x8xf32> to vector<8x8xf32>
    %482 = arith.mulf %480, %481 : vector<8x8xf32>
    %483 = arith.subf %464, %482 : vector<8x8xf32>
    %c2 = arith.constant 2 : index
    %c0_71 = arith.constant 0 : index
    %484 = vector.load %arg1[%c2, %c0_71] : memref<8x8xf32, #tpu.memory_space<vmem>>, vector<1x8xf32>
    %485 = arith.subf %484, %285 : vector<1x8xf32>
    %cst_72 = arith.constant dense<0.000000e+00> : vector<1x8xf32>
    %486 = tpu.matmul %485, %483, %cst_72 {dimension_numbers = #tpu.dot_dimension_numbers<[1], [0], [0], [1], [0, 0, 1, 1], [], []>} : vector<1x8xf32>, vector<8x8xf32>, vector<1x8xf32> -> vector<1x8xf32>
    %487 = arith.addf %285, %486 : vector<1x8xf32>
    %cst_73 = arith.constant dense<0.000000e+00> : vector<8x8xf32>
    %488 = tpu.matmul %288, %483, %cst_73 {dimension_numbers = #tpu.dot_dimension_numbers<[1], [0], [0], [1], [0, 0, 1, 1], [], []>} : vector<8x8xf32>, vector<8x8xf32>, vector<8x8xf32> -> vector<8x8xf32>
    %489 = arith.subf %33, %488 : vector<8x8xf32>
    %490 = vector.extract_strided_slice %489 {offsets = [0, 0], sizes = [1, 8], strides = [1, 1]} : vector<8x8xf32> to vector<1x8xf32>
    %491 = vector.extract_strided_slice %489 {offsets = [1, 0], sizes = [1, 8], strides = [1, 1]} : vector<8x8xf32> to vector<1x8xf32>
    %492 = vector.extract_strided_slice %489 {offsets = [2, 0], sizes = [1, 8], strides = [1, 1]} : vector<8x8xf32> to vector<1x8xf32>
    %493 = vector.extract_strided_slice %489 {offsets = [3, 0], sizes = [1, 8], strides = [1, 1]} : vector<8x8xf32> to vector<1x8xf32>
    %494 = vector.extract_strided_slice %489 {offsets = [4, 0], sizes = [1, 8], strides = [1, 1]} : vector<8x8xf32> to vector<1x8xf32>
    %495 = vector.extract_strided_slice %489 {offsets = [5, 0], sizes = [1, 8], strides = [1, 1]} : vector<8x8xf32> to vector<1x8xf32>
    %496 = vector.extract_strided_slice %489 {offsets = [6, 0], sizes = [1, 8], strides = [1, 1]} : vector<8x8xf32> to vector<1x8xf32>
    %497 = vector.extract_strided_slice %489 {offsets = [7, 0], sizes = [1, 8], strides = [1, 1]} : vector<8x8xf32> to vector<1x8xf32>
    %498 = tpu.concatenate %490, %491, %492, %493, %494, %495, %496, %497 in 1 : vector<1x8xf32>, vector<1x8xf32>, vector<1x8xf32>, vector<1x8xf32>, vector<1x8xf32>, vector<1x8xf32>, vector<1x8xf32>, vector<1x8xf32> -> vector<1x64xf32>
    %499 = vector.extract_strided_slice %24 {offsets = [2, 0], sizes = [1, 64], strides = [1, 1]} : vector<8x64xf32> to vector<1x64xf32>
    %500 = vector.extract_strided_slice %499 {offsets = [0, 0], sizes = [1, 8], strides = [1, 1]} : vector<1x64xf32> to vector<1x8xf32>
    %501 = vector.extract_strided_slice %499 {offsets = [0, 8], sizes = [1, 8], strides = [1, 1]} : vector<1x64xf32> to vector<1x8xf32>
    %502 = vector.extract_strided_slice %499 {offsets = [0, 16], sizes = [1, 8], strides = [1, 1]} : vector<1x64xf32> to vector<1x8xf32>
    %503 = vector.extract_strided_slice %499 {offsets = [0, 24], sizes = [1, 8], strides = [1, 1]} : vector<1x64xf32> to vector<1x8xf32>
    %504 = vector.extract_strided_slice %499 {offsets = [0, 32], sizes = [1, 8], strides = [1, 1]} : vector<1x64xf32> to vector<1x8xf32>
    %505 = vector.extract_strided_slice %499 {offsets = [0, 40], sizes = [1, 8], strides = [1, 1]} : vector<1x64xf32> to vector<1x8xf32>
    %506 = vector.extract_strided_slice %499 {offsets = [0, 48], sizes = [1, 8], strides = [1, 1]} : vector<1x64xf32> to vector<1x8xf32>
    %507 = vector.extract_strided_slice %499 {offsets = [0, 56], sizes = [1, 8], strides = [1, 1]} : vector<1x64xf32> to vector<1x8xf32>
    %508 = tpu.concatenate %500, %501, %502, %503, %504, %505, %506, %507 in 0 : vector<1x8xf32>, vector<1x8xf32>, vector<1x8xf32>, vector<1x8xf32>, vector<1x8xf32>, vector<1x8xf32>, vector<1x8xf32>, vector<1x8xf32> -> vector<8x8xf32>
    %509 = tpu.transpose %508, [1, 0] : vector<8x8xf32> -> vector<8x8xf32>
    %cst_74 = arith.constant dense<0.000000e+00> : vector<1x8xf32>
    %510 = tpu.matmul %487, %509, %cst_74 {dimension_numbers = #tpu.dot_dimension_numbers<[1], [0], [0], [1], [0, 0, 1, 1], [], []>} : vector<1x8xf32>, vector<8x8xf32>, vector<1x8xf32> -> vector<1x8xf32>
    %cst_75 = arith.constant dense<0.000000e+00> : vector<8x8xf32>
    %511 = tpu.matmul %508, %489, %cst_75 {dimension_numbers = #tpu.dot_dimension_numbers<[1], [0], [0], [1], [0, 0, 1, 1], [], []>} : vector<8x8xf32>, vector<8x8xf32>, vector<8x8xf32> -> vector<8x8xf32>
    %cst_76 = arith.constant dense<0.000000e+00> : vector<8x8xf32>
    %512 = tpu.matmul %511, %509, %cst_76 {dimension_numbers = #tpu.dot_dimension_numbers<[1], [0], [0], [1], [0, 0, 1, 1], [], []>} : vector<8x8xf32>, vector<8x8xf32>, vector<8x8xf32> -> vector<8x8xf32>
    %513 = arith.addf %512, %35 : vector<8x8xf32>
    %514 = arith.addf %513, %37 : vector<8x8xf32>
    %515 = vector.extract_strided_slice %514 {offsets = [0, 0], sizes = [1, 8], strides = [1, 1]} : vector<8x8xf32> to vector<1x8xf32>
    %516 = vector.extract_strided_slice %513 {offsets = [0, 0], sizes = [1, 8], strides = [1, 1]} : vector<8x8xf32> to vector<1x8xf32>
    %517 = vector.extract_strided_slice %515 {offsets = [0, 0], sizes = [1, 1], strides = [1, 1]} : vector<1x8xf32> to vector<1x1xf32>
    %cst_77 = arith.constant 1.000000e+00 : f32
    %518 = vector.broadcast %cst_77 : f32 to vector<1x1xf32>
    %519 = arith.divf %518, %517 : vector<1x1xf32>
    %520 = vector.broadcast %519 : vector<1x1xf32> to vector<1x8xf32>
    %521 = arith.mulf %515, %520 : vector<1x8xf32>
    %522 = vector.broadcast %519 : vector<1x1xf32> to vector<1x8xf32>
    %523 = arith.mulf %516, %522 : vector<1x8xf32>
    %524 = vector.extract_strided_slice %514 {offsets = [0, 0], sizes = [8, 1], strides = [1, 1]} : vector<8x8xf32> to vector<8x1xf32>
    %c0_i32_78 = arith.constant 0 : i32
    %525 = vector.broadcast %c0_i32_78 : i32 to vector<8x1xi32>
    %526 = arith.cmpi eq, %38, %525 : vector<8x1xi32>
    %cst_79 = arith.constant 1.000000e+00 : f32
    %527 = vector.broadcast %cst_79 : f32 to vector<1x1xf32>
    %528 = arith.subf %517, %527 : vector<1x1xf32>
    %529 = vector.shape_cast %528 : vector<1x1xf32> to vector<1x1xf32>
    %530 = vector.broadcast %529 : vector<1x1xf32> to vector<8x1xf32>
    %531 = arith.select %526, %530, %524 : vector<8x1xi1>, vector<8x1xf32>
    %532 = vector.broadcast %531 : vector<8x1xf32> to vector<8x8xf32>
    %533 = vector.broadcast %521 : vector<1x8xf32> to vector<8x8xf32>
    %534 = arith.mulf %532, %533 : vector<8x8xf32>
    %535 = arith.subf %514, %534 : vector<8x8xf32>
    %536 = vector.broadcast %531 : vector<8x1xf32> to vector<8x8xf32>
    %537 = vector.broadcast %523 : vector<1x8xf32> to vector<8x8xf32>
    %538 = arith.mulf %536, %537 : vector<8x8xf32>
    %539 = arith.subf %513, %538 : vector<8x8xf32>
    %540 = vector.extract_strided_slice %535 {offsets = [1, 0], sizes = [1, 8], strides = [1, 1]} : vector<8x8xf32> to vector<1x8xf32>
    %541 = vector.extract_strided_slice %539 {offsets = [1, 0], sizes = [1, 8], strides = [1, 1]} : vector<8x8xf32> to vector<1x8xf32>
    %542 = vector.extract_strided_slice %540 {offsets = [0, 1], sizes = [1, 1], strides = [1, 1]} : vector<1x8xf32> to vector<1x1xf32>
    %cst_80 = arith.constant 1.000000e+00 : f32
    %543 = vector.broadcast %cst_80 : f32 to vector<1x1xf32>
    %544 = arith.divf %543, %542 : vector<1x1xf32>
    %545 = vector.broadcast %544 : vector<1x1xf32> to vector<1x8xf32>
    %546 = arith.mulf %540, %545 : vector<1x8xf32>
    %547 = vector.broadcast %544 : vector<1x1xf32> to vector<1x8xf32>
    %548 = arith.mulf %541, %547 : vector<1x8xf32>
    %549 = vector.extract_strided_slice %535 {offsets = [0, 1], sizes = [8, 1], strides = [1, 1]} : vector<8x8xf32> to vector<8x1xf32>
    %c1_i32_81 = arith.constant 1 : i32
    %550 = vector.broadcast %c1_i32_81 : i32 to vector<8x1xi32>
    %551 = arith.cmpi eq, %38, %550 : vector<8x1xi32>
    %cst_82 = arith.constant 1.000000e+00 : f32
    %552 = vector.broadcast %cst_82 : f32 to vector<1x1xf32>
    %553 = arith.subf %542, %552 : vector<1x1xf32>
    %554 = vector.shape_cast %553 : vector<1x1xf32> to vector<1x1xf32>
    %555 = vector.broadcast %554 : vector<1x1xf32> to vector<8x1xf32>
    %556 = arith.select %551, %555, %549 : vector<8x1xi1>, vector<8x1xf32>
    %557 = vector.broadcast %556 : vector<8x1xf32> to vector<8x8xf32>
    %558 = vector.broadcast %546 : vector<1x8xf32> to vector<8x8xf32>
    %559 = arith.mulf %557, %558 : vector<8x8xf32>
    %560 = arith.subf %535, %559 : vector<8x8xf32>
    %561 = vector.broadcast %556 : vector<8x1xf32> to vector<8x8xf32>
    %562 = vector.broadcast %548 : vector<1x8xf32> to vector<8x8xf32>
    %563 = arith.mulf %561, %562 : vector<8x8xf32>
    %564 = arith.subf %539, %563 : vector<8x8xf32>
    %565 = vector.extract_strided_slice %560 {offsets = [2, 0], sizes = [1, 8], strides = [1, 1]} : vector<8x8xf32> to vector<1x8xf32>
    %566 = vector.extract_strided_slice %564 {offsets = [2, 0], sizes = [1, 8], strides = [1, 1]} : vector<8x8xf32> to vector<1x8xf32>
    %567 = vector.extract_strided_slice %565 {offsets = [0, 2], sizes = [1, 1], strides = [1, 1]} : vector<1x8xf32> to vector<1x1xf32>
    %cst_83 = arith.constant 1.000000e+00 : f32
    %568 = vector.broadcast %cst_83 : f32 to vector<1x1xf32>
    %569 = arith.divf %568, %567 : vector<1x1xf32>
    %570 = vector.broadcast %569 : vector<1x1xf32> to vector<1x8xf32>
    %571 = arith.mulf %565, %570 : vector<1x8xf32>
    %572 = vector.broadcast %569 : vector<1x1xf32> to vector<1x8xf32>
    %573 = arith.mulf %566, %572 : vector<1x8xf32>
    %574 = vector.extract_strided_slice %560 {offsets = [0, 2], sizes = [8, 1], strides = [1, 1]} : vector<8x8xf32> to vector<8x1xf32>
    %c2_i32_84 = arith.constant 2 : i32
    %575 = vector.broadcast %c2_i32_84 : i32 to vector<8x1xi32>
    %576 = arith.cmpi eq, %38, %575 : vector<8x1xi32>
    %cst_85 = arith.constant 1.000000e+00 : f32
    %577 = vector.broadcast %cst_85 : f32 to vector<1x1xf32>
    %578 = arith.subf %567, %577 : vector<1x1xf32>
    %579 = vector.shape_cast %578 : vector<1x1xf32> to vector<1x1xf32>
    %580 = vector.broadcast %579 : vector<1x1xf32> to vector<8x1xf32>
    %581 = arith.select %576, %580, %574 : vector<8x1xi1>, vector<8x1xf32>
    %582 = vector.broadcast %581 : vector<8x1xf32> to vector<8x8xf32>
    %583 = vector.broadcast %571 : vector<1x8xf32> to vector<8x8xf32>
    %584 = arith.mulf %582, %583 : vector<8x8xf32>
    %585 = arith.subf %560, %584 : vector<8x8xf32>
    %586 = vector.broadcast %581 : vector<8x1xf32> to vector<8x8xf32>
    %587 = vector.broadcast %573 : vector<1x8xf32> to vector<8x8xf32>
    %588 = arith.mulf %586, %587 : vector<8x8xf32>
    %589 = arith.subf %564, %588 : vector<8x8xf32>
    %590 = vector.extract_strided_slice %585 {offsets = [3, 0], sizes = [1, 8], strides = [1, 1]} : vector<8x8xf32> to vector<1x8xf32>
    %591 = vector.extract_strided_slice %589 {offsets = [3, 0], sizes = [1, 8], strides = [1, 1]} : vector<8x8xf32> to vector<1x8xf32>
    %592 = vector.extract_strided_slice %590 {offsets = [0, 3], sizes = [1, 1], strides = [1, 1]} : vector<1x8xf32> to vector<1x1xf32>
    %cst_86 = arith.constant 1.000000e+00 : f32
    %593 = vector.broadcast %cst_86 : f32 to vector<1x1xf32>
    %594 = arith.divf %593, %592 : vector<1x1xf32>
    %595 = vector.broadcast %594 : vector<1x1xf32> to vector<1x8xf32>
    %596 = arith.mulf %590, %595 : vector<1x8xf32>
    %597 = vector.broadcast %594 : vector<1x1xf32> to vector<1x8xf32>
    %598 = arith.mulf %591, %597 : vector<1x8xf32>
    %599 = vector.extract_strided_slice %585 {offsets = [0, 3], sizes = [8, 1], strides = [1, 1]} : vector<8x8xf32> to vector<8x1xf32>
    %c3_i32_87 = arith.constant 3 : i32
    %600 = vector.broadcast %c3_i32_87 : i32 to vector<8x1xi32>
    %601 = arith.cmpi eq, %38, %600 : vector<8x1xi32>
    %cst_88 = arith.constant 1.000000e+00 : f32
    %602 = vector.broadcast %cst_88 : f32 to vector<1x1xf32>
    %603 = arith.subf %592, %602 : vector<1x1xf32>
    %604 = vector.shape_cast %603 : vector<1x1xf32> to vector<1x1xf32>
    %605 = vector.broadcast %604 : vector<1x1xf32> to vector<8x1xf32>
    %606 = arith.select %601, %605, %599 : vector<8x1xi1>, vector<8x1xf32>
    %607 = vector.broadcast %606 : vector<8x1xf32> to vector<8x8xf32>
    %608 = vector.broadcast %596 : vector<1x8xf32> to vector<8x8xf32>
    %609 = arith.mulf %607, %608 : vector<8x8xf32>
    %610 = arith.subf %585, %609 : vector<8x8xf32>
    %611 = vector.broadcast %606 : vector<8x1xf32> to vector<8x8xf32>
    %612 = vector.broadcast %598 : vector<1x8xf32> to vector<8x8xf32>
    %613 = arith.mulf %611, %612 : vector<8x8xf32>
    %614 = arith.subf %589, %613 : vector<8x8xf32>
    %615 = vector.extract_strided_slice %610 {offsets = [4, 0], sizes = [1, 8], strides = [1, 1]} : vector<8x8xf32> to vector<1x8xf32>
    %616 = vector.extract_strided_slice %614 {offsets = [4, 0], sizes = [1, 8], strides = [1, 1]} : vector<8x8xf32> to vector<1x8xf32>
    %617 = vector.extract_strided_slice %615 {offsets = [0, 4], sizes = [1, 1], strides = [1, 1]} : vector<1x8xf32> to vector<1x1xf32>
    %cst_89 = arith.constant 1.000000e+00 : f32
    %618 = vector.broadcast %cst_89 : f32 to vector<1x1xf32>
    %619 = arith.divf %618, %617 : vector<1x1xf32>
    %620 = vector.broadcast %619 : vector<1x1xf32> to vector<1x8xf32>
    %621 = arith.mulf %615, %620 : vector<1x8xf32>
    %622 = vector.broadcast %619 : vector<1x1xf32> to vector<1x8xf32>
    %623 = arith.mulf %616, %622 : vector<1x8xf32>
    %624 = vector.extract_strided_slice %610 {offsets = [0, 4], sizes = [8, 1], strides = [1, 1]} : vector<8x8xf32> to vector<8x1xf32>
    %c4_i32_90 = arith.constant 4 : i32
    %625 = vector.broadcast %c4_i32_90 : i32 to vector<8x1xi32>
    %626 = arith.cmpi eq, %38, %625 : vector<8x1xi32>
    %cst_91 = arith.constant 1.000000e+00 : f32
    %627 = vector.broadcast %cst_91 : f32 to vector<1x1xf32>
    %628 = arith.subf %617, %627 : vector<1x1xf32>
    %629 = vector.shape_cast %628 : vector<1x1xf32> to vector<1x1xf32>
    %630 = vector.broadcast %629 : vector<1x1xf32> to vector<8x1xf32>
    %631 = arith.select %626, %630, %624 : vector<8x1xi1>, vector<8x1xf32>
    %632 = vector.broadcast %631 : vector<8x1xf32> to vector<8x8xf32>
    %633 = vector.broadcast %621 : vector<1x8xf32> to vector<8x8xf32>
    %634 = arith.mulf %632, %633 : vector<8x8xf32>
    %635 = arith.subf %610, %634 : vector<8x8xf32>
    %636 = vector.broadcast %631 : vector<8x1xf32> to vector<8x8xf32>
    %637 = vector.broadcast %623 : vector<1x8xf32> to vector<8x8xf32>
    %638 = arith.mulf %636, %637 : vector<8x8xf32>
    %639 = arith.subf %614, %638 : vector<8x8xf32>
    %640 = vector.extract_strided_slice %635 {offsets = [5, 0], sizes = [1, 8], strides = [1, 1]} : vector<8x8xf32> to vector<1x8xf32>
    %641 = vector.extract_strided_slice %639 {offsets = [5, 0], sizes = [1, 8], strides = [1, 1]} : vector<8x8xf32> to vector<1x8xf32>
    %642 = vector.extract_strided_slice %640 {offsets = [0, 5], sizes = [1, 1], strides = [1, 1]} : vector<1x8xf32> to vector<1x1xf32>
    %cst_92 = arith.constant 1.000000e+00 : f32
    %643 = vector.broadcast %cst_92 : f32 to vector<1x1xf32>
    %644 = arith.divf %643, %642 : vector<1x1xf32>
    %645 = vector.broadcast %644 : vector<1x1xf32> to vector<1x8xf32>
    %646 = arith.mulf %640, %645 : vector<1x8xf32>
    %647 = vector.broadcast %644 : vector<1x1xf32> to vector<1x8xf32>
    %648 = arith.mulf %641, %647 : vector<1x8xf32>
    %649 = vector.extract_strided_slice %635 {offsets = [0, 5], sizes = [8, 1], strides = [1, 1]} : vector<8x8xf32> to vector<8x1xf32>
    %c5_i32_93 = arith.constant 5 : i32
    %650 = vector.broadcast %c5_i32_93 : i32 to vector<8x1xi32>
    %651 = arith.cmpi eq, %38, %650 : vector<8x1xi32>
    %cst_94 = arith.constant 1.000000e+00 : f32
    %652 = vector.broadcast %cst_94 : f32 to vector<1x1xf32>
    %653 = arith.subf %642, %652 : vector<1x1xf32>
    %654 = vector.shape_cast %653 : vector<1x1xf32> to vector<1x1xf32>
    %655 = vector.broadcast %654 : vector<1x1xf32> to vector<8x1xf32>
    %656 = arith.select %651, %655, %649 : vector<8x1xi1>, vector<8x1xf32>
    %657 = vector.broadcast %656 : vector<8x1xf32> to vector<8x8xf32>
    %658 = vector.broadcast %646 : vector<1x8xf32> to vector<8x8xf32>
    %659 = arith.mulf %657, %658 : vector<8x8xf32>
    %660 = arith.subf %635, %659 : vector<8x8xf32>
    %661 = vector.broadcast %656 : vector<8x1xf32> to vector<8x8xf32>
    %662 = vector.broadcast %648 : vector<1x8xf32> to vector<8x8xf32>
    %663 = arith.mulf %661, %662 : vector<8x8xf32>
    %664 = arith.subf %639, %663 : vector<8x8xf32>
    %665 = vector.extract_strided_slice %660 {offsets = [6, 0], sizes = [1, 8], strides = [1, 1]} : vector<8x8xf32> to vector<1x8xf32>
    %666 = vector.extract_strided_slice %664 {offsets = [6, 0], sizes = [1, 8], strides = [1, 1]} : vector<8x8xf32> to vector<1x8xf32>
    %667 = vector.extract_strided_slice %665 {offsets = [0, 6], sizes = [1, 1], strides = [1, 1]} : vector<1x8xf32> to vector<1x1xf32>
    %cst_95 = arith.constant 1.000000e+00 : f32
    %668 = vector.broadcast %cst_95 : f32 to vector<1x1xf32>
    %669 = arith.divf %668, %667 : vector<1x1xf32>
    %670 = vector.broadcast %669 : vector<1x1xf32> to vector<1x8xf32>
    %671 = arith.mulf %665, %670 : vector<1x8xf32>
    %672 = vector.broadcast %669 : vector<1x1xf32> to vector<1x8xf32>
    %673 = arith.mulf %666, %672 : vector<1x8xf32>
    %674 = vector.extract_strided_slice %660 {offsets = [0, 6], sizes = [8, 1], strides = [1, 1]} : vector<8x8xf32> to vector<8x1xf32>
    %c6_i32_96 = arith.constant 6 : i32
    %675 = vector.broadcast %c6_i32_96 : i32 to vector<8x1xi32>
    %676 = arith.cmpi eq, %38, %675 : vector<8x1xi32>
    %cst_97 = arith.constant 1.000000e+00 : f32
    %677 = vector.broadcast %cst_97 : f32 to vector<1x1xf32>
    %678 = arith.subf %667, %677 : vector<1x1xf32>
    %679 = vector.shape_cast %678 : vector<1x1xf32> to vector<1x1xf32>
    %680 = vector.broadcast %679 : vector<1x1xf32> to vector<8x1xf32>
    %681 = arith.select %676, %680, %674 : vector<8x1xi1>, vector<8x1xf32>
    %682 = vector.broadcast %681 : vector<8x1xf32> to vector<8x8xf32>
    %683 = vector.broadcast %671 : vector<1x8xf32> to vector<8x8xf32>
    %684 = arith.mulf %682, %683 : vector<8x8xf32>
    %685 = arith.subf %660, %684 : vector<8x8xf32>
    %686 = vector.broadcast %681 : vector<8x1xf32> to vector<8x8xf32>
    %687 = vector.broadcast %673 : vector<1x8xf32> to vector<8x8xf32>
    %688 = arith.mulf %686, %687 : vector<8x8xf32>
    %689 = arith.subf %664, %688 : vector<8x8xf32>
    %690 = vector.extract_strided_slice %685 {offsets = [7, 0], sizes = [1, 8], strides = [1, 1]} : vector<8x8xf32> to vector<1x8xf32>
    %691 = vector.extract_strided_slice %689 {offsets = [7, 0], sizes = [1, 8], strides = [1, 1]} : vector<8x8xf32> to vector<1x8xf32>
    %692 = vector.extract_strided_slice %690 {offsets = [0, 7], sizes = [1, 1], strides = [1, 1]} : vector<1x8xf32> to vector<1x1xf32>
    %cst_98 = arith.constant 1.000000e+00 : f32
    %693 = vector.broadcast %cst_98 : f32 to vector<1x1xf32>
    %694 = arith.divf %693, %692 : vector<1x1xf32>
    %695 = vector.broadcast %694 : vector<1x1xf32> to vector<1x8xf32>
    %696 = arith.mulf %691, %695 : vector<1x8xf32>
    %697 = vector.extract_strided_slice %685 {offsets = [0, 7], sizes = [8, 1], strides = [1, 1]} : vector<8x8xf32> to vector<8x1xf32>
    %c7_i32_99 = arith.constant 7 : i32
    %698 = vector.broadcast %c7_i32_99 : i32 to vector<8x1xi32>
    %699 = arith.cmpi eq, %38, %698 : vector<8x1xi32>
    %cst_100 = arith.constant 1.000000e+00 : f32
    %700 = vector.broadcast %cst_100 : f32 to vector<1x1xf32>
    %701 = arith.subf %692, %700 : vector<1x1xf32>
    %702 = vector.shape_cast %701 : vector<1x1xf32> to vector<1x1xf32>
    %703 = vector.broadcast %702 : vector<1x1xf32> to vector<8x1xf32>
    %704 = arith.select %699, %703, %697 : vector<8x1xi1>, vector<8x1xf32>
    %705 = vector.broadcast %704 : vector<8x1xf32> to vector<8x8xf32>
    %706 = vector.broadcast %696 : vector<1x8xf32> to vector<8x8xf32>
    %707 = arith.mulf %705, %706 : vector<8x8xf32>
    %708 = arith.subf %689, %707 : vector<8x8xf32>
    %c3 = arith.constant 3 : index
    %c0_101 = arith.constant 0 : index
    %709 = vector.load %arg1[%c3, %c0_101] : memref<8x8xf32, #tpu.memory_space<vmem>>, vector<1x8xf32>
    %710 = arith.subf %709, %510 : vector<1x8xf32>
    %cst_102 = arith.constant dense<0.000000e+00> : vector<1x8xf32>
    %711 = tpu.matmul %710, %708, %cst_102 {dimension_numbers = #tpu.dot_dimension_numbers<[1], [0], [0], [1], [0, 0, 1, 1], [], []>} : vector<1x8xf32>, vector<8x8xf32>, vector<1x8xf32> -> vector<1x8xf32>
    %712 = arith.addf %510, %711 : vector<1x8xf32>
    %cst_103 = arith.constant dense<0.000000e+00> : vector<8x8xf32>
    %713 = tpu.matmul %513, %708, %cst_103 {dimension_numbers = #tpu.dot_dimension_numbers<[1], [0], [0], [1], [0, 0, 1, 1], [], []>} : vector<8x8xf32>, vector<8x8xf32>, vector<8x8xf32> -> vector<8x8xf32>
    %714 = arith.subf %33, %713 : vector<8x8xf32>
    %715 = vector.extract_strided_slice %714 {offsets = [0, 0], sizes = [1, 8], strides = [1, 1]} : vector<8x8xf32> to vector<1x8xf32>
    %716 = vector.extract_strided_slice %714 {offsets = [1, 0], sizes = [1, 8], strides = [1, 1]} : vector<8x8xf32> to vector<1x8xf32>
    %717 = vector.extract_strided_slice %714 {offsets = [2, 0], sizes = [1, 8], strides = [1, 1]} : vector<8x8xf32> to vector<1x8xf32>
    %718 = vector.extract_strided_slice %714 {offsets = [3, 0], sizes = [1, 8], strides = [1, 1]} : vector<8x8xf32> to vector<1x8xf32>
    %719 = vector.extract_strided_slice %714 {offsets = [4, 0], sizes = [1, 8], strides = [1, 1]} : vector<8x8xf32> to vector<1x8xf32>
    %720 = vector.extract_strided_slice %714 {offsets = [5, 0], sizes = [1, 8], strides = [1, 1]} : vector<8x8xf32> to vector<1x8xf32>
    %721 = vector.extract_strided_slice %714 {offsets = [6, 0], sizes = [1, 8], strides = [1, 1]} : vector<8x8xf32> to vector<1x8xf32>
    %722 = vector.extract_strided_slice %714 {offsets = [7, 0], sizes = [1, 8], strides = [1, 1]} : vector<8x8xf32> to vector<1x8xf32>
    %723 = tpu.concatenate %715, %716, %717, %718, %719, %720, %721, %722 in 1 : vector<1x8xf32>, vector<1x8xf32>, vector<1x8xf32>, vector<1x8xf32>, vector<1x8xf32>, vector<1x8xf32>, vector<1x8xf32>, vector<1x8xf32> -> vector<1x64xf32>
    %724 = vector.extract_strided_slice %24 {offsets = [3, 0], sizes = [1, 64], strides = [1, 1]} : vector<8x64xf32> to vector<1x64xf32>
    %725 = vector.extract_strided_slice %724 {offsets = [0, 0], sizes = [1, 8], strides = [1, 1]} : vector<1x64xf32> to vector<1x8xf32>
    %726 = vector.extract_strided_slice %724 {offsets = [0, 8], sizes = [1, 8], strides = [1, 1]} : vector<1x64xf32> to vector<1x8xf32>
    %727 = vector.extract_strided_slice %724 {offsets = [0, 16], sizes = [1, 8], strides = [1, 1]} : vector<1x64xf32> to vector<1x8xf32>
    %728 = vector.extract_strided_slice %724 {offsets = [0, 24], sizes = [1, 8], strides = [1, 1]} : vector<1x64xf32> to vector<1x8xf32>
    %729 = vector.extract_strided_slice %724 {offsets = [0, 32], sizes = [1, 8], strides = [1, 1]} : vector<1x64xf32> to vector<1x8xf32>
    %730 = vector.extract_strided_slice %724 {offsets = [0, 40], sizes = [1, 8], strides = [1, 1]} : vector<1x64xf32> to vector<1x8xf32>
    %731 = vector.extract_strided_slice %724 {offsets = [0, 48], sizes = [1, 8], strides = [1, 1]} : vector<1x64xf32> to vector<1x8xf32>
    %732 = vector.extract_strided_slice %724 {offsets = [0, 56], sizes = [1, 8], strides = [1, 1]} : vector<1x64xf32> to vector<1x8xf32>
    %733 = tpu.concatenate %725, %726, %727, %728, %729, %730, %731, %732 in 0 : vector<1x8xf32>, vector<1x8xf32>, vector<1x8xf32>, vector<1x8xf32>, vector<1x8xf32>, vector<1x8xf32>, vector<1x8xf32>, vector<1x8xf32> -> vector<8x8xf32>
    %734 = tpu.transpose %733, [1, 0] : vector<8x8xf32> -> vector<8x8xf32>
    %cst_104 = arith.constant dense<0.000000e+00> : vector<1x8xf32>
    %735 = tpu.matmul %712, %734, %cst_104 {dimension_numbers = #tpu.dot_dimension_numbers<[1], [0], [0], [1], [0, 0, 1, 1], [], []>} : vector<1x8xf32>, vector<8x8xf32>, vector<1x8xf32> -> vector<1x8xf32>
    %cst_105 = arith.constant dense<0.000000e+00> : vector<8x8xf32>
    %736 = tpu.matmul %733, %714, %cst_105 {dimension_numbers = #tpu.dot_dimension_numbers<[1], [0], [0], [1], [0, 0, 1, 1], [], []>} : vector<8x8xf32>, vector<8x8xf32>, vector<8x8xf32> -> vector<8x8xf32>
    %cst_106 = arith.constant dense<0.000000e+00> : vector<8x8xf32>
    %737 = tpu.matmul %736, %734, %cst_106 {dimension_numbers = #tpu.dot_dimension_numbers<[1], [0], [0], [1], [0, 0, 1, 1], [], []>} : vector<8x8xf32>, vector<8x8xf32>, vector<8x8xf32> -> vector<8x8xf32>
    %738 = arith.addf %737, %35 : vector<8x8xf32>
    %739 = arith.addf %738, %37 : vector<8x8xf32>
    %740 = vector.extract_strided_slice %739 {offsets = [0, 0], sizes = [1, 8], strides = [1, 1]} : vector<8x8xf32> to vector<1x8xf32>
    %741 = vector.extract_strided_slice %738 {offsets = [0, 0], sizes = [1, 8], strides = [1, 1]} : vector<8x8xf32> to vector<1x8xf32>
    %742 = vector.extract_strided_slice %740 {offsets = [0, 0], sizes = [1, 1], strides = [1, 1]} : vector<1x8xf32> to vector<1x1xf32>
    %cst_107 = arith.constant 1.000000e+00 : f32
    %743 = vector.broadcast %cst_107 : f32 to vector<1x1xf32>
    %744 = arith.divf %743, %742 : vector<1x1xf32>
    %745 = vector.broadcast %744 : vector<1x1xf32> to vector<1x8xf32>
    %746 = arith.mulf %740, %745 : vector<1x8xf32>
    %747 = vector.broadcast %744 : vector<1x1xf32> to vector<1x8xf32>
    %748 = arith.mulf %741, %747 : vector<1x8xf32>
    %749 = vector.extract_strided_slice %739 {offsets = [0, 0], sizes = [8, 1], strides = [1, 1]} : vector<8x8xf32> to vector<8x1xf32>
    %c0_i32_108 = arith.constant 0 : i32
    %750 = vector.broadcast %c0_i32_108 : i32 to vector<8x1xi32>
    %751 = arith.cmpi eq, %38, %750 : vector<8x1xi32>
    %cst_109 = arith.constant 1.000000e+00 : f32
    %752 = vector.broadcast %cst_109 : f32 to vector<1x1xf32>
    %753 = arith.subf %742, %752 : vector<1x1xf32>
    %754 = vector.shape_cast %753 : vector<1x1xf32> to vector<1x1xf32>
    %755 = vector.broadcast %754 : vector<1x1xf32> to vector<8x1xf32>
    %756 = arith.select %751, %755, %749 : vector<8x1xi1>, vector<8x1xf32>
    %757 = vector.broadcast %756 : vector<8x1xf32> to vector<8x8xf32>
    %758 = vector.broadcast %746 : vector<1x8xf32> to vector<8x8xf32>
    %759 = arith.mulf %757, %758 : vector<8x8xf32>
    %760 = arith.subf %739, %759 : vector<8x8xf32>
    %761 = vector.broadcast %756 : vector<8x1xf32> to vector<8x8xf32>
    %762 = vector.broadcast %748 : vector<1x8xf32> to vector<8x8xf32>
    %763 = arith.mulf %761, %762 : vector<8x8xf32>
    %764 = arith.subf %738, %763 : vector<8x8xf32>
    %765 = vector.extract_strided_slice %760 {offsets = [1, 0], sizes = [1, 8], strides = [1, 1]} : vector<8x8xf32> to vector<1x8xf32>
    %766 = vector.extract_strided_slice %764 {offsets = [1, 0], sizes = [1, 8], strides = [1, 1]} : vector<8x8xf32> to vector<1x8xf32>
    %767 = vector.extract_strided_slice %765 {offsets = [0, 1], sizes = [1, 1], strides = [1, 1]} : vector<1x8xf32> to vector<1x1xf32>
    %cst_110 = arith.constant 1.000000e+00 : f32
    %768 = vector.broadcast %cst_110 : f32 to vector<1x1xf32>
    %769 = arith.divf %768, %767 : vector<1x1xf32>
    %770 = vector.broadcast %769 : vector<1x1xf32> to vector<1x8xf32>
    %771 = arith.mulf %765, %770 : vector<1x8xf32>
    %772 = vector.broadcast %769 : vector<1x1xf32> to vector<1x8xf32>
    %773 = arith.mulf %766, %772 : vector<1x8xf32>
    %774 = vector.extract_strided_slice %760 {offsets = [0, 1], sizes = [8, 1], strides = [1, 1]} : vector<8x8xf32> to vector<8x1xf32>
    %c1_i32_111 = arith.constant 1 : i32
    %775 = vector.broadcast %c1_i32_111 : i32 to vector<8x1xi32>
    %776 = arith.cmpi eq, %38, %775 : vector<8x1xi32>
    %cst_112 = arith.constant 1.000000e+00 : f32
    %777 = vector.broadcast %cst_112 : f32 to vector<1x1xf32>
    %778 = arith.subf %767, %777 : vector<1x1xf32>
    %779 = vector.shape_cast %778 : vector<1x1xf32> to vector<1x1xf32>
    %780 = vector.broadcast %779 : vector<1x1xf32> to vector<8x1xf32>
    %781 = arith.select %776, %780, %774 : vector<8x1xi1>, vector<8x1xf32>
    %782 = vector.broadcast %781 : vector<8x1xf32> to vector<8x8xf32>
    %783 = vector.broadcast %771 : vector<1x8xf32> to vector<8x8xf32>
    %784 = arith.mulf %782, %783 : vector<8x8xf32>
    %785 = arith.subf %760, %784 : vector<8x8xf32>
    %786 = vector.broadcast %781 : vector<8x1xf32> to vector<8x8xf32>
    %787 = vector.broadcast %773 : vector<1x8xf32> to vector<8x8xf32>
    %788 = arith.mulf %786, %787 : vector<8x8xf32>
    %789 = arith.subf %764, %788 : vector<8x8xf32>
    %790 = vector.extract_strided_slice %785 {offsets = [2, 0], sizes = [1, 8], strides = [1, 1]} : vector<8x8xf32> to vector<1x8xf32>
    %791 = vector.extract_strided_slice %789 {offsets = [2, 0], sizes = [1, 8], strides = [1, 1]} : vector<8x8xf32> to vector<1x8xf32>
    %792 = vector.extract_strided_slice %790 {offsets = [0, 2], sizes = [1, 1], strides = [1, 1]} : vector<1x8xf32> to vector<1x1xf32>
    %cst_113 = arith.constant 1.000000e+00 : f32
    %793 = vector.broadcast %cst_113 : f32 to vector<1x1xf32>
    %794 = arith.divf %793, %792 : vector<1x1xf32>
    %795 = vector.broadcast %794 : vector<1x1xf32> to vector<1x8xf32>
    %796 = arith.mulf %790, %795 : vector<1x8xf32>
    %797 = vector.broadcast %794 : vector<1x1xf32> to vector<1x8xf32>
    %798 = arith.mulf %791, %797 : vector<1x8xf32>
    %799 = vector.extract_strided_slice %785 {offsets = [0, 2], sizes = [8, 1], strides = [1, 1]} : vector<8x8xf32> to vector<8x1xf32>
    %c2_i32_114 = arith.constant 2 : i32
    %800 = vector.broadcast %c2_i32_114 : i32 to vector<8x1xi32>
    %801 = arith.cmpi eq, %38, %800 : vector<8x1xi32>
    %cst_115 = arith.constant 1.000000e+00 : f32
    %802 = vector.broadcast %cst_115 : f32 to vector<1x1xf32>
    %803 = arith.subf %792, %802 : vector<1x1xf32>
    %804 = vector.shape_cast %803 : vector<1x1xf32> to vector<1x1xf32>
    %805 = vector.broadcast %804 : vector<1x1xf32> to vector<8x1xf32>
    %806 = arith.select %801, %805, %799 : vector<8x1xi1>, vector<8x1xf32>
    %807 = vector.broadcast %806 : vector<8x1xf32> to vector<8x8xf32>
    %808 = vector.broadcast %796 : vector<1x8xf32> to vector<8x8xf32>
    %809 = arith.mulf %807, %808 : vector<8x8xf32>
    %810 = arith.subf %785, %809 : vector<8x8xf32>
    %811 = vector.broadcast %806 : vector<8x1xf32> to vector<8x8xf32>
    %812 = vector.broadcast %798 : vector<1x8xf32> to vector<8x8xf32>
    %813 = arith.mulf %811, %812 : vector<8x8xf32>
    %814 = arith.subf %789, %813 : vector<8x8xf32>
    %815 = vector.extract_strided_slice %810 {offsets = [3, 0], sizes = [1, 8], strides = [1, 1]} : vector<8x8xf32> to vector<1x8xf32>
    %816 = vector.extract_strided_slice %814 {offsets = [3, 0], sizes = [1, 8], strides = [1, 1]} : vector<8x8xf32> to vector<1x8xf32>
    %817 = vector.extract_strided_slice %815 {offsets = [0, 3], sizes = [1, 1], strides = [1, 1]} : vector<1x8xf32> to vector<1x1xf32>
    %cst_116 = arith.constant 1.000000e+00 : f32
    %818 = vector.broadcast %cst_116 : f32 to vector<1x1xf32>
    %819 = arith.divf %818, %817 : vector<1x1xf32>
    %820 = vector.broadcast %819 : vector<1x1xf32> to vector<1x8xf32>
    %821 = arith.mulf %815, %820 : vector<1x8xf32>
    %822 = vector.broadcast %819 : vector<1x1xf32> to vector<1x8xf32>
    %823 = arith.mulf %816, %822 : vector<1x8xf32>
    %824 = vector.extract_strided_slice %810 {offsets = [0, 3], sizes = [8, 1], strides = [1, 1]} : vector<8x8xf32> to vector<8x1xf32>
    %c3_i32_117 = arith.constant 3 : i32
    %825 = vector.broadcast %c3_i32_117 : i32 to vector<8x1xi32>
    %826 = arith.cmpi eq, %38, %825 : vector<8x1xi32>
    %cst_118 = arith.constant 1.000000e+00 : f32
    %827 = vector.broadcast %cst_118 : f32 to vector<1x1xf32>
    %828 = arith.subf %817, %827 : vector<1x1xf32>
    %829 = vector.shape_cast %828 : vector<1x1xf32> to vector<1x1xf32>
    %830 = vector.broadcast %829 : vector<1x1xf32> to vector<8x1xf32>
    %831 = arith.select %826, %830, %824 : vector<8x1xi1>, vector<8x1xf32>
    %832 = vector.broadcast %831 : vector<8x1xf32> to vector<8x8xf32>
    %833 = vector.broadcast %821 : vector<1x8xf32> to vector<8x8xf32>
    %834 = arith.mulf %832, %833 : vector<8x8xf32>
    %835 = arith.subf %810, %834 : vector<8x8xf32>
    %836 = vector.broadcast %831 : vector<8x1xf32> to vector<8x8xf32>
    %837 = vector.broadcast %823 : vector<1x8xf32> to vector<8x8xf32>
    %838 = arith.mulf %836, %837 : vector<8x8xf32>
    %839 = arith.subf %814, %838 : vector<8x8xf32>
    %840 = vector.extract_strided_slice %835 {offsets = [4, 0], sizes = [1, 8], strides = [1, 1]} : vector<8x8xf32> to vector<1x8xf32>
    %841 = vector.extract_strided_slice %839 {offsets = [4, 0], sizes = [1, 8], strides = [1, 1]} : vector<8x8xf32> to vector<1x8xf32>
    %842 = vector.extract_strided_slice %840 {offsets = [0, 4], sizes = [1, 1], strides = [1, 1]} : vector<1x8xf32> to vector<1x1xf32>
    %cst_119 = arith.constant 1.000000e+00 : f32
    %843 = vector.broadcast %cst_119 : f32 to vector<1x1xf32>
    %844 = arith.divf %843, %842 : vector<1x1xf32>
    %845 = vector.broadcast %844 : vector<1x1xf32> to vector<1x8xf32>
    %846 = arith.mulf %840, %845 : vector<1x8xf32>
    %847 = vector.broadcast %844 : vector<1x1xf32> to vector<1x8xf32>
    %848 = arith.mulf %841, %847 : vector<1x8xf32>
    %849 = vector.extract_strided_slice %835 {offsets = [0, 4], sizes = [8, 1], strides = [1, 1]} : vector<8x8xf32> to vector<8x1xf32>
    %c4_i32_120 = arith.constant 4 : i32
    %850 = vector.broadcast %c4_i32_120 : i32 to vector<8x1xi32>
    %851 = arith.cmpi eq, %38, %850 : vector<8x1xi32>
    %cst_121 = arith.constant 1.000000e+00 : f32
    %852 = vector.broadcast %cst_121 : f32 to vector<1x1xf32>
    %853 = arith.subf %842, %852 : vector<1x1xf32>
    %854 = vector.shape_cast %853 : vector<1x1xf32> to vector<1x1xf32>
    %855 = vector.broadcast %854 : vector<1x1xf32> to vector<8x1xf32>
    %856 = arith.select %851, %855, %849 : vector<8x1xi1>, vector<8x1xf32>
    %857 = vector.broadcast %856 : vector<8x1xf32> to vector<8x8xf32>
    %858 = vector.broadcast %846 : vector<1x8xf32> to vector<8x8xf32>
    %859 = arith.mulf %857, %858 : vector<8x8xf32>
    %860 = arith.subf %835, %859 : vector<8x8xf32>
    %861 = vector.broadcast %856 : vector<8x1xf32> to vector<8x8xf32>
    %862 = vector.broadcast %848 : vector<1x8xf32> to vector<8x8xf32>
    %863 = arith.mulf %861, %862 : vector<8x8xf32>
    %864 = arith.subf %839, %863 : vector<8x8xf32>
    %865 = vector.extract_strided_slice %860 {offsets = [5, 0], sizes = [1, 8], strides = [1, 1]} : vector<8x8xf32> to vector<1x8xf32>
    %866 = vector.extract_strided_slice %864 {offsets = [5, 0], sizes = [1, 8], strides = [1, 1]} : vector<8x8xf32> to vector<1x8xf32>
    %867 = vector.extract_strided_slice %865 {offsets = [0, 5], sizes = [1, 1], strides = [1, 1]} : vector<1x8xf32> to vector<1x1xf32>
    %cst_122 = arith.constant 1.000000e+00 : f32
    %868 = vector.broadcast %cst_122 : f32 to vector<1x1xf32>
    %869 = arith.divf %868, %867 : vector<1x1xf32>
    %870 = vector.broadcast %869 : vector<1x1xf32> to vector<1x8xf32>
    %871 = arith.mulf %865, %870 : vector<1x8xf32>
    %872 = vector.broadcast %869 : vector<1x1xf32> to vector<1x8xf32>
    %873 = arith.mulf %866, %872 : vector<1x8xf32>
    %874 = vector.extract_strided_slice %860 {offsets = [0, 5], sizes = [8, 1], strides = [1, 1]} : vector<8x8xf32> to vector<8x1xf32>
    %c5_i32_123 = arith.constant 5 : i32
    %875 = vector.broadcast %c5_i32_123 : i32 to vector<8x1xi32>
    %876 = arith.cmpi eq, %38, %875 : vector<8x1xi32>
    %cst_124 = arith.constant 1.000000e+00 : f32
    %877 = vector.broadcast %cst_124 : f32 to vector<1x1xf32>
    %878 = arith.subf %867, %877 : vector<1x1xf32>
    %879 = vector.shape_cast %878 : vector<1x1xf32> to vector<1x1xf32>
    %880 = vector.broadcast %879 : vector<1x1xf32> to vector<8x1xf32>
    %881 = arith.select %876, %880, %874 : vector<8x1xi1>, vector<8x1xf32>
    %882 = vector.broadcast %881 : vector<8x1xf32> to vector<8x8xf32>
    %883 = vector.broadcast %871 : vector<1x8xf32> to vector<8x8xf32>
    %884 = arith.mulf %882, %883 : vector<8x8xf32>
    %885 = arith.subf %860, %884 : vector<8x8xf32>
    %886 = vector.broadcast %881 : vector<8x1xf32> to vector<8x8xf32>
    %887 = vector.broadcast %873 : vector<1x8xf32> to vector<8x8xf32>
    %888 = arith.mulf %886, %887 : vector<8x8xf32>
    %889 = arith.subf %864, %888 : vector<8x8xf32>
    %890 = vector.extract_strided_slice %885 {offsets = [6, 0], sizes = [1, 8], strides = [1, 1]} : vector<8x8xf32> to vector<1x8xf32>
    %891 = vector.extract_strided_slice %889 {offsets = [6, 0], sizes = [1, 8], strides = [1, 1]} : vector<8x8xf32> to vector<1x8xf32>
    %892 = vector.extract_strided_slice %890 {offsets = [0, 6], sizes = [1, 1], strides = [1, 1]} : vector<1x8xf32> to vector<1x1xf32>
    %cst_125 = arith.constant 1.000000e+00 : f32
    %893 = vector.broadcast %cst_125 : f32 to vector<1x1xf32>
    %894 = arith.divf %893, %892 : vector<1x1xf32>
    %895 = vector.broadcast %894 : vector<1x1xf32> to vector<1x8xf32>
    %896 = arith.mulf %890, %895 : vector<1x8xf32>
    %897 = vector.broadcast %894 : vector<1x1xf32> to vector<1x8xf32>
    %898 = arith.mulf %891, %897 : vector<1x8xf32>
    %899 = vector.extract_strided_slice %885 {offsets = [0, 6], sizes = [8, 1], strides = [1, 1]} : vector<8x8xf32> to vector<8x1xf32>
    %c6_i32_126 = arith.constant 6 : i32
    %900 = vector.broadcast %c6_i32_126 : i32 to vector<8x1xi32>
    %901 = arith.cmpi eq, %38, %900 : vector<8x1xi32>
    %cst_127 = arith.constant 1.000000e+00 : f32
    %902 = vector.broadcast %cst_127 : f32 to vector<1x1xf32>
    %903 = arith.subf %892, %902 : vector<1x1xf32>
    %904 = vector.shape_cast %903 : vector<1x1xf32> to vector<1x1xf32>
    %905 = vector.broadcast %904 : vector<1x1xf32> to vector<8x1xf32>
    %906 = arith.select %901, %905, %899 : vector<8x1xi1>, vector<8x1xf32>
    %907 = vector.broadcast %906 : vector<8x1xf32> to vector<8x8xf32>
    %908 = vector.broadcast %896 : vector<1x8xf32> to vector<8x8xf32>
    %909 = arith.mulf %907, %908 : vector<8x8xf32>
    %910 = arith.subf %885, %909 : vector<8x8xf32>
    %911 = vector.broadcast %906 : vector<8x1xf32> to vector<8x8xf32>
    %912 = vector.broadcast %898 : vector<1x8xf32> to vector<8x8xf32>
    %913 = arith.mulf %911, %912 : vector<8x8xf32>
    %914 = arith.subf %889, %913 : vector<8x8xf32>
    %915 = vector.extract_strided_slice %910 {offsets = [7, 0], sizes = [1, 8], strides = [1, 1]} : vector<8x8xf32> to vector<1x8xf32>
    %916 = vector.extract_strided_slice %914 {offsets = [7, 0], sizes = [1, 8], strides = [1, 1]} : vector<8x8xf32> to vector<1x8xf32>
    %917 = vector.extract_strided_slice %915 {offsets = [0, 7], sizes = [1, 1], strides = [1, 1]} : vector<1x8xf32> to vector<1x1xf32>
    %cst_128 = arith.constant 1.000000e+00 : f32
    %918 = vector.broadcast %cst_128 : f32 to vector<1x1xf32>
    %919 = arith.divf %918, %917 : vector<1x1xf32>
    %920 = vector.broadcast %919 : vector<1x1xf32> to vector<1x8xf32>
    %921 = arith.mulf %916, %920 : vector<1x8xf32>
    %922 = vector.extract_strided_slice %910 {offsets = [0, 7], sizes = [8, 1], strides = [1, 1]} : vector<8x8xf32> to vector<8x1xf32>
    %c7_i32_129 = arith.constant 7 : i32
    %923 = vector.broadcast %c7_i32_129 : i32 to vector<8x1xi32>
    %924 = arith.cmpi eq, %38, %923 : vector<8x1xi32>
    %cst_130 = arith.constant 1.000000e+00 : f32
    %925 = vector.broadcast %cst_130 : f32 to vector<1x1xf32>
    %926 = arith.subf %917, %925 : vector<1x1xf32>
    %927 = vector.shape_cast %926 : vector<1x1xf32> to vector<1x1xf32>
    %928 = vector.broadcast %927 : vector<1x1xf32> to vector<8x1xf32>
    %929 = arith.select %924, %928, %922 : vector<8x1xi1>, vector<8x1xf32>
    %930 = vector.broadcast %929 : vector<8x1xf32> to vector<8x8xf32>
    %931 = vector.broadcast %921 : vector<1x8xf32> to vector<8x8xf32>
    %932 = arith.mulf %930, %931 : vector<8x8xf32>
    %933 = arith.subf %914, %932 : vector<8x8xf32>
    %c4 = arith.constant 4 : index
    %c0_131 = arith.constant 0 : index
    %934 = vector.load %arg1[%c4, %c0_131] : memref<8x8xf32, #tpu.memory_space<vmem>>, vector<1x8xf32>
    %935 = arith.subf %934, %735 : vector<1x8xf32>
    %cst_132 = arith.constant dense<0.000000e+00> : vector<1x8xf32>
    %936 = tpu.matmul %935, %933, %cst_132 {dimension_numbers = #tpu.dot_dimension_numbers<[1], [0], [0], [1], [0, 0, 1, 1], [], []>} : vector<1x8xf32>, vector<8x8xf32>, vector<1x8xf32> -> vector<1x8xf32>
    %937 = arith.addf %735, %936 : vector<1x8xf32>
    %cst_133 = arith.constant dense<0.000000e+00> : vector<8x8xf32>
    %938 = tpu.matmul %738, %933, %cst_133 {dimension_numbers = #tpu.dot_dimension_numbers<[1], [0], [0], [1], [0, 0, 1, 1], [], []>} : vector<8x8xf32>, vector<8x8xf32>, vector<8x8xf32> -> vector<8x8xf32>
    %939 = arith.subf %33, %938 : vector<8x8xf32>
    %940 = vector.extract_strided_slice %939 {offsets = [0, 0], sizes = [1, 8], strides = [1, 1]} : vector<8x8xf32> to vector<1x8xf32>
    %941 = vector.extract_strided_slice %939 {offsets = [1, 0], sizes = [1, 8], strides = [1, 1]} : vector<8x8xf32> to vector<1x8xf32>
    %942 = vector.extract_strided_slice %939 {offsets = [2, 0], sizes = [1, 8], strides = [1, 1]} : vector<8x8xf32> to vector<1x8xf32>
    %943 = vector.extract_strided_slice %939 {offsets = [3, 0], sizes = [1, 8], strides = [1, 1]} : vector<8x8xf32> to vector<1x8xf32>
    %944 = vector.extract_strided_slice %939 {offsets = [4, 0], sizes = [1, 8], strides = [1, 1]} : vector<8x8xf32> to vector<1x8xf32>
    %945 = vector.extract_strided_slice %939 {offsets = [5, 0], sizes = [1, 8], strides = [1, 1]} : vector<8x8xf32> to vector<1x8xf32>
    %946 = vector.extract_strided_slice %939 {offsets = [6, 0], sizes = [1, 8], strides = [1, 1]} : vector<8x8xf32> to vector<1x8xf32>
    %947 = vector.extract_strided_slice %939 {offsets = [7, 0], sizes = [1, 8], strides = [1, 1]} : vector<8x8xf32> to vector<1x8xf32>
    %948 = tpu.concatenate %940, %941, %942, %943, %944, %945, %946, %947 in 1 : vector<1x8xf32>, vector<1x8xf32>, vector<1x8xf32>, vector<1x8xf32>, vector<1x8xf32>, vector<1x8xf32>, vector<1x8xf32>, vector<1x8xf32> -> vector<1x64xf32>
    %949 = vector.extract_strided_slice %24 {offsets = [4, 0], sizes = [1, 64], strides = [1, 1]} : vector<8x64xf32> to vector<1x64xf32>
    %950 = vector.extract_strided_slice %949 {offsets = [0, 0], sizes = [1, 8], strides = [1, 1]} : vector<1x64xf32> to vector<1x8xf32>
    %951 = vector.extract_strided_slice %949 {offsets = [0, 8], sizes = [1, 8], strides = [1, 1]} : vector<1x64xf32> to vector<1x8xf32>
    %952 = vector.extract_strided_slice %949 {offsets = [0, 16], sizes = [1, 8], strides = [1, 1]} : vector<1x64xf32> to vector<1x8xf32>
    %953 = vector.extract_strided_slice %949 {offsets = [0, 24], sizes = [1, 8], strides = [1, 1]} : vector<1x64xf32> to vector<1x8xf32>
    %954 = vector.extract_strided_slice %949 {offsets = [0, 32], sizes = [1, 8], strides = [1, 1]} : vector<1x64xf32> to vector<1x8xf32>
    %955 = vector.extract_strided_slice %949 {offsets = [0, 40], sizes = [1, 8], strides = [1, 1]} : vector<1x64xf32> to vector<1x8xf32>
    %956 = vector.extract_strided_slice %949 {offsets = [0, 48], sizes = [1, 8], strides = [1, 1]} : vector<1x64xf32> to vector<1x8xf32>
    %957 = vector.extract_strided_slice %949 {offsets = [0, 56], sizes = [1, 8], strides = [1, 1]} : vector<1x64xf32> to vector<1x8xf32>
    %958 = tpu.concatenate %950, %951, %952, %953, %954, %955, %956, %957 in 0 : vector<1x8xf32>, vector<1x8xf32>, vector<1x8xf32>, vector<1x8xf32>, vector<1x8xf32>, vector<1x8xf32>, vector<1x8xf32>, vector<1x8xf32> -> vector<8x8xf32>
    %959 = tpu.transpose %958, [1, 0] : vector<8x8xf32> -> vector<8x8xf32>
    %cst_134 = arith.constant dense<0.000000e+00> : vector<1x8xf32>
    %960 = tpu.matmul %937, %959, %cst_134 {dimension_numbers = #tpu.dot_dimension_numbers<[1], [0], [0], [1], [0, 0, 1, 1], [], []>} : vector<1x8xf32>, vector<8x8xf32>, vector<1x8xf32> -> vector<1x8xf32>
    %cst_135 = arith.constant dense<0.000000e+00> : vector<8x8xf32>
    %961 = tpu.matmul %958, %939, %cst_135 {dimension_numbers = #tpu.dot_dimension_numbers<[1], [0], [0], [1], [0, 0, 1, 1], [], []>} : vector<8x8xf32>, vector<8x8xf32>, vector<8x8xf32> -> vector<8x8xf32>
    %cst_136 = arith.constant dense<0.000000e+00> : vector<8x8xf32>
    %962 = tpu.matmul %961, %959, %cst_136 {dimension_numbers = #tpu.dot_dimension_numbers<[1], [0], [0], [1], [0, 0, 1, 1], [], []>} : vector<8x8xf32>, vector<8x8xf32>, vector<8x8xf32> -> vector<8x8xf32>
    %963 = arith.addf %962, %35 : vector<8x8xf32>
    %964 = arith.addf %963, %37 : vector<8x8xf32>
    %965 = vector.extract_strided_slice %964 {offsets = [0, 0], sizes = [1, 8], strides = [1, 1]} : vector<8x8xf32> to vector<1x8xf32>
    %966 = vector.extract_strided_slice %963 {offsets = [0, 0], sizes = [1, 8], strides = [1, 1]} : vector<8x8xf32> to vector<1x8xf32>
    %967 = vector.extract_strided_slice %965 {offsets = [0, 0], sizes = [1, 1], strides = [1, 1]} : vector<1x8xf32> to vector<1x1xf32>
    %cst_137 = arith.constant 1.000000e+00 : f32
    %968 = vector.broadcast %cst_137 : f32 to vector<1x1xf32>
    %969 = arith.divf %968, %967 : vector<1x1xf32>
    %970 = vector.broadcast %969 : vector<1x1xf32> to vector<1x8xf32>
    %971 = arith.mulf %965, %970 : vector<1x8xf32>
    %972 = vector.broadcast %969 : vector<1x1xf32> to vector<1x8xf32>
    %973 = arith.mulf %966, %972 : vector<1x8xf32>
    %974 = vector.extract_strided_slice %964 {offsets = [0, 0], sizes = [8, 1], strides = [1, 1]} : vector<8x8xf32> to vector<8x1xf32>
    %c0_i32_138 = arith.constant 0 : i32
    %975 = vector.broadcast %c0_i32_138 : i32 to vector<8x1xi32>
    %976 = arith.cmpi eq, %38, %975 : vector<8x1xi32>
    %cst_139 = arith.constant 1.000000e+00 : f32
    %977 = vector.broadcast %cst_139 : f32 to vector<1x1xf32>
    %978 = arith.subf %967, %977 : vector<1x1xf32>
    %979 = vector.shape_cast %978 : vector<1x1xf32> to vector<1x1xf32>
    %980 = vector.broadcast %979 : vector<1x1xf32> to vector<8x1xf32>
    %981 = arith.select %976, %980, %974 : vector<8x1xi1>, vector<8x1xf32>
    %982 = vector.broadcast %981 : vector<8x1xf32> to vector<8x8xf32>
    %983 = vector.broadcast %971 : vector<1x8xf32> to vector<8x8xf32>
    %984 = arith.mulf %982, %983 : vector<8x8xf32>
    %985 = arith.subf %964, %984 : vector<8x8xf32>
    %986 = vector.broadcast %981 : vector<8x1xf32> to vector<8x8xf32>
    %987 = vector.broadcast %973 : vector<1x8xf32> to vector<8x8xf32>
    %988 = arith.mulf %986, %987 : vector<8x8xf32>
    %989 = arith.subf %963, %988 : vector<8x8xf32>
    %990 = vector.extract_strided_slice %985 {offsets = [1, 0], sizes = [1, 8], strides = [1, 1]} : vector<8x8xf32> to vector<1x8xf32>
    %991 = vector.extract_strided_slice %989 {offsets = [1, 0], sizes = [1, 8], strides = [1, 1]} : vector<8x8xf32> to vector<1x8xf32>
    %992 = vector.extract_strided_slice %990 {offsets = [0, 1], sizes = [1, 1], strides = [1, 1]} : vector<1x8xf32> to vector<1x1xf32>
    %cst_140 = arith.constant 1.000000e+00 : f32
    %993 = vector.broadcast %cst_140 : f32 to vector<1x1xf32>
    %994 = arith.divf %993, %992 : vector<1x1xf32>
    %995 = vector.broadcast %994 : vector<1x1xf32> to vector<1x8xf32>
    %996 = arith.mulf %990, %995 : vector<1x8xf32>
    %997 = vector.broadcast %994 : vector<1x1xf32> to vector<1x8xf32>
    %998 = arith.mulf %991, %997 : vector<1x8xf32>
    %999 = vector.extract_strided_slice %985 {offsets = [0, 1], sizes = [8, 1], strides = [1, 1]} : vector<8x8xf32> to vector<8x1xf32>
    %c1_i32_141 = arith.constant 1 : i32
    %1000 = vector.broadcast %c1_i32_141 : i32 to vector<8x1xi32>
    %1001 = arith.cmpi eq, %38, %1000 : vector<8x1xi32>
    %cst_142 = arith.constant 1.000000e+00 : f32
    %1002 = vector.broadcast %cst_142 : f32 to vector<1x1xf32>
    %1003 = arith.subf %992, %1002 : vector<1x1xf32>
    %1004 = vector.shape_cast %1003 : vector<1x1xf32> to vector<1x1xf32>
    %1005 = vector.broadcast %1004 : vector<1x1xf32> to vector<8x1xf32>
    %1006 = arith.select %1001, %1005, %999 : vector<8x1xi1>, vector<8x1xf32>
    %1007 = vector.broadcast %1006 : vector<8x1xf32> to vector<8x8xf32>
    %1008 = vector.broadcast %996 : vector<1x8xf32> to vector<8x8xf32>
    %1009 = arith.mulf %1007, %1008 : vector<8x8xf32>
    %1010 = arith.subf %985, %1009 : vector<8x8xf32>
    %1011 = vector.broadcast %1006 : vector<8x1xf32> to vector<8x8xf32>
    %1012 = vector.broadcast %998 : vector<1x8xf32> to vector<8x8xf32>
    %1013 = arith.mulf %1011, %1012 : vector<8x8xf32>
    %1014 = arith.subf %989, %1013 : vector<8x8xf32>
    %1015 = vector.extract_strided_slice %1010 {offsets = [2, 0], sizes = [1, 8], strides = [1, 1]} : vector<8x8xf32> to vector<1x8xf32>
    %1016 = vector.extract_strided_slice %1014 {offsets = [2, 0], sizes = [1, 8], strides = [1, 1]} : vector<8x8xf32> to vector<1x8xf32>
    %1017 = vector.extract_strided_slice %1015 {offsets = [0, 2], sizes = [1, 1], strides = [1, 1]} : vector<1x8xf32> to vector<1x1xf32>
    %cst_143 = arith.constant 1.000000e+00 : f32
    %1018 = vector.broadcast %cst_143 : f32 to vector<1x1xf32>
    %1019 = arith.divf %1018, %1017 : vector<1x1xf32>
    %1020 = vector.broadcast %1019 : vector<1x1xf32> to vector<1x8xf32>
    %1021 = arith.mulf %1015, %1020 : vector<1x8xf32>
    %1022 = vector.broadcast %1019 : vector<1x1xf32> to vector<1x8xf32>
    %1023 = arith.mulf %1016, %1022 : vector<1x8xf32>
    %1024 = vector.extract_strided_slice %1010 {offsets = [0, 2], sizes = [8, 1], strides = [1, 1]} : vector<8x8xf32> to vector<8x1xf32>
    %c2_i32_144 = arith.constant 2 : i32
    %1025 = vector.broadcast %c2_i32_144 : i32 to vector<8x1xi32>
    %1026 = arith.cmpi eq, %38, %1025 : vector<8x1xi32>
    %cst_145 = arith.constant 1.000000e+00 : f32
    %1027 = vector.broadcast %cst_145 : f32 to vector<1x1xf32>
    %1028 = arith.subf %1017, %1027 : vector<1x1xf32>
    %1029 = vector.shape_cast %1028 : vector<1x1xf32> to vector<1x1xf32>
    %1030 = vector.broadcast %1029 : vector<1x1xf32> to vector<8x1xf32>
    %1031 = arith.select %1026, %1030, %1024 : vector<8x1xi1>, vector<8x1xf32>
    %1032 = vector.broadcast %1031 : vector<8x1xf32> to vector<8x8xf32>
    %1033 = vector.broadcast %1021 : vector<1x8xf32> to vector<8x8xf32>
    %1034 = arith.mulf %1032, %1033 : vector<8x8xf32>
    %1035 = arith.subf %1010, %1034 : vector<8x8xf32>
    %1036 = vector.broadcast %1031 : vector<8x1xf32> to vector<8x8xf32>
    %1037 = vector.broadcast %1023 : vector<1x8xf32> to vector<8x8xf32>
    %1038 = arith.mulf %1036, %1037 : vector<8x8xf32>
    %1039 = arith.subf %1014, %1038 : vector<8x8xf32>
    %1040 = vector.extract_strided_slice %1035 {offsets = [3, 0], sizes = [1, 8], strides = [1, 1]} : vector<8x8xf32> to vector<1x8xf32>
    %1041 = vector.extract_strided_slice %1039 {offsets = [3, 0], sizes = [1, 8], strides = [1, 1]} : vector<8x8xf32> to vector<1x8xf32>
    %1042 = vector.extract_strided_slice %1040 {offsets = [0, 3], sizes = [1, 1], strides = [1, 1]} : vector<1x8xf32> to vector<1x1xf32>
    %cst_146 = arith.constant 1.000000e+00 : f32
    %1043 = vector.broadcast %cst_146 : f32 to vector<1x1xf32>
    %1044 = arith.divf %1043, %1042 : vector<1x1xf32>
    %1045 = vector.broadcast %1044 : vector<1x1xf32> to vector<1x8xf32>
    %1046 = arith.mulf %1040, %1045 : vector<1x8xf32>
    %1047 = vector.broadcast %1044 : vector<1x1xf32> to vector<1x8xf32>
    %1048 = arith.mulf %1041, %1047 : vector<1x8xf32>
    %1049 = vector.extract_strided_slice %1035 {offsets = [0, 3], sizes = [8, 1], strides = [1, 1]} : vector<8x8xf32> to vector<8x1xf32>
    %c3_i32_147 = arith.constant 3 : i32
    %1050 = vector.broadcast %c3_i32_147 : i32 to vector<8x1xi32>
    %1051 = arith.cmpi eq, %38, %1050 : vector<8x1xi32>
    %cst_148 = arith.constant 1.000000e+00 : f32
    %1052 = vector.broadcast %cst_148 : f32 to vector<1x1xf32>
    %1053 = arith.subf %1042, %1052 : vector<1x1xf32>
    %1054 = vector.shape_cast %1053 : vector<1x1xf32> to vector<1x1xf32>
    %1055 = vector.broadcast %1054 : vector<1x1xf32> to vector<8x1xf32>
    %1056 = arith.select %1051, %1055, %1049 : vector<8x1xi1>, vector<8x1xf32>
    %1057 = vector.broadcast %1056 : vector<8x1xf32> to vector<8x8xf32>
    %1058 = vector.broadcast %1046 : vector<1x8xf32> to vector<8x8xf32>
    %1059 = arith.mulf %1057, %1058 : vector<8x8xf32>
    %1060 = arith.subf %1035, %1059 : vector<8x8xf32>
    %1061 = vector.broadcast %1056 : vector<8x1xf32> to vector<8x8xf32>
    %1062 = vector.broadcast %1048 : vector<1x8xf32> to vector<8x8xf32>
    %1063 = arith.mulf %1061, %1062 : vector<8x8xf32>
    %1064 = arith.subf %1039, %1063 : vector<8x8xf32>
    %1065 = vector.extract_strided_slice %1060 {offsets = [4, 0], sizes = [1, 8], strides = [1, 1]} : vector<8x8xf32> to vector<1x8xf32>
    %1066 = vector.extract_strided_slice %1064 {offsets = [4, 0], sizes = [1, 8], strides = [1, 1]} : vector<8x8xf32> to vector<1x8xf32>
    %1067 = vector.extract_strided_slice %1065 {offsets = [0, 4], sizes = [1, 1], strides = [1, 1]} : vector<1x8xf32> to vector<1x1xf32>
    %cst_149 = arith.constant 1.000000e+00 : f32
    %1068 = vector.broadcast %cst_149 : f32 to vector<1x1xf32>
    %1069 = arith.divf %1068, %1067 : vector<1x1xf32>
    %1070 = vector.broadcast %1069 : vector<1x1xf32> to vector<1x8xf32>
    %1071 = arith.mulf %1065, %1070 : vector<1x8xf32>
    %1072 = vector.broadcast %1069 : vector<1x1xf32> to vector<1x8xf32>
    %1073 = arith.mulf %1066, %1072 : vector<1x8xf32>
    %1074 = vector.extract_strided_slice %1060 {offsets = [0, 4], sizes = [8, 1], strides = [1, 1]} : vector<8x8xf32> to vector<8x1xf32>
    %c4_i32_150 = arith.constant 4 : i32
    %1075 = vector.broadcast %c4_i32_150 : i32 to vector<8x1xi32>
    %1076 = arith.cmpi eq, %38, %1075 : vector<8x1xi32>
    %cst_151 = arith.constant 1.000000e+00 : f32
    %1077 = vector.broadcast %cst_151 : f32 to vector<1x1xf32>
    %1078 = arith.subf %1067, %1077 : vector<1x1xf32>
    %1079 = vector.shape_cast %1078 : vector<1x1xf32> to vector<1x1xf32>
    %1080 = vector.broadcast %1079 : vector<1x1xf32> to vector<8x1xf32>
    %1081 = arith.select %1076, %1080, %1074 : vector<8x1xi1>, vector<8x1xf32>
    %1082 = vector.broadcast %1081 : vector<8x1xf32> to vector<8x8xf32>
    %1083 = vector.broadcast %1071 : vector<1x8xf32> to vector<8x8xf32>
    %1084 = arith.mulf %1082, %1083 : vector<8x8xf32>
    %1085 = arith.subf %1060, %1084 : vector<8x8xf32>
    %1086 = vector.broadcast %1081 : vector<8x1xf32> to vector<8x8xf32>
    %1087 = vector.broadcast %1073 : vector<1x8xf32> to vector<8x8xf32>
    %1088 = arith.mulf %1086, %1087 : vector<8x8xf32>
    %1089 = arith.subf %1064, %1088 : vector<8x8xf32>
    %1090 = vector.extract_strided_slice %1085 {offsets = [5, 0], sizes = [1, 8], strides = [1, 1]} : vector<8x8xf32> to vector<1x8xf32>
    %1091 = vector.extract_strided_slice %1089 {offsets = [5, 0], sizes = [1, 8], strides = [1, 1]} : vector<8x8xf32> to vector<1x8xf32>
    %1092 = vector.extract_strided_slice %1090 {offsets = [0, 5], sizes = [1, 1], strides = [1, 1]} : vector<1x8xf32> to vector<1x1xf32>
    %cst_152 = arith.constant 1.000000e+00 : f32
    %1093 = vector.broadcast %cst_152 : f32 to vector<1x1xf32>
    %1094 = arith.divf %1093, %1092 : vector<1x1xf32>
    %1095 = vector.broadcast %1094 : vector<1x1xf32> to vector<1x8xf32>
    %1096 = arith.mulf %1090, %1095 : vector<1x8xf32>
    %1097 = vector.broadcast %1094 : vector<1x1xf32> to vector<1x8xf32>
    %1098 = arith.mulf %1091, %1097 : vector<1x8xf32>
    %1099 = vector.extract_strided_slice %1085 {offsets = [0, 5], sizes = [8, 1], strides = [1, 1]} : vector<8x8xf32> to vector<8x1xf32>
    %c5_i32_153 = arith.constant 5 : i32
    %1100 = vector.broadcast %c5_i32_153 : i32 to vector<8x1xi32>
    %1101 = arith.cmpi eq, %38, %1100 : vector<8x1xi32>
    %cst_154 = arith.constant 1.000000e+00 : f32
    %1102 = vector.broadcast %cst_154 : f32 to vector<1x1xf32>
    %1103 = arith.subf %1092, %1102 : vector<1x1xf32>
    %1104 = vector.shape_cast %1103 : vector<1x1xf32> to vector<1x1xf32>
    %1105 = vector.broadcast %1104 : vector<1x1xf32> to vector<8x1xf32>
    %1106 = arith.select %1101, %1105, %1099 : vector<8x1xi1>, vector<8x1xf32>
    %1107 = vector.broadcast %1106 : vector<8x1xf32> to vector<8x8xf32>
    %1108 = vector.broadcast %1096 : vector<1x8xf32> to vector<8x8xf32>
    %1109 = arith.mulf %1107, %1108 : vector<8x8xf32>
    %1110 = arith.subf %1085, %1109 : vector<8x8xf32>
    %1111 = vector.broadcast %1106 : vector<8x1xf32> to vector<8x8xf32>
    %1112 = vector.broadcast %1098 : vector<1x8xf32> to vector<8x8xf32>
    %1113 = arith.mulf %1111, %1112 : vector<8x8xf32>
    %1114 = arith.subf %1089, %1113 : vector<8x8xf32>
    %1115 = vector.extract_strided_slice %1110 {offsets = [6, 0], sizes = [1, 8], strides = [1, 1]} : vector<8x8xf32> to vector<1x8xf32>
    %1116 = vector.extract_strided_slice %1114 {offsets = [6, 0], sizes = [1, 8], strides = [1, 1]} : vector<8x8xf32> to vector<1x8xf32>
    %1117 = vector.extract_strided_slice %1115 {offsets = [0, 6], sizes = [1, 1], strides = [1, 1]} : vector<1x8xf32> to vector<1x1xf32>
    %cst_155 = arith.constant 1.000000e+00 : f32
    %1118 = vector.broadcast %cst_155 : f32 to vector<1x1xf32>
    %1119 = arith.divf %1118, %1117 : vector<1x1xf32>
    %1120 = vector.broadcast %1119 : vector<1x1xf32> to vector<1x8xf32>
    %1121 = arith.mulf %1115, %1120 : vector<1x8xf32>
    %1122 = vector.broadcast %1119 : vector<1x1xf32> to vector<1x8xf32>
    %1123 = arith.mulf %1116, %1122 : vector<1x8xf32>
    %1124 = vector.extract_strided_slice %1110 {offsets = [0, 6], sizes = [8, 1], strides = [1, 1]} : vector<8x8xf32> to vector<8x1xf32>
    %c6_i32_156 = arith.constant 6 : i32
    %1125 = vector.broadcast %c6_i32_156 : i32 to vector<8x1xi32>
    %1126 = arith.cmpi eq, %38, %1125 : vector<8x1xi32>
    %cst_157 = arith.constant 1.000000e+00 : f32
    %1127 = vector.broadcast %cst_157 : f32 to vector<1x1xf32>
    %1128 = arith.subf %1117, %1127 : vector<1x1xf32>
    %1129 = vector.shape_cast %1128 : vector<1x1xf32> to vector<1x1xf32>
    %1130 = vector.broadcast %1129 : vector<1x1xf32> to vector<8x1xf32>
    %1131 = arith.select %1126, %1130, %1124 : vector<8x1xi1>, vector<8x1xf32>
    %1132 = vector.broadcast %1131 : vector<8x1xf32> to vector<8x8xf32>
    %1133 = vector.broadcast %1121 : vector<1x8xf32> to vector<8x8xf32>
    %1134 = arith.mulf %1132, %1133 : vector<8x8xf32>
    %1135 = arith.subf %1110, %1134 : vector<8x8xf32>
    %1136 = vector.broadcast %1131 : vector<8x1xf32> to vector<8x8xf32>
    %1137 = vector.broadcast %1123 : vector<1x8xf32> to vector<8x8xf32>
    %1138 = arith.mulf %1136, %1137 : vector<8x8xf32>
    %1139 = arith.subf %1114, %1138 : vector<8x8xf32>
    %1140 = vector.extract_strided_slice %1135 {offsets = [7, 0], sizes = [1, 8], strides = [1, 1]} : vector<8x8xf32> to vector<1x8xf32>
    %1141 = vector.extract_strided_slice %1139 {offsets = [7, 0], sizes = [1, 8], strides = [1, 1]} : vector<8x8xf32> to vector<1x8xf32>
    %1142 = vector.extract_strided_slice %1140 {offsets = [0, 7], sizes = [1, 1], strides = [1, 1]} : vector<1x8xf32> to vector<1x1xf32>
    %cst_158 = arith.constant 1.000000e+00 : f32
    %1143 = vector.broadcast %cst_158 : f32 to vector<1x1xf32>
    %1144 = arith.divf %1143, %1142 : vector<1x1xf32>
    %1145 = vector.broadcast %1144 : vector<1x1xf32> to vector<1x8xf32>
    %1146 = arith.mulf %1141, %1145 : vector<1x8xf32>
    %1147 = vector.extract_strided_slice %1135 {offsets = [0, 7], sizes = [8, 1], strides = [1, 1]} : vector<8x8xf32> to vector<8x1xf32>
    %c7_i32_159 = arith.constant 7 : i32
    %1148 = vector.broadcast %c7_i32_159 : i32 to vector<8x1xi32>
    %1149 = arith.cmpi eq, %38, %1148 : vector<8x1xi32>
    %cst_160 = arith.constant 1.000000e+00 : f32
    %1150 = vector.broadcast %cst_160 : f32 to vector<1x1xf32>
    %1151 = arith.subf %1142, %1150 : vector<1x1xf32>
    %1152 = vector.shape_cast %1151 : vector<1x1xf32> to vector<1x1xf32>
    %1153 = vector.broadcast %1152 : vector<1x1xf32> to vector<8x1xf32>
    %1154 = arith.select %1149, %1153, %1147 : vector<8x1xi1>, vector<8x1xf32>
    %1155 = vector.broadcast %1154 : vector<8x1xf32> to vector<8x8xf32>
    %1156 = vector.broadcast %1146 : vector<1x8xf32> to vector<8x8xf32>
    %1157 = arith.mulf %1155, %1156 : vector<8x8xf32>
    %1158 = arith.subf %1139, %1157 : vector<8x8xf32>
    %c5 = arith.constant 5 : index
    %c0_161 = arith.constant 0 : index
    %1159 = vector.load %arg1[%c5, %c0_161] : memref<8x8xf32, #tpu.memory_space<vmem>>, vector<1x8xf32>
    %1160 = arith.subf %1159, %960 : vector<1x8xf32>
    %cst_162 = arith.constant dense<0.000000e+00> : vector<1x8xf32>
    %1161 = tpu.matmul %1160, %1158, %cst_162 {dimension_numbers = #tpu.dot_dimension_numbers<[1], [0], [0], [1], [0, 0, 1, 1], [], []>} : vector<1x8xf32>, vector<8x8xf32>, vector<1x8xf32> -> vector<1x8xf32>
    %1162 = arith.addf %960, %1161 : vector<1x8xf32>
    %cst_163 = arith.constant dense<0.000000e+00> : vector<8x8xf32>
    %1163 = tpu.matmul %963, %1158, %cst_163 {dimension_numbers = #tpu.dot_dimension_numbers<[1], [0], [0], [1], [0, 0, 1, 1], [], []>} : vector<8x8xf32>, vector<8x8xf32>, vector<8x8xf32> -> vector<8x8xf32>
    %1164 = arith.subf %33, %1163 : vector<8x8xf32>
    %1165 = vector.extract_strided_slice %1164 {offsets = [0, 0], sizes = [1, 8], strides = [1, 1]} : vector<8x8xf32> to vector<1x8xf32>
    %1166 = vector.extract_strided_slice %1164 {offsets = [1, 0], sizes = [1, 8], strides = [1, 1]} : vector<8x8xf32> to vector<1x8xf32>
    %1167 = vector.extract_strided_slice %1164 {offsets = [2, 0], sizes = [1, 8], strides = [1, 1]} : vector<8x8xf32> to vector<1x8xf32>
    %1168 = vector.extract_strided_slice %1164 {offsets = [3, 0], sizes = [1, 8], strides = [1, 1]} : vector<8x8xf32> to vector<1x8xf32>
    %1169 = vector.extract_strided_slice %1164 {offsets = [4, 0], sizes = [1, 8], strides = [1, 1]} : vector<8x8xf32> to vector<1x8xf32>
    %1170 = vector.extract_strided_slice %1164 {offsets = [5, 0], sizes = [1, 8], strides = [1, 1]} : vector<8x8xf32> to vector<1x8xf32>
    %1171 = vector.extract_strided_slice %1164 {offsets = [6, 0], sizes = [1, 8], strides = [1, 1]} : vector<8x8xf32> to vector<1x8xf32>
    %1172 = vector.extract_strided_slice %1164 {offsets = [7, 0], sizes = [1, 8], strides = [1, 1]} : vector<8x8xf32> to vector<1x8xf32>
    %1173 = tpu.concatenate %1165, %1166, %1167, %1168, %1169, %1170, %1171, %1172 in 1 : vector<1x8xf32>, vector<1x8xf32>, vector<1x8xf32>, vector<1x8xf32>, vector<1x8xf32>, vector<1x8xf32>, vector<1x8xf32>, vector<1x8xf32> -> vector<1x64xf32>
    %1174 = vector.extract_strided_slice %24 {offsets = [5, 0], sizes = [1, 64], strides = [1, 1]} : vector<8x64xf32> to vector<1x64xf32>
    %1175 = vector.extract_strided_slice %1174 {offsets = [0, 0], sizes = [1, 8], strides = [1, 1]} : vector<1x64xf32> to vector<1x8xf32>
    %1176 = vector.extract_strided_slice %1174 {offsets = [0, 8], sizes = [1, 8], strides = [1, 1]} : vector<1x64xf32> to vector<1x8xf32>
    %1177 = vector.extract_strided_slice %1174 {offsets = [0, 16], sizes = [1, 8], strides = [1, 1]} : vector<1x64xf32> to vector<1x8xf32>
    %1178 = vector.extract_strided_slice %1174 {offsets = [0, 24], sizes = [1, 8], strides = [1, 1]} : vector<1x64xf32> to vector<1x8xf32>
    %1179 = vector.extract_strided_slice %1174 {offsets = [0, 32], sizes = [1, 8], strides = [1, 1]} : vector<1x64xf32> to vector<1x8xf32>
    %1180 = vector.extract_strided_slice %1174 {offsets = [0, 40], sizes = [1, 8], strides = [1, 1]} : vector<1x64xf32> to vector<1x8xf32>
    %1181 = vector.extract_strided_slice %1174 {offsets = [0, 48], sizes = [1, 8], strides = [1, 1]} : vector<1x64xf32> to vector<1x8xf32>
    %1182 = vector.extract_strided_slice %1174 {offsets = [0, 56], sizes = [1, 8], strides = [1, 1]} : vector<1x64xf32> to vector<1x8xf32>
    %1183 = tpu.concatenate %1175, %1176, %1177, %1178, %1179, %1180, %1181, %1182 in 0 : vector<1x8xf32>, vector<1x8xf32>, vector<1x8xf32>, vector<1x8xf32>, vector<1x8xf32>, vector<1x8xf32>, vector<1x8xf32>, vector<1x8xf32> -> vector<8x8xf32>
    %1184 = tpu.transpose %1183, [1, 0] : vector<8x8xf32> -> vector<8x8xf32>
    %cst_164 = arith.constant dense<0.000000e+00> : vector<1x8xf32>
    %1185 = tpu.matmul %1162, %1184, %cst_164 {dimension_numbers = #tpu.dot_dimension_numbers<[1], [0], [0], [1], [0, 0, 1, 1], [], []>} : vector<1x8xf32>, vector<8x8xf32>, vector<1x8xf32> -> vector<1x8xf32>
    %cst_165 = arith.constant dense<0.000000e+00> : vector<8x8xf32>
    %1186 = tpu.matmul %1183, %1164, %cst_165 {dimension_numbers = #tpu.dot_dimension_numbers<[1], [0], [0], [1], [0, 0, 1, 1], [], []>} : vector<8x8xf32>, vector<8x8xf32>, vector<8x8xf32> -> vector<8x8xf32>
    %cst_166 = arith.constant dense<0.000000e+00> : vector<8x8xf32>
    %1187 = tpu.matmul %1186, %1184, %cst_166 {dimension_numbers = #tpu.dot_dimension_numbers<[1], [0], [0], [1], [0, 0, 1, 1], [], []>} : vector<8x8xf32>, vector<8x8xf32>, vector<8x8xf32> -> vector<8x8xf32>
    %1188 = arith.addf %1187, %35 : vector<8x8xf32>
    %1189 = arith.addf %1188, %37 : vector<8x8xf32>
    %1190 = vector.extract_strided_slice %1189 {offsets = [0, 0], sizes = [1, 8], strides = [1, 1]} : vector<8x8xf32> to vector<1x8xf32>
    %1191 = vector.extract_strided_slice %1188 {offsets = [0, 0], sizes = [1, 8], strides = [1, 1]} : vector<8x8xf32> to vector<1x8xf32>
    %1192 = vector.extract_strided_slice %1190 {offsets = [0, 0], sizes = [1, 1], strides = [1, 1]} : vector<1x8xf32> to vector<1x1xf32>
    %cst_167 = arith.constant 1.000000e+00 : f32
    %1193 = vector.broadcast %cst_167 : f32 to vector<1x1xf32>
    %1194 = arith.divf %1193, %1192 : vector<1x1xf32>
    %1195 = vector.broadcast %1194 : vector<1x1xf32> to vector<1x8xf32>
    %1196 = arith.mulf %1190, %1195 : vector<1x8xf32>
    %1197 = vector.broadcast %1194 : vector<1x1xf32> to vector<1x8xf32>
    %1198 = arith.mulf %1191, %1197 : vector<1x8xf32>
    %1199 = vector.extract_strided_slice %1189 {offsets = [0, 0], sizes = [8, 1], strides = [1, 1]} : vector<8x8xf32> to vector<8x1xf32>
    %c0_i32_168 = arith.constant 0 : i32
    %1200 = vector.broadcast %c0_i32_168 : i32 to vector<8x1xi32>
    %1201 = arith.cmpi eq, %38, %1200 : vector<8x1xi32>
    %cst_169 = arith.constant 1.000000e+00 : f32
    %1202 = vector.broadcast %cst_169 : f32 to vector<1x1xf32>
    %1203 = arith.subf %1192, %1202 : vector<1x1xf32>
    %1204 = vector.shape_cast %1203 : vector<1x1xf32> to vector<1x1xf32>
    %1205 = vector.broadcast %1204 : vector<1x1xf32> to vector<8x1xf32>
    %1206 = arith.select %1201, %1205, %1199 : vector<8x1xi1>, vector<8x1xf32>
    %1207 = vector.broadcast %1206 : vector<8x1xf32> to vector<8x8xf32>
    %1208 = vector.broadcast %1196 : vector<1x8xf32> to vector<8x8xf32>
    %1209 = arith.mulf %1207, %1208 : vector<8x8xf32>
    %1210 = arith.subf %1189, %1209 : vector<8x8xf32>
    %1211 = vector.broadcast %1206 : vector<8x1xf32> to vector<8x8xf32>
    %1212 = vector.broadcast %1198 : vector<1x8xf32> to vector<8x8xf32>
    %1213 = arith.mulf %1211, %1212 : vector<8x8xf32>
    %1214 = arith.subf %1188, %1213 : vector<8x8xf32>
    %1215 = vector.extract_strided_slice %1210 {offsets = [1, 0], sizes = [1, 8], strides = [1, 1]} : vector<8x8xf32> to vector<1x8xf32>
    %1216 = vector.extract_strided_slice %1214 {offsets = [1, 0], sizes = [1, 8], strides = [1, 1]} : vector<8x8xf32> to vector<1x8xf32>
    %1217 = vector.extract_strided_slice %1215 {offsets = [0, 1], sizes = [1, 1], strides = [1, 1]} : vector<1x8xf32> to vector<1x1xf32>
    %cst_170 = arith.constant 1.000000e+00 : f32
    %1218 = vector.broadcast %cst_170 : f32 to vector<1x1xf32>
    %1219 = arith.divf %1218, %1217 : vector<1x1xf32>
    %1220 = vector.broadcast %1219 : vector<1x1xf32> to vector<1x8xf32>
    %1221 = arith.mulf %1215, %1220 : vector<1x8xf32>
    %1222 = vector.broadcast %1219 : vector<1x1xf32> to vector<1x8xf32>
    %1223 = arith.mulf %1216, %1222 : vector<1x8xf32>
    %1224 = vector.extract_strided_slice %1210 {offsets = [0, 1], sizes = [8, 1], strides = [1, 1]} : vector<8x8xf32> to vector<8x1xf32>
    %c1_i32_171 = arith.constant 1 : i32
    %1225 = vector.broadcast %c1_i32_171 : i32 to vector<8x1xi32>
    %1226 = arith.cmpi eq, %38, %1225 : vector<8x1xi32>
    %cst_172 = arith.constant 1.000000e+00 : f32
    %1227 = vector.broadcast %cst_172 : f32 to vector<1x1xf32>
    %1228 = arith.subf %1217, %1227 : vector<1x1xf32>
    %1229 = vector.shape_cast %1228 : vector<1x1xf32> to vector<1x1xf32>
    %1230 = vector.broadcast %1229 : vector<1x1xf32> to vector<8x1xf32>
    %1231 = arith.select %1226, %1230, %1224 : vector<8x1xi1>, vector<8x1xf32>
    %1232 = vector.broadcast %1231 : vector<8x1xf32> to vector<8x8xf32>
    %1233 = vector.broadcast %1221 : vector<1x8xf32> to vector<8x8xf32>
    %1234 = arith.mulf %1232, %1233 : vector<8x8xf32>
    %1235 = arith.subf %1210, %1234 : vector<8x8xf32>
    %1236 = vector.broadcast %1231 : vector<8x1xf32> to vector<8x8xf32>
    %1237 = vector.broadcast %1223 : vector<1x8xf32> to vector<8x8xf32>
    %1238 = arith.mulf %1236, %1237 : vector<8x8xf32>
    %1239 = arith.subf %1214, %1238 : vector<8x8xf32>
    %1240 = vector.extract_strided_slice %1235 {offsets = [2, 0], sizes = [1, 8], strides = [1, 1]} : vector<8x8xf32> to vector<1x8xf32>
    %1241 = vector.extract_strided_slice %1239 {offsets = [2, 0], sizes = [1, 8], strides = [1, 1]} : vector<8x8xf32> to vector<1x8xf32>
    %1242 = vector.extract_strided_slice %1240 {offsets = [0, 2], sizes = [1, 1], strides = [1, 1]} : vector<1x8xf32> to vector<1x1xf32>
    %cst_173 = arith.constant 1.000000e+00 : f32
    %1243 = vector.broadcast %cst_173 : f32 to vector<1x1xf32>
    %1244 = arith.divf %1243, %1242 : vector<1x1xf32>
    %1245 = vector.broadcast %1244 : vector<1x1xf32> to vector<1x8xf32>
    %1246 = arith.mulf %1240, %1245 : vector<1x8xf32>
    %1247 = vector.broadcast %1244 : vector<1x1xf32> to vector<1x8xf32>
    %1248 = arith.mulf %1241, %1247 : vector<1x8xf32>
    %1249 = vector.extract_strided_slice %1235 {offsets = [0, 2], sizes = [8, 1], strides = [1, 1]} : vector<8x8xf32> to vector<8x1xf32>
    %c2_i32_174 = arith.constant 2 : i32
    %1250 = vector.broadcast %c2_i32_174 : i32 to vector<8x1xi32>
    %1251 = arith.cmpi eq, %38, %1250 : vector<8x1xi32>
    %cst_175 = arith.constant 1.000000e+00 : f32
    %1252 = vector.broadcast %cst_175 : f32 to vector<1x1xf32>
    %1253 = arith.subf %1242, %1252 : vector<1x1xf32>
    %1254 = vector.shape_cast %1253 : vector<1x1xf32> to vector<1x1xf32>
    %1255 = vector.broadcast %1254 : vector<1x1xf32> to vector<8x1xf32>
    %1256 = arith.select %1251, %1255, %1249 : vector<8x1xi1>, vector<8x1xf32>
    %1257 = vector.broadcast %1256 : vector<8x1xf32> to vector<8x8xf32>
    %1258 = vector.broadcast %1246 : vector<1x8xf32> to vector<8x8xf32>
    %1259 = arith.mulf %1257, %1258 : vector<8x8xf32>
    %1260 = arith.subf %1235, %1259 : vector<8x8xf32>
    %1261 = vector.broadcast %1256 : vector<8x1xf32> to vector<8x8xf32>
    %1262 = vector.broadcast %1248 : vector<1x8xf32> to vector<8x8xf32>
    %1263 = arith.mulf %1261, %1262 : vector<8x8xf32>
    %1264 = arith.subf %1239, %1263 : vector<8x8xf32>
    %1265 = vector.extract_strided_slice %1260 {offsets = [3, 0], sizes = [1, 8], strides = [1, 1]} : vector<8x8xf32> to vector<1x8xf32>
    %1266 = vector.extract_strided_slice %1264 {offsets = [3, 0], sizes = [1, 8], strides = [1, 1]} : vector<8x8xf32> to vector<1x8xf32>
    %1267 = vector.extract_strided_slice %1265 {offsets = [0, 3], sizes = [1, 1], strides = [1, 1]} : vector<1x8xf32> to vector<1x1xf32>
    %cst_176 = arith.constant 1.000000e+00 : f32
    %1268 = vector.broadcast %cst_176 : f32 to vector<1x1xf32>
    %1269 = arith.divf %1268, %1267 : vector<1x1xf32>
    %1270 = vector.broadcast %1269 : vector<1x1xf32> to vector<1x8xf32>
    %1271 = arith.mulf %1265, %1270 : vector<1x8xf32>
    %1272 = vector.broadcast %1269 : vector<1x1xf32> to vector<1x8xf32>
    %1273 = arith.mulf %1266, %1272 : vector<1x8xf32>
    %1274 = vector.extract_strided_slice %1260 {offsets = [0, 3], sizes = [8, 1], strides = [1, 1]} : vector<8x8xf32> to vector<8x1xf32>
    %c3_i32_177 = arith.constant 3 : i32
    %1275 = vector.broadcast %c3_i32_177 : i32 to vector<8x1xi32>
    %1276 = arith.cmpi eq, %38, %1275 : vector<8x1xi32>
    %cst_178 = arith.constant 1.000000e+00 : f32
    %1277 = vector.broadcast %cst_178 : f32 to vector<1x1xf32>
    %1278 = arith.subf %1267, %1277 : vector<1x1xf32>
    %1279 = vector.shape_cast %1278 : vector<1x1xf32> to vector<1x1xf32>
    %1280 = vector.broadcast %1279 : vector<1x1xf32> to vector<8x1xf32>
    %1281 = arith.select %1276, %1280, %1274 : vector<8x1xi1>, vector<8x1xf32>
    %1282 = vector.broadcast %1281 : vector<8x1xf32> to vector<8x8xf32>
    %1283 = vector.broadcast %1271 : vector<1x8xf32> to vector<8x8xf32>
    %1284 = arith.mulf %1282, %1283 : vector<8x8xf32>
    %1285 = arith.subf %1260, %1284 : vector<8x8xf32>
    %1286 = vector.broadcast %1281 : vector<8x1xf32> to vector<8x8xf32>
    %1287 = vector.broadcast %1273 : vector<1x8xf32> to vector<8x8xf32>
    %1288 = arith.mulf %1286, %1287 : vector<8x8xf32>
    %1289 = arith.subf %1264, %1288 : vector<8x8xf32>
    %1290 = vector.extract_strided_slice %1285 {offsets = [4, 0], sizes = [1, 8], strides = [1, 1]} : vector<8x8xf32> to vector<1x8xf32>
    %1291 = vector.extract_strided_slice %1289 {offsets = [4, 0], sizes = [1, 8], strides = [1, 1]} : vector<8x8xf32> to vector<1x8xf32>
    %1292 = vector.extract_strided_slice %1290 {offsets = [0, 4], sizes = [1, 1], strides = [1, 1]} : vector<1x8xf32> to vector<1x1xf32>
    %cst_179 = arith.constant 1.000000e+00 : f32
    %1293 = vector.broadcast %cst_179 : f32 to vector<1x1xf32>
    %1294 = arith.divf %1293, %1292 : vector<1x1xf32>
    %1295 = vector.broadcast %1294 : vector<1x1xf32> to vector<1x8xf32>
    %1296 = arith.mulf %1290, %1295 : vector<1x8xf32>
    %1297 = vector.broadcast %1294 : vector<1x1xf32> to vector<1x8xf32>
    %1298 = arith.mulf %1291, %1297 : vector<1x8xf32>
    %1299 = vector.extract_strided_slice %1285 {offsets = [0, 4], sizes = [8, 1], strides = [1, 1]} : vector<8x8xf32> to vector<8x1xf32>
    %c4_i32_180 = arith.constant 4 : i32
    %1300 = vector.broadcast %c4_i32_180 : i32 to vector<8x1xi32>
    %1301 = arith.cmpi eq, %38, %1300 : vector<8x1xi32>
    %cst_181 = arith.constant 1.000000e+00 : f32
    %1302 = vector.broadcast %cst_181 : f32 to vector<1x1xf32>
    %1303 = arith.subf %1292, %1302 : vector<1x1xf32>
    %1304 = vector.shape_cast %1303 : vector<1x1xf32> to vector<1x1xf32>
    %1305 = vector.broadcast %1304 : vector<1x1xf32> to vector<8x1xf32>
    %1306 = arith.select %1301, %1305, %1299 : vector<8x1xi1>, vector<8x1xf32>
    %1307 = vector.broadcast %1306 : vector<8x1xf32> to vector<8x8xf32>
    %1308 = vector.broadcast %1296 : vector<1x8xf32> to vector<8x8xf32>
    %1309 = arith.mulf %1307, %1308 : vector<8x8xf32>
    %1310 = arith.subf %1285, %1309 : vector<8x8xf32>
    %1311 = vector.broadcast %1306 : vector<8x1xf32> to vector<8x8xf32>
    %1312 = vector.broadcast %1298 : vector<1x8xf32> to vector<8x8xf32>
    %1313 = arith.mulf %1311, %1312 : vector<8x8xf32>
    %1314 = arith.subf %1289, %1313 : vector<8x8xf32>
    %1315 = vector.extract_strided_slice %1310 {offsets = [5, 0], sizes = [1, 8], strides = [1, 1]} : vector<8x8xf32> to vector<1x8xf32>
    %1316 = vector.extract_strided_slice %1314 {offsets = [5, 0], sizes = [1, 8], strides = [1, 1]} : vector<8x8xf32> to vector<1x8xf32>
    %1317 = vector.extract_strided_slice %1315 {offsets = [0, 5], sizes = [1, 1], strides = [1, 1]} : vector<1x8xf32> to vector<1x1xf32>
    %cst_182 = arith.constant 1.000000e+00 : f32
    %1318 = vector.broadcast %cst_182 : f32 to vector<1x1xf32>
    %1319 = arith.divf %1318, %1317 : vector<1x1xf32>
    %1320 = vector.broadcast %1319 : vector<1x1xf32> to vector<1x8xf32>
    %1321 = arith.mulf %1315, %1320 : vector<1x8xf32>
    %1322 = vector.broadcast %1319 : vector<1x1xf32> to vector<1x8xf32>
    %1323 = arith.mulf %1316, %1322 : vector<1x8xf32>
    %1324 = vector.extract_strided_slice %1310 {offsets = [0, 5], sizes = [8, 1], strides = [1, 1]} : vector<8x8xf32> to vector<8x1xf32>
    %c5_i32_183 = arith.constant 5 : i32
    %1325 = vector.broadcast %c5_i32_183 : i32 to vector<8x1xi32>
    %1326 = arith.cmpi eq, %38, %1325 : vector<8x1xi32>
    %cst_184 = arith.constant 1.000000e+00 : f32
    %1327 = vector.broadcast %cst_184 : f32 to vector<1x1xf32>
    %1328 = arith.subf %1317, %1327 : vector<1x1xf32>
    %1329 = vector.shape_cast %1328 : vector<1x1xf32> to vector<1x1xf32>
    %1330 = vector.broadcast %1329 : vector<1x1xf32> to vector<8x1xf32>
    %1331 = arith.select %1326, %1330, %1324 : vector<8x1xi1>, vector<8x1xf32>
    %1332 = vector.broadcast %1331 : vector<8x1xf32> to vector<8x8xf32>
    %1333 = vector.broadcast %1321 : vector<1x8xf32> to vector<8x8xf32>
    %1334 = arith.mulf %1332, %1333 : vector<8x8xf32>
    %1335 = arith.subf %1310, %1334 : vector<8x8xf32>
    %1336 = vector.broadcast %1331 : vector<8x1xf32> to vector<8x8xf32>
    %1337 = vector.broadcast %1323 : vector<1x8xf32> to vector<8x8xf32>
    %1338 = arith.mulf %1336, %1337 : vector<8x8xf32>
    %1339 = arith.subf %1314, %1338 : vector<8x8xf32>
    %1340 = vector.extract_strided_slice %1335 {offsets = [6, 0], sizes = [1, 8], strides = [1, 1]} : vector<8x8xf32> to vector<1x8xf32>
    %1341 = vector.extract_strided_slice %1339 {offsets = [6, 0], sizes = [1, 8], strides = [1, 1]} : vector<8x8xf32> to vector<1x8xf32>
    %1342 = vector.extract_strided_slice %1340 {offsets = [0, 6], sizes = [1, 1], strides = [1, 1]} : vector<1x8xf32> to vector<1x1xf32>
    %cst_185 = arith.constant 1.000000e+00 : f32
    %1343 = vector.broadcast %cst_185 : f32 to vector<1x1xf32>
    %1344 = arith.divf %1343, %1342 : vector<1x1xf32>
    %1345 = vector.broadcast %1344 : vector<1x1xf32> to vector<1x8xf32>
    %1346 = arith.mulf %1340, %1345 : vector<1x8xf32>
    %1347 = vector.broadcast %1344 : vector<1x1xf32> to vector<1x8xf32>
    %1348 = arith.mulf %1341, %1347 : vector<1x8xf32>
    %1349 = vector.extract_strided_slice %1335 {offsets = [0, 6], sizes = [8, 1], strides = [1, 1]} : vector<8x8xf32> to vector<8x1xf32>
    %c6_i32_186 = arith.constant 6 : i32
    %1350 = vector.broadcast %c6_i32_186 : i32 to vector<8x1xi32>
    %1351 = arith.cmpi eq, %38, %1350 : vector<8x1xi32>
    %cst_187 = arith.constant 1.000000e+00 : f32
    %1352 = vector.broadcast %cst_187 : f32 to vector<1x1xf32>
    %1353 = arith.subf %1342, %1352 : vector<1x1xf32>
    %1354 = vector.shape_cast %1353 : vector<1x1xf32> to vector<1x1xf32>
    %1355 = vector.broadcast %1354 : vector<1x1xf32> to vector<8x1xf32>
    %1356 = arith.select %1351, %1355, %1349 : vector<8x1xi1>, vector<8x1xf32>
    %1357 = vector.broadcast %1356 : vector<8x1xf32> to vector<8x8xf32>
    %1358 = vector.broadcast %1346 : vector<1x8xf32> to vector<8x8xf32>
    %1359 = arith.mulf %1357, %1358 : vector<8x8xf32>
    %1360 = arith.subf %1335, %1359 : vector<8x8xf32>
    %1361 = vector.broadcast %1356 : vector<8x1xf32> to vector<8x8xf32>
    %1362 = vector.broadcast %1348 : vector<1x8xf32> to vector<8x8xf32>
    %1363 = arith.mulf %1361, %1362 : vector<8x8xf32>
    %1364 = arith.subf %1339, %1363 : vector<8x8xf32>
    %1365 = vector.extract_strided_slice %1360 {offsets = [7, 0], sizes = [1, 8], strides = [1, 1]} : vector<8x8xf32> to vector<1x8xf32>
    %1366 = vector.extract_strided_slice %1364 {offsets = [7, 0], sizes = [1, 8], strides = [1, 1]} : vector<8x8xf32> to vector<1x8xf32>
    %1367 = vector.extract_strided_slice %1365 {offsets = [0, 7], sizes = [1, 1], strides = [1, 1]} : vector<1x8xf32> to vector<1x1xf32>
    %cst_188 = arith.constant 1.000000e+00 : f32
    %1368 = vector.broadcast %cst_188 : f32 to vector<1x1xf32>
    %1369 = arith.divf %1368, %1367 : vector<1x1xf32>
    %1370 = vector.broadcast %1369 : vector<1x1xf32> to vector<1x8xf32>
    %1371 = arith.mulf %1366, %1370 : vector<1x8xf32>
    %1372 = vector.extract_strided_slice %1360 {offsets = [0, 7], sizes = [8, 1], strides = [1, 1]} : vector<8x8xf32> to vector<8x1xf32>
    %c7_i32_189 = arith.constant 7 : i32
    %1373 = vector.broadcast %c7_i32_189 : i32 to vector<8x1xi32>
    %1374 = arith.cmpi eq, %38, %1373 : vector<8x1xi32>
    %cst_190 = arith.constant 1.000000e+00 : f32
    %1375 = vector.broadcast %cst_190 : f32 to vector<1x1xf32>
    %1376 = arith.subf %1367, %1375 : vector<1x1xf32>
    %1377 = vector.shape_cast %1376 : vector<1x1xf32> to vector<1x1xf32>
    %1378 = vector.broadcast %1377 : vector<1x1xf32> to vector<8x1xf32>
    %1379 = arith.select %1374, %1378, %1372 : vector<8x1xi1>, vector<8x1xf32>
    %1380 = vector.broadcast %1379 : vector<8x1xf32> to vector<8x8xf32>
    %1381 = vector.broadcast %1371 : vector<1x8xf32> to vector<8x8xf32>
    %1382 = arith.mulf %1380, %1381 : vector<8x8xf32>
    %1383 = arith.subf %1364, %1382 : vector<8x8xf32>
    %c6 = arith.constant 6 : index
    %c0_191 = arith.constant 0 : index
    %1384 = vector.load %arg1[%c6, %c0_191] : memref<8x8xf32, #tpu.memory_space<vmem>>, vector<1x8xf32>
    %1385 = arith.subf %1384, %1185 : vector<1x8xf32>
    %cst_192 = arith.constant dense<0.000000e+00> : vector<1x8xf32>
    %1386 = tpu.matmul %1385, %1383, %cst_192 {dimension_numbers = #tpu.dot_dimension_numbers<[1], [0], [0], [1], [0, 0, 1, 1], [], []>} : vector<1x8xf32>, vector<8x8xf32>, vector<1x8xf32> -> vector<1x8xf32>
    %1387 = arith.addf %1185, %1386 : vector<1x8xf32>
    %cst_193 = arith.constant dense<0.000000e+00> : vector<8x8xf32>
    %1388 = tpu.matmul %1188, %1383, %cst_193 {dimension_numbers = #tpu.dot_dimension_numbers<[1], [0], [0], [1], [0, 0, 1, 1], [], []>} : vector<8x8xf32>, vector<8x8xf32>, vector<8x8xf32> -> vector<8x8xf32>
    %1389 = arith.subf %33, %1388 : vector<8x8xf32>
    %1390 = vector.extract_strided_slice %1389 {offsets = [0, 0], sizes = [1, 8], strides = [1, 1]} : vector<8x8xf32> to vector<1x8xf32>
    %1391 = vector.extract_strided_slice %1389 {offsets = [1, 0], sizes = [1, 8], strides = [1, 1]} : vector<8x8xf32> to vector<1x8xf32>
    %1392 = vector.extract_strided_slice %1389 {offsets = [2, 0], sizes = [1, 8], strides = [1, 1]} : vector<8x8xf32> to vector<1x8xf32>
    %1393 = vector.extract_strided_slice %1389 {offsets = [3, 0], sizes = [1, 8], strides = [1, 1]} : vector<8x8xf32> to vector<1x8xf32>
    %1394 = vector.extract_strided_slice %1389 {offsets = [4, 0], sizes = [1, 8], strides = [1, 1]} : vector<8x8xf32> to vector<1x8xf32>
    %1395 = vector.extract_strided_slice %1389 {offsets = [5, 0], sizes = [1, 8], strides = [1, 1]} : vector<8x8xf32> to vector<1x8xf32>
    %1396 = vector.extract_strided_slice %1389 {offsets = [6, 0], sizes = [1, 8], strides = [1, 1]} : vector<8x8xf32> to vector<1x8xf32>
    %1397 = vector.extract_strided_slice %1389 {offsets = [7, 0], sizes = [1, 8], strides = [1, 1]} : vector<8x8xf32> to vector<1x8xf32>
    %1398 = tpu.concatenate %1390, %1391, %1392, %1393, %1394, %1395, %1396, %1397 in 1 : vector<1x8xf32>, vector<1x8xf32>, vector<1x8xf32>, vector<1x8xf32>, vector<1x8xf32>, vector<1x8xf32>, vector<1x8xf32>, vector<1x8xf32> -> vector<1x64xf32>
    %1399 = vector.extract_strided_slice %24 {offsets = [6, 0], sizes = [1, 64], strides = [1, 1]} : vector<8x64xf32> to vector<1x64xf32>
    %1400 = vector.extract_strided_slice %1399 {offsets = [0, 0], sizes = [1, 8], strides = [1, 1]} : vector<1x64xf32> to vector<1x8xf32>
    %1401 = vector.extract_strided_slice %1399 {offsets = [0, 8], sizes = [1, 8], strides = [1, 1]} : vector<1x64xf32> to vector<1x8xf32>
    %1402 = vector.extract_strided_slice %1399 {offsets = [0, 16], sizes = [1, 8], strides = [1, 1]} : vector<1x64xf32> to vector<1x8xf32>
    %1403 = vector.extract_strided_slice %1399 {offsets = [0, 24], sizes = [1, 8], strides = [1, 1]} : vector<1x64xf32> to vector<1x8xf32>
    %1404 = vector.extract_strided_slice %1399 {offsets = [0, 32], sizes = [1, 8], strides = [1, 1]} : vector<1x64xf32> to vector<1x8xf32>
    %1405 = vector.extract_strided_slice %1399 {offsets = [0, 40], sizes = [1, 8], strides = [1, 1]} : vector<1x64xf32> to vector<1x8xf32>
    %1406 = vector.extract_strided_slice %1399 {offsets = [0, 48], sizes = [1, 8], strides = [1, 1]} : vector<1x64xf32> to vector<1x8xf32>
    %1407 = vector.extract_strided_slice %1399 {offsets = [0, 56], sizes = [1, 8], strides = [1, 1]} : vector<1x64xf32> to vector<1x8xf32>
    %1408 = tpu.concatenate %1400, %1401, %1402, %1403, %1404, %1405, %1406, %1407 in 0 : vector<1x8xf32>, vector<1x8xf32>, vector<1x8xf32>, vector<1x8xf32>, vector<1x8xf32>, vector<1x8xf32>, vector<1x8xf32>, vector<1x8xf32> -> vector<8x8xf32>
    %1409 = tpu.transpose %1408, [1, 0] : vector<8x8xf32> -> vector<8x8xf32>
    %cst_194 = arith.constant dense<0.000000e+00> : vector<1x8xf32>
    %1410 = tpu.matmul %1387, %1409, %cst_194 {dimension_numbers = #tpu.dot_dimension_numbers<[1], [0], [0], [1], [0, 0, 1, 1], [], []>} : vector<1x8xf32>, vector<8x8xf32>, vector<1x8xf32> -> vector<1x8xf32>
    %cst_195 = arith.constant dense<0.000000e+00> : vector<8x8xf32>
    %1411 = tpu.matmul %1408, %1389, %cst_195 {dimension_numbers = #tpu.dot_dimension_numbers<[1], [0], [0], [1], [0, 0, 1, 1], [], []>} : vector<8x8xf32>, vector<8x8xf32>, vector<8x8xf32> -> vector<8x8xf32>
    %cst_196 = arith.constant dense<0.000000e+00> : vector<8x8xf32>
    %1412 = tpu.matmul %1411, %1409, %cst_196 {dimension_numbers = #tpu.dot_dimension_numbers<[1], [0], [0], [1], [0, 0, 1, 1], [], []>} : vector<8x8xf32>, vector<8x8xf32>, vector<8x8xf32> -> vector<8x8xf32>
    %1413 = arith.addf %1412, %35 : vector<8x8xf32>
    %1414 = arith.addf %1413, %37 : vector<8x8xf32>
    %1415 = vector.extract_strided_slice %1414 {offsets = [0, 0], sizes = [1, 8], strides = [1, 1]} : vector<8x8xf32> to vector<1x8xf32>
    %1416 = vector.extract_strided_slice %1413 {offsets = [0, 0], sizes = [1, 8], strides = [1, 1]} : vector<8x8xf32> to vector<1x8xf32>
    %1417 = vector.extract_strided_slice %1415 {offsets = [0, 0], sizes = [1, 1], strides = [1, 1]} : vector<1x8xf32> to vector<1x1xf32>
    %cst_197 = arith.constant 1.000000e+00 : f32
    %1418 = vector.broadcast %cst_197 : f32 to vector<1x1xf32>
    %1419 = arith.divf %1418, %1417 : vector<1x1xf32>
    %1420 = vector.broadcast %1419 : vector<1x1xf32> to vector<1x8xf32>
    %1421 = arith.mulf %1415, %1420 : vector<1x8xf32>
    %1422 = vector.broadcast %1419 : vector<1x1xf32> to vector<1x8xf32>
    %1423 = arith.mulf %1416, %1422 : vector<1x8xf32>
    %1424 = vector.extract_strided_slice %1414 {offsets = [0, 0], sizes = [8, 1], strides = [1, 1]} : vector<8x8xf32> to vector<8x1xf32>
    %c0_i32_198 = arith.constant 0 : i32
    %1425 = vector.broadcast %c0_i32_198 : i32 to vector<8x1xi32>
    %1426 = arith.cmpi eq, %38, %1425 : vector<8x1xi32>
    %cst_199 = arith.constant 1.000000e+00 : f32
    %1427 = vector.broadcast %cst_199 : f32 to vector<1x1xf32>
    %1428 = arith.subf %1417, %1427 : vector<1x1xf32>
    %1429 = vector.shape_cast %1428 : vector<1x1xf32> to vector<1x1xf32>
    %1430 = vector.broadcast %1429 : vector<1x1xf32> to vector<8x1xf32>
    %1431 = arith.select %1426, %1430, %1424 : vector<8x1xi1>, vector<8x1xf32>
    %1432 = vector.broadcast %1431 : vector<8x1xf32> to vector<8x8xf32>
    %1433 = vector.broadcast %1421 : vector<1x8xf32> to vector<8x8xf32>
    %1434 = arith.mulf %1432, %1433 : vector<8x8xf32>
    %1435 = arith.subf %1414, %1434 : vector<8x8xf32>
    %1436 = vector.broadcast %1431 : vector<8x1xf32> to vector<8x8xf32>
    %1437 = vector.broadcast %1423 : vector<1x8xf32> to vector<8x8xf32>
    %1438 = arith.mulf %1436, %1437 : vector<8x8xf32>
    %1439 = arith.subf %1413, %1438 : vector<8x8xf32>
    %1440 = vector.extract_strided_slice %1435 {offsets = [1, 0], sizes = [1, 8], strides = [1, 1]} : vector<8x8xf32> to vector<1x8xf32>
    %1441 = vector.extract_strided_slice %1439 {offsets = [1, 0], sizes = [1, 8], strides = [1, 1]} : vector<8x8xf32> to vector<1x8xf32>
    %1442 = vector.extract_strided_slice %1440 {offsets = [0, 1], sizes = [1, 1], strides = [1, 1]} : vector<1x8xf32> to vector<1x1xf32>
    %cst_200 = arith.constant 1.000000e+00 : f32
    %1443 = vector.broadcast %cst_200 : f32 to vector<1x1xf32>
    %1444 = arith.divf %1443, %1442 : vector<1x1xf32>
    %1445 = vector.broadcast %1444 : vector<1x1xf32> to vector<1x8xf32>
    %1446 = arith.mulf %1440, %1445 : vector<1x8xf32>
    %1447 = vector.broadcast %1444 : vector<1x1xf32> to vector<1x8xf32>
    %1448 = arith.mulf %1441, %1447 : vector<1x8xf32>
    %1449 = vector.extract_strided_slice %1435 {offsets = [0, 1], sizes = [8, 1], strides = [1, 1]} : vector<8x8xf32> to vector<8x1xf32>
    %c1_i32_201 = arith.constant 1 : i32
    %1450 = vector.broadcast %c1_i32_201 : i32 to vector<8x1xi32>
    %1451 = arith.cmpi eq, %38, %1450 : vector<8x1xi32>
    %cst_202 = arith.constant 1.000000e+00 : f32
    %1452 = vector.broadcast %cst_202 : f32 to vector<1x1xf32>
    %1453 = arith.subf %1442, %1452 : vector<1x1xf32>
    %1454 = vector.shape_cast %1453 : vector<1x1xf32> to vector<1x1xf32>
    %1455 = vector.broadcast %1454 : vector<1x1xf32> to vector<8x1xf32>
    %1456 = arith.select %1451, %1455, %1449 : vector<8x1xi1>, vector<8x1xf32>
    %1457 = vector.broadcast %1456 : vector<8x1xf32> to vector<8x8xf32>
    %1458 = vector.broadcast %1446 : vector<1x8xf32> to vector<8x8xf32>
    %1459 = arith.mulf %1457, %1458 : vector<8x8xf32>
    %1460 = arith.subf %1435, %1459 : vector<8x8xf32>
    %1461 = vector.broadcast %1456 : vector<8x1xf32> to vector<8x8xf32>
    %1462 = vector.broadcast %1448 : vector<1x8xf32> to vector<8x8xf32>
    %1463 = arith.mulf %1461, %1462 : vector<8x8xf32>
    %1464 = arith.subf %1439, %1463 : vector<8x8xf32>
    %1465 = vector.extract_strided_slice %1460 {offsets = [2, 0], sizes = [1, 8], strides = [1, 1]} : vector<8x8xf32> to vector<1x8xf32>
    %1466 = vector.extract_strided_slice %1464 {offsets = [2, 0], sizes = [1, 8], strides = [1, 1]} : vector<8x8xf32> to vector<1x8xf32>
    %1467 = vector.extract_strided_slice %1465 {offsets = [0, 2], sizes = [1, 1], strides = [1, 1]} : vector<1x8xf32> to vector<1x1xf32>
    %cst_203 = arith.constant 1.000000e+00 : f32
    %1468 = vector.broadcast %cst_203 : f32 to vector<1x1xf32>
    %1469 = arith.divf %1468, %1467 : vector<1x1xf32>
    %1470 = vector.broadcast %1469 : vector<1x1xf32> to vector<1x8xf32>
    %1471 = arith.mulf %1465, %1470 : vector<1x8xf32>
    %1472 = vector.broadcast %1469 : vector<1x1xf32> to vector<1x8xf32>
    %1473 = arith.mulf %1466, %1472 : vector<1x8xf32>
    %1474 = vector.extract_strided_slice %1460 {offsets = [0, 2], sizes = [8, 1], strides = [1, 1]} : vector<8x8xf32> to vector<8x1xf32>
    %c2_i32_204 = arith.constant 2 : i32
    %1475 = vector.broadcast %c2_i32_204 : i32 to vector<8x1xi32>
    %1476 = arith.cmpi eq, %38, %1475 : vector<8x1xi32>
    %cst_205 = arith.constant 1.000000e+00 : f32
    %1477 = vector.broadcast %cst_205 : f32 to vector<1x1xf32>
    %1478 = arith.subf %1467, %1477 : vector<1x1xf32>
    %1479 = vector.shape_cast %1478 : vector<1x1xf32> to vector<1x1xf32>
    %1480 = vector.broadcast %1479 : vector<1x1xf32> to vector<8x1xf32>
    %1481 = arith.select %1476, %1480, %1474 : vector<8x1xi1>, vector<8x1xf32>
    %1482 = vector.broadcast %1481 : vector<8x1xf32> to vector<8x8xf32>
    %1483 = vector.broadcast %1471 : vector<1x8xf32> to vector<8x8xf32>
    %1484 = arith.mulf %1482, %1483 : vector<8x8xf32>
    %1485 = arith.subf %1460, %1484 : vector<8x8xf32>
    %1486 = vector.broadcast %1481 : vector<8x1xf32> to vector<8x8xf32>
    %1487 = vector.broadcast %1473 : vector<1x8xf32> to vector<8x8xf32>
    %1488 = arith.mulf %1486, %1487 : vector<8x8xf32>
    %1489 = arith.subf %1464, %1488 : vector<8x8xf32>
    %1490 = vector.extract_strided_slice %1485 {offsets = [3, 0], sizes = [1, 8], strides = [1, 1]} : vector<8x8xf32> to vector<1x8xf32>
    %1491 = vector.extract_strided_slice %1489 {offsets = [3, 0], sizes = [1, 8], strides = [1, 1]} : vector<8x8xf32> to vector<1x8xf32>
    %1492 = vector.extract_strided_slice %1490 {offsets = [0, 3], sizes = [1, 1], strides = [1, 1]} : vector<1x8xf32> to vector<1x1xf32>
    %cst_206 = arith.constant 1.000000e+00 : f32
    %1493 = vector.broadcast %cst_206 : f32 to vector<1x1xf32>
    %1494 = arith.divf %1493, %1492 : vector<1x1xf32>
    %1495 = vector.broadcast %1494 : vector<1x1xf32> to vector<1x8xf32>
    %1496 = arith.mulf %1490, %1495 : vector<1x8xf32>
    %1497 = vector.broadcast %1494 : vector<1x1xf32> to vector<1x8xf32>
    %1498 = arith.mulf %1491, %1497 : vector<1x8xf32>
    %1499 = vector.extract_strided_slice %1485 {offsets = [0, 3], sizes = [8, 1], strides = [1, 1]} : vector<8x8xf32> to vector<8x1xf32>
    %c3_i32_207 = arith.constant 3 : i32
    %1500 = vector.broadcast %c3_i32_207 : i32 to vector<8x1xi32>
    %1501 = arith.cmpi eq, %38, %1500 : vector<8x1xi32>
    %cst_208 = arith.constant 1.000000e+00 : f32
    %1502 = vector.broadcast %cst_208 : f32 to vector<1x1xf32>
    %1503 = arith.subf %1492, %1502 : vector<1x1xf32>
    %1504 = vector.shape_cast %1503 : vector<1x1xf32> to vector<1x1xf32>
    %1505 = vector.broadcast %1504 : vector<1x1xf32> to vector<8x1xf32>
    %1506 = arith.select %1501, %1505, %1499 : vector<8x1xi1>, vector<8x1xf32>
    %1507 = vector.broadcast %1506 : vector<8x1xf32> to vector<8x8xf32>
    %1508 = vector.broadcast %1496 : vector<1x8xf32> to vector<8x8xf32>
    %1509 = arith.mulf %1507, %1508 : vector<8x8xf32>
    %1510 = arith.subf %1485, %1509 : vector<8x8xf32>
    %1511 = vector.broadcast %1506 : vector<8x1xf32> to vector<8x8xf32>
    %1512 = vector.broadcast %1498 : vector<1x8xf32> to vector<8x8xf32>
    %1513 = arith.mulf %1511, %1512 : vector<8x8xf32>
    %1514 = arith.subf %1489, %1513 : vector<8x8xf32>
    %1515 = vector.extract_strided_slice %1510 {offsets = [4, 0], sizes = [1, 8], strides = [1, 1]} : vector<8x8xf32> to vector<1x8xf32>
    %1516 = vector.extract_strided_slice %1514 {offsets = [4, 0], sizes = [1, 8], strides = [1, 1]} : vector<8x8xf32> to vector<1x8xf32>
    %1517 = vector.extract_strided_slice %1515 {offsets = [0, 4], sizes = [1, 1], strides = [1, 1]} : vector<1x8xf32> to vector<1x1xf32>
    %cst_209 = arith.constant 1.000000e+00 : f32
    %1518 = vector.broadcast %cst_209 : f32 to vector<1x1xf32>
    %1519 = arith.divf %1518, %1517 : vector<1x1xf32>
    %1520 = vector.broadcast %1519 : vector<1x1xf32> to vector<1x8xf32>
    %1521 = arith.mulf %1515, %1520 : vector<1x8xf32>
    %1522 = vector.broadcast %1519 : vector<1x1xf32> to vector<1x8xf32>
    %1523 = arith.mulf %1516, %1522 : vector<1x8xf32>
    %1524 = vector.extract_strided_slice %1510 {offsets = [0, 4], sizes = [8, 1], strides = [1, 1]} : vector<8x8xf32> to vector<8x1xf32>
    %c4_i32_210 = arith.constant 4 : i32
    %1525 = vector.broadcast %c4_i32_210 : i32 to vector<8x1xi32>
    %1526 = arith.cmpi eq, %38, %1525 : vector<8x1xi32>
    %cst_211 = arith.constant 1.000000e+00 : f32
    %1527 = vector.broadcast %cst_211 : f32 to vector<1x1xf32>
    %1528 = arith.subf %1517, %1527 : vector<1x1xf32>
    %1529 = vector.shape_cast %1528 : vector<1x1xf32> to vector<1x1xf32>
    %1530 = vector.broadcast %1529 : vector<1x1xf32> to vector<8x1xf32>
    %1531 = arith.select %1526, %1530, %1524 : vector<8x1xi1>, vector<8x1xf32>
    %1532 = vector.broadcast %1531 : vector<8x1xf32> to vector<8x8xf32>
    %1533 = vector.broadcast %1521 : vector<1x8xf32> to vector<8x8xf32>
    %1534 = arith.mulf %1532, %1533 : vector<8x8xf32>
    %1535 = arith.subf %1510, %1534 : vector<8x8xf32>
    %1536 = vector.broadcast %1531 : vector<8x1xf32> to vector<8x8xf32>
    %1537 = vector.broadcast %1523 : vector<1x8xf32> to vector<8x8xf32>
    %1538 = arith.mulf %1536, %1537 : vector<8x8xf32>
    %1539 = arith.subf %1514, %1538 : vector<8x8xf32>
    %1540 = vector.extract_strided_slice %1535 {offsets = [5, 0], sizes = [1, 8], strides = [1, 1]} : vector<8x8xf32> to vector<1x8xf32>
    %1541 = vector.extract_strided_slice %1539 {offsets = [5, 0], sizes = [1, 8], strides = [1, 1]} : vector<8x8xf32> to vector<1x8xf32>
    %1542 = vector.extract_strided_slice %1540 {offsets = [0, 5], sizes = [1, 1], strides = [1, 1]} : vector<1x8xf32> to vector<1x1xf32>
    %cst_212 = arith.constant 1.000000e+00 : f32
    %1543 = vector.broadcast %cst_212 : f32 to vector<1x1xf32>
    %1544 = arith.divf %1543, %1542 : vector<1x1xf32>
    %1545 = vector.broadcast %1544 : vector<1x1xf32> to vector<1x8xf32>
    %1546 = arith.mulf %1540, %1545 : vector<1x8xf32>
    %1547 = vector.broadcast %1544 : vector<1x1xf32> to vector<1x8xf32>
    %1548 = arith.mulf %1541, %1547 : vector<1x8xf32>
    %1549 = vector.extract_strided_slice %1535 {offsets = [0, 5], sizes = [8, 1], strides = [1, 1]} : vector<8x8xf32> to vector<8x1xf32>
    %c5_i32_213 = arith.constant 5 : i32
    %1550 = vector.broadcast %c5_i32_213 : i32 to vector<8x1xi32>
    %1551 = arith.cmpi eq, %38, %1550 : vector<8x1xi32>
    %cst_214 = arith.constant 1.000000e+00 : f32
    %1552 = vector.broadcast %cst_214 : f32 to vector<1x1xf32>
    %1553 = arith.subf %1542, %1552 : vector<1x1xf32>
    %1554 = vector.shape_cast %1553 : vector<1x1xf32> to vector<1x1xf32>
    %1555 = vector.broadcast %1554 : vector<1x1xf32> to vector<8x1xf32>
    %1556 = arith.select %1551, %1555, %1549 : vector<8x1xi1>, vector<8x1xf32>
    %1557 = vector.broadcast %1556 : vector<8x1xf32> to vector<8x8xf32>
    %1558 = vector.broadcast %1546 : vector<1x8xf32> to vector<8x8xf32>
    %1559 = arith.mulf %1557, %1558 : vector<8x8xf32>
    %1560 = arith.subf %1535, %1559 : vector<8x8xf32>
    %1561 = vector.broadcast %1556 : vector<8x1xf32> to vector<8x8xf32>
    %1562 = vector.broadcast %1548 : vector<1x8xf32> to vector<8x8xf32>
    %1563 = arith.mulf %1561, %1562 : vector<8x8xf32>
    %1564 = arith.subf %1539, %1563 : vector<8x8xf32>
    %1565 = vector.extract_strided_slice %1560 {offsets = [6, 0], sizes = [1, 8], strides = [1, 1]} : vector<8x8xf32> to vector<1x8xf32>
    %1566 = vector.extract_strided_slice %1564 {offsets = [6, 0], sizes = [1, 8], strides = [1, 1]} : vector<8x8xf32> to vector<1x8xf32>
    %1567 = vector.extract_strided_slice %1565 {offsets = [0, 6], sizes = [1, 1], strides = [1, 1]} : vector<1x8xf32> to vector<1x1xf32>
    %cst_215 = arith.constant 1.000000e+00 : f32
    %1568 = vector.broadcast %cst_215 : f32 to vector<1x1xf32>
    %1569 = arith.divf %1568, %1567 : vector<1x1xf32>
    %1570 = vector.broadcast %1569 : vector<1x1xf32> to vector<1x8xf32>
    %1571 = arith.mulf %1565, %1570 : vector<1x8xf32>
    %1572 = vector.broadcast %1569 : vector<1x1xf32> to vector<1x8xf32>
    %1573 = arith.mulf %1566, %1572 : vector<1x8xf32>
    %1574 = vector.extract_strided_slice %1560 {offsets = [0, 6], sizes = [8, 1], strides = [1, 1]} : vector<8x8xf32> to vector<8x1xf32>
    %c6_i32_216 = arith.constant 6 : i32
    %1575 = vector.broadcast %c6_i32_216 : i32 to vector<8x1xi32>
    %1576 = arith.cmpi eq, %38, %1575 : vector<8x1xi32>
    %cst_217 = arith.constant 1.000000e+00 : f32
    %1577 = vector.broadcast %cst_217 : f32 to vector<1x1xf32>
    %1578 = arith.subf %1567, %1577 : vector<1x1xf32>
    %1579 = vector.shape_cast %1578 : vector<1x1xf32> to vector<1x1xf32>
    %1580 = vector.broadcast %1579 : vector<1x1xf32> to vector<8x1xf32>
    %1581 = arith.select %1576, %1580, %1574 : vector<8x1xi1>, vector<8x1xf32>
    %1582 = vector.broadcast %1581 : vector<8x1xf32> to vector<8x8xf32>
    %1583 = vector.broadcast %1571 : vector<1x8xf32> to vector<8x8xf32>
    %1584 = arith.mulf %1582, %1583 : vector<8x8xf32>
    %1585 = arith.subf %1560, %1584 : vector<8x8xf32>
    %1586 = vector.broadcast %1581 : vector<8x1xf32> to vector<8x8xf32>
    %1587 = vector.broadcast %1573 : vector<1x8xf32> to vector<8x8xf32>
    %1588 = arith.mulf %1586, %1587 : vector<8x8xf32>
    %1589 = arith.subf %1564, %1588 : vector<8x8xf32>
    %1590 = vector.extract_strided_slice %1585 {offsets = [7, 0], sizes = [1, 8], strides = [1, 1]} : vector<8x8xf32> to vector<1x8xf32>
    %1591 = vector.extract_strided_slice %1589 {offsets = [7, 0], sizes = [1, 8], strides = [1, 1]} : vector<8x8xf32> to vector<1x8xf32>
    %1592 = vector.extract_strided_slice %1590 {offsets = [0, 7], sizes = [1, 1], strides = [1, 1]} : vector<1x8xf32> to vector<1x1xf32>
    %cst_218 = arith.constant 1.000000e+00 : f32
    %1593 = vector.broadcast %cst_218 : f32 to vector<1x1xf32>
    %1594 = arith.divf %1593, %1592 : vector<1x1xf32>
    %1595 = vector.broadcast %1594 : vector<1x1xf32> to vector<1x8xf32>
    %1596 = arith.mulf %1591, %1595 : vector<1x8xf32>
    %1597 = vector.extract_strided_slice %1585 {offsets = [0, 7], sizes = [8, 1], strides = [1, 1]} : vector<8x8xf32> to vector<8x1xf32>
    %c7_i32_219 = arith.constant 7 : i32
    %1598 = vector.broadcast %c7_i32_219 : i32 to vector<8x1xi32>
    %1599 = arith.cmpi eq, %38, %1598 : vector<8x1xi32>
    %cst_220 = arith.constant 1.000000e+00 : f32
    %1600 = vector.broadcast %cst_220 : f32 to vector<1x1xf32>
    %1601 = arith.subf %1592, %1600 : vector<1x1xf32>
    %1602 = vector.shape_cast %1601 : vector<1x1xf32> to vector<1x1xf32>
    %1603 = vector.broadcast %1602 : vector<1x1xf32> to vector<8x1xf32>
    %1604 = arith.select %1599, %1603, %1597 : vector<8x1xi1>, vector<8x1xf32>
    %1605 = vector.broadcast %1604 : vector<8x1xf32> to vector<8x8xf32>
    %1606 = vector.broadcast %1596 : vector<1x8xf32> to vector<8x8xf32>
    %1607 = arith.mulf %1605, %1606 : vector<8x8xf32>
    %1608 = arith.subf %1589, %1607 : vector<8x8xf32>
    %c7 = arith.constant 7 : index
    %c0_221 = arith.constant 0 : index
    %1609 = vector.load %arg1[%c7, %c0_221] : memref<8x8xf32, #tpu.memory_space<vmem>>, vector<1x8xf32>
    %1610 = arith.subf %1609, %1410 : vector<1x8xf32>
    %cst_222 = arith.constant dense<0.000000e+00> : vector<1x8xf32>
    %1611 = tpu.matmul %1610, %1608, %cst_222 {dimension_numbers = #tpu.dot_dimension_numbers<[1], [0], [0], [1], [0, 0, 1, 1], [], []>} : vector<1x8xf32>, vector<8x8xf32>, vector<1x8xf32> -> vector<1x8xf32>
    %1612 = arith.addf %1410, %1611 : vector<1x8xf32>
    %cst_223 = arith.constant dense<0.000000e+00> : vector<8x8xf32>
    %1613 = tpu.matmul %1413, %1608, %cst_223 {dimension_numbers = #tpu.dot_dimension_numbers<[1], [0], [0], [1], [0, 0, 1, 1], [], []>} : vector<8x8xf32>, vector<8x8xf32>, vector<8x8xf32> -> vector<8x8xf32>
    %1614 = arith.subf %33, %1613 : vector<8x8xf32>
    %1615 = vector.extract_strided_slice %1614 {offsets = [0, 0], sizes = [1, 8], strides = [1, 1]} : vector<8x8xf32> to vector<1x8xf32>
    %1616 = vector.extract_strided_slice %1614 {offsets = [1, 0], sizes = [1, 8], strides = [1, 1]} : vector<8x8xf32> to vector<1x8xf32>
    %1617 = vector.extract_strided_slice %1614 {offsets = [2, 0], sizes = [1, 8], strides = [1, 1]} : vector<8x8xf32> to vector<1x8xf32>
    %1618 = vector.extract_strided_slice %1614 {offsets = [3, 0], sizes = [1, 8], strides = [1, 1]} : vector<8x8xf32> to vector<1x8xf32>
    %1619 = vector.extract_strided_slice %1614 {offsets = [4, 0], sizes = [1, 8], strides = [1, 1]} : vector<8x8xf32> to vector<1x8xf32>
    %1620 = vector.extract_strided_slice %1614 {offsets = [5, 0], sizes = [1, 8], strides = [1, 1]} : vector<8x8xf32> to vector<1x8xf32>
    %1621 = vector.extract_strided_slice %1614 {offsets = [6, 0], sizes = [1, 8], strides = [1, 1]} : vector<8x8xf32> to vector<1x8xf32>
    %1622 = vector.extract_strided_slice %1614 {offsets = [7, 0], sizes = [1, 8], strides = [1, 1]} : vector<8x8xf32> to vector<1x8xf32>
    %1623 = tpu.concatenate %1615, %1616, %1617, %1618, %1619, %1620, %1621, %1622 in 1 : vector<1x8xf32>, vector<1x8xf32>, vector<1x8xf32>, vector<1x8xf32>, vector<1x8xf32>, vector<1x8xf32>, vector<1x8xf32>, vector<1x8xf32> -> vector<1x64xf32>
    %1624 = tpu.concatenate %39, %262, %487, %712, %937, %1162, %1387, %1612 in 0 : vector<1x8xf32>, vector<1x8xf32>, vector<1x8xf32>, vector<1x8xf32>, vector<1x8xf32>, vector<1x8xf32>, vector<1x8xf32>, vector<1x8xf32> -> vector<8x8xf32>
    %c0_224 = arith.constant 0 : index
    %c0_225 = arith.constant 0 : index
    %1625 = vector.load %arg9[%c0_224, %c0_225] : memref<8x8xf32, #tpu.memory_space<vmem>>, vector<8x8xf32>
    tpu.vector_store %arg9[%c0_224, %c0_225], %1624 {strides = array<i32>} : memref<8x8xf32, #tpu.memory_space<vmem>>, vector<8x8xf32>,
    %1626 = tpu.concatenate %48, %273, %498, %723, %948, %1173, %1398, %1623 in 0 : vector<1x64xf32>, vector<1x64xf32>, vector<1x64xf32>, vector<1x64xf32>, vector<1x64xf32>, vector<1x64xf32>, vector<1x64xf32>, vector<1x64xf32> -> vector<8x64xf32>
    %c0_226 = arith.constant 0 : index
    %c0_227 = arith.constant 0 : index
    %1627 = vector.load %arg10[%c0_226, %c0_227] : memref<8x64xf32, #tpu.memory_space<vmem>>, vector<8x64xf32>
    tpu.vector_store %arg10[%c0_226, %c0_227], %1626 {strides = array<i32>} : memref<8x64xf32, #tpu.memory_space<vmem>>, vector<8x64xf32>,
    return
  }
}

</mosaic_0001>

<llo_original>
// kernel: stfnet_forward.1
$region0: #{stfnet_forward.1}
  #allocation0 [shape = 'u32[]', space=smem, size = 0x4, offset = 0x4, fixed_abs, tag = 'smem constant byte address 0x4 - core index']
  #allocation1 [shape = 'u32[144,128]{1,0:T(1,128)}', space=vmem, size = 0x12000, scoped, tag = 'internal scratch']
  %s0 = inlined_call_operand.vmem [shape: f32[2], index: 0, kind: input, shape index: {}]
  %s1 = inlined_call_operand.vmem [shape: f32[8,8], index: 1, kind: input, shape index: {}]
  %s2 = inlined_call_operand.vmem [shape: f32[8,16], index: 2, kind: input, shape index: {}]
  %s3 = inlined_call_operand.vmem [shape: bf16[16,512], index: 3, kind: input, shape index: {}]
  %s4 = inlined_call_operand.vmem [shape: f32[1,512], index: 4, kind: input, shape index: {}]
  %s5 = inlined_call_operand.hbm [shape: bf16[512,512], index: 5, kind: input, shape index: {}]
  %s6 = inlined_call_operand.vmem [shape: f32[1,512], index: 6, kind: input, shape index: {}]
  %s7 = inlined_call_operand.vmem [shape: bf16[512,64], index: 7, kind: input, shape index: {}]
  %s8 = inlined_call_operand.vmem [shape: f32[1,64], index: 8, kind: input, shape index: {}]
  %s9 = inlined_call_operand.hbm [shape: f32[8,8], index: 9, kind: output, shape index: {0}]
  %s10 = inlined_call_operand.vmem [shape: f32[8,64], index: 10, kind: output, shape index: {1}]
  %11 = xla_tuple %s9, %s10
  %s12 = sld [smem:[#allocation0]]
  $region62: #{stfnet_forward.1} parent=0
    _
  %s14 = ssub.s32 1, %s12
  %s15 = scalar_select 0, %s14, %s12
  $region1: #{stfnet_forward.1} parent=0
    #allocation2 [shape = 'u8[512]{0}', space=smem, size = 0x200, scoped, tag = 'input window, operand 0, single buffered']
    #allocation3 [shape = 's32[1]{0}', space=sflag, size = 0x4, scoped, tag = 'scoped memory for stfnet_forward.1']
    #allocation4 [shape = 's32[1]{0}', space=sflag, size = 0x4, scoped, tag = 'scoped memory for stfnet_forward.1']
    #allocation5 [shape = 's32[1]{0}', space=sflag, size = 0x4, scoped, tag = 'scoped memory for stfnet_forward.1']
    #allocation6 [shape = 'u8[524288]{0}', space=vmem, size = 0x80000, scoped, tag = 'input window, operand 5, single buffered']
    #allocation7 [shape = 'u8[4096]{0}', space=vmem, size = 0x1000, scoped, tag = 'output window, operand 0, single buffered']
    %16 = vsyncpa [#allocation5], 0
    %17 = vsyncpa [#allocation3], 0
    %18 = vsyncpa [#allocation4], 0
    // Predicated region
    $region2: #{stfnet_forward.1} parent=1 // pred_check
      _
    $region3: #{stfnet_forward.1} parent=1 // pred_check_branch
      %20 = sbr.rel (0) target = $region5
    $region4: #{stfnet_forward.1} parent=1 // pred_region
      %s22 = ssub.s32 16, 16
      %23 = vsyncadd [#allocation5], %s22
      %s25 = sshll.u32 %s0, 4
      %s26 = int_to_ptr.vmem [resolvable:$true] %s25
      %28 = dma.vmem_to_smem %s26, 16, [#allocation2], [#allocation5]
    $region5: #{stfnet_forward.1} parent=1 // pred_fallthru
      _
    // Predicated region
    $region6: #{stfnet_forward.1} parent=1 // pred_check
      _
    $region7: #{stfnet_forward.1} parent=1 // pred_check_branch
      %30 = sbr.rel (0) target = $region9
    $region8: #{stfnet_forward.1} parent=1 // pred_region
      _
    $region9: #{stfnet_forward.1} parent=1 // pred_fallthru
      _
    // Predicated region
    $region10: #{stfnet_forward.1} parent=1 // pred_check
      _
    $region11: #{stfnet_forward.1} parent=1 // pred_check_branch
      %32 = sbr.rel (0) target = $region13
    $region12: #{stfnet_forward.1} parent=1 // pred_region
      _
    $region13: #{stfnet_forward.1} parent=1 // pred_fallthru
      _
    // Predicated region
    $region14: #{stfnet_forward.1} parent=1 // pred_check
      _
    $region15: #{stfnet_forward.1} parent=1 // pred_check_branch
      %34 = sbr.rel (0) target = $region17
    $region16: #{stfnet_forward.1} parent=1 // pred_region
      _
    $region17: #{stfnet_forward.1} parent=1 // pred_fallthru
      _
    // Predicated region
    $region18: #{stfnet_forward.1} parent=1 // pred_check
      _
    $region19: #{stfnet_forward.1} parent=1 // pred_check_branch
      %36 = sbr.rel (0) target = $region21
    $region20: #{stfnet_forward.1} parent=1 // pred_region
      _
    $region21: #{stfnet_forward.1} parent=1 // pred_fallthru
      _
    // Predicated region
    $region22: #{stfnet_forward.1} parent=1 // pred_check
      _
    $region23: #{stfnet_forward.1} parent=1 // pred_check_branch
      %38 = sbr.rel (0) target = $region25
    $region24: #{stfnet_forward.1} parent=1 // pred_region
      %s40 = ssub.s32 16384, 16384
      %41 = vsyncadd [#allocation3], %s40
      %s42 = sshll.u32 [#allocation6], 4
      %s43 = int_to_ptr.vmem [resolvable:$true] %s42
      %48 = dma.hbm_to_vmem [thread:$0]  %s5, 16384, %s43, [#allocation3], 256, 256, 16
    $region25: #{stfnet_forward.1} parent=1 // pred_fallthru
      _
    // Predicated region
    $region26: #{stfnet_forward.1} parent=1 // pred_check
      _
    $region27: #{stfnet_forward.1} parent=1 // pred_check_branch
      %50 = sbr.rel (0) target = $region29
    $region28: #{stfnet_forward.1} parent=1 // pred_region
      _
    $region29: #{stfnet_forward.1} parent=1 // pred_fallthru
      _
    // Predicated region
    $region30: #{stfnet_forward.1} parent=1 // pred_check
      _
    $region31: #{stfnet_forward.1} parent=1 // pred_check_branch
      %52 = sbr.rel (0) target = $region33
    $region32: #{stfnet_forward.1} parent=1 // pred_region
      _
    $region33: #{stfnet_forward.1} parent=1 // pred_fallthru
      _
    // Predicated region
    $region34: #{stfnet_forward.1} parent=1 // pred_check
      _
    $region35: #{stfnet_forward.1} parent=1 // pred_check_branch
      %54 = sbr.rel (0) target = $region37
    $region36: #{stfnet_forward.1} parent=1 // pred_region
      _
    $region37: #{stfnet_forward.1} parent=1 // pred_fallthru
      _
    // Predicated region
    $region38: #{stfnet_forward.1} parent=1 // pred_check
      _
    $region39: #{stfnet_forward.1} parent=1 // pred_check_branch
      %56 = sbr.rel (0) target = $region41
    $region40: #{stfnet_forward.1} parent=1 // pred_region
      %57 = dma.done [#allocation5], 16
    $region41: #{stfnet_forward.1} parent=1 // pred_fallthru
      _
    // Predicated region
    $region42: #{stfnet_forward.1} parent=1 // pred_check
      _
    $region43: #{stfnet_forward.1} parent=1 // pred_check_branch
      %59 = sbr.rel (0) target = $region45
    $region44: #{stfnet_forward.1} parent=1 // pred_region
      %60 = dma.done [#allocation3], 16384
    $region45: #{stfnet_forward.1} parent=1 // pred_fallthru
      _
    %61 = sfence
    %v63 = vld [vmem:[%s2] sm:$0xff]
    %v64 = vpack.c.bf16 %v63, %v63
    %v65 = vld [vmem:[%s3] sm:$0xff]
    %v66 = vld [vmem:[%s3 + $0x8] sm:$0xff]
    %v67 = vld [vmem:[%s3 + $0x10] sm:$0xff]
    %v68 = vld [vmem:[%s3 + $0x18] sm:$0xff]
    %v69 = vld [vmem:[%s4] sm:$0xf]
    %v71 = vlaneseq
    %v72 = vshrl.u32 %v71, 7
    %v73 = vsub.s32 0, %v72
    %v74 = vrot.slane %v69, %v73
    %v75 = vlaneseq
    %v76 = vshrl.u32 %v75, 7
    %v77 = vsub.s32 1, %v76
    %v78 = vrot.slane %v69, %v77
    %v79 = vlaneseq
    %v80 = vshrl.u32 %v79, 7
    %v81 = vsub.s32 2, %v80
    %v82 = vrot.slane %v69, %v81
    %v83 = vlaneseq
    %v84 = vshrl.u32 %v83, 7
    %v85 = vsub.s32 3, %v84
    %v86 = vrot.slane %v69, %v85
    %v95 = vunpack.c.l.b16 %v65
    %v96 = vunpack.c.h.b16 %v65
    %v97 = vunpack.c.l.b16 %v66
    %v98 = vunpack.c.h.b16 %v66
    %v99 = vunpack.c.l.b16 %v67
    %v100 = vunpack.c.h.b16 %v67
    %v101 = vunpack.c.l.b16 %v68
    %v102 = vunpack.c.h.b16 %v68
    %v103 = vpack.c.b16 %v99, %v95
    %v104 = vpack.c.b16 %v100, %v96
    %v105 = vpack.c.b16 %v101, %v97
    %v106 = vpack.c.b16 %v102, %v98
    %vm111 = vcmask 130048
    %v113 = vsel %vm111, %v64, 0
    %115 = vmatprep.subr.bf16.mxu0 0
    %116 = vmatpush1.bf16.msra.mxu0 0
    %117 = vmatprep.subr.bf16.mxu0 0
    %118 = vmatpush1.bf16.msra.mxu0 0
    %119 = vmatprep.subr.bf16.mxu0 0
    %120 = vmatpush1.bf16.msra.mxu0 0
    %121 = vmatprep.subr.bf16.mxu0 0
    %122 = vmatpush1.bf16.msra.mxu0 0
    %123 = vmatprep.subr.bf16.mxu0 0
    %124 = vmatpush1.bf16.msra.mxu0 0
    %125 = vmatprep.subr.bf16.mxu0 0
    %126 = vmatpush1.bf16.msra.mxu0 0
    %127 = vmatprep.subr.bf16.mxu0 0
    %128 = vmatpush1.bf16.msra.mxu0 0
    %129 = vmatprep.subr.bf16.mxu0 %v104
    %130 = vmatpush1.bf16.msra.mxu0 %v103
    %131 = vmatprep.subr.bf16.mxu0 0
    %132 = vmatpush2.bf16.msra.mxu0 0
    %133 = vmatprep.subr.bf16.mxu0 0
    %134 = vmatpush2.bf16.msra.mxu0 0
    %135 = vmatprep.subr.bf16.mxu0 0
    %136 = vmatpush2.bf16.msra.mxu0 0
    %137 = vmatprep.subr.bf16.mxu0 0
    %138 = vmatpush2.bf16.msra.mxu0 0
    %139 = vmatprep.subr.bf16.mxu0 0
    %140 = vmatpush2.bf16.msra.mxu0 0
    %141 = vmatprep.subr.bf16.mxu0 0
    %142 = vmatpush2.bf16.msra.mxu0 0
    %143 = vmatprep.subr.bf16.mxu0 0
    %144 = vmatpush2.bf16.msra.mxu0 0
    %145 = vmatprep.subr.bf16.mxu0 0
    %146 = vmatpush2.bf16.msra.mxu0 0
    %147 = vmatprep.mubr.bf16.mxu0 0
    %148 = vmatmul.mubr.bf16.gmra.mxu0 %v113
    %v149 = vpop.f32.mrf.mxu0
    %v150 = vadd.f32 %v74, %v149
    %v151 = vpop.f32.mrf.mxu0
    %v152 = vadd.f32 %v78, %v151
    %v153 = vpop.f32.mrf.mxu0
    %v154 = vpop.f32.mrf.mxu0
    %155 = vdwg.mxu0
    %156 = vmatprep.subr.bf16.mxu0 0
    %157 = vmatpush1.bf16.msra.mxu0 0
    %158 = vmatprep.subr.bf16.mxu0 0
    %159 = vmatpush1.bf16.msra.mxu0 0
    %160 = vmatprep.subr.bf16.mxu0 0
    %161 = vmatpush1.bf16.msra.mxu0 0
    %162 = vmatprep.subr.bf16.mxu0 0
    %163 = vmatpush1.bf16.msra.mxu0 0
    %164 = vmatprep.subr.bf16.mxu0 0
    %165 = vmatpush1.bf16.msra.mxu0 0
    %166 = vmatprep.subr.bf16.mxu0 0
    %167 = vmatpush1.bf16.msra.mxu0 0
    %168 = vmatprep.subr.bf16.mxu0 0
    %169 = vmatpush1.bf16.msra.mxu0 0
    %170 = vmatprep.subr.bf16.mxu0 %v106
    %171 = vmatpush1.bf16.msra.mxu0 %v105
    %172 = vmatprep.subr.bf16.mxu0 0
    %173 = vmatpush2.bf16.msra.mxu0 0
    %174 = vmatprep.subr.bf16.mxu0 0
    %175 = vmatpush2.bf16.msra.mxu0 0
    %176 = vmatprep.subr.bf16.mxu0 0
    %177 = vmatpush2.bf16.msra.mxu0 0
    %178 = vmatprep.subr.bf16.mxu0 0
    %179 = vmatpush2.bf16.msra.mxu0 0
    %180 = vmatprep.subr.bf16.mxu0 0
    %181 = vmatpush2.bf16.msra.mxu0 0
    %182 = vmatprep.subr.bf16.mxu0 0
    %183 = vmatpush2.bf16.msra.mxu0 0
    %184 = vmatprep.subr.bf16.mxu0 0
    %185 = vmatpush2.bf16.msra.mxu0 0
    %186 = vmatprep.subr.bf16.mxu0 0
    %187 = vmatpush2.bf16.msra.mxu0 0
    %188 = vmatprep.mubr.bf16.mxu0 0
    %189 = vmatmul.mubr.bf16.gmra.mxu0 %v113
    %v190 = vpop.f32.mrf.mxu0
    %v191 = vadd.f32 %v82, %v190
    %v192 = vpop.f32.mrf.mxu0
    %v193 = vadd.f32 %v86, %v192
    %v194 = vpop.f32.mrf.mxu0
    %v195 = vpop.f32.mrf.mxu0
    %196 = vdwg.mxu0
    %v197 = vmax.f32 %v150, 0.0
    %v198 = vmax.f32 %v152, 0.0
    %v199 = vmax.f32 %v191, 0.0
    %v200 = vmax.f32 %v193, 0.0
    %v201 = vpack.c.bf16 %v197, %v197
    %v202 = vpack.c.bf16 %v198, %v198
    %v203 = vpack.c.bf16 %v199, %v199
    %v204 = vpack.c.bf16 %v200, %v200
    %v205 = vld [vmem:[#allocation6] sm:$0xff]
    %v206 = vld [vmem:[#allocation6 + $0x8] sm:$0xff]
    %v207 = vld [vmem:[#allocation6 + $0x10] sm:$0xff]
    %v208 = vld [vmem:[#allocation6 + $0x18] sm:$0xff]
    %v209 = vld [vmem:[#allocation6 + $0x20] sm:$0xff]
    %v210 = vld [vmem:[#allocation6 + $0x28] sm:$0xff]
    %v211 = vld [vmem:[#allocation6 + $0x30] sm:$0xff]
    %v212 = vld [vmem:[#allocation6 + $0x38] sm:$0xff]
    %v213 = vld [vmem:[#allocation6 + $0x40] sm:$0xff]
    %v214 = vld [vmem:[#allocation6 + $0x48] sm:$0xff]
    %v215 = vld [vmem:[#allocation6 + $0x50] sm:$0xff]
    %v216 = vld [vmem:[#allocation6 + $0x58] sm:$0xff]
    %v217 = vld [vmem:[#allocation6 + $0x60] sm:$0xff]
    %v218 = vld [vmem:[#allocation6 + $0x68] sm:$0xff]
    %v219 = vld [vmem:[#allocation6 + $0x70] sm:$0xff]
    %v220 = vld [vmem:[#allocation6 + $0x78] sm:$0xff]
    %v221 = vld [vmem:[#allocation6 + $0x80] sm:$0xff]
    %v222 = vld [vmem:[#allocation6 + $0x88] sm:$0xff]
    %v223 = vld [vmem:[#allocation6 + $0x90] sm:$0xff]
    %v224 = vld [vmem:[#allocation6 + $0x98] sm:$0xff]
    %v225 = vld [vmem:[#allocation6 + $0xa0] sm:$0xff]
    %v226 = vld [vmem:[#allocation6 + $0xa8] sm:$0xff]
    %v227 = vld [vmem:[#allocation6 + $0xb0] sm:$0xff]
    %v228 = vld [vmem:[#allocation6 + $0xb8] sm:$0xff]
    %v229 = vld [vmem:[#allocation6 + $0xc0] sm:$0xff]
    %v230 = vld [vmem:[#allocation6 + $0xc8] sm:$0xff]
    %v231 = vld [vmem:[#allocation6 + $0xd0] sm:$0xff]
    %v232 = vld [vmem:[#allocation6 + $0xd8] sm:$0xff]
    %v233 = vld [vmem:[#allocation6 + $0xe0] sm:$0xff]
    %v234 = vld [vmem:[#allocation6 + $0xe8] sm:$0xff]
    %v235 = vld [vmem:[#allocation6 + $0xf0] sm:$0xff]
    %v236 = vld [vmem:[#allocation6 + $0xf8] sm:$0xff]
    %v237 = vld [vmem:[#allocation6 + $0x100] sm:$0xff]
    %v238 = vld [vmem:[#allocation6 + $0x108] sm:$0xff]
    %v239 = vld [vmem:[#allocation6 + $0x110] sm:$0xff]
    %v240 = vld [vmem:[#allocation6 + $0x118] sm:$0xff]
    %v241 = vld [vmem:[#allocation6 + $0x120] sm:$0xff]
    %v242 = vld [vmem:[#allocation6 + $0x128] sm:$0xff]
    %v243 = vld [vmem:[#allocation6 + $0x130] sm:$0xff]
    %v244 = vld [vmem:[#allocation6 + $0x138] sm:$0xff]
    %v245 = vld [vmem:[#allocation6 + $0x140] sm:$0xff]
    %v246 = vld [vmem:[#allocation6 + $0x148] sm:$0xff]
    %v247 = vld [vmem:[#allocation6 + $0x150] sm:$0xff]
    %v248 = vld [vmem:[#allocation6 + $0x158] sm:$0xff]
    %v249 = vld [vmem:[#allocation6 + $0x160] sm:$0xff]
    %v250 = vld [vmem:[#allocation6 + $0x168] sm:$0xff]
    %v251 = vld [vmem:[#allocation6 + $0x170] sm:$0xff]
    %v252 = vld [vmem:[#allocation6 + $0x178] sm:$0xff]
    %v253 = vld [vmem:[#allocation6 + $0x180] sm:$0xff]
    %v254 = vld [vmem:[#allocation6 + $0x188] sm:$0xff]
    %v255 = vld [vmem:[#allocation6 + $0x190] sm:$0xff]
    %v256 = vld [vmem:[#allocation6 + $0x198] sm:$0xff]
    %v257 = vld [vmem:[#allocation6 + $0x1a0] sm:$0xff]
    %v258 = vld [vmem:[#allocation6 + $0x1a8] sm:$0xff]
    %v259 = vld [vmem:[#allocation6 + $0x1b0] sm:$0xff]
    %v260 = vld [vmem:[#allocation6 + $0x1b8] sm:$0xff]
    %v261 = vld [vmem:[#allocation6 + $0x1c0] sm:$0xff]
    %v262 = vld [vmem:[#allocation6 + $0x1c8] sm:$0xff]
    %v263 = vld [vmem:[#allocation6 + $0x1d0] sm:$0xff]
    %v264 = vld [vmem:[#allocation6 + $0x1d8] sm:$0xff]
    %v265 = vld [vmem:[#allocation6 + $0x1e0] sm:$0xff]
    %v266 = vld [vmem:[#allocation6 + $0x1e8] sm:$0xff]
    %v267 = vld [vmem:[#allocation6 + $0x1f0] sm:$0xff]
    %v268 = vld [vmem:[#allocation6 + $0x1f8] sm:$0xff]
    %v269 = vld [vmem:[#allocation6 + $0x200] sm:$0xff]
    %v270 = vld [vmem:[#allocation6 + $0x208] sm:$0xff]
    %v271 = vld [vmem:[#allocation6 + $0x210] sm:$0xff]
    %v272 = vld [vmem:[#allocation6 + $0x218] sm:$0xff]
    %v273 = vld [vmem:[#allocation6 + $0x220] sm:$0xff]
    %v274 = vld [vmem:[#allocation6 + $0x228] sm:$0xff]
    %v275 = vld [vmem:[#allocation6 + $0x230] sm:$0xff]
    %v276 = vld [vmem:[#allocation6 + $0x238] sm:$0xff]
    %v277 = vld [vmem:[#allocation6 + $0x240] sm:$0xff]
    %v278 = vld [vmem:[#allocation6 + $0x248] sm:$0xff]
    %v279 = vld [vmem:[#allocation6 + $0x250] sm:$0xff]
    %v280 = vld [vmem:[#allocation6 + $0x258] sm:$0xff]
    %v281 = vld [vmem:[#allocation6 + $0x260] sm:$0xff]
    %v282 = vld [vmem:[#allocation6 + $0x268] sm:$0xff]
    %v283 = vld [vmem:[#allocation6 + $0x270] sm:$0xff]
    %v284 = vld [vmem:[#allocation6 + $0x278] sm:$0xff]
    %v285 = vld [vmem:[#allocation6 + $0x280] sm:$0xff]
    %v286 = vld [vmem:[#allocation6 + $0x288] sm:$0xff]
    %v287 = vld [vmem:[#allocation6 + $0x290] sm:$0xff]
    %v288 = vld [vmem:[#allocation6 + $0x298] sm:$0xff]
    %v289 = vld [vmem:[#allocation6 + $0x2a0] sm:$0xff]
    %v290 = vld [vmem:[#allocation6 + $0x2a8] sm:$0xff]
    %v291 = vld [vmem:[#allocation6 + $0x2b0] sm:$0xff]
    %v292 = vld [vmem:[#allocation6 + $0x2b8] sm:$0xff]
    %v293 = vld [vmem:[#allocation6 + $0x2c0] sm:$0xff]
    %v294 = vld [vmem:[#allocation6 + $0x2c8] sm:$0xff]
    %v295 = vld [vmem:[#allocation6 + $0x2d0] sm:$0xff]
    %v296 = vld [vmem:[#allocation6 + $0x2d8] sm:$0xff]
    %v297 = vld [vmem:[#allocation6 + $0x2e0] sm:$0xff]
    %v298 = vld [vmem:[#allocation6 + $0x2e8] sm:$0xff]
    %v299 = vld [vmem:[#allocation6 + $0x2f0] sm:$0xff]
    %v300 = vld [vmem:[#allocation6 + $0x2f8] sm:$0xff]
    %v301 = vld [vmem:[#allocation6 + $0x300] sm:$0xff]
    %v302 = vld [vmem:[#allocation6 + $0x308] sm:$0xff]
    %v303 = vld [vmem:[#allocation6 + $0x310] sm:$0xff]
    %v304 = vld [vmem:[#allocation6 + $0x318] sm:$0xff]
    %v305 = vld [vmem:[#allocation6 + $0x320] sm:$0xff]
    %v306 = vld [vmem:[#allocation6 + $0x328] sm:$0xff]
    %v307 = vld [vmem:[#allocation6 + $0x330] sm:$0xff]
    %v308 = vld [vmem:[#allocation6 + $0x338] sm:$0xff]
    %v309 = vld [vmem:[#allocation6 + $0x340] sm:$0xff]
    %v310 = vld [vmem:[#allocation6 + $0x348] sm:$0xff]
    %v311 = vld [vmem:[#allocation6 + $0x350] sm:$0xff]
    %v312 = vld [vmem:[#allocation6 + $0x358] sm:$0xff]
    %v313 = vld [vmem:[#allocation6 + $0x360] sm:$0xff]
    %v314 = vld [vmem:[#allocation6 + $0x368] sm:$0xff]
    %v315 = vld [vmem:[#allocation6 + $0x370] sm:$0xff]
    %v316 = vld [vmem:[#allocation6 + $0x378] sm:$0xff]
    %v317 = vld [vmem:[#allocation6 + $0x380] sm:$0xff]
    %v318 = vld [vmem:[#allocation6 + $0x388] sm:$0xff]
    %v319 = vld [vmem:[#allocation6 + $0x390] sm:$0xff]
    %v320 = vld [vmem:[#allocation6 + $0x398] sm:$0xff]
    %v321 = vld [vmem:[#allocation6 + $0x3a0] sm:$0xff]
    %v322 = vld [vmem:[#allocation6 + $0x3a8] sm:$0xff]
    %v323 = vld [vmem:[#allocation6 + $0x3b0] sm:$0xff]
    %v324 = vld [vmem:[#allocation6 + $0x3b8] sm:$0xff]
    %v325 = vld [vmem:[#allocation6 + $0x3c0] sm:$0xff]
    %v326 = vld [vmem:[#allocation6 + $0x3c8] sm:$0xff]
    %v327 = vld [vmem:[#allocation6 + $0x3d0] sm:$0xff]
    %v328 = vld [vmem:[#allocation6 + $0x3d8] sm:$0xff]
    %v329 = vld [vmem:[#allocation6 + $0x3e0] sm:$0xff]
    %v330 = vld [vmem:[#allocation6 + $0x3e8] sm:$0xff]
    %v331 = vld [vmem:[#allocation6 + $0x3f0] sm:$0xff]
    %v332 = vld [vmem:[#allocation6 + $0x3f8] sm:$0xff]
    %v333 = vld [vmem:[%s6] sm:$0xf]
    %v335 = vlaneseq
    %v336 = vshrl.u32 %v335, 7
    %v337 = vsub.s32 0, %v336
    %v338 = vrot.slane %v333, %v337
    %v339 = vlaneseq
    %v340 = vshrl.u32 %v339, 7
    %v341 = vsub.s32 1, %v340
    %v342 = vrot.slane %v333, %v341
    %v343 = vlaneseq
    %v344 = vshrl.u32 %v343, 7
    %v345 = vsub.s32 2, %v344
    %v346 = vrot.slane %v333, %v345
    %v347 = vlaneseq
    %v348 = vshrl.u32 %v347, 7
    %v349 = vsub.s32 3, %v348
    %v350 = vrot.slane %v333, %v349
    %v483 = vunpack.c.l.b16 %v205
    %v484 = vunpack.c.h.b16 %v205
    %v485 = vunpack.c.l.b16 %v206
    %v486 = vunpack.c.h.b16 %v206
    %v487 = vunpack.c.l.b16 %v207
    %v488 = vunpack.c.h.b16 %v207
    %v489 = vunpack.c.l.b16 %v208
    %v490 = vunpack.c.h.b16 %v208
    %v491 = vunpack.c.l.b16 %v209
    %v492 = vunpack.c.h.b16 %v209
    %v493 = vunpack.c.l.b16 %v210
    %v494 = vunpack.c.h.b16 %v210
    %v495 = vunpack.c.l.b16 %v211
    %v496 = vunpack.c.h.b16 %v211
    %v497 = vunpack.c.l.b16 %v212
    %v498 = vunpack.c.h.b16 %v212
    %v499 = vunpack.c.l.b16 %v213
    %v500 = vunpack.c.h.b16 %v213
    %v501 = vunpack.c.l.b16 %v214
    %v502 = vunpack.c.h.b16 %v214
    %v503 = vunpack.c.l.b16 %v215
    %v504 = vunpack.c.h.b16 %v215
    %v505 = vunpack.c.l.b16 %v216
    %v506 = vunpack.c.h.b16 %v216
    %v507 = vunpack.c.l.b16 %v217
    %v508 = vunpack.c.h.b16 %v217
    %v509 = vunpack.c.l.b16 %v218
    %v510 = vunpack.c.h.b16 %v218
    %v511 = vunpack.c.l.b16 %v219
    %v512 = vunpack.c.h.b16 %v219
    %v513 = vunpack.c.l.b16 %v220
    %v514 = vunpack.c.h.b16 %v220
    %v515 = vunpack.c.l.b16 %v221
    %v516 = vunpack.c.h.b16 %v221
    %v517 = vunpack.c.l.b16 %v222
    %v518 = vunpack.c.h.b16 %v222
    %v519 = vunpack.c.l.b16 %v223
    %v520 = vunpack.c.h.b16 %v223
    %v521 = vunpack.c.l.b16 %v224
    %v522 = vunpack.c.h.b16 %v224
    %v523 = vunpack.c.l.b16 %v225
    %v524 = vunpack.c.h.b16 %v225
    %v525 = vunpack.c.l.b16 %v226
    %v526 = vunpack.c.h.b16 %v226
    %v527 = vunpack.c.l.b16 %v227
    %v528 = vunpack.c.h.b16 %v227
    %v529 = vunpack.c.l.b16 %v228
    %v530 = vunpack.c.h.b16 %v228
    %v531 = vunpack.c.l.b16 %v229
    %v532 = vunpack.c.h.b16 %v229
    %v533 = vunpack.c.l.b16 %v230
    %v534 = vunpack.c.h.b16 %v230
    %v535 = vunpack.c.l.b16 %v231
    %v536 = vunpack.c.h.b16 %v231
    %v537 = vunpack.c.l.b16 %v232
    %v538 = vunpack.c.h.b16 %v232
    %v539 = vunpack.c.l.b16 %v233
    %v540 = vunpack.c.h.b16 %v233
    %v541 = vunpack.c.l.b16 %v234
    %v542 = vunpack.c.h.b16 %v234
    %v543 = vunpack.c.l.b16 %v235
    %v544 = vunpack.c.h.b16 %v235
    %v545 = vunpack.c.l.b16 %v236
    %v546 = vunpack.c.h.b16 %v236
    %v547 = vunpack.c.l.b16 %v237
    %v548 = vunpack.c.h.b16 %v237
    %v549 = vunpack.c.l.b16 %v238
    %v550 = vunpack.c.h.b16 %v238
    %v551 = vunpack.c.l.b16 %v239
    %v552 = vunpack.c.h.b16 %v239
    %v553 = vunpack.c.l.b16 %v240
    %v554 = vunpack.c.h.b16 %v240
    %v555 = vunpack.c.l.b16 %v241
    %v556 = vunpack.c.h.b16 %v241
    %v557 = vunpack.c.l.b16 %v242
    %v558 = vunpack.c.h.b16 %v242
    %v559 = vunpack.c.l.b16 %v243
    %v560 = vunpack.c.h.b16 %v243
    %v561 = vunpack.c.l.b16 %v244
    %v562 = vunpack.c.h.b16 %v244
    %v563 = vunpack.c.l.b16 %v245
    %v564 = vunpack.c.h.b16 %v245
    %v565 = vunpack.c.l.b16 %v246
    %v566 = vunpack.c.h.b16 %v246
    %v567 = vunpack.c.l.b16 %v247
    %v568 = vunpack.c.h.b16 %v247
    %v569 = vunpack.c.l.b16 %v248
    %v570 = vunpack.c.h.b16 %v248
    %v571 = vunpack.c.l.b16 %v249
    %v572 = vunpack.c.h.b16 %v249
    %v573 = vunpack.c.l.b16 %v250
    %v574 = vunpack.c.h.b16 %v250
    %v575 = vunpack.c.l.b16 %v251
    %v576 = vunpack.c.h.b16 %v251
    %v577 = vunpack.c.l.b16 %v252
    %v578 = vunpack.c.h.b16 %v252
    %v579 = vunpack.c.l.b16 %v253
    %v580 = vunpack.c.h.b16 %v253
    %v581 = vunpack.c.l.b16 %v254
    %v582 = vunpack.c.h.b16 %v254
    %v583 = vunpack.c.l.b16 %v255
    %v584 = vunpack.c.h.b16 %v255
    %v585 = vunpack.c.l.b16 %v256
    %v586 = vunpack.c.h.b16 %v256
    %v587 = vunpack.c.l.b16 %v257
    %v588 = vunpack.c.h.b16 %v257
    %v589 = vunpack.c.l.b16 %v258
    %v590 = vunpack.c.h.b16 %v258
    %v591 = vunpack.c.l.b16 %v259
    %v592 = vunpack.c.h.b16 %v259
    %v593 = vunpack.c.l.b16 %v260
    %v594 = vunpack.c.h.b16 %v260
    %v595 = vunpack.c.l.b16 %v261
    %v596 = vunpack.c.h.b16 %v261
    %v597 = vunpack.c.l.b16 %v262
    %v598 = vunpack.c.h.b16 %v262
    %v599 = vunpack.c.l.b16 %v263
    %v600 = vunpack.c.h.b16 %v263
    %v601 = vunpack.c.l.b16 %v264
    %v602 = vunpack.c.h.b16 %v264
    %v603 = vunpack.c.l.b16 %v265
    %v604 = vunpack.c.h.b16 %v265
    %v605 = vunpack.c.l.b16 %v266
    %v606 = vunpack.c.h.b16 %v266
    %v607 = vunpack.c.l.b16 %v267
    %v608 = vunpack.c.h.b16 %v267
    %v609 = vunpack.c.l.b16 %v268
    %v610 = vunpack.c.h.b16 %v268
    %v611 = vunpack.c.l.b16 %v269
    %v612 = vunpack.c.h.b16 %v269
    %v613 = vunpack.c.l.b16 %v270
    %v614 = vunpack.c.h.b16 %v270
    %v615 = vunpack.c.l.b16 %v271
    %v616 = vunpack.c.h.b16 %v271
    %v617 = vunpack.c.l.b16 %v272
    %v618 = vunpack.c.h.b16 %v272
    %v619 = vunpack.c.l.b16 %v273
    %v620 = vunpack.c.h.b16 %v273
    %v621 = vunpack.c.l.b16 %v274
    %v622 = vunpack.c.h.b16 %v274
    %v623 = vunpack.c.l.b16 %v275
    %v624 = vunpack.c.h.b16 %v275
    %v625 = vunpack.c.l.b16 %v276
    %v626 = vunpack.c.h.b16 %v276
    %v627 = vunpack.c.l.b16 %v277
    %v628 = vunpack.c.h.b16 %v277
    %v629 = vunpack.c.l.b16 %v278
    %v630 = vunpack.c.h.b16 %v278
    %v631 = vunpack.c.l.b16 %v279
    %v632 = vunpack.c.h.b16 %v279
    %v633 = vunpack.c.l.b16 %v280
    %v634 = vunpack.c.h.b16 %v280
    %v635 = vunpack.c.l.b16 %v281
    %v636 = vunpack.c.h.b16 %v281
    %v637 = vunpack.c.l.b16 %v282
    %v638 = vunpack.c.h.b16 %v282
    %v639 = vunpack.c.l.b16 %v283
    %v640 = vunpack.c.h.b16 %v283
    %v641 = vunpack.c.l.b16 %v284
    %v642 = vunpack.c.h.b16 %v284
    %v643 = vunpack.c.l.b16 %v285
    %v644 = vunpack.c.h.b16 %v285
    %v645 = vunpack.c.l.b16 %v286
    %v646 = vunpack.c.h.b16 %v286
    %v647 = vunpack.c.l.b16 %v287
    %v648 = vunpack.c.h.b16 %v287
    %v649 = vunpack.c.l.b16 %v288
    %v650 = vunpack.c.h.b16 %v288
    %v651 = vunpack.c.l.b16 %v289
    %v652 = vunpack.c.h.b16 %v289
    %v653 = vunpack.c.l.b16 %v290
    %v654 = vunpack.c.h.b16 %v290
    %v655 = vunpack.c.l.b16 %v291
    %v656 = vunpack.c.h.b16 %v291
    %v657 = vunpack.c.l.b16 %v292
    %v658 = vunpack.c.h.b16 %v292
    %v659 = vunpack.c.l.b16 %v293
    %v660 = vunpack.c.h.b16 %v293
    %v661 = vunpack.c.l.b16 %v294
    %v662 = vunpack.c.h.b16 %v294
    %v663 = vunpack.c.l.b16 %v295
    %v664 = vunpack.c.h.b16 %v295
    %v665 = vunpack.c.l.b16 %v296
    %v666 = vunpack.c.h.b16 %v296
    %v667 = vunpack.c.l.b16 %v297
    %v668 = vunpack.c.h.b16 %v297
    %v669 = vunpack.c.l.b16 %v298
    %v670 = vunpack.c.h.b16 %v298
    %v671 = vunpack.c.l.b16 %v299
    %v672 = vunpack.c.h.b16 %v299
    %v673 = vunpack.c.l.b16 %v300
    %v674 = vunpack.c.h.b16 %v300
    %v675 = vunpack.c.l.b16 %v301
    %v676 = vunpack.c.h.b16 %v301
    %v677 = vunpack.c.l.b16 %v302
    %v678 = vunpack.c.h.b16 %v302
    %v679 = vunpack.c.l.b16 %v303
    %v680 = vunpack.c.h.b16 %v303
    %v681 = vunpack.c.l.b16 %v304
    %v682 = vunpack.c.h.b16 %v304
    %v683 = vunpack.c.l.b16 %v305
    %v684 = vunpack.c.h.b16 %v305
    %v685 = vunpack.c.l.b16 %v306
    %v686 = vunpack.c.h.b16 %v306
    %v687 = vunpack.c.l.b16 %v307
    %v688 = vunpack.c.h.b16 %v307
    %v689 = vunpack.c.l.b16 %v308
    %v690 = vunpack.c.h.b16 %v308
    %v691 = vunpack.c.l.b16 %v309
    %v692 = vunpack.c.h.b16 %v309
    %v693 = vunpack.c.l.b16 %v310
    %v694 = vunpack.c.h.b16 %v310
    %v695 = vunpack.c.l.b16 %v311
    %v696 = vunpack.c.h.b16 %v311
    %v697 = vunpack.c.l.b16 %v312
    %v698 = vunpack.c.h.b16 %v312
    %v699 = vunpack.c.l.b16 %v313
    %v700 = vunpack.c.h.b16 %v313
    %v701 = vunpack.c.l.b16 %v314
    %v702 = vunpack.c.h.b16 %v314
    %v703 = vunpack.c.l.b16 %v315
    %v704 = vunpack.c.h.b16 %v315
    %v705 = vunpack.c.l.b16 %v316
    %v706 = vunpack.c.h.b16 %v316
    %v707 = vunpack.c.l.b16 %v317
    %v708 = vunpack.c.h.b16 %v317
    %v709 = vunpack.c.l.b16 %v318
    %v710 = vunpack.c.h.b16 %v318
    %v711 = vunpack.c.l.b16 %v319
    %v712 = vunpack.c.h.b16 %v319
    %v713 = vunpack.c.l.b16 %v320
    %v714 = vunpack.c.h.b16 %v320
    %v715 = vunpack.c.l.b16 %v321
    %v716 = vunpack.c.h.b16 %v321
    %v717 = vunpack.c.l.b16 %v322
    %v718 = vunpack.c.h.b16 %v322
    %v719 = vunpack.c.l.b16 %v323
    %v720 = vunpack.c.h.b16 %v323
    %v721 = vunpack.c.l.b16 %v324
    %v722 = vunpack.c.h.b16 %v324
    %v723 = vunpack.c.l.b16 %v325
    %v724 = vunpack.c.h.b16 %v325
    %v725 = vunpack.c.l.b16 %v326
    %v726 = vunpack.c.h.b16 %v326
    %v727 = vunpack.c.l.b16 %v327
    %v728 = vunpack.c.h.b16 %v327
    %v729 = vunpack.c.l.b16 %v328
    %v730 = vunpack.c.h.b16 %v328
    %v731 = vunpack.c.l.b16 %v329
    %v732 = vunpack.c.h.b16 %v329
    %v733 = vunpack.c.l.b16 %v330
    %v734 = vunpack.c.h.b16 %v330
    %v735 = vunpack.c.l.b16 %v331
    %v736 = vunpack.c.h.b16 %v331
    %v737 = vunpack.c.l.b16 %v332
    %v738 = vunpack.c.h.b16 %v332
    %v739 = vpack.c.b16 %v487, %v483
    %v740 = vpack.c.b16 %v488, %v484
    %v741 = vpack.c.b16 %v489, %v485
    %v742 = vpack.c.b16 %v490, %v486
    %v743 = vpack.c.b16 %v495, %v491
    %v744 = vpack.c.b16 %v496, %v492
    %v745 = vpack.c.b16 %v497, %v493
    %v746 = vpack.c.b16 %v498, %v494
    %v747 = vpack.c.b16 %v503, %v499
    %v748 = vpack.c.b16 %v504, %v500
    %v749 = vpack.c.b16 %v505, %v501
    %v750 = vpack.c.b16 %v506, %v502
    %v751 = vpack.c.b16 %v511, %v507
    %v752 = vpack.c.b16 %v512, %v508
    %v753 = vpack.c.b16 %v513, %v509
    %v754 = vpack.c.b16 %v514, %v510
    %v755 = vpack.c.b16 %v519, %v515
    %v756 = vpack.c.b16 %v520, %v516
    %v757 = vpack.c.b16 %v521, %v517
    %v758 = vpack.c.b16 %v522, %v518
    %v759 = vpack.c.b16 %v527, %v523
    %v760 = vpack.c.b16 %v528, %v524
    %v761 = vpack.c.b16 %v529, %v525
    %v762 = vpack.c.b16 %v530, %v526
    %v763 = vpack.c.b16 %v535, %v531
    %v764 = vpack.c.b16 %v536, %v532
    %v765 = vpack.c.b16 %v537, %v533
    %v766 = vpack.c.b16 %v538, %v534
    %v767 = vpack.c.b16 %v543, %v539
    %v768 = vpack.c.b16 %v544, %v540
    %v769 = vpack.c.b16 %v545, %v541
    %v770 = vpack.c.b16 %v546, %v542
    %v771 = vpack.c.b16 %v551, %v547
    %v772 = vpack.c.b16 %v552, %v548
    %v773 = vpack.c.b16 %v553, %v549
    %v774 = vpack.c.b16 %v554, %v550
    %v775 = vpack.c.b16 %v559, %v555
    %v776 = vpack.c.b16 %v560, %v556
    %v777 = vpack.c.b16 %v561, %v557
    %v778 = vpack.c.b16 %v562, %v558
    %v779 = vpack.c.b16 %v567, %v563
    %v780 = vpack.c.b16 %v568, %v564
    %v781 = vpack.c.b16 %v569, %v565
    %v782 = vpack.c.b16 %v570, %v566
    %v783 = vpack.c.b16 %v575, %v571
    %v784 = vpack.c.b16 %v576, %v572
    %v785 = vpack.c.b16 %v577, %v573
    %v786 = vpack.c.b16 %v578, %v574
    %v787 = vpack.c.b16 %v583, %v579
    %v788 = vpack.c.b16 %v584, %v580
    %v789 = vpack.c.b16 %v585, %v581
    %v790 = vpack.c.b16 %v586, %v582
    %v791 = vpack.c.b16 %v591, %v587
    %v792 = vpack.c.b16 %v592, %v588
    %v793 = vpack.c.b16 %v593, %v589
    %v794 = vpack.c.b16 %v594, %v590
    %v795 = vpack.c.b16 %v599, %v595
    %v796 = vpack.c.b16 %v600, %v596
    %v797 = vpack.c.b16 %v601, %v597
    %v798 = vpack.c.b16 %v602, %v598
    %v799 = vpack.c.b16 %v607, %v603
    %v800 = vpack.c.b16 %v608, %v604
    %v801 = vpack.c.b16 %v609, %v605
    %v802 = vpack.c.b16 %v610, %v606
    %v803 = vpack.c.b16 %v615, %v611
    %v804 = vpack.c.b16 %v616, %v612
    %v805 = vpack.c.b16 %v617, %v613
    %v806 = vpack.c.b16 %v618, %v614
    %v807 = vpack.c.b16 %v623, %v619
    %v808 = vpack.c.b16 %v624, %v620
    %v809 = vpack.c.b16 %v625, %v621
    %v810 = vpack.c.b16 %v626, %v622
    %v811 = vpack.c.b16 %v631, %v627
    %v812 = vpack.c.b16 %v632, %v628
    %v813 = vpack.c.b16 %v633, %v629
    %v814 = vpack.c.b16 %v634, %v630
    %v815 = vpack.c.b16 %v639, %v635
    %v816 = vpack.c.b16 %v640, %v636
    %v817 = vpack.c.b16 %v641, %v637
    %v818 = vpack.c.b16 %v642, %v638
    %v819 = vpack.c.b16 %v647, %v643
    %v820 = vpack.c.b16 %v648, %v644
    %v821 = vpack.c.b16 %v649, %v645
    %v822 = vpack.c.b16 %v650, %v646
    %v823 = vpack.c.b16 %v655, %v651
    %v824 = vpack.c.b16 %v656, %v652
    %v825 = vpack.c.b16 %v657, %v653
    %v826 = vpack.c.b16 %v658, %v654
    %v827 = vpack.c.b16 %v663, %v659
    %v828 = vpack.c.b16 %v664, %v660
    %v829 = vpack.c.b16 %v665, %v661
    %v830 = vpack.c.b16 %v666, %v662
    %v831 = vpack.c.b16 %v671, %v667
    %v832 = vpack.c.b16 %v672, %v668
    %v833 = vpack.c.b16 %v673, %v669
    %v834 = vpack.c.b16 %v674, %v670
    %v835 = vpack.c.b16 %v679, %v675
    %v836 = vpack.c.b16 %v680, %v676
    %v837 = vpack.c.b16 %v681, %v677
    %v838 = vpack.c.b16 %v682, %v678
    %v839 = vpack.c.b16 %v687, %v683
    %v840 = vpack.c.b16 %v688, %v684
    %v841 = vpack.c.b16 %v689, %v685
    %v842 = vpack.c.b16 %v690, %v686
    %v843 = vpack.c.b16 %v695, %v691
    %v844 = vpack.c.b16 %v696, %v692
    %v845 = vpack.c.b16 %v697, %v693
    %v846 = vpack.c.b16 %v698, %v694
    %v847 = vpack.c.b16 %v703, %v699
    %v848 = vpack.c.b16 %v704, %v700
    %v849 = vpack.c.b16 %v705, %v701
    %v850 = vpack.c.b16 %v706, %v702
    %v851 = vpack.c.b16 %v711, %v707
    %v852 = vpack.c.b16 %v712, %v708
    %v853 = vpack.c.b16 %v713, %v709
    %v854 = vpack.c.b16 %v714, %v710
    %v855 = vpack.c.b16 %v719, %v715
    %v856 = vpack.c.b16 %v720, %v716
    %v857 = vpack.c.b16 %v721, %v717
    %v858 = vpack.c.b16 %v722, %v718
    %v859 = vpack.c.b16 %v727, %v723
    %v860 = vpack.c.b16 %v728, %v724
    %v861 = vpack.c.b16 %v729, %v725
    %v862 = vpack.c.b16 %v730, %v726
    %v863 = vpack.c.b16 %v735, %v731
    %v864 = vpack.c.b16 %v736, %v732
    %v865 = vpack.c.b16 %v737, %v733
    %v866 = vpack.c.b16 %v738, %v734
    %995 = vmatprep.subr.bf16.mxu0 %v768
    %996 = vmatpush1.bf16.msra.mxu0 %v767
    %997 = vmatprep.subr.bf16.mxu0 %v764
    %998 = vmatpush1.bf16.msra.mxu0 %v763
    %999 = vmatprep.subr.bf16.mxu0 %v760
    %1000 = vmatpush1.bf16.msra.mxu0 %v759
    %1001 = vmatprep.subr.bf16.mxu0 %v756
    %1002 = vmatpush1.bf16.msra.mxu0 %v755
    %1003 = vmatprep.subr.bf16.mxu0 %v752
    %1004 = vmatpush1.bf16.msra.mxu0 %v751
    %1005 = vmatprep.subr.bf16.mxu0 %v748
    %1006 = vmatpush1.bf16.msra.mxu0 %v747
    %1007 = vmatprep.subr.bf16.mxu0 %v744
    %1008 = vmatpush1.bf16.msra.mxu0 %v743
    %1009 = vmatprep.subr.bf16.mxu0 %v740
    %1010 = vmatpush1.bf16.msra.mxu0 %v739
    %1011 = vmatprep.subr.bf16.mxu0 %v800
    %1012 = vmatpush2.bf16.msra.mxu0 %v799
    %1013 = vmatprep.subr.bf16.mxu0 %v796
    %1014 = vmatpush2.bf16.msra.mxu0 %v795
    %1015 = vmatprep.subr.bf16.mxu0 %v792
    %1016 = vmatpush2.bf16.msra.mxu0 %v791
    %1017 = vmatprep.subr.bf16.mxu0 %v788
    %1018 = vmatpush2.bf16.msra.mxu0 %v787
    %1019 = vmatprep.subr.bf16.mxu0 %v784
    %1020 = vmatpush2.bf16.msra.mxu0 %v783
    %1021 = vmatprep.subr.bf16.mxu0 %v780
    %1022 = vmatpush2.bf16.msra.mxu0 %v779
    %1023 = vmatprep.subr.bf16.mxu0 %v776
    %1024 = vmatpush2.bf16.msra.mxu0 %v775
    %1025 = vmatprep.subr.bf16.mxu0 %v772
    %1026 = vmatpush2.bf16.msra.mxu0 %v771
    %1027 = vmatprep.mubr.bf16.mxu0 %v202
    %1028 = vmatmul.mubr.bf16.gmra.mxu0 %v201
    %v1029 = vpop.f32.mrf.mxu0
    %v1030 = vadd.f32 %v338, %v1029
    %v1031 = vpop.f32.mrf.mxu0
    %v1032 = vadd.f32 %v342, %v1031
    %v1033 = vpop.f32.mrf.mxu0
    %v1034 = vpop.f32.mrf.mxu0
    %1035 = vdwg.mxu0
    %1036 = vmatprep.subr.bf16.mxu0 %v832
    %1037 = vmatpush1.bf16.msra.mxu0 %v831
    %1038 = vmatprep.subr.bf16.mxu0 %v828
    %1039 = vmatpush1.bf16.msra.mxu0 %v827
    %1040 = vmatprep.subr.bf16.mxu0 %v824
    %1041 = vmatpush1.bf16.msra.mxu0 %v823
    %1042 = vmatprep.subr.bf16.mxu0 %v820
    %1043 = vmatpush1.bf16.msra.mxu0 %v819
    %1044 = vmatprep.subr.bf16.mxu0 %v816
    %1045 = vmatpush1.bf16.msra.mxu0 %v815
    %1046 = vmatprep.subr.bf16.mxu0 %v812
    %1047 = vmatpush1.bf16.msra.mxu0 %v811
    %1048 = vmatprep.subr.bf16.mxu0 %v808
    %1049 = vmatpush1.bf16.msra.mxu0 %v807
    %1050 = vmatprep.subr.bf16.mxu0 %v804
    %1051 = vmatpush1.bf16.msra.mxu0 %v803
    %1052 = vmatprep.subr.bf16.mxu0 %v864
    %1053 = vmatpush2.bf16.msra.mxu0 %v863
    %1054 = vmatprep.subr.bf16.mxu0 %v860
    %1055 = vmatpush2.bf16.msra.mxu0 %v859
    %1056 = vmatprep.subr.bf16.mxu0 %v856
    %1057 = vmatpush2.bf16.msra.mxu0 %v855
    %1058 = vmatprep.subr.bf16.mxu0 %v852
    %1059 = vmatpush2.bf16.msra.mxu0 %v851
    %1060 = vmatprep.subr.bf16.mxu0 %v848
    %1061 = vmatpush2.bf16.msra.mxu0 %v847
    %1062 = vmatprep.subr.bf16.mxu0 %v844
    %1063 = vmatpush2.bf16.msra.mxu0 %v843
    %1064 = vmatprep.subr.bf16.mxu0 %v840
    %1065 = vmatpush2.bf16.msra.mxu0 %v839
    %1066 = vmatprep.subr.bf16.mxu0 %v836
    %1067 = vmatpush2.bf16.msra.mxu0 %v835
    %1068 = vmatprep.mubr.bf16.mxu0 %v204
    %1069 = vmatmul.mubr.bf16.gmra.mxu0 %v203
    %v1070 = vpop.f32.mrf.mxu0
    %v1071 = vadd.f32 %v1030, %v1070
    %v1072 = vpop.f32.mrf.mxu0
    %v1073 = vadd.f32 %v1032, %v1072
    %v1074 = vpop.f32.mrf.mxu0
    %v1075 = vpop.f32.mrf.mxu0
    %1076 = vdwg.mxu0
    %1077 = vmatprep.subr.bf16.mxu0 %v770
    %1078 = vmatpush1.bf16.msra.mxu0 %v769
    %1079 = vmatprep.subr.bf16.mxu0 %v766
    %1080 = vmatpush1.bf16.msra.mxu0 %v765
    %1081 = vmatprep.subr.bf16.mxu0 %v762
    %1082 = vmatpush1.bf16.msra.mxu0 %v761
    %1083 = vmatprep.subr.bf16.mxu0 %v758
    %1084 = vmatpush1.bf16.msra.mxu0 %v757
    %1085 = vmatprep.subr.bf16.mxu0 %v754
    %1086 = vmatpush1.bf16.msra.mxu0 %v753
    %1087 = vmatprep.subr.bf16.mxu0 %v750
    %1088 = vmatpush1.bf16.msra.mxu0 %v749
    %1089 = vmatprep.subr.bf16.mxu0 %v746
    %1090 = vmatpush1.bf16.msra.mxu0 %v745
    %1091 = vmatprep.subr.bf16.mxu0 %v742
    %1092 = vmatpush1.bf16.msra.mxu0 %v741
    %1093 = vmatprep.subr.bf16.mxu0 %v802
    %1094 = vmatpush2.bf16.msra.mxu0 %v801
    %1095 = vmatprep.subr.bf16.mxu0 %v798
    %1096 = vmatpush2.bf16.msra.mxu0 %v797
    %1097 = vmatprep.subr.bf16.mxu0 %v794
    %1098 = vmatpush2.bf16.msra.mxu0 %v793
    %1099 = vmatprep.subr.bf16.mxu0 %v790
    %1100 = vmatpush2.bf16.msra.mxu0 %v789
    %1101 = vmatprep.subr.bf16.mxu0 %v786
    %1102 = vmatpush2.bf16.msra.mxu0 %v785
    %1103 = vmatprep.subr.bf16.mxu0 %v782
    %1104 = vmatpush2.bf16.msra.mxu0 %v781
    %1105 = vmatprep.subr.bf16.mxu0 %v778
    %1106 = vmatpush2.bf16.msra.mxu0 %v777
    %1107 = vmatprep.subr.bf16.mxu0 %v774
    %1108 = vmatpush2.bf16.msra.mxu0 %v773
    %1109 = vmatprep.mubr.bf16.mxu0 %v202
    %1110 = vmatmul.mubr.bf16.gmra.mxu0 %v201
    %v1111 = vpop.f32.mrf.mxu0
    %v1112 = vadd.f32 %v346, %v1111
    %v1113 = vpop.f32.mrf.mxu0
    %v1114 = vadd.f32 %v350, %v1113
    %v1115 = vpop.f32.mrf.mxu0
    %v1116 = vpop.f32.mrf.mxu0
    %1117 = vdwg.mxu0
    %1118 = vmatprep.subr.bf16.mxu0 %v834
    %1119 = vmatpush1.bf16.msra.mxu0 %v833
    %1120 = vmatprep.subr.bf16.mxu0 %v830
    %1121 = vmatpush1.bf16.msra.mxu0 %v829
    %1122 = vmatprep.subr.bf16.mxu0 %v826
    %1123 = vmatpush1.bf16.msra.mxu0 %v825
    %1124 = vmatprep.subr.bf16.mxu0 %v822
    %1125 = vmatpush1.bf16.msra.mxu0 %v821
    %1126 = vmatprep.subr.bf16.mxu0 %v818
    %1127 = vmatpush1.bf16.msra.mxu0 %v817
    %1128 = vmatprep.subr.bf16.mxu0 %v814
    %1129 = vmatpush1.bf16.msra.mxu0 %v813
    %1130 = vmatprep.subr.bf16.mxu0 %v810
    %1131 = vmatpush1.bf16.msra.mxu0 %v809
    %1132 = vmatprep.subr.bf16.mxu0 %v806
    %1133 = vmatpush1.bf16.msra.mxu0 %v805
    %1134 = vmatprep.subr.bf16.mxu0 %v866
    %1135 = vmatpush2.bf16.msra.mxu0 %v865
    %1136 = vmatprep.subr.bf16.mxu0 %v862
    %1137 = vmatpush2.bf16.msra.mxu0 %v861
    %1138 = vmatprep.subr.bf16.mxu0 %v858
    %1139 = vmatpush2.bf16.msra.mxu0 %v857
    %1140 = vmatprep.subr.bf16.mxu0 %v854
    %1141 = vmatpush2.bf16.msra.mxu0 %v853
    %1142 = vmatprep.subr.bf16.mxu0 %v850
    %1143 = vmatpush2.bf16.msra.mxu0 %v849
    %1144 = vmatprep.subr.bf16.mxu0 %v846
    %1145 = vmatpush2.bf16.msra.mxu0 %v845
    %1146 = vmatprep.subr.bf16.mxu0 %v842
    %1147 = vmatpush2.bf16.msra.mxu0 %v841
    %1148 = vmatprep.subr.bf16.mxu0 %v838
    %1149 = vmatpush2.bf16.msra.mxu0 %v837
    %1150 = vmatprep.mubr.bf16.mxu0 %v204
    %1151 = vmatmul.mubr.bf16.gmra.mxu0 %v203
    %v1152 = vpop.f32.mrf.mxu0
    %v1153 = vadd.f32 %v1112, %v1152
    %v1154 = vpop.f32.mrf.mxu0
    %v1155 = vadd.f32 %v1114, %v1154
    %v1156 = vpop.f32.mrf.mxu0
    %v1157 = vpop.f32.mrf.mxu0
    %1158 = vdwg.mxu0
    %v1159 = vmax.f32 %v1071, 0.0
    %v1160 = vmax.f32 %v1073, 0.0
    %v1161 = vmax.f32 %v1153, 0.0
    %v1162 = vmax.f32 %v1155, 0.0
    %v1163 = vpack.c.bf16 %v1159, %v1159
    %v1164 = vpack.c.bf16 %v1160, %v1160
    %v1165 = vpack.c.bf16 %v1161, %v1161
    %v1166 = vpack.c.bf16 %v1162, %v1162
    %v1167 = vld [vmem:[%s7] sm:$0xf]
    %v1168 = vld [vmem:[%s7 + $0x4] sm:$0xf]
    %v1169 = vld [vmem:[%s7 + $0x8] sm:$0xf]
    %v1170 = vld [vmem:[%s7 + $0xc] sm:$0xf]
    %v1171 = vld [vmem:[%s7 + $0x10] sm:$0xf]
    %v1172 = vld [vmem:[%s7 + $0x14] sm:$0xf]
    %v1173 = vld [vmem:[%s7 + $0x18] sm:$0xf]
    %v1174 = vld [vmem:[%s7 + $0x1c] sm:$0xf]
    %v1175 = vld [vmem:[%s7 + $0x20] sm:$0xf]
    %v1176 = vld [vmem:[%s7 + $0x24] sm:$0xf]
    %v1177 = vld [vmem:[%s7 + $0x28] sm:$0xf]
    %v1178 = vld [vmem:[%s7 + $0x2c] sm:$0xf]
    %v1179 = vld [vmem:[%s7 + $0x30] sm:$0xf]
    %v1180 = vld [vmem:[%s7 + $0x34] sm:$0xf]
    %v1181 = vld [vmem:[%s7 + $0x38] sm:$0xf]
    %v1182 = vld [vmem:[%s7 + $0x3c] sm:$0xf]
    %v1183 = vld [vmem:[%s7 + $0x40] sm:$0xf]
    %v1184 = vld [vmem:[%s7 + $0x44] sm:$0xf]
    %v1185 = vld [vmem:[%s7 + $0x48] sm:$0xf]
    %v1186 = vld [vmem:[%s7 + $0x4c] sm:$0xf]
    %v1187 = vld [vmem:[%s7 + $0x50] sm:$0xf]
    %v1188 = vld [vmem:[%s7 + $0x54] sm:$0xf]
    %v1189 = vld [vmem:[%s7 + $0x58] sm:$0xf]
    %v1190 = vld [vmem:[%s7 + $0x5c] sm:$0xf]
    %v1191 = vld [vmem:[%s7 + $0x60] sm:$0xf]
    %v1192 = vld [vmem:[%s7 + $0x64] sm:$0xf]
    %v1193 = vld [vmem:[%s7 + $0x68] sm:$0xf]
    %v1194 = vld [vmem:[%s7 + $0x6c] sm:$0xf]
    %v1195 = vld [vmem:[%s7 + $0x70] sm:$0xf]
    %v1196 = vld [vmem:[%s7 + $0x74] sm:$0xf]
    %v1197 = vld [vmem:[%s7 + $0x78] sm:$0xf]
    %v1198 = vld [vmem:[%s7 + $0x7c] sm:$0xf]
    %v1199 = vld [vmem:[%s7 + $0x80] sm:$0xf]
    %v1200 = vld [vmem:[%s7 + $0x84] sm:$0xf]
    %v1201 = vld [vmem:[%s7 + $0x88] sm:$0xf]
    %v1202 = vld [vmem:[%s7 + $0x8c] sm:$0xf]
    %v1203 = vld [vmem:[%s7 + $0x90] sm:$0xf]
    %v1204 = vld [vmem:[%s7 + $0x94] sm:$0xf]
    %v1205 = vld [vmem:[%s7 + $0x98] sm:$0xf]
    %v1206 = vld [vmem:[%s7 + $0x9c] sm:$0xf]
    %v1207 = vld [vmem:[%s7 + $0xa0] sm:$0xf]
    %v1208 = vld [vmem:[%s7 + $0xa4] sm:$0xf]
    %v1209 = vld [vmem:[%s7 + $0xa8] sm:$0xf]
    %v1210 = vld [vmem:[%s7 + $0xac] sm:$0xf]
    %v1211 = vld [vmem:[%s7 + $0xb0] sm:$0xf]
    %v1212 = vld [vmem:[%s7 + $0xb4] sm:$0xf]
    %v1213 = vld [vmem:[%s7 + $0xb8] sm:$0xf]
    %v1214 = vld [vmem:[%s7 + $0xbc] sm:$0xf]
    %v1215 = vld [vmem:[%s7 + $0xc0] sm:$0xf]
    %v1216 = vld [vmem:[%s7 + $0xc4] sm:$0xf]
    %v1217 = vld [vmem:[%s7 + $0xc8] sm:$0xf]
    %v1218 = vld [vmem:[%s7 + $0xcc] sm:$0xf]
    %v1219 = vld [vmem:[%s7 + $0xd0] sm:$0xf]
    %v1220 = vld [vmem:[%s7 + $0xd4] sm:$0xf]
    %v1221 = vld [vmem:[%s7 + $0xd8] sm:$0xf]
    %v1222 = vld [vmem:[%s7 + $0xdc] sm:$0xf]
    %v1223 = vld [vmem:[%s7 + $0xe0] sm:$0xf]
    %v1224 = vld [vmem:[%s7 + $0xe4] sm:$0xf]
    %v1225 = vld [vmem:[%s7 + $0xe8] sm:$0xf]
    %v1226 = vld [vmem:[%s7 + $0xec] sm:$0xf]
    %v1227 = vld [vmem:[%s7 + $0xf0] sm:$0xf]
    %v1228 = vld [vmem:[%s7 + $0xf4] sm:$0xf]
    %v1229 = vld [vmem:[%s7 + $0xf8] sm:$0xf]
    %v1230 = vld [vmem:[%s7 + $0xfc] sm:$0xf]
    %v1231 = vld [vmem:[%s8] sm:$0x1]
    %v1233 = vlaneseq
    %v1234 = vshrl.u32 %v1233, 7
    %v1235 = vsub.s32 0, %v1234
    %v1236 = vrot.slane %v1231, %v1235
    %v1302 = vunpack.c.l.b16 %v1167
    %v1303 = vunpack.c.l.b16 %v1168
    %v1304 = vunpack.c.l.b16 %v1169
    %v1305 = vunpack.c.l.b16 %v1170
    %v1306 = vunpack.c.l.b16 %v1171
    %v1307 = vunpack.c.l.b16 %v1172
    %v1308 = vunpack.c.l.b16 %v1173
    %v1309 = vunpack.c.l.b16 %v1174
    %v1310 = vunpack.c.l.b16 %v1175
    %v1311 = vunpack.c.l.b16 %v1176
    %v1312 = vunpack.c.l.b16 %v1177
    %v1313 = vunpack.c.l.b16 %v1178
    %v1314 = vunpack.c.l.b16 %v1179
    %v1315 = vunpack.c.l.b16 %v1180
    %v1316 = vunpack.c.l.b16 %v1181
    %v1317 = vunpack.c.l.b16 %v1182
    %v1318 = vunpack.c.l.b16 %v1183
    %v1319 = vunpack.c.l.b16 %v1184
    %v1320 = vunpack.c.l.b16 %v1185
    %v1321 = vunpack.c.l.b16 %v1186
    %v1322 = vunpack.c.l.b16 %v1187
    %v1323 = vunpack.c.l.b16 %v1188
    %v1324 = vunpack.c.l.b16 %v1189
    %v1325 = vunpack.c.l.b16 %v1190
    %v1326 = vunpack.c.l.b16 %v1191
    %v1327 = vunpack.c.l.b16 %v1192
    %v1328 = vunpack.c.l.b16 %v1193
    %v1329 = vunpack.c.l.b16 %v1194
    %v1330 = vunpack.c.l.b16 %v1195
    %v1331 = vunpack.c.l.b16 %v1196
    %v1332 = vunpack.c.l.b16 %v1197
    %v1333 = vunpack.c.l.b16 %v1198
    %v1334 = vunpack.c.l.b16 %v1199
    %v1335 = vunpack.c.l.b16 %v1200
    %v1336 = vunpack.c.l.b16 %v1201
    %v1337 = vunpack.c.l.b16 %v1202
    %v1338 = vunpack.c.l.b16 %v1203
    %v1339 = vunpack.c.l.b16 %v1204
    %v1340 = vunpack.c.l.b16 %v1205
    %v1341 = vunpack.c.l.b16 %v1206
    %v1342 = vunpack.c.l.b16 %v1207
    %v1343 = vunpack.c.l.b16 %v1208
    %v1344 = vunpack.c.l.b16 %v1209
    %v1345 = vunpack.c.l.b16 %v1210
    %v1346 = vunpack.c.l.b16 %v1211
    %v1347 = vunpack.c.l.b16 %v1212
    %v1348 = vunpack.c.l.b16 %v1213
    %v1349 = vunpack.c.l.b16 %v1214
    %v1350 = vunpack.c.l.b16 %v1215
    %v1351 = vunpack.c.l.b16 %v1216
    %v1352 = vunpack.c.l.b16 %v1217
    %v1353 = vunpack.c.l.b16 %v1218
    %v1354 = vunpack.c.l.b16 %v1219
    %v1355 = vunpack.c.l.b16 %v1220
    %v1356 = vunpack.c.l.b16 %v1221
    %v1357 = vunpack.c.l.b16 %v1222
    %v1358 = vunpack.c.l.b16 %v1223
    %v1359 = vunpack.c.l.b16 %v1224
    %v1360 = vunpack.c.l.b16 %v1225
    %v1361 = vunpack.c.l.b16 %v1226
    %v1362 = vunpack.c.l.b16 %v1227
    %v1363 = vunpack.c.l.b16 %v1228
    %v1364 = vunpack.c.l.b16 %v1229
    %v1365 = vunpack.c.l.b16 %v1230
    %v1366 = vpack.c.b16 %v1303, %v1302
    %v1367 = vpack.c.b16 %v1305, %v1304
    %v1368 = vpack.c.b16 %v1307, %v1306
    %v1369 = vpack.c.b16 %v1309, %v1308
    %v1370 = vpack.c.b16 %v1311, %v1310
    %v1371 = vpack.c.b16 %v1313, %v1312
    %v1372 = vpack.c.b16 %v1315, %v1314
    %v1373 = vpack.c.b16 %v1317, %v1316
    %v1374 = vpack.c.b16 %v1319, %v1318
    %v1375 = vpack.c.b16 %v1321, %v1320
    %v1376 = vpack.c.b16 %v1323, %v1322
    %v1377 = vpack.c.b16 %v1325, %v1324
    %v1378 = vpack.c.b16 %v1327, %v1326
    %v1379 = vpack.c.b16 %v1329, %v1328
    %v1380 = vpack.c.b16 %v1331, %v1330
    %v1381 = vpack.c.b16 %v1333, %v1332
    %v1382 = vpack.c.b16 %v1335, %v1334
    %v1383 = vpack.c.b16 %v1337, %v1336
    %v1384 = vpack.c.b16 %v1339, %v1338
    %v1385 = vpack.c.b16 %v1341, %v1340
    %v1386 = vpack.c.b16 %v1343, %v1342
    %v1387 = vpack.c.b16 %v1345, %v1344
    %v1388 = vpack.c.b16 %v1347, %v1346
    %v1389 = vpack.c.b16 %v1349, %v1348
    %v1390 = vpack.c.b16 %v1351, %v1350
    %v1391 = vpack.c.b16 %v1353, %v1352
    %v1392 = vpack.c.b16 %v1355, %v1354
    %v1393 = vpack.c.b16 %v1357, %v1356
    %v1394 = vpack.c.b16 %v1359, %v1358
    %v1395 = vpack.c.b16 %v1361, %v1360
    %v1396 = vpack.c.b16 %v1363, %v1362
    %v1397 = vpack.c.b16 %v1365, %v1364
    %1430 = vmatprep.subr.bf16.mxu0 0
    %1431 = vmatpush1.bf16.msra.mxu0 %v1373
    %1432 = vmatprep.subr.bf16.mxu0 0
    %1433 = vmatpush1.bf16.msra.mxu0 %v1372
    %1434 = vmatprep.subr.bf16.mxu0 0
    %1435 = vmatpush1.bf16.msra.mxu0 %v1371
    %1436 = vmatprep.subr.bf16.mxu0 0
    %1437 = vmatpush1.bf16.msra.mxu0 %v1370
    %1438 = vmatprep.subr.bf16.mxu0 0
    %1439 = vmatpush1.bf16.msra.mxu0 %v1369
    %1440 = vmatprep.subr.bf16.mxu0 0
    %1441 = vmatpush1.bf16.msra.mxu0 %v1368
    %1442 = vmatprep.subr.bf16.mxu0 0
    %1443 = vmatpush1.bf16.msra.mxu0 %v1367
    %1444 = vmatprep.subr.bf16.mxu0 0
    %1445 = vmatpush1.bf16.msra.mxu0 %v1366
    %1446 = vmatprep.subr.bf16.mxu0 0
    %1447 = vmatpush2.bf16.msra.mxu0 %v1381
    %1448 = vmatprep.subr.bf16.mxu0 0
    %1449 = vmatpush2.bf16.msra.mxu0 %v1380
    %1450 = vmatprep.subr.bf16.mxu0 0
    %1451 = vmatpush2.bf16.msra.mxu0 %v1379
    %1452 = vmatprep.subr.bf16.mxu0 0
    %1453 = vmatpush2.bf16.msra.mxu0 %v1378
    %1454 = vmatprep.subr.bf16.mxu0 0
    %1455 = vmatpush2.bf16.msra.mxu0 %v1377
    %1456 = vmatprep.subr.bf16.mxu0 0
    %1457 = vmatpush2.bf16.msra.mxu0 %v1376
    %1458 = vmatprep.subr.bf16.mxu0 0
    %1459 = vmatpush2.bf16.msra.mxu0 %v1375
    %1460 = vmatprep.subr.bf16.mxu0 0
    %1461 = vmatpush2.bf16.msra.mxu0 %v1374
    %1462 = vmatprep.mubr.bf16.mxu0 %v1164
    %1463 = vmatmul.mubr.bf16.gmra.mxu0 %v1163
    %v1464 = vpop.f32.mrf.mxu0
    %v1465 = vadd.f32 %v1236, %v1464
    %v1466 = vpop.f32.mrf.mxu0
    %v1467 = vpop.f32.mrf.mxu0
    %v1468 = vpop.f32.mrf.mxu0
    %1469 = vdwg.mxu0
    %1470 = vmatprep.subr.bf16.mxu0 0
    %1471 = vmatpush1.bf16.msra.mxu0 %v1389
    %1472 = vmatprep.subr.bf16.mxu0 0
    %1473 = vmatpush1.bf16.msra.mxu0 %v1388
    %1474 = vmatprep.subr.bf16.mxu0 0
    %1475 = vmatpush1.bf16.msra.mxu0 %v1387
    %1476 = vmatprep.subr.bf16.mxu0 0
    %1477 = vmatpush1.bf16.msra.mxu0 %v1386
    %1478 = vmatprep.subr.bf16.mxu0 0
    %1479 = vmatpush1.bf16.msra.mxu0 %v1385
    %1480 = vmatprep.subr.bf16.mxu0 0
    %1481 = vmatpush1.bf16.msra.mxu0 %v1384
    %1482 = vmatprep.subr.bf16.mxu0 0
    %1483 = vmatpush1.bf16.msra.mxu0 %v1383
    %1484 = vmatprep.subr.bf16.mxu0 0
    %1485 = vmatpush1.bf16.msra.mxu0 %v1382
    %1486 = vmatprep.subr.bf16.mxu0 0
    %1487 = vmatpush2.bf16.msra.mxu0 %v1397
    %1488 = vmatprep.subr.bf16.mxu0 0
    %1489 = vmatpush2.bf16.msra.mxu0 %v1396
    %1490 = vmatprep.subr.bf16.mxu0 0
    %1491 = vmatpush2.bf16.msra.mxu0 %v1395
    %1492 = vmatprep.subr.bf16.mxu0 0
    %1493 = vmatpush2.bf16.msra.mxu0 %v1394
    %1494 = vmatprep.subr.bf16.mxu0 0
    %1495 = vmatpush2.bf16.msra.mxu0 %v1393
    %1496 = vmatprep.subr.bf16.mxu0 0
    %1497 = vmatpush2.bf16.msra.mxu0 %v1392
    %1498 = vmatprep.subr.bf16.mxu0 0
    %1499 = vmatpush2.bf16.msra.mxu0 %v1391
    %1500 = vmatprep.subr.bf16.mxu0 0
    %1501 = vmatpush2.bf16.msra.mxu0 %v1390
    %1502 = vmatprep.mubr.bf16.mxu0 %v1166
    %1503 = vmatmul.mubr.bf16.gmra.mxu0 %v1165
    %v1504 = vpop.f32.mrf.mxu0
    %v1505 = vadd.f32 %v1465, %v1504
    %v1506 = vpop.f32.mrf.mxu0
    %v1507 = vpop.f32.mrf.mxu0
    %v1508 = vpop.f32.mrf.mxu0
    %1509 = vdwg.mxu0
    %v1510 = vmax.f32 %v1505, 0.0
    %s1511 = sld [smem:[#allocation2]]
    %s1512 = sld [smem:[#allocation2 + $0x1]]
    %v1513 = vlaneseq
    %v1514 = vshrl.u32 %v1513, 7
    %v1515 = vlaneseq
    %v1516 = vand.u32 %v1515, 127
    %vm1517 = vcmp.eq.s32.totalorder %v1514, %v1516
    %v1518 = vsel %vm1517, 1, 0
    %v1519 = vcvt.s32.f32 %v1518
    %v1520 = vstv %s1511
    %v1521 = vmul.f32 %v1520, %v1519
    %v1522 = vstv %s1512
    %v1523 = vmul.f32 %v1522, %v1519
    %v1525 = vrot.slane %v1519, 1
    %1526 = vrot.lane.b32.xlu0 %v1525, 8
    %v1527 = vpop.permute.xlu0 %1526
    %v1529 = vrot.slane %v1519, 2
    %1530 = vrot.lane.b32.xlu0 %v1529, 16
    %v1531 = vpop.permute.xlu0 %1530
    %v1533 = vrot.slane %v1519, 3
    %1534 = vrot.lane.b32.xlu0 %v1533, 24
    %v1535 = vpop.permute.xlu0 %1534
    %v1537 = vrot.slane %v1519, 4
    %1538 = vrot.lane.b32.xlu0 %v1537, 32
    %v1539 = vpop.permute.xlu0 %1538
    %v1541 = vrot.slane %v1519, 5
    %1542 = vrot.lane.b32.xlu0 %v1541, 40
    %v1543 = vpop.permute.xlu0 %1542
    %v1545 = vrot.slane %v1519, 6
    %1546 = vrot.lane.b32.xlu0 %v1545, 48
    %v1547 = vpop.permute.xlu0 %1546
    %v1549 = vrot.slane %v1519, 7
    %1550 = vrot.lane.b32.xlu0 %v1549, 56
    %v1551 = vpop.permute.xlu0 %1550
    %vm1553 = vcmask 64512
    %v1554 = vsel %vm1553, %v1519, %v1527
    %v1555 = vsel %vm111, %v1554, %v1531
    %vm1556 = vcmask 195584
    %v1557 = vsel %vm1556, %v1555, %v1535
    %vm1558 = vcmask 261120
    %v1559 = vsel %vm1558, %v1557, %v1539
    %vm1560 = vcmask 326656
    %v1561 = vsel %vm1560, %v1559, %v1543
    %vm1562 = vcmask 392192
    %v1563 = vsel %vm1562, %v1561, %v1547
    %vm1564 = vcmask 457728
    %v1565 = vsel %vm1564, %v1563, %v1551
    %v1567 = vrot.slane %v1510, 7
    %1568 = vrot.lane.b32.xlu0 %v1567, 120
    %v1569 = vpop.permute.xlu0 %1568
    %v1571 = vrot.slane %v1510, 6
    %1572 = vrot.lane.b32.xlu0 %v1571, 112
    %v1573 = vpop.permute.xlu0 %1572
    %v1575 = vrot.slane %v1510, 5
    %1576 = vrot.lane.b32.xlu0 %v1575, 104
    %v1577 = vpop.permute.xlu0 %1576
    %v1579 = vrot.slane %v1510, 4
    %1580 = vrot.lane.b32.xlu0 %v1579, 96
    %v1581 = vpop.permute.xlu0 %1580
    %v1583 = vrot.slane %v1510, 3
    %1584 = vrot.lane.b32.xlu0 %v1583, 88
    %v1585 = vpop.permute.xlu0 %1584
    %v1587 = vrot.slane %v1510, 2
    %1588 = vrot.lane.b32.xlu0 %v1587, 80
    %v1589 = vpop.permute.xlu0 %1588
    %v1591 = vrot.slane %v1510, 1
    %1592 = vrot.lane.b32.xlu0 %v1591, 72
    %v1593 = vpop.permute.xlu0 %1592
    %vm1595 = vcmask 1040384
    %v1596 = vsel %vm1595, %v1510, %v1569
    %vm1597 = vcmask 1041408
    %v1598 = vsel %vm1597, %v1596, %v1573
    %vm1599 = vcmask 1042432
    %v1600 = vsel %vm1599, %v1598, %v1577
    %vm1601 = vcmask 1043456
    %v1602 = vsel %vm1601, %v1600, %v1581
    %vm1603 = vcmask 1044480
    %v1604 = vsel %vm1603, %v1602, %v1585
    %vm1605 = vcmask 1045504
    %v1606 = vsel %vm1605, %v1604, %v1589
    %vm1607 = vcmask 1046528
    %v1608 = vsel %vm1607, %v1606, %v1593
    %v1610 = vsel %vm1553, 1.0, 0
    %v1613 = vsel %vm1553, %v1608, 0
    %1615 = vmatprep.subr.mxu0 0.0
    %1616 = vmatpush1.xpose.msra.mxu0 0.0
    %1617 = vmatprep.subr.mxu0 0.0
    %1618 = vmatpush1.xpose.msra.mxu0 0.0
    %1619 = vmatprep.subr.mxu0 0.0
    %1620 = vmatpush1.xpose.msra.mxu0 0.0
    %1621 = vmatprep.subr.mxu0 0.0
    %1622 = vmatpush1.xpose.msra.mxu0 0.0
    %1623 = vmatprep.subr.mxu0 0.0
    %1624 = vmatpush1.xpose.msra.mxu0 0.0
    %1625 = vmatprep.subr.mxu0 0.0
    %1626 = vmatpush1.xpose.msra.mxu0 0.0
    %1627 = vmatprep.subr.mxu0 0.0
    %1628 = vmatpush1.xpose.msra.mxu0 0.0
    %1629 = vmatprep.subr.mxu0 0.0
    %1630 = vmatpush1.xpose.msra.mxu0 0.0
    %1631 = vmatprep.subr.mxu0 0.0
    %1632 = vmatpush1.xpose.msra.mxu0 0.0
    %1633 = vmatprep.subr.mxu0 0.0
    %1634 = vmatpush1.xpose.msra.mxu0 0.0
    %1635 = vmatprep.subr.mxu0 0.0
    %1636 = vmatpush1.xpose.msra.mxu0 0.0
    %1637 = vmatprep.subr.mxu0 0.0
    %1638 = vmatpush1.xpose.msra.mxu0 0.0
    %1639 = vmatprep.subr.mxu0 0.0
    %1640 = vmatpush1.xpose.msra.mxu0 0.0
    %1641 = vmatprep.subr.mxu0 0.0
    %1642 = vmatpush1.xpose.msra.mxu0 0.0
    %1643 = vmatprep.subr.mxu0 0.0
    %1644 = vmatpush1.xpose.msra.mxu0 0.0
    %1645 = vmatprep.subr.mxu0 0.0
    %1646 = vmatpush1.xpose.msra.mxu0 %v1613
    %1647 = vmatprep.subr.mxu0 0.0
    %1648 = vmatpush2.xpose.msra.mxu0 0.0
    %1649 = vmatprep.subr.mxu0 0.0
    %1650 = vmatpush2.xpose.msra.mxu0 0.0
    %1651 = vmatprep.subr.mxu0 0.0
    %1652 = vmatpush2.xpose.msra.mxu0 0.0
    %1653 = vmatprep.subr.mxu0 0.0
    %1654 = vmatpush2.xpose.msra.mxu0 0.0
    %1655 = vmatprep.subr.mxu0 0.0
    %1656 = vmatpush2.xpose.msra.mxu0 0.0
    %1657 = vmatprep.subr.mxu0 0.0
    %1658 = vmatpush2.xpose.msra.mxu0 0.0
    %1659 = vmatprep.subr.mxu0 0.0
    %1660 = vmatpush2.xpose.msra.mxu0 0.0
    %1661 = vmatprep.subr.mxu0 0.0
    %1662 = vmatpush2.xpose.msra.mxu0 0.0
    %1663 = vmatprep.subr.mxu0 0.0
    %1664 = vmatpush2.xpose.msra.mxu0 0.0
    %1665 = vmatprep.subr.mxu0 0.0
    %1666 = vmatpush2.xpose.msra.mxu0 0.0
    %1667 = vmatprep.subr.mxu0 0.0
    %1668 = vmatpush2.xpose.msra.mxu0 0.0
    %1669 = vmatprep.subr.mxu0 0.0
    %1670 = vmatpush2.xpose.msra.mxu0 0.0
    %1671 = vmatprep.subr.mxu0 0.0
    %1672 = vmatpush2.xpose.msra.mxu0 0.0
    %1673 = vmatprep.subr.mxu0 0.0
    %1674 = vmatpush2.xpose.msra.mxu0 0.0
    %1675 = vmatprep.subr.mxu0 0.0
    %1676 = vmatpush2.xpose.msra.mxu0 0.0
    %1677 = vmatprep.subr.mxu0 0.0
    %1678 = vmatpush2.xpose.msra.mxu0 0.0
    %1679 = vmatprep.mubr.f32.mxu0 0.0
    %1680 = vmatmul.mubr.f32.gmra.mxu0 %v1610
    %v1681 = vpop.f32.mrf.mxu0
    %v1682 = vadd.f32 0.0, %v1681
    %v1683 = vpop.f32.mrf.mxu0
    %1684 = vdwg.mxu0
    %1685 = vmatprep.subr.mxu0 0.0
    %1686 = vmatpush1.msra.mxu0 0.0
    %1687 = vmatprep.subr.mxu0 0.0
    %1688 = vmatpush1.msra.mxu0 0.0
    %1689 = vmatprep.subr.mxu0 0.0
    %1690 = vmatpush1.msra.mxu0 0.0
    %1691 = vmatprep.subr.mxu0 0.0
    %1692 = vmatpush1.msra.mxu0 0.0
    %1693 = vmatprep.subr.mxu0 0.0
    %1694 = vmatpush1.msra.mxu0 0.0
    %1695 = vmatprep.subr.mxu0 0.0
    %1696 = vmatpush1.msra.mxu0 0.0
    %1697 = vmatprep.subr.mxu0 0.0
    %1698 = vmatpush1.msra.mxu0 0.0
    %1699 = vmatprep.subr.mxu0 0.0
    %1700 = vmatpush1.msra.mxu0 0.0
    %1701 = vmatprep.subr.mxu0 0.0
    %1702 = vmatpush1.msra.mxu0 0.0
    %1703 = vmatprep.subr.mxu0 0.0
    %1704 = vmatpush1.msra.mxu0 0.0
    %1705 = vmatprep.subr.mxu0 0.0
    %1706 = vmatpush1.msra.mxu0 0.0
    %1707 = vmatprep.subr.mxu0 0.0
    %1708 = vmatpush1.msra.mxu0 0.0
    %1709 = vmatprep.subr.mxu0 0.0
    %1710 = vmatpush1.msra.mxu0 0.0
    %1711 = vmatprep.subr.mxu0 0.0
    %1712 = vmatpush1.msra.mxu0 0.0
    %1713 = vmatprep.subr.mxu0 0.0
    %1714 = vmatpush1.msra.mxu0 0.0
    %1715 = vmatprep.subr.mxu0 0.0
    %1716 = vmatpush1.msra.mxu0 %v1519
    %1717 = vmatprep.subr.mxu0 0.0
    %1718 = vmatpush2.msra.mxu0 0.0
    %1719 = vmatprep.subr.mxu0 0.0
    %1720 = vmatpush2.msra.mxu0 0.0
    %1721 = vmatprep.subr.mxu0 0.0
    %1722 = vmatpush2.msra.mxu0 0.0
    %1723 = vmatprep.subr.mxu0 0.0
    %1724 = vmatpush2.msra.mxu0 0.0
    %1725 = vmatprep.subr.mxu0 0.0
    %1726 = vmatpush2.msra.mxu0 0.0
    %1727 = vmatprep.subr.mxu0 0.0
    %1728 = vmatpush2.msra.mxu0 0.0
    %1729 = vmatprep.subr.mxu0 0.0
    %1730 = vmatpush2.msra.mxu0 0.0
    %1731 = vmatprep.subr.mxu0 0.0
    %1732 = vmatpush2.msra.mxu0 0.0
    %1733 = vmatprep.subr.mxu0 0.0
    %1734 = vmatpush2.msra.mxu0 0.0
    %1735 = vmatprep.subr.mxu0 0.0
    %1736 = vmatpush2.msra.mxu0 0.0
    %1737 = vmatprep.subr.mxu0 0.0
    %1738 = vmatpush2.msra.mxu0 0.0
    %1739 = vmatprep.subr.mxu0 0.0
    %1740 = vmatpush2.msra.mxu0 0.0
    %1741 = vmatprep.subr.mxu0 0.0
    %1742 = vmatpush2.msra.mxu0 0.0
    %1743 = vmatprep.subr.mxu0 0.0
    %1744 = vmatpush2.msra.mxu0 0.0
    %1745 = vmatprep.subr.mxu0 0.0
    %1746 = vmatpush2.msra.mxu0 0.0
    %1747 = vmatprep.subr.mxu0 0.0
    %1748 = vmatpush2.msra.mxu0 0.0
    %1749 = vmatprep.mubr.f32.mxu0 0.0
    %1750 = vmatmul.mubr.f32.gmra.mxu0 %v1613
    %v1751 = vpop.f32.mrf.mxu0
    %v1752 = vadd.f32 0.0, %v1751
    %v1753 = vpop.f32.mrf.mxu0
    %1754 = vdwg.mxu0
    %v1756 = vsel %vm1553, %v1752, 0
    %1758 = vmatprep.subr.mxu0 0.0
    %1759 = vmatpush1.xpose.msra.mxu0 0.0
    %1760 = vmatprep.subr.mxu0 0.0
    %1761 = vmatpush1.xpose.msra.mxu0 0.0
    %1762 = vmatprep.subr.mxu0 0.0
    %1763 = vmatpush1.xpose.msra.mxu0 0.0
    %1764 = vmatprep.subr.mxu0 0.0
    %1765 = vmatpush1.xpose.msra.mxu0 0.0
    %1766 = vmatprep.subr.mxu0 0.0
    %1767 = vmatpush1.xpose.msra.mxu0 0.0
    %1768 = vmatprep.subr.mxu0 0.0
    %1769 = vmatpush1.xpose.msra.mxu0 0.0
    %1770 = vmatprep.subr.mxu0 0.0
    %1771 = vmatpush1.xpose.msra.mxu0 0.0
    %1772 = vmatprep.subr.mxu0 0.0
    %1773 = vmatpush1.xpose.msra.mxu0 0.0
    %1774 = vmatprep.subr.mxu0 0.0
    %1775 = vmatpush1.xpose.msra.mxu0 0.0
    %1776 = vmatprep.subr.mxu0 0.0
    %1777 = vmatpush1.xpose.msra.mxu0 0.0
    %1778 = vmatprep.subr.mxu0 0.0
    %1779 = vmatpush1.xpose.msra.mxu0 0.0
    %1780 = vmatprep.subr.mxu0 0.0
    %1781 = vmatpush1.xpose.msra.mxu0 0.0
    %1782 = vmatprep.subr.mxu0 0.0
    %1783 = vmatpush1.xpose.msra.mxu0 0.0
    %1784 = vmatprep.subr.mxu0 0.0
    %1785 = vmatpush1.xpose.msra.mxu0 0.0
    %1786 = vmatprep.subr.mxu0 0.0
    %1787 = vmatpush1.xpose.msra.mxu0 0.0
    %1788 = vmatprep.subr.mxu0 0.0
    %1789 = vmatpush1.xpose.msra.mxu0 %v1613
    %1790 = vmatprep.subr.mxu0 0.0
    %1791 = vmatpush2.xpose.msra.mxu0 0.0
    %1792 = vmatprep.subr.mxu0 0.0
    %1793 = vmatpush2.xpose.msra.mxu0 0.0
    %1794 = vmatprep.subr.mxu0 0.0
    %1795 = vmatpush2.xpose.msra.mxu0 0.0
    %1796 = vmatprep.subr.mxu0 0.0
    %1797 = vmatpush2.xpose.msra.mxu0 0.0
    %1798 = vmatprep.subr.mxu0 0.0
    %1799 = vmatpush2.xpose.msra.mxu0 0.0
    %1800 = vmatprep.subr.mxu0 0.0
    %1801 = vmatpush2.xpose.msra.mxu0 0.0
    %1802 = vmatprep.subr.mxu0 0.0
    %1803 = vmatpush2.xpose.msra.mxu0 0.0
    %1804 = vmatprep.subr.mxu0 0.0
    %1805 = vmatpush2.xpose.msra.mxu0 0.0
    %1806 = vmatprep.subr.mxu0 0.0
    %1807 = vmatpush2.xpose.msra.mxu0 0.0
    %1808 = vmatprep.subr.mxu0 0.0
    %1809 = vmatpush2.xpose.msra.mxu0 0.0
    %1810 = vmatprep.subr.mxu0 0.0
    %1811 = vmatpush2.xpose.msra.mxu0 0.0
    %1812 = vmatprep.subr.mxu0 0.0
    %1813 = vmatpush2.xpose.msra.mxu0 0.0
    %1814 = vmatprep.subr.mxu0 0.0
    %1815 = vmatpush2.xpose.msra.mxu0 0.0
    %1816 = vmatprep.subr.mxu0 0.0
    %1817 = vmatpush2.xpose.msra.mxu0 0.0
    %1818 = vmatprep.subr.mxu0 0.0
    %1819 = vmatpush2.xpose.msra.mxu0 0.0
    %1820 = vmatprep.subr.mxu0 0.0
    %1821 = vmatpush2.xpose.msra.mxu0 0.0
    %1822 = vmatprep.mubr.f32.mxu0 0.0
    %1823 = vmatmul.mubr.f32.gmra.mxu0 %v1756
    %v1824 = vpop.f32.mrf.mxu0
    %v1825 = vadd.f32 %v1521, %v1824
    %v1826 = vpop.f32.mrf.mxu0
    %1827 = vdwg.mxu0
    %v1828 = vadd.f32 %v1825, %v1523
    %v1829 = vrcp.pop %v1828
    %v1830 = vmul.f32 1.0, %v1829
    %1832 = vset.pattern.permute.xlu0 0
    %1833 = vperm.xlu0 %1832, %v1830
    %v1834 = vpop.permute.xlu0 %1833
    %v1836 = vmul.f32 %v1828, %v1834
    %v1837 = vmul.f32 %v1825, %v1834
    %vm1838 = vcmp.eq.s32.totalorder %v1514, 0
    %v1839 = vsub.f32 %v1828, 1.0
    %v1840 = vlaneseq
    %v1841 = vshrl.u32 %v1840, 7
    %v1842 = vsub.s32 0, %v1841
    %v1843 = vrot.slane %v1839, %v1842
    %v1844 = vsel %vm1838, %v1843, %v1828
    %1846 = vset.pattern.permute.xlu0 0
    %1847 = vperm.xlu0 %1846, %v1844
    %v1848 = vpop.permute.xlu0 %1847
    %v1850 = vlaneseq
    %v1851 = vshrl.u32 %v1850, 7
    %v1852 = vsub.s32 0, %v1851
    %v1853 = vrot.slane %v1836, %v1852
    %v1854 = vmul.f32 %v1848, %v1853
    %v1855 = vsub.f32 %v1828, %v1854
    %v1856 = vlaneseq
    %v1857 = vshrl.u32 %v1856, 7
    %v1858 = vsub.s32 0, %v1857
    %v1859 = vrot.slane %v1837, %v1858
    %v1860 = vmul.f32 %v1848, %v1859
    %v1861 = vsub.f32 %v1825, %v1860
    %v1862 = vrcp.pop %v1855
    %v1863 = vmul.f32 1.0, %v1862
    %1865 = vset.pattern.permute.xlu0 1
    %1866 = vperm.xlu0 %1865, %v1863
    %v1867 = vpop.permute.xlu0 %1866
    %v1869 = vmul.f32 %v1855, %v1867
    %v1870 = vmul.f32 %v1861, %v1867
    %vm1871 = vcmp.eq.s32.totalorder %v1514, 1
    %v1872 = vsub.f32 %v1855, 1.0
    %v1873 = vlaneseq
    %v1874 = vshrl.u32 %v1873, 7
    %v1875 = vsub.s32 1, %v1874
    %v1876 = vrot.slane %v1872, %v1875
    %v1877 = vsel %vm1871, %v1876, %v1855
    %1879 = vset.pattern.permute.xlu0 1
    %1880 = vperm.xlu0 %1879, %v1877
    %v1881 = vpop.permute.xlu0 %1880
    %v1883 = vlaneseq
    %v1884 = vshrl.u32 %v1883, 7
    %v1885 = vsub.s32 1, %v1884
    %v1886 = vrot.slane %v1869, %v1885
    %v1887 = vmul.f32 %v1881, %v1886
    %v1888 = vsub.f32 %v1855, %v1887
    %v1889 = vlaneseq
    %v1890 = vshrl.u32 %v1889, 7
    %v1891 = vsub.s32 1, %v1890
    %v1892 = vrot.slane %v1870, %v1891
    %v1893 = vmul.f32 %v1881, %v1892
    %v1894 = vsub.f32 %v1861, %v1893
    %v1895 = vrcp.pop %v1888
    %v1896 = vmul.f32 1.0, %v1895
    %1898 = vset.pattern.permute.xlu0 2
    %1899 = vperm.xlu0 %1898, %v1896
    %v1900 = vpop.permute.xlu0 %1899
    %v1902 = vmul.f32 %v1888, %v1900
    %v1903 = vmul.f32 %v1894, %v1900
    %vm1904 = vcmp.eq.s32.totalorder %v1514, 2
    %v1905 = vsub.f32 %v1888, 1.0
    %v1906 = vlaneseq
    %v1907 = vshrl.u32 %v1906, 7
    %v1908 = vsub.s32 2, %v1907
    %v1909 = vrot.slane %v1905, %v1908
    %v1910 = vsel %vm1904, %v1909, %v1888
    %1912 = vset.pattern.permute.xlu0 2
    %1913 = vperm.xlu0 %1912, %v1910
    %v1914 = vpop.permute.xlu0 %1913
    %v1916 = vlaneseq
    %v1917 = vshrl.u32 %v1916, 7
    %v1918 = vsub.s32 2, %v1917
    %v1919 = vrot.slane %v1902, %v1918
    %v1920 = vmul.f32 %v1914, %v1919
    %v1921 = vsub.f32 %v1888, %v1920
    %v1922 = vlaneseq
    %v1923 = vshrl.u32 %v1922, 7
    %v1924 = vsub.s32 2, %v1923
    %v1925 = vrot.slane %v1903, %v1924
    %v1926 = vmul.f32 %v1914, %v1925
    %v1927 = vsub.f32 %v1894, %v1926
    %v1928 = vrcp.pop %v1921
    %v1929 = vmul.f32 1.0, %v1928
    %1931 = vset.pattern.permute.xlu0 3
    %1932 = vperm.xlu0 %1931, %v1929
    %v1933 = vpop.permute.xlu0 %1932
    %v1935 = vmul.f32 %v1921, %v1933
    %v1936 = vmul.f32 %v1927, %v1933
    %vm1937 = vcmp.eq.s32.totalorder %v1514, 3
    %v1938 = vsub.f32 %v1921, 1.0
    %v1939 = vlaneseq
    %v1940 = vshrl.u32 %v1939, 7
    %v1941 = vsub.s32 3, %v1940
    %v1942 = vrot.slane %v1938, %v1941
    %v1943 = vsel %vm1937, %v1942, %v1921
    %1945 = vset.pattern.permute.xlu0 3
    %1946 = vperm.xlu0 %1945, %v1943
    %v1947 = vpop.permute.xlu0 %1946
    %v1949 = vlaneseq
    %v1950 = vshrl.u32 %v1949, 7
    %v1951 = vsub.s32 3, %v1950
    %v1952 = vrot.slane %v1935, %v1951
    %v1953 = vmul.f32 %v1947, %v1952
    %v1954 = vsub.f32 %v1921, %v1953
    %v1955 = vlaneseq
    %v1956 = vshrl.u32 %v1955, 7
    %v1957 = vsub.s32 3, %v1956
    %v1958 = vrot.slane %v1936, %v1957
    %v1959 = vmul.f32 %v1947, %v1958
    %v1960 = vsub.f32 %v1927, %v1959
    %v1961 = vrcp.pop %v1954
    %v1962 = vmul.f32 1.0, %v1961
    %1964 = vset.pattern.permute.xlu0 4
    %1965 = vperm.xlu0 %1964, %v1962
    %v1966 = vpop.permute.xlu0 %1965
    %v1968 = vmul.f32 %v1954, %v1966
    %v1969 = vmul.f32 %v1960, %v1966
    %vm1970 = vcmp.eq.s32.totalorder %v1514, 4
    %v1971 = vsub.f32 %v1954, 1.0
    %v1972 = vlaneseq
    %v1973 = vshrl.u32 %v1972, 7
    %v1974 = vsub.s32 4, %v1973
    %v1975 = vrot.slane %v1971, %v1974
    %v1976 = vsel %vm1970, %v1975, %v1954
    %1978 = vset.pattern.permute.xlu0 4
    %1979 = vperm.xlu0 %1978, %v1976
    %v1980 = vpop.permute.xlu0 %1979
    %v1982 = vlaneseq
    %v1983 = vshrl.u32 %v1982, 7
    %v1984 = vsub.s32 4, %v1983
    %v1985 = vrot.slane %v1968, %v1984
    %v1986 = vmul.f32 %v1980, %v1985
    %v1987 = vsub.f32 %v1954, %v1986
    %v1988 = vlaneseq
    %v1989 = vshrl.u32 %v1988, 7
    %v1990 = vsub.s32 4, %v1989
    %v1991 = vrot.slane %v1969, %v1990
    %v1992 = vmul.f32 %v1980, %v1991
    %v1993 = vsub.f32 %v1960, %v1992
    %v1994 = vrcp.pop %v1987
    %v1995 = vmul.f32 1.0, %v1994
    %1997 = vset.pattern.permute.xlu0 5
    %1998 = vperm.xlu0 %1997, %v1995
    %v1999 = vpop.permute.xlu0 %1998
    %v2001 = vmul.f32 %v1987, %v1999
    %v2002 = vmul.f32 %v1993, %v1999
    %vm2003 = vcmp.eq.s32.totalorder %v1514, 5
    %v2004 = vsub.f32 %v1987, 1.0
    %v2005 = vlaneseq
    %v2006 = vshrl.u32 %v2005, 7
    %v2007 = vsub.s32 5, %v2006
    %v2008 = vrot.slane %v2004, %v2007
    %v2009 = vsel %vm2003, %v2008, %v1987
    %2011 = vset.pattern.permute.xlu0 5
    %2012 = vperm.xlu0 %2011, %v2009
    %v2013 = vpop.permute.xlu0 %2012
    %v2015 = vlaneseq
    %v2016 = vshrl.u32 %v2015, 7
    %v2017 = vsub.s32 5, %v2016
    %v2018 = vrot.slane %v2001, %v2017
    %v2019 = vmul.f32 %v2013, %v2018
    %v2020 = vsub.f32 %v1987, %v2019
    %v2021 = vlaneseq
    %v2022 = vshrl.u32 %v2021, 7
    %v2023 = vsub.s32 5, %v2022
    %v2024 = vrot.slane %v2002, %v2023
    %v2025 = vmul.f32 %v2013, %v2024
    %v2026 = vsub.f32 %v1993, %v2025
    %v2027 = vrcp.pop %v2020
    %v2028 = vmul.f32 1.0, %v2027
    %2030 = vset.pattern.permute.xlu0 6
    %2031 = vperm.xlu0 %2030, %v2028
    %v2032 = vpop.permute.xlu0 %2031
    %v2034 = vmul.f32 %v2020, %v2032
    %v2035 = vmul.f32 %v2026, %v2032
    %vm2036 = vcmp.eq.s32.totalorder %v1514, 6
    %v2037 = vsub.f32 %v2020, 1.0
    %v2038 = vlaneseq
    %v2039 = vshrl.u32 %v2038, 7
    %v2040 = vsub.s32 6, %v2039
    %v2041 = vrot.slane %v2037, %v2040
    %v2042 = vsel %vm2036, %v2041, %v2020
    %2044 = vset.pattern.permute.xlu0 6
    %2045 = vperm.xlu0 %2044, %v2042
    %v2046 = vpop.permute.xlu0 %2045
    %v2048 = vlaneseq
    %v2049 = vshrl.u32 %v2048, 7
    %v2050 = vsub.s32 6, %v2049
    %v2051 = vrot.slane %v2034, %v2050
    %v2052 = vmul.f32 %v2046, %v2051
    %v2053 = vsub.f32 %v2020, %v2052
    %v2054 = vlaneseq
    %v2055 = vshrl.u32 %v2054, 7
    %v2056 = vsub.s32 6, %v2055
    %v2057 = vrot.slane %v2035, %v2056
    %v2058 = vmul.f32 %v2046, %v2057
    %v2059 = vsub.f32 %v2026, %v2058
    %v2060 = vrcp.pop %v2053
    %v2061 = vmul.f32 1.0, %v2060
    %2063 = vset.pattern.permute.xlu0 7
    %2064 = vperm.xlu0 %2063, %v2061
    %v2065 = vpop.permute.xlu0 %2064
    %v2067 = vmul.f32 %v2059, %v2065
    %vm2068 = vcmp.eq.s32.totalorder %v1514, 7
    %v2069 = vsub.f32 %v2053, 1.0
    %v2070 = vlaneseq
    %v2071 = vshrl.u32 %v2070, 7
    %v2072 = vsub.s32 7, %v2071
    %v2073 = vrot.slane %v2069, %v2072
    %v2074 = vsel %vm2068, %v2073, %v2053
    %2076 = vset.pattern.permute.xlu0 7
    %2077 = vperm.xlu0 %2076, %v2074
    %v2078 = vpop.permute.xlu0 %2077
    %v2080 = vlaneseq
    %v2081 = vshrl.u32 %v2080, 7
    %v2082 = vsub.s32 7, %v2081
    %v2083 = vrot.slane %v2067, %v2082
    %v2084 = vmul.f32 %v2078, %v2083
    %v2085 = vsub.f32 %v2059, %v2084
    %v2086 = vld [vmem:[%s1 + $0x1] sm:$0x1]
    %v2087 = vsub.f32 %v2086, %v1682
    %v2089 = vsel %vm1553, %v2087, 0
    %2091 = vmatprep.subr.mxu0 0.0
    %2092 = vmatpush1.msra.mxu0 0.0
    %2093 = vmatprep.subr.mxu0 0.0
    %2094 = vmatpush1.msra.mxu0 0.0
    %2095 = vmatprep.subr.mxu0 0.0
    %2096 = vmatpush1.msra.mxu0 0.0
    %2097 = vmatprep.subr.mxu0 0.0
    %2098 = vmatpush1.msra.mxu0 0.0
    %2099 = vmatprep.subr.mxu0 0.0
    %2100 = vmatpush1.msra.mxu0 0.0
    %2101 = vmatprep.subr.mxu0 0.0
    %2102 = vmatpush1.msra.mxu0 0.0
    %2103 = vmatprep.subr.mxu0 0.0
    %2104 = vmatpush1.msra.mxu0 0.0
    %2105 = vmatprep.subr.mxu0 0.0
    %2106 = vmatpush1.msra.mxu0 0.0
    %2107 = vmatprep.subr.mxu0 0.0
    %2108 = vmatpush1.msra.mxu0 0.0
    %2109 = vmatprep.subr.mxu0 0.0
    %2110 = vmatpush1.msra.mxu0 0.0
    %2111 = vmatprep.subr.mxu0 0.0
    %2112 = vmatpush1.msra.mxu0 0.0
    %2113 = vmatprep.subr.mxu0 0.0
    %2114 = vmatpush1.msra.mxu0 0.0
    %2115 = vmatprep.subr.mxu0 0.0
    %2116 = vmatpush1.msra.mxu0 0.0
    %2117 = vmatprep.subr.mxu0 0.0
    %2118 = vmatpush1.msra.mxu0 0.0
    %2119 = vmatprep.subr.mxu0 0.0
    %2120 = vmatpush1.msra.mxu0 0.0
    %2121 = vmatprep.subr.mxu0 0.0
    %2122 = vmatpush1.msra.mxu0 %v2085
    %2123 = vmatprep.subr.mxu0 0.0
    %2124 = vmatpush2.msra.mxu0 0.0
    %2125 = vmatprep.subr.mxu0 0.0
    %2126 = vmatpush2.msra.mxu0 0.0
    %2127 = vmatprep.subr.mxu0 0.0
    %2128 = vmatpush2.msra.mxu0 0.0
    %2129 = vmatprep.subr.mxu0 0.0
    %2130 = vmatpush2.msra.mxu0 0.0
    %2131 = vmatprep.subr.mxu0 0.0
    %2132 = vmatpush2.msra.mxu0 0.0
    %2133 = vmatprep.subr.mxu0 0.0
    %2134 = vmatpush2.msra.mxu0 0.0
    %2135 = vmatprep.subr.mxu0 0.0
    %2136 = vmatpush2.msra.mxu0 0.0
    %2137 = vmatprep.subr.mxu0 0.0
    %2138 = vmatpush2.msra.mxu0 0.0
    %2139 = vmatprep.subr.mxu0 0.0
    %2140 = vmatpush2.msra.mxu0 0.0
    %2141 = vmatprep.subr.mxu0 0.0
    %2142 = vmatpush2.msra.mxu0 0.0
    %2143 = vmatprep.subr.mxu0 0.0
    %2144 = vmatpush2.msra.mxu0 0.0
    %2145 = vmatprep.subr.mxu0 0.0
    %2146 = vmatpush2.msra.mxu0 0.0
    %2147 = vmatprep.subr.mxu0 0.0
    %2148 = vmatpush2.msra.mxu0 0.0
    %2149 = vmatprep.subr.mxu0 0.0
    %2150 = vmatpush2.msra.mxu0 0.0
    %2151 = vmatprep.subr.mxu0 0.0
    %2152 = vmatpush2.msra.mxu0 0.0
    %2153 = vmatprep.subr.mxu0 0.0
    %2154 = vmatpush2.msra.mxu0 0.0
    %2155 = vmatprep.mubr.f32.mxu0 0.0
    %2156 = vmatmul.mubr.f32.gmra.mxu0 %v2089
    %v2157 = vpop.f32.mrf.mxu0
    %v2158 = vadd.f32 0.0, %v2157
    %v2159 = vpop.f32.mrf.mxu0
    %2160 = vdwg.mxu0
    %v2161 = vadd.f32 %v1682, %v2158
    %v2163 = vsel %vm1553, %v1825, 0
    %2165 = vmatprep.subr.mxu0 0.0
    %2166 = vmatpush1.msra.mxu0 0.0
    %2167 = vmatprep.subr.mxu0 0.0
    %2168 = vmatpush1.msra.mxu0 0.0
    %2169 = vmatprep.subr.mxu0 0.0
    %2170 = vmatpush1.msra.mxu0 0.0
    %2171 = vmatprep.subr.mxu0 0.0
    %2172 = vmatpush1.msra.mxu0 0.0
    %2173 = vmatprep.subr.mxu0 0.0
    %2174 = vmatpush1.msra.mxu0 0.0
    %2175 = vmatprep.subr.mxu0 0.0
    %2176 = vmatpush1.msra.mxu0 0.0
    %2177 = vmatprep.subr.mxu0 0.0
    %2178 = vmatpush1.msra.mxu0 0.0
    %2179 = vmatprep.subr.mxu0 0.0
    %2180 = vmatpush1.msra.mxu0 0.0
    %2181 = vmatprep.subr.mxu0 0.0
    %2182 = vmatpush1.msra.mxu0 0.0
    %2183 = vmatprep.subr.mxu0 0.0
    %2184 = vmatpush1.msra.mxu0 0.0
    %2185 = vmatprep.subr.mxu0 0.0
    %2186 = vmatpush1.msra.mxu0 0.0
    %2187 = vmatprep.subr.mxu0 0.0
    %2188 = vmatpush1.msra.mxu0 0.0
    %2189 = vmatprep.subr.mxu0 0.0
    %2190 = vmatpush1.msra.mxu0 0.0
    %2191 = vmatprep.subr.mxu0 0.0
    %2192 = vmatpush1.msra.mxu0 0.0
    %2193 = vmatprep.subr.mxu0 0.0
    %2194 = vmatpush1.msra.mxu0 0.0
    %2195 = vmatprep.subr.mxu0 0.0
    %2196 = vmatpush1.msra.mxu0 %v2085
    %2197 = vmatprep.subr.mxu0 0.0
    %2198 = vmatpush2.msra.mxu0 0.0
    %2199 = vmatprep.subr.mxu0 0.0
    %2200 = vmatpush2.msra.mxu0 0.0
    %2201 = vmatprep.subr.mxu0 0.0
    %2202 = vmatpush2.msra.mxu0 0.0
    %2203 = vmatprep.subr.mxu0 0.0
    %2204 = vmatpush2.msra.mxu0 0.0
    %2205 = vmatprep.subr.mxu0 0.0
    %2206 = vmatpush2.msra.mxu0 0.0
    %2207 = vmatprep.subr.mxu0 0.0
    %2208 = vmatpush2.msra.mxu0 0.0
    %2209 = vmatprep.subr.mxu0 0.0
    %2210 = vmatpush2.msra.mxu0 0.0
    %2211 = vmatprep.subr.mxu0 0.0
    %2212 = vmatpush2.msra.mxu0 0.0
    %2213 = vmatprep.subr.mxu0 0.0
    %2214 = vmatpush2.msra.mxu0 0.0
    %2215 = vmatprep.subr.mxu0 0.0
    %2216 = vmatpush2.msra.mxu0 0.0
    %2217 = vmatprep.subr.mxu0 0.0
    %2218 = vmatpush2.msra.mxu0 0.0
    %2219 = vmatprep.subr.mxu0 0.0
    %2220 = vmatpush2.msra.mxu0 0.0
    %2221 = vmatprep.subr.mxu0 0.0
    %2222 = vmatpush2.msra.mxu0 0.0
    %2223 = vmatprep.subr.mxu0 0.0
    %2224 = vmatpush2.msra.mxu0 0.0
    %2225 = vmatprep.subr.mxu0 0.0
    %2226 = vmatpush2.msra.mxu0 0.0
    %2227 = vmatprep.subr.mxu0 0.0
    %2228 = vmatpush2.msra.mxu0 0.0
    %2229 = vmatprep.mubr.f32.mxu0 0.0
    %2230 = vmatmul.mubr.f32.gmra.mxu0 %v2163
    %v2231 = vpop.f32.mrf.mxu0
    %v2232 = vadd.f32 0.0, %v2231
    %v2233 = vpop.f32.mrf.mxu0
    %2234 = vdwg.mxu0
    %v2235 = vsub.f32 %v1519, %v2232
    %v2237 = vrot.slane %v2235, 1
    %2238 = vrot.lane.b32.xlu0 %v2237, 8
    %v2239 = vpop.permute.xlu0 %2238
    %v2241 = vrot.slane %v2235, 2
    %2242 = vrot.lane.b32.xlu0 %v2241, 16
    %v2243 = vpop.permute.xlu0 %2242
    %v2245 = vrot.slane %v2235, 3
    %2246 = vrot.lane.b32.xlu0 %v2245, 24
    %v2247 = vpop.permute.xlu0 %2246
    %v2249 = vrot.slane %v2235, 4
    %2250 = vrot.lane.b32.xlu0 %v2249, 32
    %v2251 = vpop.permute.xlu0 %2250
    %v2253 = vrot.slane %v2235, 5
    %2254 = vrot.lane.b32.xlu0 %v2253, 40
    %v2255 = vpop.permute.xlu0 %2254
    %v2257 = vrot.slane %v2235, 6
    %2258 = vrot.lane.b32.xlu0 %v2257, 48
    %v2259 = vpop.permute.xlu0 %2258
    %v2261 = vrot.slane %v2235, 7
    %2262 = vrot.lane.b32.xlu0 %v2261, 56
    %v2263 = vpop.permute.xlu0 %2262
    %v2265 = vsel %vm1553, %v2235, %v2239
    %v2266 = vsel %vm111, %v2265, %v2243
    %v2267 = vsel %vm1556, %v2266, %v2247
    %v2268 = vsel %vm1558, %v2267, %v2251
    %v2269 = vsel %vm1560, %v2268, %v2255
    %v2270 = vsel %vm1562, %v2269, %v2259
    %v2271 = vsel %vm1564, %v2270, %v2263
    %2273 = vrot.lane.b32.xlu0 %v1510, 120
    %v2274 = vpop.permute.xlu0 %2273
    %2276 = vrot.lane.b32.xlu0 %v1567, 112
    %v2277 = vpop.permute.xlu0 %2276
    %2279 = vrot.lane.b32.xlu0 %v1571, 104
    %v2280 = vpop.permute.xlu0 %2279
    %2282 = vrot.lane.b32.xlu0 %v1575, 96
    %v2283 = vpop.permute.xlu0 %2282
    %2285 = vrot.lane.b32.xlu0 %v1579, 88
    %v2286 = vpop.permute.xlu0 %2285
    %2288 = vrot.lane.b32.xlu0 %v1583, 80
    %v2289 = vpop.permute.xlu0 %2288
    %2291 = vrot.lane.b32.xlu0 %v1587, 72
    %v2292 = vpop.permute.xlu0 %2291
    %v2294 = vsel %vm1595, %v1591, %v2274
    %v2295 = vsel %vm1597, %v2294, %v2277
    %v2296 = vsel %vm1599, %v2295, %v2280
    %v2297 = vsel %vm1601, %v2296, %v2283
    %v2298 = vsel %vm1603, %v2297, %v2286
    %v2299 = vsel %vm1605, %v2298, %v2289
    %v2300 = vsel %vm1607, %v2299, %v2292
    %v2302 = vsel %vm1553, %v2161, 0
    %v2305 = vsel %vm1553, %v2300, 0
    %2307 = vmatprep.subr.mxu0 0.0
    %2308 = vmatpush1.xpose.msra.mxu0 0.0
    %2309 = vmatprep.subr.mxu0 0.0
    %2310 = vmatpush1.xpose.msra.mxu0 0.0
    %2311 = vmatprep.subr.mxu0 0.0
    %2312 = vmatpush1.xpose.msra.mxu0 0.0
    %2313 = vmatprep.subr.mxu0 0.0
    %2314 = vmatpush1.xpose.msra.mxu0 0.0
    %2315 = vmatprep.subr.mxu0 0.0
    %2316 = vmatpush1.xpose.msra.mxu0 0.0
    %2317 = vmatprep.subr.mxu0 0.0
    %2318 = vmatpush1.xpose.msra.mxu0 0.0
    %2319 = vmatprep.subr.mxu0 0.0
    %2320 = vmatpush1.xpose.msra.mxu0 0.0
    %2321 = vmatprep.subr.mxu0 0.0
    %2322 = vmatpush1.xpose.msra.mxu0 0.0
    %2323 = vmatprep.subr.mxu0 0.0
    %2324 = vmatpush1.xpose.msra.mxu0 0.0
    %2325 = vmatprep.subr.mxu0 0.0
    %2326 = vmatpush1.xpose.msra.mxu0 0.0
    %2327 = vmatprep.subr.mxu0 0.0
    %2328 = vmatpush1.xpose.msra.mxu0 0.0
    %2329 = vmatprep.subr.mxu0 0.0
    %2330 = vmatpush1.xpose.msra.mxu0 0.0
    %2331 = vmatprep.subr.mxu0 0.0
    %2332 = vmatpush1.xpose.msra.mxu0 0.0
    %2333 = vmatprep.subr.mxu0 0.0
    %2334 = vmatpush1.xpose.msra.mxu0 0.0
    %2335 = vmatprep.subr.mxu0 0.0
    %2336 = vmatpush1.xpose.msra.mxu0 0.0
    %2337 = vmatprep.subr.mxu0 0.0
    %2338 = vmatpush1.xpose.msra.mxu0 %v2305
    %2339 = vmatprep.subr.mxu0 0.0
    %2340 = vmatpush2.xpose.msra.mxu0 0.0
    %2341 = vmatprep.subr.mxu0 0.0
    %2342 = vmatpush2.xpose.msra.mxu0 0.0
    %2343 = vmatprep.subr.mxu0 0.0
    %2344 = vmatpush2.xpose.msra.mxu0 0.0
    %2345 = vmatprep.subr.mxu0 0.0
    %2346 = vmatpush2.xpose.msra.mxu0 0.0
    %2347 = vmatprep.subr.mxu0 0.0
    %2348 = vmatpush2.xpose.msra.mxu0 0.0
    %2349 = vmatprep.subr.mxu0 0.0
    %2350 = vmatpush2.xpose.msra.mxu0 0.0
    %2351 = vmatprep.subr.mxu0 0.0
    %2352 = vmatpush2.xpose.msra.mxu0 0.0
    %2353 = vmatprep.subr.mxu0 0.0
    %2354 = vmatpush2.xpose.msra.mxu0 0.0
    %2355 = vmatprep.subr.mxu0 0.0
    %2356 = vmatpush2.xpose.msra.mxu0 0.0
    %2357 = vmatprep.subr.mxu0 0.0
    %2358 = vmatpush2.xpose.msra.mxu0 0.0
    %2359 = vmatprep.subr.mxu0 0.0
    %2360 = vmatpush2.xpose.msra.mxu0 0.0
    %2361 = vmatprep.subr.mxu0 0.0
    %2362 = vmatpush2.xpose.msra.mxu0 0.0
    %2363 = vmatprep.subr.mxu0 0.0
    %2364 = vmatpush2.xpose.msra.mxu0 0.0
    %2365 = vmatprep.subr.mxu0 0.0
    %2366 = vmatpush2.xpose.msra.mxu0 0.0
    %2367 = vmatprep.subr.mxu0 0.0
    %2368 = vmatpush2.xpose.msra.mxu0 0.0
    %2369 = vmatprep.subr.mxu0 0.0
    %2370 = vmatpush2.xpose.msra.mxu0 0.0
    %2371 = vmatprep.mubr.f32.mxu0 0.0
    %2372 = vmatmul.mubr.f32.gmra.mxu0 %v2302
    %v2373 = vpop.f32.mrf.mxu0
    %v2374 = vadd.f32 0.0, %v2373
    %v2375 = vpop.f32.mrf.mxu0
    %2376 = vdwg.mxu0
    %2377 = vmatprep.subr.mxu0 0.0
    %2378 = vmatpush1.msra.mxu0 0.0
    %2379 = vmatprep.subr.mxu0 0.0
    %2380 = vmatpush1.msra.mxu0 0.0
    %2381 = vmatprep.subr.mxu0 0.0
    %2382 = vmatpush1.msra.mxu0 0.0
    %2383 = vmatprep.subr.mxu0 0.0
    %2384 = vmatpush1.msra.mxu0 0.0
    %2385 = vmatprep.subr.mxu0 0.0
    %2386 = vmatpush1.msra.mxu0 0.0
    %2387 = vmatprep.subr.mxu0 0.0
    %2388 = vmatpush1.msra.mxu0 0.0
    %2389 = vmatprep.subr.mxu0 0.0
    %2390 = vmatpush1.msra.mxu0 0.0
    %2391 = vmatprep.subr.mxu0 0.0
    %2392 = vmatpush1.msra.mxu0 0.0
    %2393 = vmatprep.subr.mxu0 0.0
    %2394 = vmatpush1.msra.mxu0 0.0
    %2395 = vmatprep.subr.mxu0 0.0
    %2396 = vmatpush1.msra.mxu0 0.0
    %2397 = vmatprep.subr.mxu0 0.0
    %2398 = vmatpush1.msra.mxu0 0.0
    %2399 = vmatprep.subr.mxu0 0.0
    %2400 = vmatpush1.msra.mxu0 0.0
    %2401 = vmatprep.subr.mxu0 0.0
    %2402 = vmatpush1.msra.mxu0 0.0
    %2403 = vmatprep.subr.mxu0 0.0
    %2404 = vmatpush1.msra.mxu0 0.0
    %2405 = vmatprep.subr.mxu0 0.0
    %2406 = vmatpush1.msra.mxu0 0.0
    %2407 = vmatprep.subr.mxu0 0.0
    %2408 = vmatpush1.msra.mxu0 %v2235
    %2409 = vmatprep.subr.mxu0 0.0
    %2410 = vmatpush2.msra.mxu0 0.0
    %2411 = vmatprep.subr.mxu0 0.0
    %2412 = vmatpush2.msra.mxu0 0.0
    %2413 = vmatprep.subr.mxu0 0.0
    %2414 = vmatpush2.msra.mxu0 0.0
    %2415 = vmatprep.subr.mxu0 0.0
    %2416 = vmatpush2.msra.mxu0 0.0
    %2417 = vmatprep.subr.mxu0 0.0
    %2418 = vmatpush2.msra.mxu0 0.0
    %2419 = vmatprep.subr.mxu0 0.0
    %2420 = vmatpush2.msra.mxu0 0.0
    %2421 = vmatprep.subr.mxu0 0.0
    %2422 = vmatpush2.msra.mxu0 0.0
    %2423 = vmatprep.subr.mxu0 0.0
    %2424 = vmatpush2.msra.mxu0 0.0
    %2425 = vmatprep.subr.mxu0 0.0
    %2426 = vmatpush2.msra.mxu0 0.0
    %2427 = vmatprep.subr.mxu0 0.0
    %2428 = vmatpush2.msra.mxu0 0.0
    %2429 = vmatprep.subr.mxu0 0.0
    %2430 = vmatpush2.msra.mxu0 0.0
    %2431 = vmatprep.subr.mxu0 0.0
    %2432 = vmatpush2.msra.mxu0 0.0
    %2433 = vmatprep.subr.mxu0 0.0
    %2434 = vmatpush2.msra.mxu0 0.0
    %2435 = vmatprep.subr.mxu0 0.0
    %2436 = vmatpush2.msra.mxu0 0.0
    %2437 = vmatprep.subr.mxu0 0.0
    %2438 = vmatpush2.msra.mxu0 0.0
    %2439 = vmatprep.subr.mxu0 0.0
    %2440 = vmatpush2.msra.mxu0 0.0
    %2441 = vmatprep.mubr.f32.mxu0 0.0
    %2442 = vmatmul.mubr.f32.gmra.mxu0 %v2305
    %v2443 = vpop.f32.mrf.mxu0
    %v2444 = vadd.f32 0.0, %v2443
    %v2445 = vpop.f32.mrf.mxu0
    %2446 = vdwg.mxu0
    %v2448 = vsel %vm1553, %v2444, 0
    %2450 = vmatprep.subr.mxu0 0.0
    %2451 = vmatpush1.xpose.msra.mxu0 0.0
    %2452 = vmatprep.subr.mxu0 0.0
    %2453 = vmatpush1.xpose.msra.mxu0 0.0
    %2454 = vmatprep.subr.mxu0 0.0
    %2455 = vmatpush1.xpose.msra.mxu0 0.0
    %2456 = vmatprep.subr.mxu0 0.0
    %2457 = vmatpush1.xpose.msra.mxu0 0.0
    %2458 = vmatprep.subr.mxu0 0.0
    %2459 = vmatpush1.xpose.msra.mxu0 0.0
    %2460 = vmatprep.subr.mxu0 0.0
    %2461 = vmatpush1.xpose.msra.mxu0 0.0
    %2462 = vmatprep.subr.mxu0 0.0
    %2463 = vmatpush1.xpose.msra.mxu0 0.0
    %2464 = vmatprep.subr.mxu0 0.0
    %2465 = vmatpush1.xpose.msra.mxu0 0.0
    %2466 = vmatprep.subr.mxu0 0.0
    %2467 = vmatpush1.xpose.msra.mxu0 0.0
    %2468 = vmatprep.subr.mxu0 0.0
    %2469 = vmatpush1.xpose.msra.mxu0 0.0
    %2470 = vmatprep.subr.mxu0 0.0
    %2471 = vmatpush1.xpose.msra.mxu0 0.0
    %2472 = vmatprep.subr.mxu0 0.0
    %2473 = vmatpush1.xpose.msra.mxu0 0.0
    %2474 = vmatprep.subr.mxu0 0.0
    %2475 = vmatpush1.xpose.msra.mxu0 0.0
    %2476 = vmatprep.subr.mxu0 0.0
    %2477 = vmatpush1.xpose.msra.mxu0 0.0
    %2478 = vmatprep.subr.mxu0 0.0
    %2479 = vmatpush1.xpose.msra.mxu0 0.0
    %2480 = vmatprep.subr.mxu0 0.0
    %2481 = vmatpush1.xpose.msra.mxu0 %v2305
    %2482 = vmatprep.subr.mxu0 0.0
    %2483 = vmatpush2.xpose.msra.mxu0 0.0
    %2484 = vmatprep.subr.mxu0 0.0
    %2485 = vmatpush2.xpose.msra.mxu0 0.0
    %2486 = vmatprep.subr.mxu0 0.0
    %2487 = vmatpush2.xpose.msra.mxu0 0.0
    %2488 = vmatprep.subr.mxu0 0.0
    %2489 = vmatpush2.xpose.msra.mxu0 0.0
    %2490 = vmatprep.subr.mxu0 0.0
    %2491 = vmatpush2.xpose.msra.mxu0 0.0
    %2492 = vmatprep.subr.mxu0 0.0
    %2493 = vmatpush2.xpose.msra.mxu0 0.0
    %2494 = vmatprep.subr.mxu0 0.0
    %2495 = vmatpush2.xpose.msra.mxu0 0.0
    %2496 = vmatprep.subr.mxu0 0.0
    %2497 = vmatpush2.xpose.msra.mxu0 0.0
    %2498 = vmatprep.subr.mxu0 0.0
    %2499 = vmatpush2.xpose.msra.mxu0 0.0
    %2500 = vmatprep.subr.mxu0 0.0
    %2501 = vmatpush2.xpose.msra.mxu0 0.0
    %2502 = vmatprep.subr.mxu0 0.0
    %2503 = vmatpush2.xpose.msra.mxu0 0.0
    %2504 = vmatprep.subr.mxu0 0.0
    %2505 = vmatpush2.xpose.msra.mxu0 0.0
    %2506 = vmatprep.subr.mxu0 0.0
    %2507 = vmatpush2.xpose.msra.mxu0 0.0
    %2508 = vmatprep.subr.mxu0 0.0
    %2509 = vmatpush2.xpose.msra.mxu0 0.0
    %2510 = vmatprep.subr.mxu0 0.0
    %2511 = vmatpush2.xpose.msra.mxu0 0.0
    %2512 = vmatprep.subr.mxu0 0.0
    %2513 = vmatpush2.xpose.msra.mxu0 0.0
    %2514 = vmatprep.mubr.f32.mxu0 0.0
    %2515 = vmatmul.mubr.f32.gmra.mxu0 %v2448
    %v2516 = vpop.f32.mrf.mxu0
    %v2517 = vadd.f32 %v1521, %v2516
    %v2518 = vpop.f32.mrf.mxu0
    %2519 = vdwg.mxu0
    %v2520 = vadd.f32 %v2517, %v1523
    %v2521 = vrcp.pop %v2520
    %v2522 = vmul.f32 1.0, %v2521
    %2524 = vset.pattern.permute.xlu0 0
    %2525 = vperm.xlu0 %2524, %v2522
    %v2526 = vpop.permute.xlu0 %2525
    %v2528 = vmul.f32 %v2520, %v2526
    %v2529 = vmul.f32 %v2517, %v2526
    %v2530 = vsub.f32 %v2520, 1.0
    %v2531 = vlaneseq
    %v2532 = vshrl.u32 %v2531, 7
    %v2533 = vsub.s32 0, %v2532
    %v2534 = vrot.slane %v2530, %v2533
    %v2535 = vsel %vm1838, %v2534, %v2520
    %2537 = vset.pattern.permute.xlu0 0
    %2538 = vperm.xlu0 %2537, %v2535
    %v2539 = vpop.permute.xlu0 %2538
    %v2541 = vlaneseq
    %v2542 = vshrl.u32 %v2541, 7
    %v2543 = vsub.s32 0, %v2542
    %v2544 = vrot.slane %v2528, %v2543
    %v2545 = vmul.f32 %v2539, %v2544
    %v2546 = vsub.f32 %v2520, %v2545
    %v2547 = vlaneseq
    %v2548 = vshrl.u32 %v2547, 7
    %v2549 = vsub.s32 0, %v2548
    %v2550 = vrot.slane %v2529, %v2549
    %v2551 = vmul.f32 %v2539, %v2550
    %v2552 = vsub.f32 %v2517, %v2551
    %v2553 = vrcp.pop %v2546
    %v2554 = vmul.f32 1.0, %v2553
    %2556 = vset.pattern.permute.xlu0 1
    %2557 = vperm.xlu0 %2556, %v2554
    %v2558 = vpop.permute.xlu0 %2557
    %v2560 = vmul.f32 %v2546, %v2558
    %v2561 = vmul.f32 %v2552, %v2558
    %v2562 = vsub.f32 %v2546, 1.0
    %v2563 = vlaneseq
    %v2564 = vshrl.u32 %v2563, 7
    %v2565 = vsub.s32 1, %v2564
    %v2566 = vrot.slane %v2562, %v2565
    %v2567 = vsel %vm1871, %v2566, %v2546
    %2569 = vset.pattern.permute.xlu0 1
    %2570 = vperm.xlu0 %2569, %v2567
    %v2571 = vpop.permute.xlu0 %2570
    %v2573 = vlaneseq
    %v2574 = vshrl.u32 %v2573, 7
    %v2575 = vsub.s32 1, %v2574
    %v2576 = vrot.slane %v2560, %v2575
    %v2577 = vmul.f32 %v2571, %v2576
    %v2578 = vsub.f32 %v2546, %v2577
    %v2579 = vlaneseq
    %v2580 = vshrl.u32 %v2579, 7
    %v2581 = vsub.s32 1, %v2580
    %v2582 = vrot.slane %v2561, %v2581
    %v2583 = vmul.f32 %v2571, %v2582
    %v2584 = vsub.f32 %v2552, %v2583
    %v2585 = vrcp.pop %v2578
    %v2586 = vmul.f32 1.0, %v2585
    %2588 = vset.pattern.permute.xlu0 2
    %2589 = vperm.xlu0 %2588, %v2586
    %v2590 = vpop.permute.xlu0 %2589
    %v2592 = vmul.f32 %v2578, %v2590
    %v2593 = vmul.f32 %v2584, %v2590
    %v2594 = vsub.f32 %v2578, 1.0
    %v2595 = vlaneseq
    %v2596 = vshrl.u32 %v2595, 7
    %v2597 = vsub.s32 2, %v2596
    %v2598 = vrot.slane %v2594, %v2597
    %v2599 = vsel %vm1904, %v2598, %v2578
    %2601 = vset.pattern.permute.xlu0 2
    %2602 = vperm.xlu0 %2601, %v2599
    %v2603 = vpop.permute.xlu0 %2602
    %v2605 = vlaneseq
    %v2606 = vshrl.u32 %v2605, 7
    %v2607 = vsub.s32 2, %v2606
    %v2608 = vrot.slane %v2592, %v2607
    %v2609 = vmul.f32 %v2603, %v2608
    %v2610 = vsub.f32 %v2578, %v2609
    %v2611 = vlaneseq
    %v2612 = vshrl.u32 %v2611, 7
    %v2613 = vsub.s32 2, %v2612
    %v2614 = vrot.slane %v2593, %v2613
    %v2615 = vmul.f32 %v2603, %v2614
    %v2616 = vsub.f32 %v2584, %v2615
    %v2617 = vrcp.pop %v2610
    %v2618 = vmul.f32 1.0, %v2617
    %2620 = vset.pattern.permute.xlu0 3
    %2621 = vperm.xlu0 %2620, %v2618
    %v2622 = vpop.permute.xlu0 %2621
    %v2624 = vmul.f32 %v2610, %v2622
    %v2625 = vmul.f32 %v2616, %v2622
    %v2626 = vsub.f32 %v2610, 1.0
    %v2627 = vlaneseq
    %v2628 = vshrl.u32 %v2627, 7
    %v2629 = vsub.s32 3, %v2628
    %v2630 = vrot.slane %v2626, %v2629
    %v2631 = vsel %vm1937, %v2630, %v2610
    %2633 = vset.pattern.permute.xlu0 3
    %2634 = vperm.xlu0 %2633, %v2631
    %v2635 = vpop.permute.xlu0 %2634
    %v2637 = vlaneseq
    %v2638 = vshrl.u32 %v2637, 7
    %v2639 = vsub.s32 3, %v2638
    %v2640 = vrot.slane %v2624, %v2639
    %v2641 = vmul.f32 %v2635, %v2640
    %v2642 = vsub.f32 %v2610, %v2641
    %v2643 = vlaneseq
    %v2644 = vshrl.u32 %v2643, 7
    %v2645 = vsub.s32 3, %v2644
    %v2646 = vrot.slane %v2625, %v2645
    %v2647 = vmul.f32 %v2635, %v2646
    %v2648 = vsub.f32 %v2616, %v2647
    %v2649 = vrcp.pop %v2642
    %v2650 = vmul.f32 1.0, %v2649
    %2652 = vset.pattern.permute.xlu0 4
    %2653 = vperm.xlu0 %2652, %v2650
    %v2654 = vpop.permute.xlu0 %2653
    %v2656 = vmul.f32 %v2642, %v2654
    %v2657 = vmul.f32 %v2648, %v2654
    %v2658 = vsub.f32 %v2642, 1.0
    %v2659 = vlaneseq
    %v2660 = vshrl.u32 %v2659, 7
    %v2661 = vsub.s32 4, %v2660
    %v2662 = vrot.slane %v2658, %v2661
    %v2663 = vsel %vm1970, %v2662, %v2642
    %2665 = vset.pattern.permute.xlu0 4
    %2666 = vperm.xlu0 %2665, %v2663
    %v2667 = vpop.permute.xlu0 %2666
    %v2669 = vlaneseq
    %v2670 = vshrl.u32 %v2669, 7
    %v2671 = vsub.s32 4, %v2670
    %v2672 = vrot.slane %v2656, %v2671
    %v2673 = vmul.f32 %v2667, %v2672
    %v2674 = vsub.f32 %v2642, %v2673
    %v2675 = vlaneseq
    %v2676 = vshrl.u32 %v2675, 7
    %v2677 = vsub.s32 4, %v2676
    %v2678 = vrot.slane %v2657, %v2677
    %v2679 = vmul.f32 %v2667, %v2678
    %v2680 = vsub.f32 %v2648, %v2679
    %v2681 = vrcp.pop %v2674
    %v2682 = vmul.f32 1.0, %v2681
    %2684 = vset.pattern.permute.xlu0 5
    %2685 = vperm.xlu0 %2684, %v2682
    %v2686 = vpop.permute.xlu0 %2685
    %v2688 = vmul.f32 %v2674, %v2686
    %v2689 = vmul.f32 %v2680, %v2686
    %v2690 = vsub.f32 %v2674, 1.0
    %v2691 = vlaneseq
    %v2692 = vshrl.u32 %v2691, 7
    %v2693 = vsub.s32 5, %v2692
    %v2694 = vrot.slane %v2690, %v2693
    %v2695 = vsel %vm2003, %v2694, %v2674
    %2697 = vset.pattern.permute.xlu0 5
    %2698 = vperm.xlu0 %2697, %v2695
    %v2699 = vpop.permute.xlu0 %2698
    %v2701 = vlaneseq
    %v2702 = vshrl.u32 %v2701, 7
    %v2703 = vsub.s32 5, %v2702
    %v2704 = vrot.slane %v2688, %v2703
    %v2705 = vmul.f32 %v2699, %v2704
    %v2706 = vsub.f32 %v2674, %v2705
    %v2707 = vlaneseq
    %v2708 = vshrl.u32 %v2707, 7
    %v2709 = vsub.s32 5, %v2708
    %v2710 = vrot.slane %v2689, %v2709
    %v2711 = vmul.f32 %v2699, %v2710
    %v2712 = vsub.f32 %v2680, %v2711
    %v2713 = vrcp.pop %v2706
    %v2714 = vmul.f32 1.0, %v2713
    %2716 = vset.pattern.permute.xlu0 6
    %2717 = vperm.xlu0 %2716, %v2714
    %v2718 = vpop.permute.xlu0 %2717
    %v2720 = vmul.f32 %v2706, %v2718
    %v2721 = vmul.f32 %v2712, %v2718
    %v2722 = vsub.f32 %v2706, 1.0
    %v2723 = vlaneseq
    %v2724 = vshrl.u32 %v2723, 7
    %v2725 = vsub.s32 6, %v2724
    %v2726 = vrot.slane %v2722, %v2725
    %v2727 = vsel %vm2036, %v2726, %v2706
    %2729 = vset.pattern.permute.xlu0 6
    %2730 = vperm.xlu0 %2729, %v2727
    %v2731 = vpop.permute.xlu0 %2730
    %v2733 = vlaneseq
    %v2734 = vshrl.u32 %v2733, 7
    %v2735 = vsub.s32 6, %v2734
    %v2736 = vrot.slane %v2720, %v2735
    %v2737 = vmul.f32 %v2731, %v2736
    %v2738 = vsub.f32 %v2706, %v2737
    %v2739 = vlaneseq
    %v2740 = vshrl.u32 %v2739, 7
    %v2741 = vsub.s32 6, %v2740
    %v2742 = vrot.slane %v2721, %v2741
    %v2743 = vmul.f32 %v2731, %v2742
    %v2744 = vsub.f32 %v2712, %v2743
    %v2745 = vrcp.pop %v2738
    %v2746 = vmul.f32 1.0, %v2745
    %2748 = vset.pattern.permute.xlu0 7
    %2749 = vperm.xlu0 %2748, %v2746
    %v2750 = vpop.permute.xlu0 %2749
    %v2752 = vmul.f32 %v2744, %v2750
    %v2753 = vsub.f32 %v2738, 1.0
    %v2754 = vlaneseq
    %v2755 = vshrl.u32 %v2754, 7
    %v2756 = vsub.s32 7, %v2755
    %v2757 = vrot.slane %v2753, %v2756
    %v2758 = vsel %vm2068, %v2757, %v2738
    %2760 = vset.pattern.permute.xlu0 7
    %2761 = vperm.xlu0 %2760, %v2758
    %v2762 = vpop.permute.xlu0 %2761
    %v2764 = vlaneseq
    %v2765 = vshrl.u32 %v2764, 7
    %v2766 = vsub.s32 7, %v2765
    %v2767 = vrot.slane %v2752, %v2766
    %v2768 = vmul.f32 %v2762, %v2767
    %v2769 = vsub.f32 %v2744, %v2768
    %v2770 = vld [vmem:[%s1 + $0x2] sm:$0x1]
    %v2771 = vsub.f32 %v2770, %v2374
    %v2773 = vsel %vm1553, %v2771, 0
    %2775 = vmatprep.subr.mxu0 0.0
    %2776 = vmatpush1.msra.mxu0 0.0
    %2777 = vmatprep.subr.mxu0 0.0
    %2778 = vmatpush1.msra.mxu0 0.0
    %2779 = vmatprep.subr.mxu0 0.0
    %2780 = vmatpush1.msra.mxu0 0.0
    %2781 = vmatprep.subr.mxu0 0.0
    %2782 = vmatpush1.msra.mxu0 0.0
    %2783 = vmatprep.subr.mxu0 0.0
    %2784 = vmatpush1.msra.mxu0 0.0
    %2785 = vmatprep.subr.mxu0 0.0
    %2786 = vmatpush1.msra.mxu0 0.0
    %2787 = vmatprep.subr.mxu0 0.0
    %2788 = vmatpush1.msra.mxu0 0.0
    %2789 = vmatprep.subr.mxu0 0.0
    %2790 = vmatpush1.msra.mxu0 0.0
    %2791 = vmatprep.subr.mxu0 0.0
    %2792 = vmatpush1.msra.mxu0 0.0
    %2793 = vmatprep.subr.mxu0 0.0
    %2794 = vmatpush1.msra.mxu0 0.0
    %2795 = vmatprep.subr.mxu0 0.0
    %2796 = vmatpush1.msra.mxu0 0.0
    %2797 = vmatprep.subr.mxu0 0.0
    %2798 = vmatpush1.msra.mxu0 0.0
    %2799 = vmatprep.subr.mxu0 0.0
    %2800 = vmatpush1.msra.mxu0 0.0
    %2801 = vmatprep.subr.mxu0 0.0
    %2802 = vmatpush1.msra.mxu0 0.0
    %2803 = vmatprep.subr.mxu0 0.0
    %2804 = vmatpush1.msra.mxu0 0.0
    %2805 = vmatprep.subr.mxu0 0.0
    %2806 = vmatpush1.msra.mxu0 %v2769
    %2807 = vmatprep.subr.mxu0 0.0
    %2808 = vmatpush2.msra.mxu0 0.0
    %2809 = vmatprep.subr.mxu0 0.0
    %2810 = vmatpush2.msra.mxu0 0.0
    %2811 = vmatprep.subr.mxu0 0.0
    %2812 = vmatpush2.msra.mxu0 0.0
    %2813 = vmatprep.subr.mxu0 0.0
    %2814 = vmatpush2.msra.mxu0 0.0
    %2815 = vmatprep.subr.mxu0 0.0
    %2816 = vmatpush2.msra.mxu0 0.0
    %2817 = vmatprep.subr.mxu0 0.0
    %2818 = vmatpush2.msra.mxu0 0.0
    %2819 = vmatprep.subr.mxu0 0.0
    %2820 = vmatpush2.msra.mxu0 0.0
    %2821 = vmatprep.subr.mxu0 0.0
    %2822 = vmatpush2.msra.mxu0 0.0
    %2823 = vmatprep.subr.mxu0 0.0
    %2824 = vmatpush2.msra.mxu0 0.0
    %2825 = vmatprep.subr.mxu0 0.0
    %2826 = vmatpush2.msra.mxu0 0.0
    %2827 = vmatprep.subr.mxu0 0.0
    %2828 = vmatpush2.msra.mxu0 0.0
    %2829 = vmatprep.subr.mxu0 0.0
    %2830 = vmatpush2.msra.mxu0 0.0
    %2831 = vmatprep.subr.mxu0 0.0
    %2832 = vmatpush2.msra.mxu0 0.0
    %2833 = vmatprep.subr.mxu0 0.0
    %2834 = vmatpush2.msra.mxu0 0.0
    %2835 = vmatprep.subr.mxu0 0.0
    %2836 = vmatpush2.msra.mxu0 0.0
    %2837 = vmatprep.subr.mxu0 0.0
    %2838 = vmatpush2.msra.mxu0 0.0
    %2839 = vmatprep.mubr.f32.mxu0 0.0
    %2840 = vmatmul.mubr.f32.gmra.mxu0 %v2773
    %v2841 = vpop.f32.mrf.mxu0
    %v2842 = vadd.f32 0.0, %v2841
    %v2843 = vpop.f32.mrf.mxu0
    %2844 = vdwg.mxu0
    %v2845 = vadd.f32 %v2374, %v2842
    %v2847 = vsel %vm1553, %v2517, 0
    %2849 = vmatprep.subr.mxu0 0.0
    %2850 = vmatpush1.msra.mxu0 0.0
    %2851 = vmatprep.subr.mxu0 0.0
    %2852 = vmatpush1.msra.mxu0 0.0
    %2853 = vmatprep.subr.mxu0 0.0
    %2854 = vmatpush1.msra.mxu0 0.0
    %2855 = vmatprep.subr.mxu0 0.0
    %2856 = vmatpush1.msra.mxu0 0.0
    %2857 = vmatprep.subr.mxu0 0.0
    %2858 = vmatpush1.msra.mxu0 0.0
    %2859 = vmatprep.subr.mxu0 0.0
    %2860 = vmatpush1.msra.mxu0 0.0
    %2861 = vmatprep.subr.mxu0 0.0
    %2862 = vmatpush1.msra.mxu0 0.0
    %2863 = vmatprep.subr.mxu0 0.0
    %2864 = vmatpush1.msra.mxu0 0.0
    %2865 = vmatprep.subr.mxu0 0.0
    %2866 = vmatpush1.msra.mxu0 0.0
    %2867 = vmatprep.subr.mxu0 0.0
    %2868 = vmatpush1.msra.mxu0 0.0
    %2869 = vmatprep.subr.mxu0 0.0
    %2870 = vmatpush1.msra.mxu0 0.0
    %2871 = vmatprep.subr.mxu0 0.0
    %2872 = vmatpush1.msra.mxu0 0.0
    %2873 = vmatprep.subr.mxu0 0.0
    %2874 = vmatpush1.msra.mxu0 0.0
    %2875 = vmatprep.subr.mxu0 0.0
    %2876 = vmatpush1.msra.mxu0 0.0
    %2877 = vmatprep.subr.mxu0 0.0
    %2878 = vmatpush1.msra.mxu0 0.0
    %2879 = vmatprep.subr.mxu0 0.0
    %2880 = vmatpush1.msra.mxu0 %v2769
    %2881 = vmatprep.subr.mxu0 0.0
    %2882 = vmatpush2.msra.mxu0 0.0
    %2883 = vmatprep.subr.mxu0 0.0
    %2884 = vmatpush2.msra.mxu0 0.0
    %2885 = vmatprep.subr.mxu0 0.0
    %2886 = vmatpush2.msra.mxu0 0.0
    %2887 = vmatprep.subr.mxu0 0.0
    %2888 = vmatpush2.msra.mxu0 0.0
    %2889 = vmatprep.subr.mxu0 0.0
    %2890 = vmatpush2.msra.mxu0 0.0
    %2891 = vmatprep.subr.mxu0 0.0
    %2892 = vmatpush2.msra.mxu0 0.0
    %2893 = vmatprep.subr.mxu0 0.0
    %2894 = vmatpush2.msra.mxu0 0.0
    %2895 = vmatprep.subr.mxu0 0.0
    %2896 = vmatpush2.msra.mxu0 0.0
    %2897 = vmatprep.subr.mxu0 0.0
    %2898 = vmatpush2.msra.mxu0 0.0
    %2899 = vmatprep.subr.mxu0 0.0
    %2900 = vmatpush2.msra.mxu0 0.0
    %2901 = vmatprep.subr.mxu0 0.0
    %2902 = vmatpush2.msra.mxu0 0.0
    %2903 = vmatprep.subr.mxu0 0.0
    %2904 = vmatpush2.msra.mxu0 0.0
    %2905 = vmatprep.subr.mxu0 0.0
    %2906 = vmatpush2.msra.mxu0 0.0
    %2907 = vmatprep.subr.mxu0 0.0
    %2908 = vmatpush2.msra.mxu0 0.0
    %2909 = vmatprep.subr.mxu0 0.0
    %2910 = vmatpush2.msra.mxu0 0.0
    %2911 = vmatprep.subr.mxu0 0.0
    %2912 = vmatpush2.msra.mxu0 0.0
    %2913 = vmatprep.mubr.f32.mxu0 0.0
    %2914 = vmatmul.mubr.f32.gmra.mxu0 %v2847
    %v2915 = vpop.f32.mrf.mxu0
    %v2916 = vadd.f32 0.0, %v2915
    %v2917 = vpop.f32.mrf.mxu0
    %2918 = vdwg.mxu0
    %v2919 = vsub.f32 %v1519, %v2916
    %v2921 = vrot.slane %v2919, 1
    %2922 = vrot.lane.b32.xlu0 %v2921, 8
    %v2923 = vpop.permute.xlu0 %2922
    %v2925 = vrot.slane %v2919, 2
    %2926 = vrot.lane.b32.xlu0 %v2925, 16
    %v2927 = vpop.permute.xlu0 %2926
    %v2929 = vrot.slane %v2919, 3
    %2930 = vrot.lane.b32.xlu0 %v2929, 24
    %v2931 = vpop.permute.xlu0 %2930
    %v2933 = vrot.slane %v2919, 4
    %2934 = vrot.lane.b32.xlu0 %v2933, 32
    %v2935 = vpop.permute.xlu0 %2934
    %v2937 = vrot.slane %v2919, 5
    %2938 = vrot.lane.b32.xlu0 %v2937, 40
    %v2939 = vpop.permute.xlu0 %2938
    %v2941 = vrot.slane %v2919, 6
    %2942 = vrot.lane.b32.xlu0 %v2941, 48
    %v2943 = vpop.permute.xlu0 %2942
    %v2945 = vrot.slane %v2919, 7
    %2946 = vrot.lane.b32.xlu0 %v2945, 56
    %v2947 = vpop.permute.xlu0 %2946
    %v2949 = vsel %vm1553, %v2919, %v2923
    %v2950 = vsel %vm111, %v2949, %v2927
    %v2951 = vsel %vm1556, %v2950, %v2931
    %v2952 = vsel %vm1558, %v2951, %v2935
    %v2953 = vsel %vm1560, %v2952, %v2939
    %v2954 = vsel %vm1562, %v2953, %v2943
    %v2955 = vsel %vm1564, %v2954, %v2947
    %2957 = vrot.lane.b32.xlu0 %v1591, 120
    %v2958 = vpop.permute.xlu0 %2957
    %2960 = vrot.lane.b32.xlu0 %v1510, 112
    %v2961 = vpop.permute.xlu0 %2960
    %2963 = vrot.lane.b32.xlu0 %v1567, 104
    %v2964 = vpop.permute.xlu0 %2963
    %2966 = vrot.lane.b32.xlu0 %v1571, 96
    %v2967 = vpop.permute.xlu0 %2966
    %2969 = vrot.lane.b32.xlu0 %v1575, 88
    %v2970 = vpop.permute.xlu0 %2969
    %2972 = vrot.lane.b32.xlu0 %v1579, 80
    %v2973 = vpop.permute.xlu0 %2972
    %2975 = vrot.lane.b32.xlu0 %v1583, 72
    %v2976 = vpop.permute.xlu0 %2975
    %v2978 = vsel %vm1595, %v1587, %v2958
    %v2979 = vsel %vm1597, %v2978, %v2961
    %v2980 = vsel %vm1599, %v2979, %v2964
    %v2981 = vsel %vm1601, %v2980, %v2967
    %v2982 = vsel %vm1603, %v2981, %v2970
    %v2983 = vsel %vm1605, %v2982, %v2973
    %v2984 = vsel %vm1607, %v2983, %v2976
    %v2986 = vsel %vm1553, %v2845, 0
    %v2989 = vsel %vm1553, %v2984, 0
    %2991 = vmatprep.subr.mxu0 0.0
    %2992 = vmatpush1.xpose.msra.mxu0 0.0
    %2993 = vmatprep.subr.mxu0 0.0
    %2994 = vmatpush1.xpose.msra.mxu0 0.0
    %2995 = vmatprep.subr.mxu0 0.0
    %2996 = vmatpush1.xpose.msra.mxu0 0.0
    %2997 = vmatprep.subr.mxu0 0.0
    %2998 = vmatpush1.xpose.msra.mxu0 0.0
    %2999 = vmatprep.subr.mxu0 0.0
    %3000 = vmatpush1.xpose.msra.mxu0 0.0
    %3001 = vmatprep.subr.mxu0 0.0
    %3002 = vmatpush1.xpose.msra.mxu0 0.0
    %3003 = vmatprep.subr.mxu0 0.0
    %3004 = vmatpush1.xpose.msra.mxu0 0.0
    %3005 = vmatprep.subr.mxu0 0.0
    %3006 = vmatpush1.xpose.msra.mxu0 0.0
    %3007 = vmatprep.subr.mxu0 0.0
    %3008 = vmatpush1.xpose.msra.mxu0 0.0
    %3009 = vmatprep.subr.mxu0 0.0
    %3010 = vmatpush1.xpose.msra.mxu0 0.0
    %3011 = vmatprep.subr.mxu0 0.0
    %3012 = vmatpush1.xpose.msra.mxu0 0.0
    %3013 = vmatprep.subr.mxu0 0.0
    %3014 = vmatpush1.xpose.msra.mxu0 0.0
    %3015 = vmatprep.subr.mxu0 0.0
    %3016 = vmatpush1.xpose.msra.mxu0 0.0
    %3017 = vmatprep.subr.mxu0 0.0
    %3018 = vmatpush1.xpose.msra.mxu0 0.0
    %3019 = vmatprep.subr.mxu0 0.0
    %3020 = vmatpush1.xpose.msra.mxu0 0.0
    %3021 = vmatprep.subr.mxu0 0.0
    %3022 = vmatpush1.xpose.msra.mxu0 %v2989
    %3023 = vmatprep.subr.mxu0 0.0
    %3024 = vmatpush2.xpose.msra.mxu0 0.0
    %3025 = vmatprep.subr.mxu0 0.0
    %3026 = vmatpush2.xpose.msra.mxu0 0.0
    %3027 = vmatprep.subr.mxu0 0.0
    %3028 = vmatpush2.xpose.msra.mxu0 0.0
    %3029 = vmatprep.subr.mxu0 0.0
    %3030 = vmatpush2.xpose.msra.mxu0 0.0
    %3031 = vmatprep.subr.mxu0 0.0
    %3032 = vmatpush2.xpose.msra.mxu0 0.0
    %3033 = vmatprep.subr.mxu0 0.0
    %3034 = vmatpush2.xpose.msra.mxu0 0.0
    %3035 = vmatprep.subr.mxu0 0.0
    %3036 = vmatpush2.xpose.msra.mxu0 0.0
    %3037 = vmatprep.subr.mxu0 0.0
    %3038 = vmatpush2.xpose.msra.mxu0 0.0
    %3039 = vmatprep.subr.mxu0 0.0
    %3040 = vmatpush2.xpose.msra.mxu0 0.0
    %3041 = vmatprep.subr.mxu0 0.0
    %3042 = vmatpush2.xpose.msra.mxu0 0.0
    %3043 = vmatprep.subr.mxu0 0.0
    %3044 = vmatpush2.xpose.msra.mxu0 0.0
    %3045 = vmatprep.subr.mxu0 0.0
    %3046 = vmatpush2.xpose.msra.mxu0 0.0
    %3047 = vmatprep.subr.mxu0 0.0
    %3048 = vmatpush2.xpose.msra.mxu0 0.0
    %3049 = vmatprep.subr.mxu0 0.0
    %3050 = vmatpush2.xpose.msra.mxu0 0.0
    %3051 = vmatprep.subr.mxu0 0.0
    %3052 = vmatpush2.xpose.msra.mxu0 0.0
    %3053 = vmatprep.subr.mxu0 0.0
    %3054 = vmatpush2.xpose.msra.mxu0 0.0
    %3055 = vmatprep.mubr.f32.mxu0 0.0
    %3056 = vmatmul.mubr.f32.gmra.mxu0 %v2986
    %v3057 = vpop.f32.mrf.mxu0
    %v3058 = vadd.f32 0.0, %v3057
    %v3059 = vpop.f32.mrf.mxu0
    %3060 = vdwg.mxu0
    %3061 = vmatprep.subr.mxu0 0.0
    %3062 = vmatpush1.msra.mxu0 0.0
    %3063 = vmatprep.subr.mxu0 0.0
    %3064 = vmatpush1.msra.mxu0 0.0
    %3065 = vmatprep.subr.mxu0 0.0
    %3066 = vmatpush1.msra.mxu0 0.0
    %3067 = vmatprep.subr.mxu0 0.0
    %3068 = vmatpush1.msra.mxu0 0.0
    %3069 = vmatprep.subr.mxu0 0.0
    %3070 = vmatpush1.msra.mxu0 0.0
    %3071 = vmatprep.subr.mxu0 0.0
    %3072 = vmatpush1.msra.mxu0 0.0
    %3073 = vmatprep.subr.mxu0 0.0
    %3074 = vmatpush1.msra.mxu0 0.0
    %3075 = vmatprep.subr.mxu0 0.0
    %3076 = vmatpush1.msra.mxu0 0.0
    %3077 = vmatprep.subr.mxu0 0.0
    %3078 = vmatpush1.msra.mxu0 0.0
    %3079 = vmatprep.subr.mxu0 0.0
    %3080 = vmatpush1.msra.mxu0 0.0
    %3081 = vmatprep.subr.mxu0 0.0
    %3082 = vmatpush1.msra.mxu0 0.0
    %3083 = vmatprep.subr.mxu0 0.0
    %3084 = vmatpush1.msra.mxu0 0.0
    %3085 = vmatprep.subr.mxu0 0.0
    %3086 = vmatpush1.msra.mxu0 0.0
    %3087 = vmatprep.subr.mxu0 0.0
    %3088 = vmatpush1.msra.mxu0 0.0
    %3089 = vmatprep.subr.mxu0 0.0
    %3090 = vmatpush1.msra.mxu0 0.0
    %3091 = vmatprep.subr.mxu0 0.0
    %3092 = vmatpush1.msra.mxu0 %v2919
    %3093 = vmatprep.subr.mxu0 0.0
    %3094 = vmatpush2.msra.mxu0 0.0
    %3095 = vmatprep.subr.mxu0 0.0
    %3096 = vmatpush2.msra.mxu0 0.0
    %3097 = vmatprep.subr.mxu0 0.0
    %3098 = vmatpush2.msra.mxu0 0.0
    %3099 = vmatprep.subr.mxu0 0.0
    %3100 = vmatpush2.msra.mxu0 0.0
    %3101 = vmatprep.subr.mxu0 0.0
    %3102 = vmatpush2.msra.mxu0 0.0
    %3103 = vmatprep.subr.mxu0 0.0
    %3104 = vmatpush2.msra.mxu0 0.0
    %3105 = vmatprep.subr.mxu0 0.0
    %3106 = vmatpush2.msra.mxu0 0.0
    %3107 = vmatprep.subr.mxu0 0.0
    %3108 = vmatpush2.msra.mxu0 0.0
    %3109 = vmatprep.subr.mxu0 0.0
    %3110 = vmatpush2.msra.mxu0 0.0
    %3111 = vmatprep.subr.mxu0 0.0
    %3112 = vmatpush2.msra.mxu0 0.0
    %3113 = vmatprep.subr.mxu0 0.0
    %3114 = vmatpush2.msra.mxu0 0.0
    %3115 = vmatprep.subr.mxu0 0.0
    %3116 = vmatpush2.msra.mxu0 0.0
    %3117 = vmatprep.subr.mxu0 0.0
    %3118 = vmatpush2.msra.mxu0 0.0
    %3119 = vmatprep.subr.mxu0 0.0
    %3120 = vmatpush2.msra.mxu0 0.0
    %3121 = vmatprep.subr.mxu0 0.0
    %3122 = vmatpush2.msra.mxu0 0.0
    %3123 = vmatprep.subr.mxu0 0.0
    %3124 = vmatpush2.msra.mxu0 0.0
    %3125 = vmatprep.mubr.f32.mxu0 0.0
    %3126 = vmatmul.mubr.f32.gmra.mxu0 %v2989
    %v3127 = vpop.f32.mrf.mxu0
    %v3128 = vadd.f32 0.0, %v3127
    %v3129 = vpop.f32.mrf.mxu0
    %3130 = vdwg.mxu0
    %v3132 = vsel %vm1553, %v3128, 0
    %3134 = vmatprep.subr.mxu0 0.0
    %3135 = vmatpush1.xpose.msra.mxu0 0.0
    %3136 = vmatprep.subr.mxu0 0.0
    %3137 = vmatpush1.xpose.msra.mxu0 0.0
    %3138 = vmatprep.subr.mxu0 0.0
    %3139 = vmatpush1.xpose.msra.mxu0 0.0
    %3140 = vmatprep.subr.mxu0 0.0
    %3141 = vmatpush1.xpose.msra.mxu0 0.0
    %3142 = vmatprep.subr.mxu0 0.0
    %3143 = vmatpush1.xpose.msra.mxu0 0.0
    %3144 = vmatprep.subr.mxu0 0.0
    %3145 = vmatpush1.xpose.msra.mxu0 0.0
    %3146 = vmatprep.subr.mxu0 0.0
    %3147 = vmatpush1.xpose.msra.mxu0 0.0
    %3148 = vmatprep.subr.mxu0 0.0
    %3149 = vmatpush1.xpose.msra.mxu0 0.0
    %3150 = vmatprep.subr.mxu0 0.0
    %3151 = vmatpush1.xpose.msra.mxu0 0.0
    %3152 = vmatprep.subr.mxu0 0.0
    %3153 = vmatpush1.xpose.msra.mxu0 0.0
    %3154 = vmatprep.subr.mxu0 0.0
    %3155 = vmatpush1.xpose.msra.mxu0 0.0
    %3156 = vmatprep.subr.mxu0 0.0
    %3157 = vmatpush1.xpose.msra.mxu0 0.0
    %3158 = vmatprep.subr.mxu0 0.0
    %3159 = vmatpush1.xpose.msra.mxu0 0.0
    %3160 = vmatprep.subr.mxu0 0.0
    %3161 = vmatpush1.xpose.msra.mxu0 0.0
    %3162 = vmatprep.subr.mxu0 0.0
    %3163 = vmatpush1.xpose.msra.mxu0 0.0
    %3164 = vmatprep.subr.mxu0 0.0
    %3165 = vmatpush1.xpose.msra.mxu0 %v2989
    %3166 = vmatprep.subr.mxu0 0.0
    %3167 = vmatpush2.xpose.msra.mxu0 0.0
    %3168 = vmatprep.subr.mxu0 0.0
    %3169 = vmatpush2.xpose.msra.mxu0 0.0
    %3170 = vmatprep.subr.mxu0 0.0
    %3171 = vmatpush2.xpose.msra.mxu0 0.0
    %3172 = vmatprep.subr.mxu0 0.0
    %3173 = vmatpush2.xpose.msra.mxu0 0.0
    %3174 = vmatprep.subr.mxu0 0.0
    %3175 = vmatpush2.xpose.msra.mxu0 0.0
    %3176 = vmatprep.subr.mxu0 0.0
    %3177 = vmatpush2.xpose.msra.mxu0 0.0
    %3178 = vmatprep.subr.mxu0 0.0
    %3179 = vmatpush2.xpose.msra.mxu0 0.0
    %3180 = vmatprep.subr.mxu0 0.0
    %3181 = vmatpush2.xpose.msra.mxu0 0.0
    %3182 = vmatprep.subr.mxu0 0.0
    %3183 = vmatpush2.xpose.msra.mxu0 0.0
    %3184 = vmatprep.subr.mxu0 0.0
    %3185 = vmatpush2.xpose.msra.mxu0 0.0
    %3186 = vmatprep.subr.mxu0 0.0
    %3187 = vmatpush2.xpose.msra.mxu0 0.0
    %3188 = vmatprep.subr.mxu0 0.0
    %3189 = vmatpush2.xpose.msra.mxu0 0.0
    %3190 = vmatprep.subr.mxu0 0.0
    %3191 = vmatpush2.xpose.msra.mxu0 0.0
    %3192 = vmatprep.subr.mxu0 0.0
    %3193 = vmatpush2.xpose.msra.mxu0 0.0
    %3194 = vmatprep.subr.mxu0 0.0
    %3195 = vmatpush2.xpose.msra.mxu0 0.0
    %3196 = vmatprep.subr.mxu0 0.0
    %3197 = vmatpush2.xpose.msra.mxu0 0.0
    %3198 = vmatprep.mubr.f32.mxu0 0.0
    %3199 = vmatmul.mubr.f32.gmra.mxu0 %v3132
    %v3200 = vpop.f32.mrf.mxu0
    %v3201 = vadd.f32 %v1521, %v3200
    %v3202 = vpop.f32.mrf.mxu0
    %3203 = vdwg.mxu0
    %v3204 = vadd.f32 %v3201, %v1523
    %v3205 = vrcp.pop %v3204
    %v3206 = vmul.f32 1.0, %v3205
    %3208 = vset.pattern.permute.xlu0 0
    %3209 = vperm.xlu0 %3208, %v3206
    %v3210 = vpop.permute.xlu0 %3209
    %v3212 = vmul.f32 %v3204, %v3210
    %v3213 = vmul.f32 %v3201, %v3210
    %v3214 = vsub.f32 %v3204, 1.0
    %v3215 = vlaneseq
    %v3216 = vshrl.u32 %v3215, 7
    %v3217 = vsub.s32 0, %v3216
    %v3218 = vrot.slane %v3214, %v3217
    %v3219 = vsel %vm1838, %v3218, %v3204
    %3221 = vset.pattern.permute.xlu0 0
    %3222 = vperm.xlu0 %3221, %v3219
    %v3223 = vpop.permute.xlu0 %3222
    %v3225 = vlaneseq
    %v3226 = vshrl.u32 %v3225, 7
    %v3227 = vsub.s32 0, %v3226
    %v3228 = vrot.slane %v3212, %v3227
    %v3229 = vmul.f32 %v3223, %v3228
    %v3230 = vsub.f32 %v3204, %v3229
    %v3231 = vlaneseq
    %v3232 = vshrl.u32 %v3231, 7
    %v3233 = vsub.s32 0, %v3232
    %v3234 = vrot.slane %v3213, %v3233
    %v3235 = vmul.f32 %v3223, %v3234
    %v3236 = vsub.f32 %v3201, %v3235
    %v3237 = vrcp.pop %v3230
    %v3238 = vmul.f32 1.0, %v3237
    %3240 = vset.pattern.permute.xlu0 1
    %3241 = vperm.xlu0 %3240, %v3238
    %v3242 = vpop.permute.xlu0 %3241
    %v3244 = vmul.f32 %v3230, %v3242
    %v3245 = vmul.f32 %v3236, %v3242
    %v3246 = vsub.f32 %v3230, 1.0
    %v3247 = vlaneseq
    %v3248 = vshrl.u32 %v3247, 7
    %v3249 = vsub.s32 1, %v3248
    %v3250 = vrot.slane %v3246, %v3249
    %v3251 = vsel %vm1871, %v3250, %v3230
    %3253 = vset.pattern.permute.xlu0 1
    %3254 = vperm.xlu0 %3253, %v3251
    %v3255 = vpop.permute.xlu0 %3254
    %v3257 = vlaneseq
    %v3258 = vshrl.u32 %v3257, 7
    %v3259 = vsub.s32 1, %v3258
    %v3260 = vrot.slane %v3244, %v3259
    %v3261 = vmul.f32 %v3255, %v3260
    %v3262 = vsub.f32 %v3230, %v3261
    %v3263 = vlaneseq
    %v3264 = vshrl.u32 %v3263, 7
    %v3265 = vsub.s32 1, %v3264
    %v3266 = vrot.slane %v3245, %v3265
    %v3267 = vmul.f32 %v3255, %v3266
    %v3268 = vsub.f32 %v3236, %v3267
    %v3269 = vrcp.pop %v3262
    %v3270 = vmul.f32 1.0, %v3269
    %3272 = vset.pattern.permute.xlu0 2
    %3273 = vperm.xlu0 %3272, %v3270
    %v3274 = vpop.permute.xlu0 %3273
    %v3276 = vmul.f32 %v3262, %v3274
    %v3277 = vmul.f32 %v3268, %v3274
    %v3278 = vsub.f32 %v3262, 1.0
    %v3279 = vlaneseq
    %v3280 = vshrl.u32 %v3279, 7
    %v3281 = vsub.s32 2, %v3280
    %v3282 = vrot.slane %v3278, %v3281
    %v3283 = vsel %vm1904, %v3282, %v3262
    %3285 = vset.pattern.permute.xlu0 2
    %3286 = vperm.xlu0 %3285, %v3283
    %v3287 = vpop.permute.xlu0 %3286
    %v3289 = vlaneseq
    %v3290 = vshrl.u32 %v3289, 7
    %v3291 = vsub.s32 2, %v3290
    %v3292 = vrot.slane %v3276, %v3291
    %v3293 = vmul.f32 %v3287, %v3292
    %v3294 = vsub.f32 %v3262, %v3293
    %v3295 = vlaneseq
    %v3296 = vshrl.u32 %v3295, 7
    %v3297 = vsub.s32 2, %v3296
    %v3298 = vrot.slane %v3277, %v3297
    %v3299 = vmul.f32 %v3287, %v3298
    %v3300 = vsub.f32 %v3268, %v3299
    %v3301 = vrcp.pop %v3294
    %v3302 = vmul.f32 1.0, %v3301
    %3304 = vset.pattern.permute.xlu0 3
    %3305 = vperm.xlu0 %3304, %v3302
    %v3306 = vpop.permute.xlu0 %3305
    %v3308 = vmul.f32 %v3294, %v3306
    %v3309 = vmul.f32 %v3300, %v3306
    %v3310 = vsub.f32 %v3294, 1.0
    %v3311 = vlaneseq
    %v3312 = vshrl.u32 %v3311, 7
    %v3313 = vsub.s32 3, %v3312
    %v3314 = vrot.slane %v3310, %v3313
    %v3315 = vsel %vm1937, %v3314, %v3294
    %3317 = vset.pattern.permute.xlu0 3
    %3318 = vperm.xlu0 %3317, %v3315
    %v3319 = vpop.permute.xlu0 %3318
    %v3321 = vlaneseq
    %v3322 = vshrl.u32 %v3321, 7
    %v3323 = vsub.s32 3, %v3322
    %v3324 = vrot.slane %v3308, %v3323
    %v3325 = vmul.f32 %v3319, %v3324
    %v3326 = vsub.f32 %v3294, %v3325
    %v3327 = vlaneseq
    %v3328 = vshrl.u32 %v3327, 7
    %v3329 = vsub.s32 3, %v3328
    %v3330 = vrot.slane %v3309, %v3329
    %v3331 = vmul.f32 %v3319, %v3330
    %v3332 = vsub.f32 %v3300, %v3331
    %v3333 = vrcp.pop %v3326
    %v3334 = vmul.f32 1.0, %v3333
    %3336 = vset.pattern.permute.xlu0 4
    %3337 = vperm.xlu0 %3336, %v3334
    %v3338 = vpop.permute.xlu0 %3337
    %v3340 = vmul.f32 %v3326, %v3338
    %v3341 = vmul.f32 %v3332, %v3338
    %v3342 = vsub.f32 %v3326, 1.0
    %v3343 = vlaneseq
    %v3344 = vshrl.u32 %v3343, 7
    %v3345 = vsub.s32 4, %v3344
    %v3346 = vrot.slane %v3342, %v3345
    %v3347 = vsel %vm1970, %v3346, %v3326
    %3349 = vset.pattern.permute.xlu0 4
    %3350 = vperm.xlu0 %3349, %v3347
    %v3351 = vpop.permute.xlu0 %3350
    %v3353 = vlaneseq
    %v3354 = vshrl.u32 %v3353, 7
    %v3355 = vsub.s32 4, %v3354
    %v3356 = vrot.slane %v3340, %v3355
    %v3357 = vmul.f32 %v3351, %v3356
    %v3358 = vsub.f32 %v3326, %v3357
    %v3359 = vlaneseq
    %v3360 = vshrl.u32 %v3359, 7
    %v3361 = vsub.s32 4, %v3360
    %v3362 = vrot.slane %v3341, %v3361
    %v3363 = vmul.f32 %v3351, %v3362
    %v3364 = vsub.f32 %v3332, %v3363
    %v3365 = vrcp.pop %v3358
    %v3366 = vmul.f32 1.0, %v3365
    %3368 = vset.pattern.permute.xlu0 5
    %3369 = vperm.xlu0 %3368, %v3366
    %v3370 = vpop.permute.xlu0 %3369
    %v3372 = vmul.f32 %v3358, %v3370
    %v3373 = vmul.f32 %v3364, %v3370
    %v3374 = vsub.f32 %v3358, 1.0
    %v3375 = vlaneseq
    %v3376 = vshrl.u32 %v3375, 7
    %v3377 = vsub.s32 5, %v3376
    %v3378 = vrot.slane %v3374, %v3377
    %v3379 = vsel %vm2003, %v3378, %v3358
    %3381 = vset.pattern.permute.xlu0 5
    %3382 = vperm.xlu0 %3381, %v3379
    %v3383 = vpop.permute.xlu0 %3382
    %v3385 = vlaneseq
    %v3386 = vshrl.u32 %v3385, 7
    %v3387 = vsub.s32 5, %v3386
    %v3388 = vrot.slane %v3372, %v3387
    %v3389 = vmul.f32 %v3383, %v3388
    %v3390 = vsub.f32 %v3358, %v3389
    %v3391 = vlaneseq
    %v3392 = vshrl.u32 %v3391, 7
    %v3393 = vsub.s32 5, %v3392
    %v3394 = vrot.slane %v3373, %v3393
    %v3395 = vmul.f32 %v3383, %v3394
    %v3396 = vsub.f32 %v3364, %v3395
    %v3397 = vrcp.pop %v3390
    %v3398 = vmul.f32 1.0, %v3397
    %3400 = vset.pattern.permute.xlu0 6
    %3401 = vperm.xlu0 %3400, %v3398
    %v3402 = vpop.permute.xlu0 %3401
    %v3404 = vmul.f32 %v3390, %v3402
    %v3405 = vmul.f32 %v3396, %v3402
    %v3406 = vsub.f32 %v3390, 1.0
    %v3407 = vlaneseq
    %v3408 = vshrl.u32 %v3407, 7
    %v3409 = vsub.s32 6, %v3408
    %v3410 = vrot.slane %v3406, %v3409
    %v3411 = vsel %vm2036, %v3410, %v3390
    %3413 = vset.pattern.permute.xlu0 6
    %3414 = vperm.xlu0 %3413, %v3411
    %v3415 = vpop.permute.xlu0 %3414
    %v3417 = vlaneseq
    %v3418 = vshrl.u32 %v3417, 7
    %v3419 = vsub.s32 6, %v3418
    %v3420 = vrot.slane %v3404, %v3419
    %v3421 = vmul.f32 %v3415, %v3420
    %v3422 = vsub.f32 %v3390, %v3421
    %v3423 = vlaneseq
    %v3424 = vshrl.u32 %v3423, 7
    %v3425 = vsub.s32 6, %v3424
    %v3426 = vrot.slane %v3405, %v3425
    %v3427 = vmul.f32 %v3415, %v3426
    %v3428 = vsub.f32 %v3396, %v3427
    %v3429 = vrcp.pop %v3422
    %v3430 = vmul.f32 1.0, %v3429
    %3432 = vset.pattern.permute.xlu0 7
    %3433 = vperm.xlu0 %3432, %v3430
    %v3434 = vpop.permute.xlu0 %3433
    %v3436 = vmul.f32 %v3428, %v3434
    %v3437 = vsub.f32 %v3422, 1.0
    %v3438 = vlaneseq
    %v3439 = vshrl.u32 %v3438, 7
    %v3440 = vsub.s32 7, %v3439
    %v3441 = vrot.slane %v3437, %v3440
    %v3442 = vsel %vm2068, %v3441, %v3422
    %3444 = vset.pattern.permute.xlu0 7
    %3445 = vperm.xlu0 %3444, %v3442
    %v3446 = vpop.permute.xlu0 %3445
    %v3448 = vlaneseq
    %v3449 = vshrl.u32 %v3448, 7
    %v3450 = vsub.s32 7, %v3449
    %v3451 = vrot.slane %v3436, %v3450
    %v3452 = vmul.f32 %v3446, %v3451
    %v3453 = vsub.f32 %v3428, %v3452
    %v3454 = vld [vmem:[%s1 + $0x3] sm:$0x1]
    %v3455 = vsub.f32 %v3454, %v3058
    %v3457 = vsel %vm1553, %v3455, 0
    %3459 = vmatprep.subr.mxu0 0.0
    %3460 = vmatpush1.msra.mxu0 0.0
    %3461 = vmatprep.subr.mxu0 0.0
    %3462 = vmatpush1.msra.mxu0 0.0
    %3463 = vmatprep.subr.mxu0 0.0
    %3464 = vmatpush1.msra.mxu0 0.0
    %3465 = vmatprep.subr.mxu0 0.0
    %3466 = vmatpush1.msra.mxu0 0.0
    %3467 = vmatprep.subr.mxu0 0.0
    %3468 = vmatpush1.msra.mxu0 0.0
    %3469 = vmatprep.subr.mxu0 0.0
    %3470 = vmatpush1.msra.mxu0 0.0
    %3471 = vmatprep.subr.mxu0 0.0
    %3472 = vmatpush1.msra.mxu0 0.0
    %3473 = vmatprep.subr.mxu0 0.0
    %3474 = vmatpush1.msra.mxu0 0.0
    %3475 = vmatprep.subr.mxu0 0.0
    %3476 = vmatpush1.msra.mxu0 0.0
    %3477 = vmatprep.subr.mxu0 0.0
    %3478 = vmatpush1.msra.mxu0 0.0
    %3479 = vmatprep.subr.mxu0 0.0
    %3480 = vmatpush1.msra.mxu0 0.0
    %3481 = vmatprep.subr.mxu0 0.0
    %3482 = vmatpush1.msra.mxu0 0.0
    %3483 = vmatprep.subr.mxu0 0.0
    %3484 = vmatpush1.msra.mxu0 0.0
    %3485 = vmatprep.subr.mxu0 0.0
    %3486 = vmatpush1.msra.mxu0 0.0
    %3487 = vmatprep.subr.mxu0 0.0
    %3488 = vmatpush1.msra.mxu0 0.0
    %3489 = vmatprep.subr.mxu0 0.0
    %3490 = vmatpush1.msra.mxu0 %v3453
    %3491 = vmatprep.subr.mxu0 0.0
    %3492 = vmatpush2.msra.mxu0 0.0
    %3493 = vmatprep.subr.mxu0 0.0
    %3494 = vmatpush2.msra.mxu0 0.0
    %3495 = vmatprep.subr.mxu0 0.0
    %3496 = vmatpush2.msra.mxu0 0.0
    %3497 = vmatprep.subr.mxu0 0.0
    %3498 = vmatpush2.msra.mxu0 0.0
    %3499 = vmatprep.subr.mxu0 0.0
    %3500 = vmatpush2.msra.mxu0 0.0
    %3501 = vmatprep.subr.mxu0 0.0
    %3502 = vmatpush2.msra.mxu0 0.0
    %3503 = vmatprep.subr.mxu0 0.0
    %3504 = vmatpush2.msra.mxu0 0.0
    %3505 = vmatprep.subr.mxu0 0.0
    %3506 = vmatpush2.msra.mxu0 0.0
    %3507 = vmatprep.subr.mxu0 0.0
    %3508 = vmatpush2.msra.mxu0 0.0
    %3509 = vmatprep.subr.mxu0 0.0
    %3510 = vmatpush2.msra.mxu0 0.0
    %3511 = vmatprep.subr.mxu0 0.0
    %3512 = vmatpush2.msra.mxu0 0.0
    %3513 = vmatprep.subr.mxu0 0.0
    %3514 = vmatpush2.msra.mxu0 0.0
    %3515 = vmatprep.subr.mxu0 0.0
    %3516 = vmatpush2.msra.mxu0 0.0
    %3517 = vmatprep.subr.mxu0 0.0
    %3518 = vmatpush2.msra.mxu0 0.0
    %3519 = vmatprep.subr.mxu0 0.0
    %3520 = vmatpush2.msra.mxu0 0.0
    %3521 = vmatprep.subr.mxu0 0.0
    %3522 = vmatpush2.msra.mxu0 0.0
    %3523 = vmatprep.mubr.f32.mxu0 0.0
    %3524 = vmatmul.mubr.f32.gmra.mxu0 %v3457
    %v3525 = vpop.f32.mrf.mxu0
    %v3526 = vadd.f32 0.0, %v3525
    %v3527 = vpop.f32.mrf.mxu0
    %3528 = vdwg.mxu0
    %v3529 = vadd.f32 %v3058, %v3526
    %v3531 = vsel %vm1553, %v3201, 0
    %3533 = vmatprep.subr.mxu0 0.0
    %3534 = vmatpush1.msra.mxu0 0.0
    %3535 = vmatprep.subr.mxu0 0.0
    %3536 = vmatpush1.msra.mxu0 0.0
    %3537 = vmatprep.subr.mxu0 0.0
    %3538 = vmatpush1.msra.mxu0 0.0
    %3539 = vmatprep.subr.mxu0 0.0
    %3540 = vmatpush1.msra.mxu0 0.0
    %3541 = vmatprep.subr.mxu0 0.0
    %3542 = vmatpush1.msra.mxu0 0.0
    %3543 = vmatprep.subr.mxu0 0.0
    %3544 = vmatpush1.msra.mxu0 0.0
    %3545 = vmatprep.subr.mxu0 0.0
    %3546 = vmatpush1.msra.mxu0 0.0
    %3547 = vmatprep.subr.mxu0 0.0
    %3548 = vmatpush1.msra.mxu0 0.0
    %3549 = vmatprep.subr.mxu0 0.0
    %3550 = vmatpush1.msra.mxu0 0.0
    %3551 = vmatprep.subr.mxu0 0.0
    %3552 = vmatpush1.msra.mxu0 0.0
    %3553 = vmatprep.subr.mxu0 0.0
    %3554 = vmatpush1.msra.mxu0 0.0
    %3555 = vmatprep.subr.mxu0 0.0
    %3556 = vmatpush1.msra.mxu0 0.0
    %3557 = vmatprep.subr.mxu0 0.0
    %3558 = vmatpush1.msra.mxu0 0.0
    %3559 = vmatprep.subr.mxu0 0.0
    %3560 = vmatpush1.msra.mxu0 0.0
    %3561 = vmatprep.subr.mxu0 0.0
    %3562 = vmatpush1.msra.mxu0 0.0
    %3563 = vmatprep.subr.mxu0 0.0
    %3564 = vmatpush1.msra.mxu0 %v3453
    %3565 = vmatprep.subr.mxu0 0.0
    %3566 = vmatpush2.msra.mxu0 0.0
    %3567 = vmatprep.subr.mxu0 0.0
    %3568 = vmatpush2.msra.mxu0 0.0
    %3569 = vmatprep.subr.mxu0 0.0
    %3570 = vmatpush2.msra.mxu0 0.0
    %3571 = vmatprep.subr.mxu0 0.0
    %3572 = vmatpush2.msra.mxu0 0.0
    %3573 = vmatprep.subr.mxu0 0.0
    %3574 = vmatpush2.msra.mxu0 0.0
    %3575 = vmatprep.subr.mxu0 0.0
    %3576 = vmatpush2.msra.mxu0 0.0
    %3577 = vmatprep.subr.mxu0 0.0
    %3578 = vmatpush2.msra.mxu0 0.0
    %3579 = vmatprep.subr.mxu0 0.0
    %3580 = vmatpush2.msra.mxu0 0.0
    %3581 = vmatprep.subr.mxu0 0.0
    %3582 = vmatpush2.msra.mxu0 0.0
    %3583 = vmatprep.subr.mxu0 0.0
    %3584 = vmatpush2.msra.mxu0 0.0
    %3585 = vmatprep.subr.mxu0 0.0
    %3586 = vmatpush2.msra.mxu0 0.0
    %3587 = vmatprep.subr.mxu0 0.0
    %3588 = vmatpush2.msra.mxu0 0.0
    %3589 = vmatprep.subr.mxu0 0.0
    %3590 = vmatpush2.msra.mxu0 0.0
    %3591 = vmatprep.subr.mxu0 0.0
    %3592 = vmatpush2.msra.mxu0 0.0
    %3593 = vmatprep.subr.mxu0 0.0
    %3594 = vmatpush2.msra.mxu0 0.0
    %3595 = vmatprep.subr.mxu0 0.0
    %3596 = vmatpush2.msra.mxu0 0.0
    %3597 = vmatprep.mubr.f32.mxu0 0.0
    %3598 = vmatmul.mubr.f32.gmra.mxu0 %v3531
    %v3599 = vpop.f32.mrf.mxu0
    %v3600 = vadd.f32 0.0, %v3599
    %v3601 = vpop.f32.mrf.mxu0
    %3602 = vdwg.mxu0
    %v3603 = vsub.f32 %v1519, %v3600
    %v3605 = vrot.slane %v3603, 1
    %3606 = vrot.lane.b32.xlu0 %v3605, 8
    %v3607 = vpop.permute.xlu0 %3606
    %v3609 = vrot.slane %v3603, 2
    %3610 = vrot.lane.b32.xlu0 %v3609, 16
    %v3611 = vpop.permute.xlu0 %3610
    %v3613 = vrot.slane %v3603, 3
    %3614 = vrot.lane.b32.xlu0 %v3613, 24
    %v3615 = vpop.permute.xlu0 %3614
    %v3617 = vrot.slane %v3603, 4
    %3618 = vrot.lane.b32.xlu0 %v3617, 32
    %v3619 = vpop.permute.xlu0 %3618
    %v3621 = vrot.slane %v3603, 5
    %3622 = vrot.lane.b32.xlu0 %v3621, 40
    %v3623 = vpop.permute.xlu0 %3622
    %v3625 = vrot.slane %v3603, 6
    %3626 = vrot.lane.b32.xlu0 %v3625, 48
    %v3627 = vpop.permute.xlu0 %3626
    %v3629 = vrot.slane %v3603, 7
    %3630 = vrot.lane.b32.xlu0 %v3629, 56
    %v3631 = vpop.permute.xlu0 %3630
    %v3633 = vsel %vm1553, %v3603, %v3607
    %v3634 = vsel %vm111, %v3633, %v3611
    %v3635 = vsel %vm1556, %v3634, %v3615
    %v3636 = vsel %vm1558, %v3635, %v3619
    %v3637 = vsel %vm1560, %v3636, %v3623
    %v3638 = vsel %vm1562, %v3637, %v3627
    %v3639 = vsel %vm1564, %v3638, %v3631
    %3641 = vrot.lane.b32.xlu0 %v1587, 120
    %v3642 = vpop.permute.xlu0 %3641
    %3644 = vrot.lane.b32.xlu0 %v1591, 112
    %v3645 = vpop.permute.xlu0 %3644
    %3647 = vrot.lane.b32.xlu0 %v1510, 104
    %v3648 = vpop.permute.xlu0 %3647
    %3650 = vrot.lane.b32.xlu0 %v1567, 96
    %v3651 = vpop.permute.xlu0 %3650
    %3653 = vrot.lane.b32.xlu0 %v1571, 88
    %v3654 = vpop.permute.xlu0 %3653
    %3656 = vrot.lane.b32.xlu0 %v1575, 80
    %v3657 = vpop.permute.xlu0 %3656
    %3659 = vrot.lane.b32.xlu0 %v1579, 72
    %v3660 = vpop.permute.xlu0 %3659
    %v3662 = vsel %vm1595, %v1583, %v3642
    %v3663 = vsel %vm1597, %v3662, %v3645
    %v3664 = vsel %vm1599, %v3663, %v3648
    %v3665 = vsel %vm1601, %v3664, %v3651
    %v3666 = vsel %vm1603, %v3665, %v3654
    %v3667 = vsel %vm1605, %v3666, %v3657
    %v3668 = vsel %vm1607, %v3667, %v3660
    %v3670 = vsel %vm1553, %v3529, 0
    %v3673 = vsel %vm1553, %v3668, 0
    %3675 = vmatprep.subr.mxu0 0.0
    %3676 = vmatpush1.xpose.msra.mxu0 0.0
    %3677 = vmatprep.subr.mxu0 0.0
    %3678 = vmatpush1.xpose.msra.mxu0 0.0
    %3679 = vmatprep.subr.mxu0 0.0
    %3680 = vmatpush1.xpose.msra.mxu0 0.0
    %3681 = vmatprep.subr.mxu0 0.0
    %3682 = vmatpush1.xpose.msra.mxu0 0.0
    %3683 = vmatprep.subr.mxu0 0.0
    %3684 = vmatpush1.xpose.msra.mxu0 0.0
    %3685 = vmatprep.subr.mxu0 0.0
    %3686 = vmatpush1.xpose.msra.mxu0 0.0
    %3687 = vmatprep.subr.mxu0 0.0
    %3688 = vmatpush1.xpose.msra.mxu0 0.0
    %3689 = vmatprep.subr.mxu0 0.0
    %3690 = vmatpush1.xpose.msra.mxu0 0.0
    %3691 = vmatprep.subr.mxu0 0.0
    %3692 = vmatpush1.xpose.msra.mxu0 0.0
    %3693 = vmatprep.subr.mxu0 0.0
    %3694 = vmatpush1.xpose.msra.mxu0 0.0
    %3695 = vmatprep.subr.mxu0 0.0
    %3696 = vmatpush1.xpose.msra.mxu0 0.0
    %3697 = vmatprep.subr.mxu0 0.0
    %3698 = vmatpush1.xpose.msra.mxu0 0.0
    %3699 = vmatprep.subr.mxu0 0.0
    %3700 = vmatpush1.xpose.msra.mxu0 0.0
    %3701 = vmatprep.subr.mxu0 0.0
    %3702 = vmatpush1.xpose.msra.mxu0 0.0
    %3703 = vmatprep.subr.mxu0 0.0
    %3704 = vmatpush1.xpose.msra.mxu0 0.0
    %3705 = vmatprep.subr.mxu0 0.0
    %3706 = vmatpush1.xpose.msra.mxu0 %v3673
    %3707 = vmatprep.subr.mxu0 0.0
    %3708 = vmatpush2.xpose.msra.mxu0 0.0
    %3709 = vmatprep.subr.mxu0 0.0
    %3710 = vmatpush2.xpose.msra.mxu0 0.0
    %3711 = vmatprep.subr.mxu0 0.0
    %3712 = vmatpush2.xpose.msra.mxu0 0.0
    %3713 = vmatprep.subr.mxu0 0.0
    %3714 = vmatpush2.xpose.msra.mxu0 0.0
    %3715 = vmatprep.subr.mxu0 0.0
    %3716 = vmatpush2.xpose.msra.mxu0 0.0
    %3717 = vmatprep.subr.mxu0 0.0
    %3718 = vmatpush2.xpose.msra.mxu0 0.0
    %3719 = vmatprep.subr.mxu0 0.0
    %3720 = vmatpush2.xpose.msra.mxu0 0.0
    %3721 = vmatprep.subr.mxu0 0.0
    %3722 = vmatpush2.xpose.msra.mxu0 0.0
    %3723 = vmatprep.subr.mxu0 0.0
    %3724 = vmatpush2.xpose.msra.mxu0 0.0
    %3725 = vmatprep.subr.mxu0 0.0
    %3726 = vmatpush2.xpose.msra.mxu0 0.0
    %3727 = vmatprep.subr.mxu0 0.0
    %3728 = vmatpush2.xpose.msra.mxu0 0.0
    %3729 = vmatprep.subr.mxu0 0.0
    %3730 = vmatpush2.xpose.msra.mxu0 0.0
    %3731 = vmatprep.subr.mxu0 0.0
    %3732 = vmatpush2.xpose.msra.mxu0 0.0
    %3733 = vmatprep.subr.mxu0 0.0
    %3734 = vmatpush2.xpose.msra.mxu0 0.0
    %3735 = vmatprep.subr.mxu0 0.0
    %3736 = vmatpush2.xpose.msra.mxu0 0.0
    %3737 = vmatprep.subr.mxu0 0.0
    %3738 = vmatpush2.xpose.msra.mxu0 0.0
    %3739 = vmatprep.mubr.f32.mxu0 0.0
    %3740 = vmatmul.mubr.f32.gmra.mxu0 %v3670
    %v3741 = vpop.f32.mrf.mxu0
    %v3742 = vadd.f32 0.0, %v3741
    %v3743 = vpop.f32.mrf.mxu0
    %3744 = vdwg.mxu0
    %3745 = vmatprep.subr.mxu0 0.0
    %3746 = vmatpush1.msra.mxu0 0.0
    %3747 = vmatprep.subr.mxu0 0.0
    %3748 = vmatpush1.msra.mxu0 0.0
    %3749 = vmatprep.subr.mxu0 0.0
    %3750 = vmatpush1.msra.mxu0 0.0
    %3751 = vmatprep.subr.mxu0 0.0
    %3752 = vmatpush1.msra.mxu0 0.0
    %3753 = vmatprep.subr.mxu0 0.0
    %3754 = vmatpush1.msra.mxu0 0.0
    %3755 = vmatprep.subr.mxu0 0.0
    %3756 = vmatpush1.msra.mxu0 0.0
    %3757 = vmatprep.subr.mxu0 0.0
    %3758 = vmatpush1.msra.mxu0 0.0
    %3759 = vmatprep.subr.mxu0 0.0
    %3760 = vmatpush1.msra.mxu0 0.0
    %3761 = vmatprep.subr.mxu0 0.0
    %3762 = vmatpush1.msra.mxu0 0.0
    %3763 = vmatprep.subr.mxu0 0.0
    %3764 = vmatpush1.msra.mxu0 0.0
    %3765 = vmatprep.subr.mxu0 0.0
    %3766 = vmatpush1.msra.mxu0 0.0
    %3767 = vmatprep.subr.mxu0 0.0
    %3768 = vmatpush1.msra.mxu0 0.0
    %3769 = vmatprep.subr.mxu0 0.0
    %3770 = vmatpush1.msra.mxu0 0.0
    %3771 = vmatprep.subr.mxu0 0.0
    %3772 = vmatpush1.msra.mxu0 0.0
    %3773 = vmatprep.subr.mxu0 0.0
    %3774 = vmatpush1.msra.mxu0 0.0
    %3775 = vmatprep.subr.mxu0 0.0
    %3776 = vmatpush1.msra.mxu0 %v3603
    %3777 = vmatprep.subr.mxu0 0.0
    %3778 = vmatpush2.msra.mxu0 0.0
    %3779 = vmatprep.subr.mxu0 0.0
    %3780 = vmatpush2.msra.mxu0 0.0
    %3781 = vmatprep.subr.mxu0 0.0
    %3782 = vmatpush2.msra.mxu0 0.0
    %3783 = vmatprep.subr.mxu0 0.0
    %3784 = vmatpush2.msra.mxu0 0.0
    %3785 = vmatprep.subr.mxu0 0.0
    %3786 = vmatpush2.msra.mxu0 0.0
    %3787 = vmatprep.subr.mxu0 0.0
    %3788 = vmatpush2.msra.mxu0 0.0
    %3789 = vmatprep.subr.mxu0 0.0
    %3790 = vmatpush2.msra.mxu0 0.0
    %3791 = vmatprep.subr.mxu0 0.0
    %3792 = vmatpush2.msra.mxu0 0.0
    %3793 = vmatprep.subr.mxu0 0.0
    %3794 = vmatpush2.msra.mxu0 0.0
    %3795 = vmatprep.subr.mxu0 0.0
    %3796 = vmatpush2.msra.mxu0 0.0
    %3797 = vmatprep.subr.mxu0 0.0
    %3798 = vmatpush2.msra.mxu0 0.0
    %3799 = vmatprep.subr.mxu0 0.0
    %3800 = vmatpush2.msra.mxu0 0.0
    %3801 = vmatprep.subr.mxu0 0.0
    %3802 = vmatpush2.msra.mxu0 0.0
    %3803 = vmatprep.subr.mxu0 0.0
    %3804 = vmatpush2.msra.mxu0 0.0
    %3805 = vmatprep.subr.mxu0 0.0
    %3806 = vmatpush2.msra.mxu0 0.0
    %3807 = vmatprep.subr.mxu0 0.0
    %3808 = vmatpush2.msra.mxu0 0.0
    %3809 = vmatprep.mubr.f32.mxu0 0.0
    %3810 = vmatmul.mubr.f32.gmra.mxu0 %v3673
    %v3811 = vpop.f32.mrf.mxu0
    %v3812 = vadd.f32 0.0, %v3811
    %v3813 = vpop.f32.mrf.mxu0
    %3814 = vdwg.mxu0
    %v3816 = vsel %vm1553, %v3812, 0
    %3818 = vmatprep.subr.mxu0 0.0
    %3819 = vmatpush1.xpose.msra.mxu0 0.0
    %3820 = vmatprep.subr.mxu0 0.0
    %3821 = vmatpush1.xpose.msra.mxu0 0.0
    %3822 = vmatprep.subr.mxu0 0.0
    %3823 = vmatpush1.xpose.msra.mxu0 0.0
    %3824 = vmatprep.subr.mxu0 0.0
    %3825 = vmatpush1.xpose.msra.mxu0 0.0
    %3826 = vmatprep.subr.mxu0 0.0
    %3827 = vmatpush1.xpose.msra.mxu0 0.0
    %3828 = vmatprep.subr.mxu0 0.0
    %3829 = vmatpush1.xpose.msra.mxu0 0.0
    %3830 = vmatprep.subr.mxu0 0.0
    %3831 = vmatpush1.xpose.msra.mxu0 0.0
    %3832 = vmatprep.subr.mxu0 0.0
    %3833 = vmatpush1.xpose.msra.mxu0 0.0
    %3834 = vmatprep.subr.mxu0 0.0
    %3835 = vmatpush1.xpose.msra.mxu0 0.0
    %3836 = vmatprep.subr.mxu0 0.0
    %3837 = vmatpush1.xpose.msra.mxu0 0.0
    %3838 = vmatprep.subr.mxu0 0.0
    %3839 = vmatpush1.xpose.msra.mxu0 0.0
    %3840 = vmatprep.subr.mxu0 0.0
    %3841 = vmatpush1.xpose.msra.mxu0 0.0
    %3842 = vmatprep.subr.mxu0 0.0
    %3843 = vmatpush1.xpose.msra.mxu0 0.0
    %3844 = vmatprep.subr.mxu0 0.0
    %3845 = vmatpush1.xpose.msra.mxu0 0.0
    %3846 = vmatprep.subr.mxu0 0.0
    %3847 = vmatpush1.xpose.msra.mxu0 0.0
    %3848 = vmatprep.subr.mxu0 0.0
    %3849 = vmatpush1.xpose.msra.mxu0 %v3673
    %3850 = vmatprep.subr.mxu0 0.0
    %3851 = vmatpush2.xpose.msra.mxu0 0.0
    %3852 = vmatprep.subr.mxu0 0.0
    %3853 = vmatpush2.xpose.msra.mxu0 0.0
    %3854 = vmatprep.subr.mxu0 0.0
    %3855 = vmatpush2.xpose.msra.mxu0 0.0
    %3856 = vmatprep.subr.mxu0 0.0
    %3857 = vmatpush2.xpose.msra.mxu0 0.0
    %3858 = vmatprep.subr.mxu0 0.0
    %3859 = vmatpush2.xpose.msra.mxu0 0.0
    %3860 = vmatprep.subr.mxu0 0.0
    %3861 = vmatpush2.xpose.msra.mxu0 0.0
    %3862 = vmatprep.subr.mxu0 0.0
    %3863 = vmatpush2.xpose.msra.mxu0 0.0
    %3864 = vmatprep.subr.mxu0 0.0
    %3865 = vmatpush2.xpose.msra.mxu0 0.0
    %3866 = vmatprep.subr.mxu0 0.0
    %3867 = vmatpush2.xpose.msra.mxu0 0.0
    %3868 = vmatprep.subr.mxu0 0.0
    %3869 = vmatpush2.xpose.msra.mxu0 0.0
    %3870 = vmatprep.subr.mxu0 0.0
    %3871 = vmatpush2.xpose.msra.mxu0 0.0
    %3872 = vmatprep.subr.mxu0 0.0
    %3873 = vmatpush2.xpose.msra.mxu0 0.0
    %3874 = vmatprep.subr.mxu0 0.0
    %3875 = vmatpush2.xpose.msra.mxu0 0.0
    %3876 = vmatprep.subr.mxu0 0.0
    %3877 = vmatpush2.xpose.msra.mxu0 0.0
    %3878 = vmatprep.subr.mxu0 0.0
    %3879 = vmatpush2.xpose.msra.mxu0 0.0
    %3880 = vmatprep.subr.mxu0 0.0
    %3881 = vmatpush2.xpose.msra.mxu0 0.0
    %3882 = vmatprep.mubr.f32.mxu0 0.0
    %3883 = vmatmul.mubr.f32.gmra.mxu0 %v3816
    %v3884 = vpop.f32.mrf.mxu0
    %v3885 = vadd.f32 %v1521, %v3884
    %v3886 = vpop.f32.mrf.mxu0
    %3887 = vdwg.mxu0
    %v3888 = vadd.f32 %v3885, %v1523
    %v3889 = vrcp.pop %v3888
    %v3890 = vmul.f32 1.0, %v3889
    %3892 = vset.pattern.permute.xlu0 0
    %3893 = vperm.xlu0 %3892, %v3890
    %v3894 = vpop.permute.xlu0 %3893
    %v3896 = vmul.f32 %v3888, %v3894
    %v3897 = vmul.f32 %v3885, %v3894
    %v3898 = vsub.f32 %v3888, 1.0
    %v3899 = vlaneseq
    %v3900 = vshrl.u32 %v3899, 7
    %v3901 = vsub.s32 0, %v3900
    %v3902 = vrot.slane %v3898, %v3901
    %v3903 = vsel %vm1838, %v3902, %v3888
    %3905 = vset.pattern.permute.xlu0 0
    %3906 = vperm.xlu0 %3905, %v3903
    %v3907 = vpop.permute.xlu0 %3906
    %v3909 = vlaneseq
    %v3910 = vshrl.u32 %v3909, 7
    %v3911 = vsub.s32 0, %v3910
    %v3912 = vrot.slane %v3896, %v3911
    %v3913 = vmul.f32 %v3907, %v3912
    %v3914 = vsub.f32 %v3888, %v3913
    %v3915 = vlaneseq
    %v3916 = vshrl.u32 %v3915, 7
    %v3917 = vsub.s32 0, %v3916
    %v3918 = vrot.slane %v3897, %v3917
    %v3919 = vmul.f32 %v3907, %v3918
    %v3920 = vsub.f32 %v3885, %v3919
    %v3921 = vrcp.pop %v3914
    %v3922 = vmul.f32 1.0, %v3921
    %3924 = vset.pattern.permute.xlu0 1
    %3925 = vperm.xlu0 %3924, %v3922
    %v3926 = vpop.permute.xlu0 %3925
    %v3928 = vmul.f32 %v3914, %v3926
    %v3929 = vmul.f32 %v3920, %v3926
    %v3930 = vsub.f32 %v3914, 1.0
    %v3931 = vlaneseq
    %v3932 = vshrl.u32 %v3931, 7
    %v3933 = vsub.s32 1, %v3932
    %v3934 = vrot.slane %v3930, %v3933
    %v3935 = vsel %vm1871, %v3934, %v3914
    %3937 = vset.pattern.permute.xlu0 1
    %3938 = vperm.xlu0 %3937, %v3935
    %v3939 = vpop.permute.xlu0 %3938
    %v3941 = vlaneseq
    %v3942 = vshrl.u32 %v3941, 7
    %v3943 = vsub.s32 1, %v3942
    %v3944 = vrot.slane %v3928, %v3943
    %v3945 = vmul.f32 %v3939, %v3944
    %v3946 = vsub.f32 %v3914, %v3945
    %v3947 = vlaneseq
    %v3948 = vshrl.u32 %v3947, 7
    %v3949 = vsub.s32 1, %v3948
    %v3950 = vrot.slane %v3929, %v3949
    %v3951 = vmul.f32 %v3939, %v3950
    %v3952 = vsub.f32 %v3920, %v3951
    %v3953 = vrcp.pop %v3946
    %v3954 = vmul.f32 1.0, %v3953
    %3956 = vset.pattern.permute.xlu0 2
    %3957 = vperm.xlu0 %3956, %v3954
    %v3958 = vpop.permute.xlu0 %3957
    %v3960 = vmul.f32 %v3946, %v3958
    %v3961 = vmul.f32 %v3952, %v3958
    %v3962 = vsub.f32 %v3946, 1.0
    %v3963 = vlaneseq
    %v3964 = vshrl.u32 %v3963, 7
    %v3965 = vsub.s32 2, %v3964
    %v3966 = vrot.slane %v3962, %v3965
    %v3967 = vsel %vm1904, %v3966, %v3946
    %3969 = vset.pattern.permute.xlu0 2
    %3970 = vperm.xlu0 %3969, %v3967
    %v3971 = vpop.permute.xlu0 %3970
    %v3973 = vlaneseq
    %v3974 = vshrl.u32 %v3973, 7
    %v3975 = vsub.s32 2, %v3974
    %v3976 = vrot.slane %v3960, %v3975
    %v3977 = vmul.f32 %v3971, %v3976
    %v3978 = vsub.f32 %v3946, %v3977
    %v3979 = vlaneseq
    %v3980 = vshrl.u32 %v3979, 7
    %v3981 = vsub.s32 2, %v3980
    %v3982 = vrot.slane %v3961, %v3981
    %v3983 = vmul.f32 %v3971, %v3982
    %v3984 = vsub.f32 %v3952, %v3983
    %v3985 = vrcp.pop %v3978
    %v3986 = vmul.f32 1.0, %v3985
    %3988 = vset.pattern.permute.xlu0 3
    %3989 = vperm.xlu0 %3988, %v3986
    %v3990 = vpop.permute.xlu0 %3989
    %v3992 = vmul.f32 %v3978, %v3990
    %v3993 = vmul.f32 %v3984, %v3990
    %v3994 = vsub.f32 %v3978, 1.0
    %v3995 = vlaneseq
    %v3996 = vshrl.u32 %v3995, 7
    %v3997 = vsub.s32 3, %v3996
    %v3998 = vrot.slane %v3994, %v3997
    %v3999 = vsel %vm1937, %v3998, %v3978
    %4001 = vset.pattern.permute.xlu0 3
    %4002 = vperm.xlu0 %4001, %v3999
    %v4003 = vpop.permute.xlu0 %4002
    %v4005 = vlaneseq
    %v4006 = vshrl.u32 %v4005, 7
    %v4007 = vsub.s32 3, %v4006
    %v4008 = vrot.slane %v3992, %v4007
    %v4009 = vmul.f32 %v4003, %v4008
    %v4010 = vsub.f32 %v3978, %v4009
    %v4011 = vlaneseq
    %v4012 = vshrl.u32 %v4011, 7
    %v4013 = vsub.s32 3, %v4012
    %v4014 = vrot.slane %v3993, %v4013
    %v4015 = vmul.f32 %v4003, %v4014
    %v4016 = vsub.f32 %v3984, %v4015
    %v4017 = vrcp.pop %v4010
    %v4018 = vmul.f32 1.0, %v4017
    %4020 = vset.pattern.permute.xlu0 4
    %4021 = vperm.xlu0 %4020, %v4018
    %v4022 = vpop.permute.xlu0 %4021
    %v4024 = vmul.f32 %v4010, %v4022
    %v4025 = vmul.f32 %v4016, %v4022
    %v4026 = vsub.f32 %v4010, 1.0
    %v4027 = vlaneseq
    %v4028 = vshrl.u32 %v4027, 7
    %v4029 = vsub.s32 4, %v4028
    %v4030 = vrot.slane %v4026, %v4029
    %v4031 = vsel %vm1970, %v4030, %v4010
    %4033 = vset.pattern.permute.xlu0 4
    %4034 = vperm.xlu0 %4033, %v4031
    %v4035 = vpop.permute.xlu0 %4034
    %v4037 = vlaneseq
    %v4038 = vshrl.u32 %v4037, 7
    %v4039 = vsub.s32 4, %v4038
    %v4040 = vrot.slane %v4024, %v4039
    %v4041 = vmul.f32 %v4035, %v4040
    %v4042 = vsub.f32 %v4010, %v4041
    %v4043 = vlaneseq
    %v4044 = vshrl.u32 %v4043, 7
    %v4045 = vsub.s32 4, %v4044
    %v4046 = vrot.slane %v4025, %v4045
    %v4047 = vmul.f32 %v4035, %v4046
    %v4048 = vsub.f32 %v4016, %v4047
    %v4049 = vrcp.pop %v4042
    %v4050 = vmul.f32 1.0, %v4049
    %4052 = vset.pattern.permute.xlu0 5
    %4053 = vperm.xlu0 %4052, %v4050
    %v4054 = vpop.permute.xlu0 %4053
    %v4056 = vmul.f32 %v4042, %v4054
    %v4057 = vmul.f32 %v4048, %v4054
    %v4058 = vsub.f32 %v4042, 1.0
    %v4059 = vlaneseq
    %v4060 = vshrl.u32 %v4059, 7
    %v4061 = vsub.s32 5, %v4060
    %v4062 = vrot.slane %v4058, %v4061
    %v4063 = vsel %vm2003, %v4062, %v4042
    %4065 = vset.pattern.permute.xlu0 5
    %4066 = vperm.xlu0 %4065, %v4063
    %v4067 = vpop.permute.xlu0 %4066
    %v4069 = vlaneseq
    %v4070 = vshrl.u32 %v4069, 7
    %v4071 = vsub.s32 5, %v4070
    %v4072 = vrot.slane %v4056, %v4071
    %v4073 = vmul.f32 %v4067, %v4072
    %v4074 = vsub.f32 %v4042, %v4073
    %v4075 = vlaneseq
    %v4076 = vshrl.u32 %v4075, 7
    %v4077 = vsub.s32 5, %v4076
    %v4078 = vrot.slane %v4057, %v4077
    %v4079 = vmul.f32 %v4067, %v4078
    %v4080 = vsub.f32 %v4048, %v4079
    %v4081 = vrcp.pop %v4074
    %v4082 = vmul.f32 1.0, %v4081
    %4084 = vset.pattern.permute.xlu0 6
    %4085 = vperm.xlu0 %4084, %v4082
    %v4086 = vpop.permute.xlu0 %4085
    %v4088 = vmul.f32 %v4074, %v4086
    %v4089 = vmul.f32 %v4080, %v4086
    %v4090 = vsub.f32 %v4074, 1.0
    %v4091 = vlaneseq
    %v4092 = vshrl.u32 %v4091, 7
    %v4093 = vsub.s32 6, %v4092
    %v4094 = vrot.slane %v4090, %v4093
    %v4095 = vsel %vm2036, %v4094, %v4074
    %4097 = vset.pattern.permute.xlu0 6
    %4098 = vperm.xlu0 %4097, %v4095
    %v4099 = vpop.permute.xlu0 %4098
    %v4101 = vlaneseq
    %v4102 = vshrl.u32 %v4101, 7
    %v4103 = vsub.s32 6, %v4102
    %v4104 = vrot.slane %v4088, %v4103
    %v4105 = vmul.f32 %v4099, %v4104
    %v4106 = vsub.f32 %v4074, %v4105
    %v4107 = vlaneseq
    %v4108 = vshrl.u32 %v4107, 7
    %v4109 = vsub.s32 6, %v4108
    %v4110 = vrot.slane %v4089, %v4109
    %v4111 = vmul.f32 %v4099, %v4110
    %v4112 = vsub.f32 %v4080, %v4111
    %v4113 = vrcp.pop %v4106
    %v4114 = vmul.f32 1.0, %v4113
    %4116 = vset.pattern.permute.xlu0 7
    %4117 = vperm.xlu0 %4116, %v4114
    %v4118 = vpop.permute.xlu0 %4117
    %v4120 = vmul.f32 %v4112, %v4118
    %v4121 = vsub.f32 %v4106, 1.0
    %v4122 = vlaneseq
    %v4123 = vshrl.u32 %v4122, 7
    %v4124 = vsub.s32 7, %v4123
    %v4125 = vrot.slane %v4121, %v4124
    %v4126 = vsel %vm2068, %v4125, %v4106
    %4128 = vset.pattern.permute.xlu0 7
    %4129 = vperm.xlu0 %4128, %v4126
    %v4130 = vpop.permute.xlu0 %4129
    %v4132 = vlaneseq
    %v4133 = vshrl.u32 %v4132, 7
    %v4134 = vsub.s32 7, %v4133
    %v4135 = vrot.slane %v4120, %v4134
    %v4136 = vmul.f32 %v4130, %v4135
    %v4137 = vsub.f32 %v4112, %v4136
    %v4138 = vld [vmem:[%s1 + $0x4] sm:$0x1]
    %v4139 = vsub.f32 %v4138, %v3742
    %v4141 = vsel %vm1553, %v4139, 0
    %4143 = vmatprep.subr.mxu0 0.0
    %4144 = vmatpush1.msra.mxu0 0.0
    %4145 = vmatprep.subr.mxu0 0.0
    %4146 = vmatpush1.msra.mxu0 0.0
    %4147 = vmatprep.subr.mxu0 0.0
    %4148 = vmatpush1.msra.mxu0 0.0
    %4149 = vmatprep.subr.mxu0 0.0
    %4150 = vmatpush1.msra.mxu0 0.0
    %4151 = vmatprep.subr.mxu0 0.0
    %4152 = vmatpush1.msra.mxu0 0.0
    %4153 = vmatprep.subr.mxu0 0.0
    %4154 = vmatpush1.msra.mxu0 0.0
    %4155 = vmatprep.subr.mxu0 0.0
    %4156 = vmatpush1.msra.mxu0 0.0
    %4157 = vmatprep.subr.mxu0 0.0
    %4158 = vmatpush1.msra.mxu0 0.0
    %4159 = vmatprep.subr.mxu0 0.0
    %4160 = vmatpush1.msra.mxu0 0.0
    %4161 = vmatprep.subr.mxu0 0.0
    %4162 = vmatpush1.msra.mxu0 0.0
    %4163 = vmatprep.subr.mxu0 0.0
    %4164 = vmatpush1.msra.mxu0 0.0
    %4165 = vmatprep.subr.mxu0 0.0
    %4166 = vmatpush1.msra.mxu0 0.0
    %4167 = vmatprep.subr.mxu0 0.0
    %4168 = vmatpush1.msra.mxu0 0.0
    %4169 = vmatprep.subr.mxu0 0.0
    %4170 = vmatpush1.msra.mxu0 0.0
    %4171 = vmatprep.subr.mxu0 0.0
    %4172 = vmatpush1.msra.mxu0 0.0
    %4173 = vmatprep.subr.mxu0 0.0
    %4174 = vmatpush1.msra.mxu0 %v4137
    %4175 = vmatprep.subr.mxu0 0.0
    %4176 = vmatpush2.msra.mxu0 0.0
    %4177 = vmatprep.subr.mxu0 0.0
    %4178 = vmatpush2.msra.mxu0 0.0
    %4179 = vmatprep.subr.mxu0 0.0
    %4180 = vmatpush2.msra.mxu0 0.0
    %4181 = vmatprep.subr.mxu0 0.0
    %4182 = vmatpush2.msra.mxu0 0.0
    %4183 = vmatprep.subr.mxu0 0.0
    %4184 = vmatpush2.msra.mxu0 0.0
    %4185 = vmatprep.subr.mxu0 0.0
    %4186 = vmatpush2.msra.mxu0 0.0
    %4187 = vmatprep.subr.mxu0 0.0
    %4188 = vmatpush2.msra.mxu0 0.0
    %4189 = vmatprep.subr.mxu0 0.0
    %4190 = vmatpush2.msra.mxu0 0.0
    %4191 = vmatprep.subr.mxu0 0.0
    %4192 = vmatpush2.msra.mxu0 0.0
    %4193 = vmatprep.subr.mxu0 0.0
    %4194 = vmatpush2.msra.mxu0 0.0
    %4195 = vmatprep.subr.mxu0 0.0
    %4196 = vmatpush2.msra.mxu0 0.0
    %4197 = vmatprep.subr.mxu0 0.0
    %4198 = vmatpush2.msra.mxu0 0.0
    %4199 = vmatprep.subr.mxu0 0.0
    %4200 = vmatpush2.msra.mxu0 0.0
    %4201 = vmatprep.subr.mxu0 0.0
    %4202 = vmatpush2.msra.mxu0 0.0
    %4203 = vmatprep.subr.mxu0 0.0
    %4204 = vmatpush2.msra.mxu0 0.0
    %4205 = vmatprep.subr.mxu0 0.0
    %4206 = vmatpush2.msra.mxu0 0.0
    %4207 = vmatprep.mubr.f32.mxu0 0.0
    %4208 = vmatmul.mubr.f32.gmra.mxu0 %v4141
    %v4209 = vpop.f32.mrf.mxu0
    %v4210 = vadd.f32 0.0, %v4209
    %v4211 = vpop.f32.mrf.mxu0
    %4212 = vdwg.mxu0
    %v4213 = vadd.f32 %v3742, %v4210
    %v4215 = vsel %vm1553, %v3885, 0
    %4217 = vmatprep.subr.mxu0 0.0
    %4218 = vmatpush1.msra.mxu0 0.0
    %4219 = vmatprep.subr.mxu0 0.0
    %4220 = vmatpush1.msra.mxu0 0.0
    %4221 = vmatprep.subr.mxu0 0.0
    %4222 = vmatpush1.msra.mxu0 0.0
    %4223 = vmatprep.subr.mxu0 0.0
    %4224 = vmatpush1.msra.mxu0 0.0
    %4225 = vmatprep.subr.mxu0 0.0
    %4226 = vmatpush1.msra.mxu0 0.0
    %4227 = vmatprep.subr.mxu0 0.0
    %4228 = vmatpush1.msra.mxu0 0.0
    %4229 = vmatprep.subr.mxu0 0.0
    %4230 = vmatpush1.msra.mxu0 0.0
    %4231 = vmatprep.subr.mxu0 0.0
    %4232 = vmatpush1.msra.mxu0 0.0
    %4233 = vmatprep.subr.mxu0 0.0
    %4234 = vmatpush1.msra.mxu0 0.0
    %4235 = vmatprep.subr.mxu0 0.0
    %4236 = vmatpush1.msra.mxu0 0.0
    %4237 = vmatprep.subr.mxu0 0.0
    %4238 = vmatpush1.msra.mxu0 0.0
    %4239 = vmatprep.subr.mxu0 0.0
    %4240 = vmatpush1.msra.mxu0 0.0
    %4241 = vmatprep.subr.mxu0 0.0
    %4242 = vmatpush1.msra.mxu0 0.0
    %4243 = vmatprep.subr.mxu0 0.0
    %4244 = vmatpush1.msra.mxu0 0.0
    %4245 = vmatprep.subr.mxu0 0.0
    %4246 = vmatpush1.msra.mxu0 0.0
    %4247 = vmatprep.subr.mxu0 0.0
    %4248 = vmatpush1.msra.mxu0 %v4137
    %4249 = vmatprep.subr.mxu0 0.0
    %4250 = vmatpush2.msra.mxu0 0.0
    %4251 = vmatprep.subr.mxu0 0.0
    %4252 = vmatpush2.msra.mxu0 0.0
    %4253 = vmatprep.subr.mxu0 0.0
    %4254 = vmatpush2.msra.mxu0 0.0
    %4255 = vmatprep.subr.mxu0 0.0
    %4256 = vmatpush2.msra.mxu0 0.0
    %4257 = vmatprep.subr.mxu0 0.0
    %4258 = vmatpush2.msra.mxu0 0.0
    %4259 = vmatprep.subr.mxu0 0.0
    %4260 = vmatpush2.msra.mxu0 0.0
    %4261 = vmatprep.subr.mxu0 0.0
    %4262 = vmatpush2.msra.mxu0 0.0
    %4263 = vmatprep.subr.mxu0 0.0
    %4264 = vmatpush2.msra.mxu0 0.0
    %4265 = vmatprep.subr.mxu0 0.0
    %4266 = vmatpush2.msra.mxu0 0.0
    %4267 = vmatprep.subr.mxu0 0.0
    %4268 = vmatpush2.msra.mxu0 0.0
    %4269 = vmatprep.subr.mxu0 0.0
    %4270 = vmatpush2.msra.mxu0 0.0
    %4271 = vmatprep.subr.mxu0 0.0
    %4272 = vmatpush2.msra.mxu0 0.0
    %4273 = vmatprep.subr.mxu0 0.0
    %4274 = vmatpush2.msra.mxu0 0.0
    %4275 = vmatprep.subr.mxu0 0.0
    %4276 = vmatpush2.msra.mxu0 0.0
    %4277 = vmatprep.subr.mxu0 0.0
    %4278 = vmatpush2.msra.mxu0 0.0
    %4279 = vmatprep.subr.mxu0 0.0
    %4280 = vmatpush2.msra.mxu0 0.0
    %4281 = vmatprep.mubr.f32.mxu0 0.0
    %4282 = vmatmul.mubr.f32.gmra.mxu0 %v4215
    %v4283 = vpop.f32.mrf.mxu0
    %v4284 = vadd.f32 0.0, %v4283
    %v4285 = vpop.f32.mrf.mxu0
    %4286 = vdwg.mxu0
    %v4287 = vsub.f32 %v1519, %v4284
    %v4289 = vrot.slane %v4287, 1
    %4290 = vrot.lane.b32.xlu0 %v4289, 8
    %v4291 = vpop.permute.xlu0 %4290
    %v4293 = vrot.slane %v4287, 2
    %4294 = vrot.lane.b32.xlu0 %v4293, 16
    %v4295 = vpop.permute.xlu0 %4294
    %v4297 = vrot.slane %v4287, 3
    %4298 = vrot.lane.b32.xlu0 %v4297, 24
    %v4299 = vpop.permute.xlu0 %4298
    %v4301 = vrot.slane %v4287, 4
    %4302 = vrot.lane.b32.xlu0 %v4301, 32
    %v4303 = vpop.permute.xlu0 %4302
    %v4305 = vrot.slane %v4287, 5
    %4306 = vrot.lane.b32.xlu0 %v4305, 40
    %v4307 = vpop.permute.xlu0 %4306
    %v4309 = vrot.slane %v4287, 6
    %4310 = vrot.lane.b32.xlu0 %v4309, 48
    %v4311 = vpop.permute.xlu0 %4310
    %v4313 = vrot.slane %v4287, 7
    %4314 = vrot.lane.b32.xlu0 %v4313, 56
    %v4315 = vpop.permute.xlu0 %4314
    %v4317 = vsel %vm1553, %v4287, %v4291
    %v4318 = vsel %vm111, %v4317, %v4295
    %v4319 = vsel %vm1556, %v4318, %v4299
    %v4320 = vsel %vm1558, %v4319, %v4303
    %v4321 = vsel %vm1560, %v4320, %v4307
    %v4322 = vsel %vm1562, %v4321, %v4311
    %v4323 = vsel %vm1564, %v4322, %v4315
    %4325 = vrot.lane.b32.xlu0 %v1583, 120
    %v4326 = vpop.permute.xlu0 %4325
    %4328 = vrot.lane.b32.xlu0 %v1587, 112
    %v4329 = vpop.permute.xlu0 %4328
    %4331 = vrot.lane.b32.xlu0 %v1591, 104
    %v4332 = vpop.permute.xlu0 %4331
    %4334 = vrot.lane.b32.xlu0 %v1510, 96
    %v4335 = vpop.permute.xlu0 %4334
    %4337 = vrot.lane.b32.xlu0 %v1567, 88
    %v4338 = vpop.permute.xlu0 %4337
    %4340 = vrot.lane.b32.xlu0 %v1571, 80
    %v4341 = vpop.permute.xlu0 %4340
    %4343 = vrot.lane.b32.xlu0 %v1575, 72
    %v4344 = vpop.permute.xlu0 %4343
    %v4346 = vsel %vm1595, %v1579, %v4326
    %v4347 = vsel %vm1597, %v4346, %v4329
    %v4348 = vsel %vm1599, %v4347, %v4332
    %v4349 = vsel %vm1601, %v4348, %v4335
    %v4350 = vsel %vm1603, %v4349, %v4338
    %v4351 = vsel %vm1605, %v4350, %v4341
    %v4352 = vsel %vm1607, %v4351, %v4344
    %v4354 = vsel %vm1553, %v4213, 0
    %v4357 = vsel %vm1553, %v4352, 0
    %4359 = vmatprep.subr.mxu0 0.0
    %4360 = vmatpush1.xpose.msra.mxu0 0.0
    %4361 = vmatprep.subr.mxu0 0.0
    %4362 = vmatpush1.xpose.msra.mxu0 0.0
    %4363 = vmatprep.subr.mxu0 0.0
    %4364 = vmatpush1.xpose.msra.mxu0 0.0
    %4365 = vmatprep.subr.mxu0 0.0
    %4366 = vmatpush1.xpose.msra.mxu0 0.0
    %4367 = vmatprep.subr.mxu0 0.0
    %4368 = vmatpush1.xpose.msra.mxu0 0.0
    %4369 = vmatprep.subr.mxu0 0.0
    %4370 = vmatpush1.xpose.msra.mxu0 0.0
    %4371 = vmatprep.subr.mxu0 0.0
    %4372 = vmatpush1.xpose.msra.mxu0 0.0
    %4373 = vmatprep.subr.mxu0 0.0
    %4374 = vmatpush1.xpose.msra.mxu0 0.0
    %4375 = vmatprep.subr.mxu0 0.0
    %4376 = vmatpush1.xpose.msra.mxu0 0.0
    %4377 = vmatprep.subr.mxu0 0.0
    %4378 = vmatpush1.xpose.msra.mxu0 0.0
    %4379 = vmatprep.subr.mxu0 0.0
    %4380 = vmatpush1.xpose.msra.mxu0 0.0
    %4381 = vmatprep.subr.mxu0 0.0
    %4382 = vmatpush1.xpose.msra.mxu0 0.0
    %4383 = vmatprep.subr.mxu0 0.0
    %4384 = vmatpush1.xpose.msra.mxu0 0.0
    %4385 = vmatprep.subr.mxu0 0.0
    %4386 = vmatpush1.xpose.msra.mxu0 0.0
    %4387 = vmatprep.subr.mxu0 0.0
    %4388 = vmatpush1.xpose.msra.mxu0 0.0
    %4389 = vmatprep.subr.mxu0 0.0
    %4390 = vmatpush1.xpose.msra.mxu0 %v4357
    %4391 = vmatprep.subr.mxu0 0.0
    %4392 = vmatpush2.xpose.msra.mxu0 0.0
    %4393 = vmatprep.subr.mxu0 0.0
    %4394 = vmatpush2.xpose.msra.mxu0 0.0
    %4395 = vmatprep.subr.mxu0 0.0
    %4396 = vmatpush2.xpose.msra.mxu0 0.0
    %4397 = vmatprep.subr.mxu0 0.0
    %4398 = vmatpush2.xpose.msra.mxu0 0.0
    %4399 = vmatprep.subr.mxu0 0.0
    %4400 = vmatpush2.xpose.msra.mxu0 0.0
    %4401 = vmatprep.subr.mxu0 0.0
    %4402 = vmatpush2.xpose.msra.mxu0 0.0
    %4403 = vmatprep.subr.mxu0 0.0
    %4404 = vmatpush2.xpose.msra.mxu0 0.0
    %4405 = vmatprep.subr.mxu0 0.0
    %4406 = vmatpush2.xpose.msra.mxu0 0.0
    %4407 = vmatprep.subr.mxu0 0.0
    %4408 = vmatpush2.xpose.msra.mxu0 0.0
    %4409 = vmatprep.subr.mxu0 0.0
    %4410 = vmatpush2.xpose.msra.mxu0 0.0
    %4411 = vmatprep.subr.mxu0 0.0
    %4412 = vmatpush2.xpose.msra.mxu0 0.0
    %4413 = vmatprep.subr.mxu0 0.0
    %4414 = vmatpush2.xpose.msra.mxu0 0.0
    %4415 = vmatprep.subr.mxu0 0.0
    %4416 = vmatpush2.xpose.msra.mxu0 0.0
    %4417 = vmatprep.subr.mxu0 0.0
    %4418 = vmatpush2.xpose.msra.mxu0 0.0
    %4419 = vmatprep.subr.mxu0 0.0
    %4420 = vmatpush2.xpose.msra.mxu0 0.0
    %4421 = vmatprep.subr.mxu0 0.0
    %4422 = vmatpush2.xpose.msra.mxu0 0.0
    %4423 = vmatprep.mubr.f32.mxu0 0.0
    %4424 = vmatmul.mubr.f32.gmra.mxu0 %v4354
    %v4425 = vpop.f32.mrf.mxu0
    %v4426 = vadd.f32 0.0, %v4425
    %v4427 = vpop.f32.mrf.mxu0
    %4428 = vdwg.mxu0
    %4429 = vmatprep.subr.mxu0 0.0
    %4430 = vmatpush1.msra.mxu0 0.0
    %4431 = vmatprep.subr.mxu0 0.0
    %4432 = vmatpush1.msra.mxu0 0.0
    %4433 = vmatprep.subr.mxu0 0.0
    %4434 = vmatpush1.msra.mxu0 0.0
    %4435 = vmatprep.subr.mxu0 0.0
    %4436 = vmatpush1.msra.mxu0 0.0
    %4437 = vmatprep.subr.mxu0 0.0
    %4438 = vmatpush1.msra.mxu0 0.0
    %4439 = vmatprep.subr.mxu0 0.0
    %4440 = vmatpush1.msra.mxu0 0.0
    %4441 = vmatprep.subr.mxu0 0.0
    %4442 = vmatpush1.msra.mxu0 0.0
    %4443 = vmatprep.subr.mxu0 0.0
    %4444 = vmatpush1.msra.mxu0 0.0
    %4445 = vmatprep.subr.mxu0 0.0
    %4446 = vmatpush1.msra.mxu0 0.0
    %4447 = vmatprep.subr.mxu0 0.0
    %4448 = vmatpush1.msra.mxu0 0.0
    %4449 = vmatprep.subr.mxu0 0.0
    %4450 = vmatpush1.msra.mxu0 0.0
    %4451 = vmatprep.subr.mxu0 0.0
    %4452 = vmatpush1.msra.mxu0 0.0
    %4453 = vmatprep.subr.mxu0 0.0
    %4454 = vmatpush1.msra.mxu0 0.0
    %4455 = vmatprep.subr.mxu0 0.0
    %4456 = vmatpush1.msra.mxu0 0.0
    %4457 = vmatprep.subr.mxu0 0.0
    %4458 = vmatpush1.msra.mxu0 0.0
    %4459 = vmatprep.subr.mxu0 0.0
    %4460 = vmatpush1.msra.mxu0 %v4287
    %4461 = vmatprep.subr.mxu0 0.0
    %4462 = vmatpush2.msra.mxu0 0.0
    %4463 = vmatprep.subr.mxu0 0.0
    %4464 = vmatpush2.msra.mxu0 0.0
    %4465 = vmatprep.subr.mxu0 0.0
    %4466 = vmatpush2.msra.mxu0 0.0
    %4467 = vmatprep.subr.mxu0 0.0
    %4468 = vmatpush2.msra.mxu0 0.0
    %4469 = vmatprep.subr.mxu0 0.0
    %4470 = vmatpush2.msra.mxu0 0.0
    %4471 = vmatprep.subr.mxu0 0.0
    %4472 = vmatpush2.msra.mxu0 0.0
    %4473 = vmatprep.subr.mxu0 0.0
    %4474 = vmatpush2.msra.mxu0 0.0
    %4475 = vmatprep.subr.mxu0 0.0
    %4476 = vmatpush2.msra.mxu0 0.0
    %4477 = vmatprep.subr.mxu0 0.0
    %4478 = vmatpush2.msra.mxu0 0.0
    %4479 = vmatprep.subr.mxu0 0.0
    %4480 = vmatpush2.msra.mxu0 0.0
    %4481 = vmatprep.subr.mxu0 0.0
    %4482 = vmatpush2.msra.mxu0 0.0
    %4483 = vmatprep.subr.mxu0 0.0
    %4484 = vmatpush2.msra.mxu0 0.0
    %4485 = vmatprep.subr.mxu0 0.0
    %4486 = vmatpush2.msra.mxu0 0.0
    %4487 = vmatprep.subr.mxu0 0.0
    %4488 = vmatpush2.msra.mxu0 0.0
    %4489 = vmatprep.subr.mxu0 0.0
    %4490 = vmatpush2.msra.mxu0 0.0
    %4491 = vmatprep.subr.mxu0 0.0
    %4492 = vmatpush2.msra.mxu0 0.0
    %4493 = vmatprep.mubr.f32.mxu0 0.0
    %4494 = vmatmul.mubr.f32.gmra.mxu0 %v4357
    %v4495 = vpop.f32.mrf.mxu0
    %v4496 = vadd.f32 0.0, %v4495
    %v4497 = vpop.f32.mrf.mxu0
    %4498 = vdwg.mxu0
    %v4500 = vsel %vm1553, %v4496, 0
    %4502 = vmatprep.subr.mxu0 0.0
    %4503 = vmatpush1.xpose.msra.mxu0 0.0
    %4504 = vmatprep.subr.mxu0 0.0
    %4505 = vmatpush1.xpose.msra.mxu0 0.0
    %4506 = vmatprep.subr.mxu0 0.0
    %4507 = vmatpush1.xpose.msra.mxu0 0.0
    %4508 = vmatprep.subr.mxu0 0.0
    %4509 = vmatpush1.xpose.msra.mxu0 0.0
    %4510 = vmatprep.subr.mxu0 0.0
    %4511 = vmatpush1.xpose.msra.mxu0 0.0
    %4512 = vmatprep.subr.mxu0 0.0
    %4513 = vmatpush1.xpose.msra.mxu0 0.0
    %4514 = vmatprep.subr.mxu0 0.0
    %4515 = vmatpush1.xpose.msra.mxu0 0.0
    %4516 = vmatprep.subr.mxu0 0.0
    %4517 = vmatpush1.xpose.msra.mxu0 0.0
    %4518 = vmatprep.subr.mxu0 0.0
    %4519 = vmatpush1.xpose.msra.mxu0 0.0
    %4520 = vmatprep.subr.mxu0 0.0
    %4521 = vmatpush1.xpose.msra.mxu0 0.0
    %4522 = vmatprep.subr.mxu0 0.0
    %4523 = vmatpush1.xpose.msra.mxu0 0.0
    %4524 = vmatprep.subr.mxu0 0.0
    %4525 = vmatpush1.xpose.msra.mxu0 0.0
    %4526 = vmatprep.subr.mxu0 0.0
    %4527 = vmatpush1.xpose.msra.mxu0 0.0
    %4528 = vmatprep.subr.mxu0 0.0
    %4529 = vmatpush1.xpose.msra.mxu0 0.0
    %4530 = vmatprep.subr.mxu0 0.0
    %4531 = vmatpush1.xpose.msra.mxu0 0.0
    %4532 = vmatprep.subr.mxu0 0.0
    %4533 = vmatpush1.xpose.msra.mxu0 %v4357
    %4534 = vmatprep.subr.mxu0 0.0
    %4535 = vmatpush2.xpose.msra.mxu0 0.0
    %4536 = vmatprep.subr.mxu0 0.0
    %4537 = vmatpush2.xpose.msra.mxu0 0.0
    %4538 = vmatprep.subr.mxu0 0.0
    %4539 = vmatpush2.xpose.msra.mxu0 0.0
    %4540 = vmatprep.subr.mxu0 0.0
    %4541 = vmatpush2.xpose.msra.mxu0 0.0
    %4542 = vmatprep.subr.mxu0 0.0
    %4543 = vmatpush2.xpose.msra.mxu0 0.0
    %4544 = vmatprep.subr.mxu0 0.0
    %4545 = vmatpush2.xpose.msra.mxu0 0.0
    %4546 = vmatprep.subr.mxu0 0.0
    %4547 = vmatpush2.xpose.msra.mxu0 0.0
    %4548 = vmatprep.subr.mxu0 0.0
    %4549 = vmatpush2.xpose.msra.mxu0 0.0
    %4550 = vmatprep.subr.mxu0 0.0
    %4551 = vmatpush2.xpose.msra.mxu0 0.0
    %4552 = vmatprep.subr.mxu0 0.0
    %4553 = vmatpush2.xpose.msra.mxu0 0.0
    %4554 = vmatprep.subr.mxu0 0.0
    %4555 = vmatpush2.xpose.msra.mxu0 0.0
    %4556 = vmatprep.subr.mxu0 0.0
    %4557 = vmatpush2.xpose.msra.mxu0 0.0
    %4558 = vmatprep.subr.mxu0 0.0
    %4559 = vmatpush2.xpose.msra.mxu0 0.0
    %4560 = vmatprep.subr.mxu0 0.0
    %4561 = vmatpush2.xpose.msra.mxu0 0.0
    %4562 = vmatprep.subr.mxu0 0.0
    %4563 = vmatpush2.xpose.msra.mxu0 0.0
    %4564 = vmatprep.subr.mxu0 0.0
    %4565 = vmatpush2.xpose.msra.mxu0 0.0
    %4566 = vmatprep.mubr.f32.mxu0 0.0
    %4567 = vmatmul.mubr.f32.gmra.mxu0 %v4500
    %v4568 = vpop.f32.mrf.mxu0
    %v4569 = vadd.f32 %v1521, %v4568
    %v4570 = vpop.f32.mrf.mxu0
    %4571 = vdwg.mxu0
    %v4572 = vadd.f32 %v4569, %v1523
    %v4573 = vrcp.pop %v4572
    %v4574 = vmul.f32 1.0, %v4573
    %4576 = vset.pattern.permute.xlu0 0
    %4577 = vperm.xlu0 %4576, %v4574
    %v4578 = vpop.permute.xlu0 %4577
    %v4580 = vmul.f32 %v4572, %v4578
    %v4581 = vmul.f32 %v4569, %v4578
    %v4582 = vsub.f32 %v4572, 1.0
    %v4583 = vlaneseq
    %v4584 = vshrl.u32 %v4583, 7
    %v4585 = vsub.s32 0, %v4584
    %v4586 = vrot.slane %v4582, %v4585
    %v4587 = vsel %vm1838, %v4586, %v4572
    %4589 = vset.pattern.permute.xlu0 0
    %4590 = vperm.xlu0 %4589, %v4587
    %v4591 = vpop.permute.xlu0 %4590
    %v4593 = vlaneseq
    %v4594 = vshrl.u32 %v4593, 7
    %v4595 = vsub.s32 0, %v4594
    %v4596 = vrot.slane %v4580, %v4595
    %v4597 = vmul.f32 %v4591, %v4596
    %v4598 = vsub.f32 %v4572, %v4597
    %v4599 = vlaneseq
    %v4600 = vshrl.u32 %v4599, 7
    %v4601 = vsub.s32 0, %v4600
    %v4602 = vrot.slane %v4581, %v4601
    %v4603 = vmul.f32 %v4591, %v4602
    %v4604 = vsub.f32 %v4569, %v4603
    %v4605 = vrcp.pop %v4598
    %v4606 = vmul.f32 1.0, %v4605
    %4608 = vset.pattern.permute.xlu0 1
    %4609 = vperm.xlu0 %4608, %v4606
    %v4610 = vpop.permute.xlu0 %4609
    %v4612 = vmul.f32 %v4598, %v4610
    %v4613 = vmul.f32 %v4604, %v4610
    %v4614 = vsub.f32 %v4598, 1.0
    %v4615 = vlaneseq
    %v4616 = vshrl.u32 %v4615, 7
    %v4617 = vsub.s32 1, %v4616
    %v4618 = vrot.slane %v4614, %v4617
    %v4619 = vsel %vm1871, %v4618, %v4598
    %4621 = vset.pattern.permute.xlu0 1
    %4622 = vperm.xlu0 %4621, %v4619
    %v4623 = vpop.permute.xlu0 %4622
    %v4625 = vlaneseq
    %v4626 = vshrl.u32 %v4625, 7
    %v4627 = vsub.s32 1, %v4626
    %v4628 = vrot.slane %v4612, %v4627
    %v4629 = vmul.f32 %v4623, %v4628
    %v4630 = vsub.f32 %v4598, %v4629
    %v4631 = vlaneseq
    %v4632 = vshrl.u32 %v4631, 7
    %v4633 = vsub.s32 1, %v4632
    %v4634 = vrot.slane %v4613, %v4633
    %v4635 = vmul.f32 %v4623, %v4634
    %v4636 = vsub.f32 %v4604, %v4635
    %v4637 = vrcp.pop %v4630
    %v4638 = vmul.f32 1.0, %v4637
    %4640 = vset.pattern.permute.xlu0 2
    %4641 = vperm.xlu0 %4640, %v4638
    %v4642 = vpop.permute.xlu0 %4641
    %v4644 = vmul.f32 %v4630, %v4642
    %v4645 = vmul.f32 %v4636, %v4642
    %v4646 = vsub.f32 %v4630, 1.0
    %v4647 = vlaneseq
    %v4648 = vshrl.u32 %v4647, 7
    %v4649 = vsub.s32 2, %v4648
    %v4650 = vrot.slane %v4646, %v4649
    %v4651 = vsel %vm1904, %v4650, %v4630
    %4653 = vset.pattern.permute.xlu0 2
    %4654 = vperm.xlu0 %4653, %v4651
    %v4655 = vpop.permute.xlu0 %4654
    %v4657 = vlaneseq
    %v4658 = vshrl.u32 %v4657, 7
    %v4659 = vsub.s32 2, %v4658
    %v4660 = vrot.slane %v4644, %v4659
    %v4661 = vmul.f32 %v4655, %v4660
    %v4662 = vsub.f32 %v4630, %v4661
    %v4663 = vlaneseq
    %v4664 = vshrl.u32 %v4663, 7
    %v4665 = vsub.s32 2, %v4664
    %v4666 = vrot.slane %v4645, %v4665
    %v4667 = vmul.f32 %v4655, %v4666
    %v4668 = vsub.f32 %v4636, %v4667
    %v4669 = vrcp.pop %v4662
    %v4670 = vmul.f32 1.0, %v4669
    %4672 = vset.pattern.permute.xlu0 3
    %4673 = vperm.xlu0 %4672, %v4670
    %v4674 = vpop.permute.xlu0 %4673
    %v4676 = vmul.f32 %v4662, %v4674
    %v4677 = vmul.f32 %v4668, %v4674
    %v4678 = vsub.f32 %v4662, 1.0
    %v4679 = vlaneseq
    %v4680 = vshrl.u32 %v4679, 7
    %v4681 = vsub.s32 3, %v4680
    %v4682 = vrot.slane %v4678, %v4681
    %v4683 = vsel %vm1937, %v4682, %v4662
    %4685 = vset.pattern.permute.xlu0 3
    %4686 = vperm.xlu0 %4685, %v4683
    %v4687 = vpop.permute.xlu0 %4686
    %v4689 = vlaneseq
    %v4690 = vshrl.u32 %v4689, 7
    %v4691 = vsub.s32 3, %v4690
    %v4692 = vrot.slane %v4676, %v4691
    %v4693 = vmul.f32 %v4687, %v4692
    %v4694 = vsub.f32 %v4662, %v4693
    %v4695 = vlaneseq
    %v4696 = vshrl.u32 %v4695, 7
    %v4697 = vsub.s32 3, %v4696
    %v4698 = vrot.slane %v4677, %v4697
    %v4699 = vmul.f32 %v4687, %v4698
    %v4700 = vsub.f32 %v4668, %v4699
    %v4701 = vrcp.pop %v4694
    %v4702 = vmul.f32 1.0, %v4701
    %4704 = vset.pattern.permute.xlu0 4
    %4705 = vperm.xlu0 %4704, %v4702
    %v4706 = vpop.permute.xlu0 %4705
    %v4708 = vmul.f32 %v4694, %v4706
    %v4709 = vmul.f32 %v4700, %v4706
    %v4710 = vsub.f32 %v4694, 1.0
    %v4711 = vlaneseq
    %v4712 = vshrl.u32 %v4711, 7
    %v4713 = vsub.s32 4, %v4712
    %v4714 = vrot.slane %v4710, %v4713
    %v4715 = vsel %vm1970, %v4714, %v4694
    %4717 = vset.pattern.permute.xlu0 4
    %4718 = vperm.xlu0 %4717, %v4715
    %v4719 = vpop.permute.xlu0 %4718
    %v4721 = vlaneseq
    %v4722 = vshrl.u32 %v4721, 7
    %v4723 = vsub.s32 4, %v4722
    %v4724 = vrot.slane %v4708, %v4723
    %v4725 = vmul.f32 %v4719, %v4724
    %v4726 = vsub.f32 %v4694, %v4725
    %v4727 = vlaneseq
    %v4728 = vshrl.u32 %v4727, 7
    %v4729 = vsub.s32 4, %v4728
    %v4730 = vrot.slane %v4709, %v4729
    %v4731 = vmul.f32 %v4719, %v4730
    %v4732 = vsub.f32 %v4700, %v4731
    %v4733 = vrcp.pop %v4726
    %v4734 = vmul.f32 1.0, %v4733
    %4736 = vset.pattern.permute.xlu0 5
    %4737 = vperm.xlu0 %4736, %v4734
    %v4738 = vpop.permute.xlu0 %4737
    %v4740 = vmul.f32 %v4726, %v4738
    %v4741 = vmul.f32 %v4732, %v4738
    %v4742 = vsub.f32 %v4726, 1.0
    %v4743 = vlaneseq
    %v4744 = vshrl.u32 %v4743, 7
    %v4745 = vsub.s32 5, %v4744
    %v4746 = vrot.slane %v4742, %v4745
    %v4747 = vsel %vm2003, %v4746, %v4726
    %4749 = vset.pattern.permute.xlu0 5
    %4750 = vperm.xlu0 %4749, %v4747
    %v4751 = vpop.permute.xlu0 %4750
    %v4753 = vlaneseq
    %v4754 = vshrl.u32 %v4753, 7
    %v4755 = vsub.s32 5, %v4754
    %v4756 = vrot.slane %v4740, %v4755
    %v4757 = vmul.f32 %v4751, %v4756
    %v4758 = vsub.f32 %v4726, %v4757
    %v4759 = vlaneseq
    %v4760 = vshrl.u32 %v4759, 7
    %v4761 = vsub.s32 5, %v4760
    %v4762 = vrot.slane %v4741, %v4761
    %v4763 = vmul.f32 %v4751, %v4762
    %v4764 = vsub.f32 %v4732, %v4763
    %v4765 = vrcp.pop %v4758
    %v4766 = vmul.f32 1.0, %v4765
    %4768 = vset.pattern.permute.xlu0 6
    %4769 = vperm.xlu0 %4768, %v4766
    %v4770 = vpop.permute.xlu0 %4769
    %v4772 = vmul.f32 %v4758, %v4770
    %v4773 = vmul.f32 %v4764, %v4770
    %v4774 = vsub.f32 %v4758, 1.0
    %v4775 = vlaneseq
    %v4776 = vshrl.u32 %v4775, 7
    %v4777 = vsub.s32 6, %v4776
    %v4778 = vrot.slane %v4774, %v4777
    %v4779 = vsel %vm2036, %v4778, %v4758
    %4781 = vset.pattern.permute.xlu0 6
    %4782 = vperm.xlu0 %4781, %v4779
    %v4783 = vpop.permute.xlu0 %4782
    %v4785 = vlaneseq
    %v4786 = vshrl.u32 %v4785, 7
    %v4787 = vsub.s32 6, %v4786
    %v4788 = vrot.slane %v4772, %v4787
    %v4789 = vmul.f32 %v4783, %v4788
    %v4790 = vsub.f32 %v4758, %v4789
    %v4791 = vlaneseq
    %v4792 = vshrl.u32 %v4791, 7
    %v4793 = vsub.s32 6, %v4792
    %v4794 = vrot.slane %v4773, %v4793
    %v4795 = vmul.f32 %v4783, %v4794
    %v4796 = vsub.f32 %v4764, %v4795
    %v4797 = vrcp.pop %v4790
    %v4798 = vmul.f32 1.0, %v4797
    %4800 = vset.pattern.permute.xlu0 7
    %4801 = vperm.xlu0 %4800, %v4798
    %v4802 = vpop.permute.xlu0 %4801
    %v4804 = vmul.f32 %v4796, %v4802
    %v4805 = vsub.f32 %v4790, 1.0
    %v4806 = vlaneseq
    %v4807 = vshrl.u32 %v4806, 7
    %v4808 = vsub.s32 7, %v4807
    %v4809 = vrot.slane %v4805, %v4808
    %v4810 = vsel %vm2068, %v4809, %v4790
    %4812 = vset.pattern.permute.xlu0 7
    %4813 = vperm.xlu0 %4812, %v4810
    %v4814 = vpop.permute.xlu0 %4813
    %v4816 = vlaneseq
    %v4817 = vshrl.u32 %v4816, 7
    %v4818 = vsub.s32 7, %v4817
    %v4819 = vrot.slane %v4804, %v4818
    %v4820 = vmul.f32 %v4814, %v4819
    %v4821 = vsub.f32 %v4796, %v4820
    %v4822 = vld [vmem:[%s1 + $0x5] sm:$0x1]
    %v4823 = vsub.f32 %v4822, %v4426
    %v4825 = vsel %vm1553, %v4823, 0
    %4827 = vmatprep.subr.mxu0 0.0
    %4828 = vmatpush1.msra.mxu0 0.0
    %4829 = vmatprep.subr.mxu0 0.0
    %4830 = vmatpush1.msra.mxu0 0.0
    %4831 = vmatprep.subr.mxu0 0.0
    %4832 = vmatpush1.msra.mxu0 0.0
    %4833 = vmatprep.subr.mxu0 0.0
    %4834 = vmatpush1.msra.mxu0 0.0
    %4835 = vmatprep.subr.mxu0 0.0
    %4836 = vmatpush1.msra.mxu0 0.0
    %4837 = vmatprep.subr.mxu0 0.0
    %4838 = vmatpush1.msra.mxu0 0.0
    %4839 = vmatprep.subr.mxu0 0.0
    %4840 = vmatpush1.msra.mxu0 0.0
    %4841 = vmatprep.subr.mxu0 0.0
    %4842 = vmatpush1.msra.mxu0 0.0
    %4843 = vmatprep.subr.mxu0 0.0
    %4844 = vmatpush1.msra.mxu0 0.0
    %4845 = vmatprep.subr.mxu0 0.0
    %4846 = vmatpush1.msra.mxu0 0.0
    %4847 = vmatprep.subr.mxu0 0.0
    %4848 = vmatpush1.msra.mxu0 0.0
    %4849 = vmatprep.subr.mxu0 0.0
    %4850 = vmatpush1.msra.mxu0 0.0
    %4851 = vmatprep.subr.mxu0 0.0
    %4852 = vmatpush1.msra.mxu0 0.0
    %4853 = vmatprep.subr.mxu0 0.0
    %4854 = vmatpush1.msra.mxu0 0.0
    %4855 = vmatprep.subr.mxu0 0.0
    %4856 = vmatpush1.msra.mxu0 0.0
    %4857 = vmatprep.subr.mxu0 0.0
    %4858 = vmatpush1.msra.mxu0 %v4821
    %4859 = vmatprep.subr.mxu0 0.0
    %4860 = vmatpush2.msra.mxu0 0.0
    %4861 = vmatprep.subr.mxu0 0.0
    %4862 = vmatpush2.msra.mxu0 0.0
    %4863 = vmatprep.subr.mxu0 0.0
    %4864 = vmatpush2.msra.mxu0 0.0
    %4865 = vmatprep.subr.mxu0 0.0
    %4866 = vmatpush2.msra.mxu0 0.0
    %4867 = vmatprep.subr.mxu0 0.0
    %4868 = vmatpush2.msra.mxu0 0.0
    %4869 = vmatprep.subr.mxu0 0.0
    %4870 = vmatpush2.msra.mxu0 0.0
    %4871 = vmatprep.subr.mxu0 0.0
    %4872 = vmatpush2.msra.mxu0 0.0
    %4873 = vmatprep.subr.mxu0 0.0
    %4874 = vmatpush2.msra.mxu0 0.0
    %4875 = vmatprep.subr.mxu0 0.0
    %4876 = vmatpush2.msra.mxu0 0.0
    %4877 = vmatprep.subr.mxu0 0.0
    %4878 = vmatpush2.msra.mxu0 0.0
    %4879 = vmatprep.subr.mxu0 0.0
    %4880 = vmatpush2.msra.mxu0 0.0
    %4881 = vmatprep.subr.mxu0 0.0
    %4882 = vmatpush2.msra.mxu0 0.0
    %4883 = vmatprep.subr.mxu0 0.0
    %4884 = vmatpush2.msra.mxu0 0.0
    %4885 = vmatprep.subr.mxu0 0.0
    %4886 = vmatpush2.msra.mxu0 0.0
    %4887 = vmatprep.subr.mxu0 0.0
    %4888 = vmatpush2.msra.mxu0 0.0
    %4889 = vmatprep.subr.mxu0 0.0
    %4890 = vmatpush2.msra.mxu0 0.0
    %4891 = vmatprep.mubr.f32.mxu0 0.0
    %4892 = vmatmul.mubr.f32.gmra.mxu0 %v4825
    %v4893 = vpop.f32.mrf.mxu0
    %v4894 = vadd.f32 0.0, %v4893
    %v4895 = vpop.f32.mrf.mxu0
    %4896 = vdwg.mxu0
    %v4897 = vadd.f32 %v4426, %v4894
    %v4899 = vsel %vm1553, %v4569, 0
    %4901 = vmatprep.subr.mxu0 0.0
    %4902 = vmatpush1.msra.mxu0 0.0
    %4903 = vmatprep.subr.mxu0 0.0
    %4904 = vmatpush1.msra.mxu0 0.0
    %4905 = vmatprep.subr.mxu0 0.0
    %4906 = vmatpush1.msra.mxu0 0.0
    %4907 = vmatprep.subr.mxu0 0.0
    %4908 = vmatpush1.msra.mxu0 0.0
    %4909 = vmatprep.subr.mxu0 0.0
    %4910 = vmatpush1.msra.mxu0 0.0
    %4911 = vmatprep.subr.mxu0 0.0
    %4912 = vmatpush1.msra.mxu0 0.0
    %4913 = vmatprep.subr.mxu0 0.0
    %4914 = vmatpush1.msra.mxu0 0.0
    %4915 = vmatprep.subr.mxu0 0.0
    %4916 = vmatpush1.msra.mxu0 0.0
    %4917 = vmatprep.subr.mxu0 0.0
    %4918 = vmatpush1.msra.mxu0 0.0
    %4919 = vmatprep.subr.mxu0 0.0
    %4920 = vmatpush1.msra.mxu0 0.0
    %4921 = vmatprep.subr.mxu0 0.0
    %4922 = vmatpush1.msra.mxu0 0.0
    %4923 = vmatprep.subr.mxu0 0.0
    %4924 = vmatpush1.msra.mxu0 0.0
    %4925 = vmatprep.subr.mxu0 0.0
    %4926 = vmatpush1.msra.mxu0 0.0
    %4927 = vmatprep.subr.mxu0 0.0
    %4928 = vmatpush1.msra.mxu0 0.0
    %4929 = vmatprep.subr.mxu0 0.0
    %4930 = vmatpush1.msra.mxu0 0.0
    %4931 = vmatprep.subr.mxu0 0.0
    %4932 = vmatpush1.msra.mxu0 %v4821
    %4933 = vmatprep.subr.mxu0 0.0
    %4934 = vmatpush2.msra.mxu0 0.0
    %4935 = vmatprep.subr.mxu0 0.0
    %4936 = vmatpush2.msra.mxu0 0.0
    %4937 = vmatprep.subr.mxu0 0.0
    %4938 = vmatpush2.msra.mxu0 0.0
    %4939 = vmatprep.subr.mxu0 0.0
    %4940 = vmatpush2.msra.mxu0 0.0
    %4941 = vmatprep.subr.mxu0 0.0
    %4942 = vmatpush2.msra.mxu0 0.0
    %4943 = vmatprep.subr.mxu0 0.0
    %4944 = vmatpush2.msra.mxu0 0.0
    %4945 = vmatprep.subr.mxu0 0.0
    %4946 = vmatpush2.msra.mxu0 0.0
    %4947 = vmatprep.subr.mxu0 0.0
    %4948 = vmatpush2.msra.mxu0 0.0
    %4949 = vmatprep.subr.mxu0 0.0
    %4950 = vmatpush2.msra.mxu0 0.0
    %4951 = vmatprep.subr.mxu0 0.0
    %4952 = vmatpush2.msra.mxu0 0.0
    %4953 = vmatprep.subr.mxu0 0.0
    %4954 = vmatpush2.msra.mxu0 0.0
    %4955 = vmatprep.subr.mxu0 0.0
    %4956 = vmatpush2.msra.mxu0 0.0
    %4957 = vmatprep.subr.mxu0 0.0
    %4958 = vmatpush2.msra.mxu0 0.0
    %4959 = vmatprep.subr.mxu0 0.0
    %4960 = vmatpush2.msra.mxu0 0.0
    %4961 = vmatprep.subr.mxu0 0.0
    %4962 = vmatpush2.msra.mxu0 0.0
    %4963 = vmatprep.subr.mxu0 0.0
    %4964 = vmatpush2.msra.mxu0 0.0
    %4965 = vmatprep.mubr.f32.mxu0 0.0
    %4966 = vmatmul.mubr.f32.gmra.mxu0 %v4899
    %v4967 = vpop.f32.mrf.mxu0
    %v4968 = vadd.f32 0.0, %v4967
    %v4969 = vpop.f32.mrf.mxu0
    %4970 = vdwg.mxu0
    %v4971 = vsub.f32 %v1519, %v4968
    %v4973 = vrot.slane %v4971, 1
    %4974 = vrot.lane.b32.xlu0 %v4973, 8
    %v4975 = vpop.permute.xlu0 %4974
    %v4977 = vrot.slane %v4971, 2
    %4978 = vrot.lane.b32.xlu0 %v4977, 16
    %v4979 = vpop.permute.xlu0 %4978
    %v4981 = vrot.slane %v4971, 3
    %4982 = vrot.lane.b32.xlu0 %v4981, 24
    %v4983 = vpop.permute.xlu0 %4982
    %v4985 = vrot.slane %v4971, 4
    %4986 = vrot.lane.b32.xlu0 %v4985, 32
    %v4987 = vpop.permute.xlu0 %4986
    %v4989 = vrot.slane %v4971, 5
    %4990 = vrot.lane.b32.xlu0 %v4989, 40
    %v4991 = vpop.permute.xlu0 %4990
    %v4993 = vrot.slane %v4971, 6
    %4994 = vrot.lane.b32.xlu0 %v4993, 48
    %v4995 = vpop.permute.xlu0 %4994
    %v4997 = vrot.slane %v4971, 7
    %4998 = vrot.lane.b32.xlu0 %v4997, 56
    %v4999 = vpop.permute.xlu0 %4998
    %v5001 = vsel %vm1553, %v4971, %v4975
    %v5002 = vsel %vm111, %v5001, %v4979
    %v5003 = vsel %vm1556, %v5002, %v4983
    %v5004 = vsel %vm1558, %v5003, %v4987
    %v5005 = vsel %vm1560, %v5004, %v4991
    %v5006 = vsel %vm1562, %v5005, %v4995
    %v5007 = vsel %vm1564, %v5006, %v4999
    %5009 = vrot.lane.b32.xlu0 %v1579, 120
    %v5010 = vpop.permute.xlu0 %5009
    %5012 = vrot.lane.b32.xlu0 %v1583, 112
    %v5013 = vpop.permute.xlu0 %5012
    %5015 = vrot.lane.b32.xlu0 %v1587, 104
    %v5016 = vpop.permute.xlu0 %5015
    %5018 = vrot.lane.b32.xlu0 %v1591, 96
    %v5019 = vpop.permute.xlu0 %5018
    %5021 = vrot.lane.b32.xlu0 %v1510, 88
    %v5022 = vpop.permute.xlu0 %5021
    %5024 = vrot.lane.b32.xlu0 %v1567, 80
    %v5025 = vpop.permute.xlu0 %5024
    %5027 = vrot.lane.b32.xlu0 %v1571, 72
    %v5028 = vpop.permute.xlu0 %5027
    %v5030 = vsel %vm1595, %v1575, %v5010
    %v5031 = vsel %vm1597, %v5030, %v5013
    %v5032 = vsel %vm1599, %v5031, %v5016
    %v5033 = vsel %vm1601, %v5032, %v5019
    %v5034 = vsel %vm1603, %v5033, %v5022
    %v5035 = vsel %vm1605, %v5034, %v5025
    %v5036 = vsel %vm1607, %v5035, %v5028
    %v5038 = vsel %vm1553, %v4897, 0
    %v5041 = vsel %vm1553, %v5036, 0
    %5043 = vmatprep.subr.mxu0 0.0
    %5044 = vmatpush1.xpose.msra.mxu0 0.0
    %5045 = vmatprep.subr.mxu0 0.0
    %5046 = vmatpush1.xpose.msra.mxu0 0.0
    %5047 = vmatprep.subr.mxu0 0.0
    %5048 = vmatpush1.xpose.msra.mxu0 0.0
    %5049 = vmatprep.subr.mxu0 0.0
    %5050 = vmatpush1.xpose.msra.mxu0 0.0
    %5051 = vmatprep.subr.mxu0 0.0
    %5052 = vmatpush1.xpose.msra.mxu0 0.0
    %5053 = vmatprep.subr.mxu0 0.0
    %5054 = vmatpush1.xpose.msra.mxu0 0.0
    %5055 = vmatprep.subr.mxu0 0.0
    %5056 = vmatpush1.xpose.msra.mxu0 0.0
    %5057 = vmatprep.subr.mxu0 0.0
    %5058 = vmatpush1.xpose.msra.mxu0 0.0
    %5059 = vmatprep.subr.mxu0 0.0
    %5060 = vmatpush1.xpose.msra.mxu0 0.0
    %5061 = vmatprep.subr.mxu0 0.0
    %5062 = vmatpush1.xpose.msra.mxu0 0.0
    %5063 = vmatprep.subr.mxu0 0.0
    %5064 = vmatpush1.xpose.msra.mxu0 0.0
    %5065 = vmatprep.subr.mxu0 0.0
    %5066 = vmatpush1.xpose.msra.mxu0 0.0
    %5067 = vmatprep.subr.mxu0 0.0
    %5068 = vmatpush1.xpose.msra.mxu0 0.0
    %5069 = vmatprep.subr.mxu0 0.0
    %5070 = vmatpush1.xpose.msra.mxu0 0.0
    %5071 = vmatprep.subr.mxu0 0.0
    %5072 = vmatpush1.xpose.msra.mxu0 0.0
    %5073 = vmatprep.subr.mxu0 0.0
    %5074 = vmatpush1.xpose.msra.mxu0 %v5041
    %5075 = vmatprep.subr.mxu0 0.0
    %5076 = vmatpush2.xpose.msra.mxu0 0.0
    %5077 = vmatprep.subr.mxu0 0.0
    %5078 = vmatpush2.xpose.msra.mxu0 0.0
    %5079 = vmatprep.subr.mxu0 0.0
    %5080 = vmatpush2.xpose.msra.mxu0 0.0
    %5081 = vmatprep.subr.mxu0 0.0
    %5082 = vmatpush2.xpose.msra.mxu0 0.0
    %5083 = vmatprep.subr.mxu0 0.0
    %5084 = vmatpush2.xpose.msra.mxu0 0.0
    %5085 = vmatprep.subr.mxu0 0.0
    %5086 = vmatpush2.xpose.msra.mxu0 0.0
    %5087 = vmatprep.subr.mxu0 0.0
    %5088 = vmatpush2.xpose.msra.mxu0 0.0
    %5089 = vmatprep.subr.mxu0 0.0
    %5090 = vmatpush2.xpose.msra.mxu0 0.0
    %5091 = vmatprep.subr.mxu0 0.0
    %5092 = vmatpush2.xpose.msra.mxu0 0.0
    %5093 = vmatprep.subr.mxu0 0.0
    %5094 = vmatpush2.xpose.msra.mxu0 0.0
    %5095 = vmatprep.subr.mxu0 0.0
    %5096 = vmatpush2.xpose.msra.mxu0 0.0
    %5097 = vmatprep.subr.mxu0 0.0
    %5098 = vmatpush2.xpose.msra.mxu0 0.0
    %5099 = vmatprep.subr.mxu0 0.0
    %5100 = vmatpush2.xpose.msra.mxu0 0.0
    %5101 = vmatprep.subr.mxu0 0.0
    %5102 = vmatpush2.xpose.msra.mxu0 0.0
    %5103 = vmatprep.subr.mxu0 0.0
    %5104 = vmatpush2.xpose.msra.mxu0 0.0
    %5105 = vmatprep.subr.mxu0 0.0
    %5106 = vmatpush2.xpose.msra.mxu0 0.0
    %5107 = vmatprep.mubr.f32.mxu0 0.0
    %5108 = vmatmul.mubr.f32.gmra.mxu0 %v5038
    %v5109 = vpop.f32.mrf.mxu0
    %v5110 = vadd.f32 0.0, %v5109
    %v5111 = vpop.f32.mrf.mxu0
    %5112 = vdwg.mxu0
    %5113 = vmatprep.subr.mxu0 0.0
    %5114 = vmatpush1.msra.mxu0 0.0
    %5115 = vmatprep.subr.mxu0 0.0
    %5116 = vmatpush1.msra.mxu0 0.0
    %5117 = vmatprep.subr.mxu0 0.0
    %5118 = vmatpush1.msra.mxu0 0.0
    %5119 = vmatprep.subr.mxu0 0.0
    %5120 = vmatpush1.msra.mxu0 0.0
    %5121 = vmatprep.subr.mxu0 0.0
    %5122 = vmatpush1.msra.mxu0 0.0
    %5123 = vmatprep.subr.mxu0 0.0
    %5124 = vmatpush1.msra.mxu0 0.0
    %5125 = vmatprep.subr.mxu0 0.0
    %5126 = vmatpush1.msra.mxu0 0.0
    %5127 = vmatprep.subr.mxu0 0.0
    %5128 = vmatpush1.msra.mxu0 0.0
    %5129 = vmatprep.subr.mxu0 0.0
    %5130 = vmatpush1.msra.mxu0 0.0
    %5131 = vmatprep.subr.mxu0 0.0
    %5132 = vmatpush1.msra.mxu0 0.0
    %5133 = vmatprep.subr.mxu0 0.0
    %5134 = vmatpush1.msra.mxu0 0.0
    %5135 = vmatprep.subr.mxu0 0.0
    %5136 = vmatpush1.msra.mxu0 0.0
    %5137 = vmatprep.subr.mxu0 0.0
    %5138 = vmatpush1.msra.mxu0 0.0
    %5139 = vmatprep.subr.mxu0 0.0
    %5140 = vmatpush1.msra.mxu0 0.0
    %5141 = vmatprep.subr.mxu0 0.0
    %5142 = vmatpush1.msra.mxu0 0.0
    %5143 = vmatprep.subr.mxu0 0.0
    %5144 = vmatpush1.msra.mxu0 %v4971
    %5145 = vmatprep.subr.mxu0 0.0
    %5146 = vmatpush2.msra.mxu0 0.0
    %5147 = vmatprep.subr.mxu0 0.0
    %5148 = vmatpush2.msra.mxu0 0.0
    %5149 = vmatprep.subr.mxu0 0.0
    %5150 = vmatpush2.msra.mxu0 0.0
    %5151 = vmatprep.subr.mxu0 0.0
    %5152 = vmatpush2.msra.mxu0 0.0
    %5153 = vmatprep.subr.mxu0 0.0
    %5154 = vmatpush2.msra.mxu0 0.0
    %5155 = vmatprep.subr.mxu0 0.0
    %5156 = vmatpush2.msra.mxu0 0.0
    %5157 = vmatprep.subr.mxu0 0.0
    %5158 = vmatpush2.msra.mxu0 0.0
    %5159 = vmatprep.subr.mxu0 0.0
    %5160 = vmatpush2.msra.mxu0 0.0
    %5161 = vmatprep.subr.mxu0 0.0
    %5162 = vmatpush2.msra.mxu0 0.0
    %5163 = vmatprep.subr.mxu0 0.0
    %5164 = vmatpush2.msra.mxu0 0.0
    %5165 = vmatprep.subr.mxu0 0.0
    %5166 = vmatpush2.msra.mxu0 0.0
    %5167 = vmatprep.subr.mxu0 0.0
    %5168 = vmatpush2.msra.mxu0 0.0
    %5169 = vmatprep.subr.mxu0 0.0
    %5170 = vmatpush2.msra.mxu0 0.0
    %5171 = vmatprep.subr.mxu0 0.0
    %5172 = vmatpush2.msra.mxu0 0.0
    %5173 = vmatprep.subr.mxu0 0.0
    %5174 = vmatpush2.msra.mxu0 0.0
    %5175 = vmatprep.subr.mxu0 0.0
    %5176 = vmatpush2.msra.mxu0 0.0
    %5177 = vmatprep.mubr.f32.mxu0 0.0
    %5178 = vmatmul.mubr.f32.gmra.mxu0 %v5041
    %v5179 = vpop.f32.mrf.mxu0
    %v5180 = vadd.f32 0.0, %v5179
    %v5181 = vpop.f32.mrf.mxu0
    %5182 = vdwg.mxu0
    %v5184 = vsel %vm1553, %v5180, 0
    %5186 = vmatprep.subr.mxu0 0.0
    %5187 = vmatpush1.xpose.msra.mxu0 0.0
    %5188 = vmatprep.subr.mxu0 0.0
    %5189 = vmatpush1.xpose.msra.mxu0 0.0
    %5190 = vmatprep.subr.mxu0 0.0
    %5191 = vmatpush1.xpose.msra.mxu0 0.0
    %5192 = vmatprep.subr.mxu0 0.0
    %5193 = vmatpush1.xpose.msra.mxu0 0.0
    %5194 = vmatprep.subr.mxu0 0.0
    %5195 = vmatpush1.xpose.msra.mxu0 0.0
    %5196 = vmatprep.subr.mxu0 0.0
    %5197 = vmatpush1.xpose.msra.mxu0 0.0
    %5198 = vmatprep.subr.mxu0 0.0
    %5199 = vmatpush1.xpose.msra.mxu0 0.0
    %5200 = vmatprep.subr.mxu0 0.0
    %5201 = vmatpush1.xpose.msra.mxu0 0.0
    %5202 = vmatprep.subr.mxu0 0.0
    %5203 = vmatpush1.xpose.msra.mxu0 0.0
    %5204 = vmatprep.subr.mxu0 0.0
    %5205 = vmatpush1.xpose.msra.mxu0 0.0
    %5206 = vmatprep.subr.mxu0 0.0
    %5207 = vmatpush1.xpose.msra.mxu0 0.0
    %5208 = vmatprep.subr.mxu0 0.0
    %5209 = vmatpush1.xpose.msra.mxu0 0.0
    %5210 = vmatprep.subr.mxu0 0.0
    %5211 = vmatpush1.xpose.msra.mxu0 0.0
    %5212 = vmatprep.subr.mxu0 0.0
    %5213 = vmatpush1.xpose.msra.mxu0 0.0
    %5214 = vmatprep.subr.mxu0 0.0
    %5215 = vmatpush1.xpose.msra.mxu0 0.0
    %5216 = vmatprep.subr.mxu0 0.0
    %5217 = vmatpush1.xpose.msra.mxu0 %v5041
    %5218 = vmatprep.subr.mxu0 0.0
    %5219 = vmatpush2.xpose.msra.mxu0 0.0
    %5220 = vmatprep.subr.mxu0 0.0
    %5221 = vmatpush2.xpose.msra.mxu0 0.0
    %5222 = vmatprep.subr.mxu0 0.0
    %5223 = vmatpush2.xpose.msra.mxu0 0.0
    %5224 = vmatprep.subr.mxu0 0.0
    %5225 = vmatpush2.xpose.msra.mxu0 0.0
    %5226 = vmatprep.subr.mxu0 0.0
    %5227 = vmatpush2.xpose.msra.mxu0 0.0
    %5228 = vmatprep.subr.mxu0 0.0
    %5229 = vmatpush2.xpose.msra.mxu0 0.0
    %5230 = vmatprep.subr.mxu0 0.0
    %5231 = vmatpush2.xpose.msra.mxu0 0.0
    %5232 = vmatprep.subr.mxu0 0.0
    %5233 = vmatpush2.xpose.msra.mxu0 0.0
    %5234 = vmatprep.subr.mxu0 0.0
    %5235 = vmatpush2.xpose.msra.mxu0 0.0
    %5236 = vmatprep.subr.mxu0 0.0
    %5237 = vmatpush2.xpose.msra.mxu0 0.0
    %5238 = vmatprep.subr.mxu0 0.0
    %5239 = vmatpush2.xpose.msra.mxu0 0.0
    %5240 = vmatprep.subr.mxu0 0.0
    %5241 = vmatpush2.xpose.msra.mxu0 0.0
    %5242 = vmatprep.subr.mxu0 0.0
    %5243 = vmatpush2.xpose.msra.mxu0 0.0
    %5244 = vmatprep.subr.mxu0 0.0
    %5245 = vmatpush2.xpose.msra.mxu0 0.0
    %5246 = vmatprep.subr.mxu0 0.0
    %5247 = vmatpush2.xpose.msra.mxu0 0.0
    %5248 = vmatprep.subr.mxu0 0.0
    %5249 = vmatpush2.xpose.msra.mxu0 0.0
    %5250 = vmatprep.mubr.f32.mxu0 0.0
    %5251 = vmatmul.mubr.f32.gmra.mxu0 %v5184
    %v5252 = vpop.f32.mrf.mxu0
    %v5253 = vadd.f32 %v1521, %v5252
    %v5254 = vpop.f32.mrf.mxu0
    %5255 = vdwg.mxu0
    %v5256 = vadd.f32 %v5253, %v1523
    %v5257 = vrcp.pop %v5256
    %v5258 = vmul.f32 1.0, %v5257
    %5260 = vset.pattern.permute.xlu0 0
    %5261 = vperm.xlu0 %5260, %v5258
    %v5262 = vpop.permute.xlu0 %5261
    %v5264 = vmul.f32 %v5256, %v5262
    %v5265 = vmul.f32 %v5253, %v5262
    %v5266 = vsub.f32 %v5256, 1.0
    %v5267 = vlaneseq
    %v5268 = vshrl.u32 %v5267, 7
    %v5269 = vsub.s32 0, %v5268
    %v5270 = vrot.slane %v5266, %v5269
    %v5271 = vsel %vm1838, %v5270, %v5256
    %5273 = vset.pattern.permute.xlu0 0
    %5274 = vperm.xlu0 %5273, %v5271
    %v5275 = vpop.permute.xlu0 %5274
    %v5277 = vlaneseq
    %v5278 = vshrl.u32 %v5277, 7
    %v5279 = vsub.s32 0, %v5278
    %v5280 = vrot.slane %v5264, %v5279
    %v5281 = vmul.f32 %v5275, %v5280
    %v5282 = vsub.f32 %v5256, %v5281
    %v5283 = vlaneseq
    %v5284 = vshrl.u32 %v5283, 7
    %v5285 = vsub.s32 0, %v5284
    %v5286 = vrot.slane %v5265, %v5285
    %v5287 = vmul.f32 %v5275, %v5286
    %v5288 = vsub.f32 %v5253, %v5287
    %v5289 = vrcp.pop %v5282
    %v5290 = vmul.f32 1.0, %v5289
    %5292 = vset.pattern.permute.xlu0 1
    %5293 = vperm.xlu0 %5292, %v5290
    %v5294 = vpop.permute.xlu0 %5293
    %v5296 = vmul.f32 %v5282, %v5294
    %v5297 = vmul.f32 %v5288, %v5294
    %v5298 = vsub.f32 %v5282, 1.0
    %v5299 = vlaneseq
    %v5300 = vshrl.u32 %v5299, 7
    %v5301 = vsub.s32 1, %v5300
    %v5302 = vrot.slane %v5298, %v5301
    %v5303 = vsel %vm1871, %v5302, %v5282
    %5305 = vset.pattern.permute.xlu0 1
    %5306 = vperm.xlu0 %5305, %v5303
    %v5307 = vpop.permute.xlu0 %5306
    %v5309 = vlaneseq
    %v5310 = vshrl.u32 %v5309, 7
    %v5311 = vsub.s32 1, %v5310
    %v5312 = vrot.slane %v5296, %v5311
    %v5313 = vmul.f32 %v5307, %v5312
    %v5314 = vsub.f32 %v5282, %v5313
    %v5315 = vlaneseq
    %v5316 = vshrl.u32 %v5315, 7
    %v5317 = vsub.s32 1, %v5316
    %v5318 = vrot.slane %v5297, %v5317
    %v5319 = vmul.f32 %v5307, %v5318
    %v5320 = vsub.f32 %v5288, %v5319
    %v5321 = vrcp.pop %v5314
    %v5322 = vmul.f32 1.0, %v5321
    %5324 = vset.pattern.permute.xlu0 2
    %5325 = vperm.xlu0 %5324, %v5322
    %v5326 = vpop.permute.xlu0 %5325
    %v5328 = vmul.f32 %v5314, %v5326
    %v5329 = vmul.f32 %v5320, %v5326
    %v5330 = vsub.f32 %v5314, 1.0
    %v5331 = vlaneseq
    %v5332 = vshrl.u32 %v5331, 7
    %v5333 = vsub.s32 2, %v5332
    %v5334 = vrot.slane %v5330, %v5333
    %v5335 = vsel %vm1904, %v5334, %v5314
    %5337 = vset.pattern.permute.xlu0 2
    %5338 = vperm.xlu0 %5337, %v5335
    %v5339 = vpop.permute.xlu0 %5338
    %v5341 = vlaneseq
    %v5342 = vshrl.u32 %v5341, 7
    %v5343 = vsub.s32 2, %v5342
    %v5344 = vrot.slane %v5328, %v5343
    %v5345 = vmul.f32 %v5339, %v5344
    %v5346 = vsub.f32 %v5314, %v5345
    %v5347 = vlaneseq
    %v5348 = vshrl.u32 %v5347, 7
    %v5349 = vsub.s32 2, %v5348
    %v5350 = vrot.slane %v5329, %v5349
    %v5351 = vmul.f32 %v5339, %v5350
    %v5352 = vsub.f32 %v5320, %v5351
    %v5353 = vrcp.pop %v5346
    %v5354 = vmul.f32 1.0, %v5353
    %5356 = vset.pattern.permute.xlu0 3
    %5357 = vperm.xlu0 %5356, %v5354
    %v5358 = vpop.permute.xlu0 %5357
    %v5360 = vmul.f32 %v5346, %v5358
    %v5361 = vmul.f32 %v5352, %v5358
    %v5362 = vsub.f32 %v5346, 1.0
    %v5363 = vlaneseq
    %v5364 = vshrl.u32 %v5363, 7
    %v5365 = vsub.s32 3, %v5364
    %v5366 = vrot.slane %v5362, %v5365
    %v5367 = vsel %vm1937, %v5366, %v5346
    %5369 = vset.pattern.permute.xlu0 3
    %5370 = vperm.xlu0 %5369, %v5367
    %v5371 = vpop.permute.xlu0 %5370
    %v5373 = vlaneseq
    %v5374 = vshrl.u32 %v5373, 7
    %v5375 = vsub.s32 3, %v5374
    %v5376 = vrot.slane %v5360, %v5375
    %v5377 = vmul.f32 %v5371, %v5376
    %v5378 = vsub.f32 %v5346, %v5377
    %v5379 = vlaneseq
    %v5380 = vshrl.u32 %v5379, 7
    %v5381 = vsub.s32 3, %v5380
    %v5382 = vrot.slane %v5361, %v5381
    %v5383 = vmul.f32 %v5371, %v5382
    %v5384 = vsub.f32 %v5352, %v5383
    %v5385 = vrcp.pop %v5378
    %v5386 = vmul.f32 1.0, %v5385
    %5388 = vset.pattern.permute.xlu0 4
    %5389 = vperm.xlu0 %5388, %v5386
    %v5390 = vpop.permute.xlu0 %5389
    %v5392 = vmul.f32 %v5378, %v5390
    %v5393 = vmul.f32 %v5384, %v5390
    %v5394 = vsub.f32 %v5378, 1.0
    %v5395 = vlaneseq
    %v5396 = vshrl.u32 %v5395, 7
    %v5397 = vsub.s32 4, %v5396
    %v5398 = vrot.slane %v5394, %v5397
    %v5399 = vsel %vm1970, %v5398, %v5378
    %5401 = vset.pattern.permute.xlu0 4
    %5402 = vperm.xlu0 %5401, %v5399
    %v5403 = vpop.permute.xlu0 %5402
    %v5405 = vlaneseq
    %v5406 = vshrl.u32 %v5405, 7
    %v5407 = vsub.s32 4, %v5406
    %v5408 = vrot.slane %v5392, %v5407
    %v5409 = vmul.f32 %v5403, %v5408
    %v5410 = vsub.f32 %v5378, %v5409
    %v5411 = vlaneseq
    %v5412 = vshrl.u32 %v5411, 7
    %v5413 = vsub.s32 4, %v5412
    %v5414 = vrot.slane %v5393, %v5413
    %v5415 = vmul.f32 %v5403, %v5414
    %v5416 = vsub.f32 %v5384, %v5415
    %v5417 = vrcp.pop %v5410
    %v5418 = vmul.f32 1.0, %v5417
    %5420 = vset.pattern.permute.xlu0 5
    %5421 = vperm.xlu0 %5420, %v5418
    %v5422 = vpop.permute.xlu0 %5421
    %v5424 = vmul.f32 %v5410, %v5422
    %v5425 = vmul.f32 %v5416, %v5422
    %v5426 = vsub.f32 %v5410, 1.0
    %v5427 = vlaneseq
    %v5428 = vshrl.u32 %v5427, 7
    %v5429 = vsub.s32 5, %v5428
    %v5430 = vrot.slane %v5426, %v5429
    %v5431 = vsel %vm2003, %v5430, %v5410
    %5433 = vset.pattern.permute.xlu0 5
    %5434 = vperm.xlu0 %5433, %v5431
    %v5435 = vpop.permute.xlu0 %5434
    %v5437 = vlaneseq
    %v5438 = vshrl.u32 %v5437, 7
    %v5439 = vsub.s32 5, %v5438
    %v5440 = vrot.slane %v5424, %v5439
    %v5441 = vmul.f32 %v5435, %v5440
    %v5442 = vsub.f32 %v5410, %v5441
    %v5443 = vlaneseq
    %v5444 = vshrl.u32 %v5443, 7
    %v5445 = vsub.s32 5, %v5444
    %v5446 = vrot.slane %v5425, %v5445
    %v5447 = vmul.f32 %v5435, %v5446
    %v5448 = vsub.f32 %v5416, %v5447
    %v5449 = vrcp.pop %v5442
    %v5450 = vmul.f32 1.0, %v5449
    %5452 = vset.pattern.permute.xlu0 6
    %5453 = vperm.xlu0 %5452, %v5450
    %v5454 = vpop.permute.xlu0 %5453
    %v5456 = vmul.f32 %v5442, %v5454
    %v5457 = vmul.f32 %v5448, %v5454
    %v5458 = vsub.f32 %v5442, 1.0
    %v5459 = vlaneseq
    %v5460 = vshrl.u32 %v5459, 7
    %v5461 = vsub.s32 6, %v5460
    %v5462 = vrot.slane %v5458, %v5461
    %v5463 = vsel %vm2036, %v5462, %v5442
    %5465 = vset.pattern.permute.xlu0 6
    %5466 = vperm.xlu0 %5465, %v5463
    %v5467 = vpop.permute.xlu0 %5466
    %v5469 = vlaneseq
    %v5470 = vshrl.u32 %v5469, 7
    %v5471 = vsub.s32 6, %v5470
    %v5472 = vrot.slane %v5456, %v5471
    %v5473 = vmul.f32 %v5467, %v5472
    %v5474 = vsub.f32 %v5442, %v5473
    %v5475 = vlaneseq
    %v5476 = vshrl.u32 %v5475, 7
    %v5477 = vsub.s32 6, %v5476
    %v5478 = vrot.slane %v5457, %v5477
    %v5479 = vmul.f32 %v5467, %v5478
    %v5480 = vsub.f32 %v5448, %v5479
    %v5481 = vrcp.pop %v5474
    %v5482 = vmul.f32 1.0, %v5481
    %5484 = vset.pattern.permute.xlu0 7
    %5485 = vperm.xlu0 %5484, %v5482
    %v5486 = vpop.permute.xlu0 %5485
    %v5488 = vmul.f32 %v5480, %v5486
    %v5489 = vsub.f32 %v5474, 1.0
    %v5490 = vlaneseq
    %v5491 = vshrl.u32 %v5490, 7
    %v5492 = vsub.s32 7, %v5491
    %v5493 = vrot.slane %v5489, %v5492
    %v5494 = vsel %vm2068, %v5493, %v5474
    %5496 = vset.pattern.permute.xlu0 7
    %5497 = vperm.xlu0 %5496, %v5494
    %v5498 = vpop.permute.xlu0 %5497
    %v5500 = vlaneseq
    %v5501 = vshrl.u32 %v5500, 7
    %v5502 = vsub.s32 7, %v5501
    %v5503 = vrot.slane %v5488, %v5502
    %v5504 = vmul.f32 %v5498, %v5503
    %v5505 = vsub.f32 %v5480, %v5504
    %v5506 = vld [vmem:[%s1 + $0x6] sm:$0x1]
    %v5507 = vsub.f32 %v5506, %v5110
    %v5509 = vsel %vm1553, %v5507, 0
    %5511 = vmatprep.subr.mxu0 0.0
    %5512 = vmatpush1.msra.mxu0 0.0
    %5513 = vmatprep.subr.mxu0 0.0
    %5514 = vmatpush1.msra.mxu0 0.0
    %5515 = vmatprep.subr.mxu0 0.0
    %5516 = vmatpush1.msra.mxu0 0.0
    %5517 = vmatprep.subr.mxu0 0.0
    %5518 = vmatpush1.msra.mxu0 0.0
    %5519 = vmatprep.subr.mxu0 0.0
    %5520 = vmatpush1.msra.mxu0 0.0
    %5521 = vmatprep.subr.mxu0 0.0
    %5522 = vmatpush1.msra.mxu0 0.0
    %5523 = vmatprep.subr.mxu0 0.0
    %5524 = vmatpush1.msra.mxu0 0.0
    %5525 = vmatprep.subr.mxu0 0.0
    %5526 = vmatpush1.msra.mxu0 0.0
    %5527 = vmatprep.subr.mxu0 0.0
    %5528 = vmatpush1.msra.mxu0 0.0
    %5529 = vmatprep.subr.mxu0 0.0
    %5530 = vmatpush1.msra.mxu0 0.0
    %5531 = vmatprep.subr.mxu0 0.0
    %5532 = vmatpush1.msra.mxu0 0.0
    %5533 = vmatprep.subr.mxu0 0.0
    %5534 = vmatpush1.msra.mxu0 0.0
    %5535 = vmatprep.subr.mxu0 0.0
    %5536 = vmatpush1.msra.mxu0 0.0
    %5537 = vmatprep.subr.mxu0 0.0
    %5538 = vmatpush1.msra.mxu0 0.0
    %5539 = vmatprep.subr.mxu0 0.0
    %5540 = vmatpush1.msra.mxu0 0.0
    %5541 = vmatprep.subr.mxu0 0.0
    %5542 = vmatpush1.msra.mxu0 %v5505
    %5543 = vmatprep.subr.mxu0 0.0
    %5544 = vmatpush2.msra.mxu0 0.0
    %5545 = vmatprep.subr.mxu0 0.0
    %5546 = vmatpush2.msra.mxu0 0.0
    %5547 = vmatprep.subr.mxu0 0.0
    %5548 = vmatpush2.msra.mxu0 0.0
    %5549 = vmatprep.subr.mxu0 0.0
    %5550 = vmatpush2.msra.mxu0 0.0
    %5551 = vmatprep.subr.mxu0 0.0
    %5552 = vmatpush2.msra.mxu0 0.0
    %5553 = vmatprep.subr.mxu0 0.0
    %5554 = vmatpush2.msra.mxu0 0.0
    %5555 = vmatprep.subr.mxu0 0.0
    %5556 = vmatpush2.msra.mxu0 0.0
    %5557 = vmatprep.subr.mxu0 0.0
    %5558 = vmatpush2.msra.mxu0 0.0
    %5559 = vmatprep.subr.mxu0 0.0
    %5560 = vmatpush2.msra.mxu0 0.0
    %5561 = vmatprep.subr.mxu0 0.0
    %5562 = vmatpush2.msra.mxu0 0.0
    %5563 = vmatprep.subr.mxu0 0.0
    %5564 = vmatpush2.msra.mxu0 0.0
    %5565 = vmatprep.subr.mxu0 0.0
    %5566 = vmatpush2.msra.mxu0 0.0
    %5567 = vmatprep.subr.mxu0 0.0
    %5568 = vmatpush2.msra.mxu0 0.0
    %5569 = vmatprep.subr.mxu0 0.0
    %5570 = vmatpush2.msra.mxu0 0.0
    %5571 = vmatprep.subr.mxu0 0.0
    %5572 = vmatpush2.msra.mxu0 0.0
    %5573 = vmatprep.subr.mxu0 0.0
    %5574 = vmatpush2.msra.mxu0 0.0
    %5575 = vmatprep.mubr.f32.mxu0 0.0
    %5576 = vmatmul.mubr.f32.gmra.mxu0 %v5509
    %v5577 = vpop.f32.mrf.mxu0
    %v5578 = vadd.f32 0.0, %v5577
    %v5579 = vpop.f32.mrf.mxu0
    %5580 = vdwg.mxu0
    %v5581 = vadd.f32 %v5110, %v5578
    %v5583 = vsel %vm1553, %v5253, 0
    %5585 = vmatprep.subr.mxu0 0.0
    %5586 = vmatpush1.msra.mxu0 0.0
    %5587 = vmatprep.subr.mxu0 0.0
    %5588 = vmatpush1.msra.mxu0 0.0
    %5589 = vmatprep.subr.mxu0 0.0
    %5590 = vmatpush1.msra.mxu0 0.0
    %5591 = vmatprep.subr.mxu0 0.0
    %5592 = vmatpush1.msra.mxu0 0.0
    %5593 = vmatprep.subr.mxu0 0.0
    %5594 = vmatpush1.msra.mxu0 0.0
    %5595 = vmatprep.subr.mxu0 0.0
    %5596 = vmatpush1.msra.mxu0 0.0
    %5597 = vmatprep.subr.mxu0 0.0
    %5598 = vmatpush1.msra.mxu0 0.0
    %5599 = vmatprep.subr.mxu0 0.0
    %5600 = vmatpush1.msra.mxu0 0.0
    %5601 = vmatprep.subr.mxu0 0.0
    %5602 = vmatpush1.msra.mxu0 0.0
    %5603 = vmatprep.subr.mxu0 0.0
    %5604 = vmatpush1.msra.mxu0 0.0
    %5605 = vmatprep.subr.mxu0 0.0
    %5606 = vmatpush1.msra.mxu0 0.0
    %5607 = vmatprep.subr.mxu0 0.0
    %5608 = vmatpush1.msra.mxu0 0.0
    %5609 = vmatprep.subr.mxu0 0.0
    %5610 = vmatpush1.msra.mxu0 0.0
    %5611 = vmatprep.subr.mxu0 0.0
    %5612 = vmatpush1.msra.mxu0 0.0
    %5613 = vmatprep.subr.mxu0 0.0
    %5614 = vmatpush1.msra.mxu0 0.0
    %5615 = vmatprep.subr.mxu0 0.0
    %5616 = vmatpush1.msra.mxu0 %v5505
    %5617 = vmatprep.subr.mxu0 0.0
    %5618 = vmatpush2.msra.mxu0 0.0
    %5619 = vmatprep.subr.mxu0 0.0
    %5620 = vmatpush2.msra.mxu0 0.0
    %5621 = vmatprep.subr.mxu0 0.0
    %5622 = vmatpush2.msra.mxu0 0.0
    %5623 = vmatprep.subr.mxu0 0.0
    %5624 = vmatpush2.msra.mxu0 0.0
    %5625 = vmatprep.subr.mxu0 0.0
    %5626 = vmatpush2.msra.mxu0 0.0
    %5627 = vmatprep.subr.mxu0 0.0
    %5628 = vmatpush2.msra.mxu0 0.0
    %5629 = vmatprep.subr.mxu0 0.0
    %5630 = vmatpush2.msra.mxu0 0.0
    %5631 = vmatprep.subr.mxu0 0.0
    %5632 = vmatpush2.msra.mxu0 0.0
    %5633 = vmatprep.subr.mxu0 0.0
    %5634 = vmatpush2.msra.mxu0 0.0
    %5635 = vmatprep.subr.mxu0 0.0
    %5636 = vmatpush2.msra.mxu0 0.0
    %5637 = vmatprep.subr.mxu0 0.0
    %5638 = vmatpush2.msra.mxu0 0.0
    %5639 = vmatprep.subr.mxu0 0.0
    %5640 = vmatpush2.msra.mxu0 0.0
    %5641 = vmatprep.subr.mxu0 0.0
    %5642 = vmatpush2.msra.mxu0 0.0
    %5643 = vmatprep.subr.mxu0 0.0
    %5644 = vmatpush2.msra.mxu0 0.0
    %5645 = vmatprep.subr.mxu0 0.0
    %5646 = vmatpush2.msra.mxu0 0.0
    %5647 = vmatprep.subr.mxu0 0.0
    %5648 = vmatpush2.msra.mxu0 0.0
    %5649 = vmatprep.mubr.f32.mxu0 0.0
    %5650 = vmatmul.mubr.f32.gmra.mxu0 %v5583
    %v5651 = vpop.f32.mrf.mxu0
    %v5652 = vadd.f32 0.0, %v5651
    %v5653 = vpop.f32.mrf.mxu0
    %5654 = vdwg.mxu0
    %v5655 = vsub.f32 %v1519, %v5652
    %v5657 = vrot.slane %v5655, 1
    %5658 = vrot.lane.b32.xlu0 %v5657, 8
    %v5659 = vpop.permute.xlu0 %5658
    %v5661 = vrot.slane %v5655, 2
    %5662 = vrot.lane.b32.xlu0 %v5661, 16
    %v5663 = vpop.permute.xlu0 %5662
    %v5665 = vrot.slane %v5655, 3
    %5666 = vrot.lane.b32.xlu0 %v5665, 24
    %v5667 = vpop.permute.xlu0 %5666
    %v5669 = vrot.slane %v5655, 4
    %5670 = vrot.lane.b32.xlu0 %v5669, 32
    %v5671 = vpop.permute.xlu0 %5670
    %v5673 = vrot.slane %v5655, 5
    %5674 = vrot.lane.b32.xlu0 %v5673, 40
    %v5675 = vpop.permute.xlu0 %5674
    %v5677 = vrot.slane %v5655, 6
    %5678 = vrot.lane.b32.xlu0 %v5677, 48
    %v5679 = vpop.permute.xlu0 %5678
    %v5681 = vrot.slane %v5655, 7
    %5682 = vrot.lane.b32.xlu0 %v5681, 56
    %v5683 = vpop.permute.xlu0 %5682
    %v5685 = vsel %vm1553, %v5655, %v5659
    %v5686 = vsel %vm111, %v5685, %v5663
    %v5687 = vsel %vm1556, %v5686, %v5667
    %v5688 = vsel %vm1558, %v5687, %v5671
    %v5689 = vsel %vm1560, %v5688, %v5675
    %v5690 = vsel %vm1562, %v5689, %v5679
    %v5691 = vsel %vm1564, %v5690, %v5683
    %5693 = vrot.lane.b32.xlu0 %v1575, 120
    %v5694 = vpop.permute.xlu0 %5693
    %5696 = vrot.lane.b32.xlu0 %v1579, 112
    %v5697 = vpop.permute.xlu0 %5696
    %5699 = vrot.lane.b32.xlu0 %v1583, 104
    %v5700 = vpop.permute.xlu0 %5699
    %5702 = vrot.lane.b32.xlu0 %v1587, 96
    %v5703 = vpop.permute.xlu0 %5702
    %5705 = vrot.lane.b32.xlu0 %v1591, 88
    %v5706 = vpop.permute.xlu0 %5705
    %5708 = vrot.lane.b32.xlu0 %v1510, 80
    %v5709 = vpop.permute.xlu0 %5708
    %5711 = vrot.lane.b32.xlu0 %v1567, 72
    %v5712 = vpop.permute.xlu0 %5711
    %v5714 = vsel %vm1595, %v1571, %v5694
    %v5715 = vsel %vm1597, %v5714, %v5697
    %v5716 = vsel %vm1599, %v5715, %v5700
    %v5717 = vsel %vm1601, %v5716, %v5703
    %v5718 = vsel %vm1603, %v5717, %v5706
    %v5719 = vsel %vm1605, %v5718, %v5709
    %v5720 = vsel %vm1607, %v5719, %v5712
    %v5722 = vsel %vm1553, %v5581, 0
    %v5725 = vsel %vm1553, %v5720, 0
    %5727 = vmatprep.subr.mxu0 0.0
    %5728 = vmatpush1.xpose.msra.mxu0 0.0
    %5729 = vmatprep.subr.mxu0 0.0
    %5730 = vmatpush1.xpose.msra.mxu0 0.0
    %5731 = vmatprep.subr.mxu0 0.0
    %5732 = vmatpush1.xpose.msra.mxu0 0.0
    %5733 = vmatprep.subr.mxu0 0.0
    %5734 = vmatpush1.xpose.msra.mxu0 0.0
    %5735 = vmatprep.subr.mxu0 0.0
    %5736 = vmatpush1.xpose.msra.mxu0 0.0
    %5737 = vmatprep.subr.mxu0 0.0
    %5738 = vmatpush1.xpose.msra.mxu0 0.0
    %5739 = vmatprep.subr.mxu0 0.0
    %5740 = vmatpush1.xpose.msra.mxu0 0.0
    %5741 = vmatprep.subr.mxu0 0.0
    %5742 = vmatpush1.xpose.msra.mxu0 0.0
    %5743 = vmatprep.subr.mxu0 0.0
    %5744 = vmatpush1.xpose.msra.mxu0 0.0
    %5745 = vmatprep.subr.mxu0 0.0
    %5746 = vmatpush1.xpose.msra.mxu0 0.0
    %5747 = vmatprep.subr.mxu0 0.0
    %5748 = vmatpush1.xpose.msra.mxu0 0.0
    %5749 = vmatprep.subr.mxu0 0.0
    %5750 = vmatpush1.xpose.msra.mxu0 0.0
    %5751 = vmatprep.subr.mxu0 0.0
    %5752 = vmatpush1.xpose.msra.mxu0 0.0
    %5753 = vmatprep.subr.mxu0 0.0
    %5754 = vmatpush1.xpose.msra.mxu0 0.0
    %5755 = vmatprep.subr.mxu0 0.0
    %5756 = vmatpush1.xpose.msra.mxu0 0.0
    %5757 = vmatprep.subr.mxu0 0.0
    %5758 = vmatpush1.xpose.msra.mxu0 %v5725
    %5759 = vmatprep.subr.mxu0 0.0
    %5760 = vmatpush2.xpose.msra.mxu0 0.0
    %5761 = vmatprep.subr.mxu0 0.0
    %5762 = vmatpush2.xpose.msra.mxu0 0.0
    %5763 = vmatprep.subr.mxu0 0.0
    %5764 = vmatpush2.xpose.msra.mxu0 0.0
    %5765 = vmatprep.subr.mxu0 0.0
    %5766 = vmatpush2.xpose.msra.mxu0 0.0
    %5767 = vmatprep.subr.mxu0 0.0
    %5768 = vmatpush2.xpose.msra.mxu0 0.0
    %5769 = vmatprep.subr.mxu0 0.0
    %5770 = vmatpush2.xpose.msra.mxu0 0.0
    %5771 = vmatprep.subr.mxu0 0.0
    %5772 = vmatpush2.xpose.msra.mxu0 0.0
    %5773 = vmatprep.subr.mxu0 0.0
    %5774 = vmatpush2.xpose.msra.mxu0 0.0
    %5775 = vmatprep.subr.mxu0 0.0
    %5776 = vmatpush2.xpose.msra.mxu0 0.0
    %5777 = vmatprep.subr.mxu0 0.0
    %5778 = vmatpush2.xpose.msra.mxu0 0.0
    %5779 = vmatprep.subr.mxu0 0.0
    %5780 = vmatpush2.xpose.msra.mxu0 0.0
    %5781 = vmatprep.subr.mxu0 0.0
    %5782 = vmatpush2.xpose.msra.mxu0 0.0
    %5783 = vmatprep.subr.mxu0 0.0
    %5784 = vmatpush2.xpose.msra.mxu0 0.0
    %5785 = vmatprep.subr.mxu0 0.0
    %5786 = vmatpush2.xpose.msra.mxu0 0.0
    %5787 = vmatprep.subr.mxu0 0.0
    %5788 = vmatpush2.xpose.msra.mxu0 0.0
    %5789 = vmatprep.subr.mxu0 0.0
    %5790 = vmatpush2.xpose.msra.mxu0 0.0
    %5791 = vmatprep.mubr.f32.mxu0 0.0
    %5792 = vmatmul.mubr.f32.gmra.mxu0 %v5722
    %v5793 = vpop.f32.mrf.mxu0
    %v5794 = vadd.f32 0.0, %v5793
    %v5795 = vpop.f32.mrf.mxu0
    %5796 = vdwg.mxu0
    %5797 = vmatprep.subr.mxu0 0.0
    %5798 = vmatpush1.msra.mxu0 0.0
    %5799 = vmatprep.subr.mxu0 0.0
    %5800 = vmatpush1.msra.mxu0 0.0
    %5801 = vmatprep.subr.mxu0 0.0
    %5802 = vmatpush1.msra.mxu0 0.0
    %5803 = vmatprep.subr.mxu0 0.0
    %5804 = vmatpush1.msra.mxu0 0.0
    %5805 = vmatprep.subr.mxu0 0.0
    %5806 = vmatpush1.msra.mxu0 0.0
    %5807 = vmatprep.subr.mxu0 0.0
    %5808 = vmatpush1.msra.mxu0 0.0
    %5809 = vmatprep.subr.mxu0 0.0
    %5810 = vmatpush1.msra.mxu0 0.0
    %5811 = vmatprep.subr.mxu0 0.0
    %5812 = vmatpush1.msra.mxu0 0.0
    %5813 = vmatprep.subr.mxu0 0.0
    %5814 = vmatpush1.msra.mxu0 0.0
    %5815 = vmatprep.subr.mxu0 0.0
    %5816 = vmatpush1.msra.mxu0 0.0
    %5817 = vmatprep.subr.mxu0 0.0
    %5818 = vmatpush1.msra.mxu0 0.0
    %5819 = vmatprep.subr.mxu0 0.0
    %5820 = vmatpush1.msra.mxu0 0.0
    %5821 = vmatprep.subr.mxu0 0.0
    %5822 = vmatpush1.msra.mxu0 0.0
    %5823 = vmatprep.subr.mxu0 0.0
    %5824 = vmatpush1.msra.mxu0 0.0
    %5825 = vmatprep.subr.mxu0 0.0
    %5826 = vmatpush1.msra.mxu0 0.0
    %5827 = vmatprep.subr.mxu0 0.0
    %5828 = vmatpush1.msra.mxu0 %v5655
    %5829 = vmatprep.subr.mxu0 0.0
    %5830 = vmatpush2.msra.mxu0 0.0
    %5831 = vmatprep.subr.mxu0 0.0
    %5832 = vmatpush2.msra.mxu0 0.0
    %5833 = vmatprep.subr.mxu0 0.0
    %5834 = vmatpush2.msra.mxu0 0.0
    %5835 = vmatprep.subr.mxu0 0.0
    %5836 = vmatpush2.msra.mxu0 0.0
    %5837 = vmatprep.subr.mxu0 0.0
    %5838 = vmatpush2.msra.mxu0 0.0
    %5839 = vmatprep.subr.mxu0 0.0
    %5840 = vmatpush2.msra.mxu0 0.0
    %5841 = vmatprep.subr.mxu0 0.0
    %5842 = vmatpush2.msra.mxu0 0.0
    %5843 = vmatprep.subr.mxu0 0.0
    %5844 = vmatpush2.msra.mxu0 0.0
    %5845 = vmatprep.subr.mxu0 0.0
    %5846 = vmatpush2.msra.mxu0 0.0
    %5847 = vmatprep.subr.mxu0 0.0
    %5848 = vmatpush2.msra.mxu0 0.0
    %5849 = vmatprep.subr.mxu0 0.0
    %5850 = vmatpush2.msra.mxu0 0.0
    %5851 = vmatprep.subr.mxu0 0.0
    %5852 = vmatpush2.msra.mxu0 0.0
    %5853 = vmatprep.subr.mxu0 0.0
    %5854 = vmatpush2.msra.mxu0 0.0
    %5855 = vmatprep.subr.mxu0 0.0
    %5856 = vmatpush2.msra.mxu0 0.0
    %5857 = vmatprep.subr.mxu0 0.0
    %5858 = vmatpush2.msra.mxu0 0.0
    %5859 = vmatprep.subr.mxu0 0.0
    %5860 = vmatpush2.msra.mxu0 0.0
    %5861 = vmatprep.mubr.f32.mxu0 0.0
    %5862 = vmatmul.mubr.f32.gmra.mxu0 %v5725
    %v5863 = vpop.f32.mrf.mxu0
    %v5864 = vadd.f32 0.0, %v5863
    %v5865 = vpop.f32.mrf.mxu0
    %5866 = vdwg.mxu0
    %v5868 = vsel %vm1553, %v5864, 0
    %5870 = vmatprep.subr.mxu0 0.0
    %5871 = vmatpush1.xpose.msra.mxu0 0.0
    %5872 = vmatprep.subr.mxu0 0.0
    %5873 = vmatpush1.xpose.msra.mxu0 0.0
    %5874 = vmatprep.subr.mxu0 0.0
    %5875 = vmatpush1.xpose.msra.mxu0 0.0
    %5876 = vmatprep.subr.mxu0 0.0
    %5877 = vmatpush1.xpose.msra.mxu0 0.0
    %5878 = vmatprep.subr.mxu0 0.0
    %5879 = vmatpush1.xpose.msra.mxu0 0.0
    %5880 = vmatprep.subr.mxu0 0.0
    %5881 = vmatpush1.xpose.msra.mxu0 0.0
    %5882 = vmatprep.subr.mxu0 0.0
    %5883 = vmatpush1.xpose.msra.mxu0 0.0
    %5884 = vmatprep.subr.mxu0 0.0
    %5885 = vmatpush1.xpose.msra.mxu0 0.0
    %5886 = vmatprep.subr.mxu0 0.0
    %5887 = vmatpush1.xpose.msra.mxu0 0.0
    %5888 = vmatprep.subr.mxu0 0.0
    %5889 = vmatpush1.xpose.msra.mxu0 0.0
    %5890 = vmatprep.subr.mxu0 0.0
    %5891 = vmatpush1.xpose.msra.mxu0 0.0
    %5892 = vmatprep.subr.mxu0 0.0
    %5893 = vmatpush1.xpose.msra.mxu0 0.0
    %5894 = vmatprep.subr.mxu0 0.0
    %5895 = vmatpush1.xpose.msra.mxu0 0.0
    %5896 = vmatprep.subr.mxu0 0.0
    %5897 = vmatpush1.xpose.msra.mxu0 0.0
    %5898 = vmatprep.subr.mxu0 0.0
    %5899 = vmatpush1.xpose.msra.mxu0 0.0
    %5900 = vmatprep.subr.mxu0 0.0
    %5901 = vmatpush1.xpose.msra.mxu0 %v5725
    %5902 = vmatprep.subr.mxu0 0.0
    %5903 = vmatpush2.xpose.msra.mxu0 0.0
    %5904 = vmatprep.subr.mxu0 0.0
    %5905 = vmatpush2.xpose.msra.mxu0 0.0
    %5906 = vmatprep.subr.mxu0 0.0
    %5907 = vmatpush2.xpose.msra.mxu0 0.0
    %5908 = vmatprep.subr.mxu0 0.0
    %5909 = vmatpush2.xpose.msra.mxu0 0.0
    %5910 = vmatprep.subr.mxu0 0.0
    %5911 = vmatpush2.xpose.msra.mxu0 0.0
    %5912 = vmatprep.subr.mxu0 0.0
    %5913 = vmatpush2.xpose.msra.mxu0 0.0
    %5914 = vmatprep.subr.mxu0 0.0
    %5915 = vmatpush2.xpose.msra.mxu0 0.0
    %5916 = vmatprep.subr.mxu0 0.0
    %5917 = vmatpush2.xpose.msra.mxu0 0.0
    %5918 = vmatprep.subr.mxu0 0.0
    %5919 = vmatpush2.xpose.msra.mxu0 0.0
    %5920 = vmatprep.subr.mxu0 0.0
    %5921 = vmatpush2.xpose.msra.mxu0 0.0
    %5922 = vmatprep.subr.mxu0 0.0
    %5923 = vmatpush2.xpose.msra.mxu0 0.0
    %5924 = vmatprep.subr.mxu0 0.0
    %5925 = vmatpush2.xpose.msra.mxu0 0.0
    %5926 = vmatprep.subr.mxu0 0.0
    %5927 = vmatpush2.xpose.msra.mxu0 0.0
    %5928 = vmatprep.subr.mxu0 0.0
    %5929 = vmatpush2.xpose.msra.mxu0 0.0
    %5930 = vmatprep.subr.mxu0 0.0
    %5931 = vmatpush2.xpose.msra.mxu0 0.0
    %5932 = vmatprep.subr.mxu0 0.0
    %5933 = vmatpush2.xpose.msra.mxu0 0.0
    %5934 = vmatprep.mubr.f32.mxu0 0.0
    %5935 = vmatmul.mubr.f32.gmra.mxu0 %v5868
    %v5936 = vpop.f32.mrf.mxu0
    %v5937 = vadd.f32 %v1521, %v5936
    %v5938 = vpop.f32.mrf.mxu0
    %5939 = vdwg.mxu0
    %v5940 = vadd.f32 %v5937, %v1523
    %v5941 = vrcp.pop %v5940
    %v5942 = vmul.f32 1.0, %v5941
    %5944 = vset.pattern.permute.xlu0 0
    %5945 = vperm.xlu0 %5944, %v5942
    %v5946 = vpop.permute.xlu0 %5945
    %v5948 = vmul.f32 %v5940, %v5946
    %v5949 = vmul.f32 %v5937, %v5946
    %v5950 = vsub.f32 %v5940, 1.0
    %v5951 = vlaneseq
    %v5952 = vshrl.u32 %v5951, 7
    %v5953 = vsub.s32 0, %v5952
    %v5954 = vrot.slane %v5950, %v5953
    %v5955 = vsel %vm1838, %v5954, %v5940
    %5957 = vset.pattern.permute.xlu0 0
    %5958 = vperm.xlu0 %5957, %v5955
    %v5959 = vpop.permute.xlu0 %5958
    %v5961 = vlaneseq
    %v5962 = vshrl.u32 %v5961, 7
    %v5963 = vsub.s32 0, %v5962
    %v5964 = vrot.slane %v5948, %v5963
    %v5965 = vmul.f32 %v5959, %v5964
    %v5966 = vsub.f32 %v5940, %v5965
    %v5967 = vlaneseq
    %v5968 = vshrl.u32 %v5967, 7
    %v5969 = vsub.s32 0, %v5968
    %v5970 = vrot.slane %v5949, %v5969
    %v5971 = vmul.f32 %v5959, %v5970
    %v5972 = vsub.f32 %v5937, %v5971
    %v5973 = vrcp.pop %v5966
    %v5974 = vmul.f32 1.0, %v5973
    %5976 = vset.pattern.permute.xlu0 1
    %5977 = vperm.xlu0 %5976, %v5974
    %v5978 = vpop.permute.xlu0 %5977
    %v5980 = vmul.f32 %v5966, %v5978
    %v5981 = vmul.f32 %v5972, %v5978
    %v5982 = vsub.f32 %v5966, 1.0
    %v5983 = vlaneseq
    %v5984 = vshrl.u32 %v5983, 7
    %v5985 = vsub.s32 1, %v5984
    %v5986 = vrot.slane %v5982, %v5985
    %v5987 = vsel %vm1871, %v5986, %v5966
    %5989 = vset.pattern.permute.xlu0 1
    %5990 = vperm.xlu0 %5989, %v5987
    %v5991 = vpop.permute.xlu0 %5990
    %v5993 = vlaneseq
    %v5994 = vshrl.u32 %v5993, 7
    %v5995 = vsub.s32 1, %v5994
    %v5996 = vrot.slane %v5980, %v5995
    %v5997 = vmul.f32 %v5991, %v5996
    %v5998 = vsub.f32 %v5966, %v5997
    %v5999 = vlaneseq
    %v6000 = vshrl.u32 %v5999, 7
    %v6001 = vsub.s32 1, %v6000
    %v6002 = vrot.slane %v5981, %v6001
    %v6003 = vmul.f32 %v5991, %v6002
    %v6004 = vsub.f32 %v5972, %v6003
    %v6005 = vrcp.pop %v5998
    %v6006 = vmul.f32 1.0, %v6005
    %6008 = vset.pattern.permute.xlu0 2
    %6009 = vperm.xlu0 %6008, %v6006
    %v6010 = vpop.permute.xlu0 %6009
    %v6012 = vmul.f32 %v5998, %v6010
    %v6013 = vmul.f32 %v6004, %v6010
    %v6014 = vsub.f32 %v5998, 1.0
    %v6015 = vlaneseq
    %v6016 = vshrl.u32 %v6015, 7
    %v6017 = vsub.s32 2, %v6016
    %v6018 = vrot.slane %v6014, %v6017
    %v6019 = vsel %vm1904, %v6018, %v5998
    %6021 = vset.pattern.permute.xlu0 2
    %6022 = vperm.xlu0 %6021, %v6019
    %v6023 = vpop.permute.xlu0 %6022
    %v6025 = vlaneseq
    %v6026 = vshrl.u32 %v6025, 7
    %v6027 = vsub.s32 2, %v6026
    %v6028 = vrot.slane %v6012, %v6027
    %v6029 = vmul.f32 %v6023, %v6028
    %v6030 = vsub.f32 %v5998, %v6029
    %v6031 = vlaneseq
    %v6032 = vshrl.u32 %v6031, 7
    %v6033 = vsub.s32 2, %v6032
    %v6034 = vrot.slane %v6013, %v6033
    %v6035 = vmul.f32 %v6023, %v6034
    %v6036 = vsub.f32 %v6004, %v6035
    %v6037 = vrcp.pop %v6030
    %v6038 = vmul.f32 1.0, %v6037
    %6040 = vset.pattern.permute.xlu0 3
    %6041 = vperm.xlu0 %6040, %v6038
    %v6042 = vpop.permute.xlu0 %6041
    %v6044 = vmul.f32 %v6030, %v6042
    %v6045 = vmul.f32 %v6036, %v6042
    %v6046 = vsub.f32 %v6030, 1.0
    %v6047 = vlaneseq
    %v6048 = vshrl.u32 %v6047, 7
    %v6049 = vsub.s32 3, %v6048
    %v6050 = vrot.slane %v6046, %v6049
    %v6051 = vsel %vm1937, %v6050, %v6030
    %6053 = vset.pattern.permute.xlu0 3
    %6054 = vperm.xlu0 %6053, %v6051
    %v6055 = vpop.permute.xlu0 %6054
    %v6057 = vlaneseq
    %v6058 = vshrl.u32 %v6057, 7
    %v6059 = vsub.s32 3, %v6058
    %v6060 = vrot.slane %v6044, %v6059
    %v6061 = vmul.f32 %v6055, %v6060
    %v6062 = vsub.f32 %v6030, %v6061
    %v6063 = vlaneseq
    %v6064 = vshrl.u32 %v6063, 7
    %v6065 = vsub.s32 3, %v6064
    %v6066 = vrot.slane %v6045, %v6065
    %v6067 = vmul.f32 %v6055, %v6066
    %v6068 = vsub.f32 %v6036, %v6067
    %v6069 = vrcp.pop %v6062
    %v6070 = vmul.f32 1.0, %v6069
    %6072 = vset.pattern.permute.xlu0 4
    %6073 = vperm.xlu0 %6072, %v6070
    %v6074 = vpop.permute.xlu0 %6073
    %v6076 = vmul.f32 %v6062, %v6074
    %v6077 = vmul.f32 %v6068, %v6074
    %v6078 = vsub.f32 %v6062, 1.0
    %v6079 = vlaneseq
    %v6080 = vshrl.u32 %v6079, 7
    %v6081 = vsub.s32 4, %v6080
    %v6082 = vrot.slane %v6078, %v6081
    %v6083 = vsel %vm1970, %v6082, %v6062
    %6085 = vset.pattern.permute.xlu0 4
    %6086 = vperm.xlu0 %6085, %v6083
    %v6087 = vpop.permute.xlu0 %6086
    %v6089 = vlaneseq
    %v6090 = vshrl.u32 %v6089, 7
    %v6091 = vsub.s32 4, %v6090
    %v6092 = vrot.slane %v6076, %v6091
    %v6093 = vmul.f32 %v6087, %v6092
    %v6094 = vsub.f32 %v6062, %v6093
    %v6095 = vlaneseq
    %v6096 = vshrl.u32 %v6095, 7
    %v6097 = vsub.s32 4, %v6096
    %v6098 = vrot.slane %v6077, %v6097
    %v6099 = vmul.f32 %v6087, %v6098
    %v6100 = vsub.f32 %v6068, %v6099
    %v6101 = vrcp.pop %v6094
    %v6102 = vmul.f32 1.0, %v6101
    %6104 = vset.pattern.permute.xlu0 5
    %6105 = vperm.xlu0 %6104, %v6102
    %v6106 = vpop.permute.xlu0 %6105
    %v6108 = vmul.f32 %v6094, %v6106
    %v6109 = vmul.f32 %v6100, %v6106
    %v6110 = vsub.f32 %v6094, 1.0
    %v6111 = vlaneseq
    %v6112 = vshrl.u32 %v6111, 7
    %v6113 = vsub.s32 5, %v6112
    %v6114 = vrot.slane %v6110, %v6113
    %v6115 = vsel %vm2003, %v6114, %v6094
    %6117 = vset.pattern.permute.xlu0 5
    %6118 = vperm.xlu0 %6117, %v6115
    %v6119 = vpop.permute.xlu0 %6118
    %v6121 = vlaneseq
    %v6122 = vshrl.u32 %v6121, 7
    %v6123 = vsub.s32 5, %v6122
    %v6124 = vrot.slane %v6108, %v6123
    %v6125 = vmul.f32 %v6119, %v6124
    %v6126 = vsub.f32 %v6094, %v6125
    %v6127 = vlaneseq
    %v6128 = vshrl.u32 %v6127, 7
    %v6129 = vsub.s32 5, %v6128
    %v6130 = vrot.slane %v6109, %v6129
    %v6131 = vmul.f32 %v6119, %v6130
    %v6132 = vsub.f32 %v6100, %v6131
    %v6133 = vrcp.pop %v6126
    %v6134 = vmul.f32 1.0, %v6133
    %6136 = vset.pattern.permute.xlu0 6
    %6137 = vperm.xlu0 %6136, %v6134
    %v6138 = vpop.permute.xlu0 %6137
    %v6140 = vmul.f32 %v6126, %v6138
    %v6141 = vmul.f32 %v6132, %v6138
    %v6142 = vsub.f32 %v6126, 1.0
    %v6143 = vlaneseq
    %v6144 = vshrl.u32 %v6143, 7
    %v6145 = vsub.s32 6, %v6144
    %v6146 = vrot.slane %v6142, %v6145
    %v6147 = vsel %vm2036, %v6146, %v6126
    %6149 = vset.pattern.permute.xlu0 6
    %6150 = vperm.xlu0 %6149, %v6147
    %v6151 = vpop.permute.xlu0 %6150
    %v6153 = vlaneseq
    %v6154 = vshrl.u32 %v6153, 7
    %v6155 = vsub.s32 6, %v6154
    %v6156 = vrot.slane %v6140, %v6155
    %v6157 = vmul.f32 %v6151, %v6156
    %v6158 = vsub.f32 %v6126, %v6157
    %v6159 = vlaneseq
    %v6160 = vshrl.u32 %v6159, 7
    %v6161 = vsub.s32 6, %v6160
    %v6162 = vrot.slane %v6141, %v6161
    %v6163 = vmul.f32 %v6151, %v6162
    %v6164 = vsub.f32 %v6132, %v6163
    %v6165 = vrcp.pop %v6158
    %v6166 = vmul.f32 1.0, %v6165
    %6168 = vset.pattern.permute.xlu0 7
    %6169 = vperm.xlu0 %6168, %v6166
    %v6170 = vpop.permute.xlu0 %6169
    %v6172 = vmul.f32 %v6164, %v6170
    %v6173 = vsub.f32 %v6158, 1.0
    %v6174 = vlaneseq
    %v6175 = vshrl.u32 %v6174, 7
    %v6176 = vsub.s32 7, %v6175
    %v6177 = vrot.slane %v6173, %v6176
    %v6178 = vsel %vm2068, %v6177, %v6158
    %6180 = vset.pattern.permute.xlu0 7
    %6181 = vperm.xlu0 %6180, %v6178
    %v6182 = vpop.permute.xlu0 %6181
    %v6184 = vlaneseq
    %v6185 = vshrl.u32 %v6184, 7
    %v6186 = vsub.s32 7, %v6185
    %v6187 = vrot.slane %v6172, %v6186
    %v6188 = vmul.f32 %v6182, %v6187
    %v6189 = vsub.f32 %v6164, %v6188
    %v6190 = vld [vmem:[%s1 + $0x7] sm:$0x1]
    %v6191 = vsub.f32 %v6190, %v5794
    %v6193 = vsel %vm1553, %v6191, 0
    %6195 = vmatprep.subr.mxu0 0.0
    %6196 = vmatpush1.msra.mxu0 0.0
    %6197 = vmatprep.subr.mxu0 0.0
    %6198 = vmatpush1.msra.mxu0 0.0
    %6199 = vmatprep.subr.mxu0 0.0
    %6200 = vmatpush1.msra.mxu0 0.0
    %6201 = vmatprep.subr.mxu0 0.0
    %6202 = vmatpush1.msra.mxu0 0.0
    %6203 = vmatprep.subr.mxu0 0.0
    %6204 = vmatpush1.msra.mxu0 0.0
    %6205 = vmatprep.subr.mxu0 0.0
    %6206 = vmatpush1.msra.mxu0 0.0
    %6207 = vmatprep.subr.mxu0 0.0
    %6208 = vmatpush1.msra.mxu0 0.0
    %6209 = vmatprep.subr.mxu0 0.0
    %6210 = vmatpush1.msra.mxu0 0.0
    %6211 = vmatprep.subr.mxu0 0.0
    %6212 = vmatpush1.msra.mxu0 0.0
    %6213 = vmatprep.subr.mxu0 0.0
    %6214 = vmatpush1.msra.mxu0 0.0
    %6215 = vmatprep.subr.mxu0 0.0
    %6216 = vmatpush1.msra.mxu0 0.0
    %6217 = vmatprep.subr.mxu0 0.0
    %6218 = vmatpush1.msra.mxu0 0.0
    %6219 = vmatprep.subr.mxu0 0.0
    %6220 = vmatpush1.msra.mxu0 0.0
    %6221 = vmatprep.subr.mxu0 0.0
    %6222 = vmatpush1.msra.mxu0 0.0
    %6223 = vmatprep.subr.mxu0 0.0
    %6224 = vmatpush1.msra.mxu0 0.0
    %6225 = vmatprep.subr.mxu0 0.0
    %6226 = vmatpush1.msra.mxu0 %v6189
    %6227 = vmatprep.subr.mxu0 0.0
    %6228 = vmatpush2.msra.mxu0 0.0
    %6229 = vmatprep.subr.mxu0 0.0
    %6230 = vmatpush2.msra.mxu0 0.0
    %6231 = vmatprep.subr.mxu0 0.0
    %6232 = vmatpush2.msra.mxu0 0.0
    %6233 = vmatprep.subr.mxu0 0.0
    %6234 = vmatpush2.msra.mxu0 0.0
    %6235 = vmatprep.subr.mxu0 0.0
    %6236 = vmatpush2.msra.mxu0 0.0
    %6237 = vmatprep.subr.mxu0 0.0
    %6238 = vmatpush2.msra.mxu0 0.0
    %6239 = vmatprep.subr.mxu0 0.0
    %6240 = vmatpush2.msra.mxu0 0.0
    %6241 = vmatprep.subr.mxu0 0.0
    %6242 = vmatpush2.msra.mxu0 0.0
    %6243 = vmatprep.subr.mxu0 0.0
    %6244 = vmatpush2.msra.mxu0 0.0
    %6245 = vmatprep.subr.mxu0 0.0
    %6246 = vmatpush2.msra.mxu0 0.0
    %6247 = vmatprep.subr.mxu0 0.0
    %6248 = vmatpush2.msra.mxu0 0.0
    %6249 = vmatprep.subr.mxu0 0.0
    %6250 = vmatpush2.msra.mxu0 0.0
    %6251 = vmatprep.subr.mxu0 0.0
    %6252 = vmatpush2.msra.mxu0 0.0
    %6253 = vmatprep.subr.mxu0 0.0
    %6254 = vmatpush2.msra.mxu0 0.0
    %6255 = vmatprep.subr.mxu0 0.0
    %6256 = vmatpush2.msra.mxu0 0.0
    %6257 = vmatprep.subr.mxu0 0.0
    %6258 = vmatpush2.msra.mxu0 0.0
    %6259 = vmatprep.mubr.f32.mxu0 0.0
    %6260 = vmatmul.mubr.f32.gmra.mxu0 %v6193
    %v6261 = vpop.f32.mrf.mxu0
    %v6262 = vadd.f32 0.0, %v6261
    %v6263 = vpop.f32.mrf.mxu0
    %6264 = vdwg.mxu0
    %v6265 = vadd.f32 %v5794, %v6262
    %v6267 = vsel %vm1553, %v5937, 0
    %6269 = vmatprep.subr.mxu0 0.0
    %6270 = vmatpush1.msra.mxu0 0.0
    %6271 = vmatprep.subr.mxu0 0.0
    %6272 = vmatpush1.msra.mxu0 0.0
    %6273 = vmatprep.subr.mxu0 0.0
    %6274 = vmatpush1.msra.mxu0 0.0
    %6275 = vmatprep.subr.mxu0 0.0
    %6276 = vmatpush1.msra.mxu0 0.0
    %6277 = vmatprep.subr.mxu0 0.0
    %6278 = vmatpush1.msra.mxu0 0.0
    %6279 = vmatprep.subr.mxu0 0.0
    %6280 = vmatpush1.msra.mxu0 0.0
    %6281 = vmatprep.subr.mxu0 0.0
    %6282 = vmatpush1.msra.mxu0 0.0
    %6283 = vmatprep.subr.mxu0 0.0
    %6284 = vmatpush1.msra.mxu0 0.0
    %6285 = vmatprep.subr.mxu0 0.0
    %6286 = vmatpush1.msra.mxu0 0.0
    %6287 = vmatprep.subr.mxu0 0.0
    %6288 = vmatpush1.msra.mxu0 0.0
    %6289 = vmatprep.subr.mxu0 0.0
    %6290 = vmatpush1.msra.mxu0 0.0
    %6291 = vmatprep.subr.mxu0 0.0
    %6292 = vmatpush1.msra.mxu0 0.0
    %6293 = vmatprep.subr.mxu0 0.0
    %6294 = vmatpush1.msra.mxu0 0.0
    %6295 = vmatprep.subr.mxu0 0.0
    %6296 = vmatpush1.msra.mxu0 0.0
    %6297 = vmatprep.subr.mxu0 0.0
    %6298 = vmatpush1.msra.mxu0 0.0
    %6299 = vmatprep.subr.mxu0 0.0
    %6300 = vmatpush1.msra.mxu0 %v6189
    %6301 = vmatprep.subr.mxu0 0.0
    %6302 = vmatpush2.msra.mxu0 0.0
    %6303 = vmatprep.subr.mxu0 0.0
    %6304 = vmatpush2.msra.mxu0 0.0
    %6305 = vmatprep.subr.mxu0 0.0
    %6306 = vmatpush2.msra.mxu0 0.0
    %6307 = vmatprep.subr.mxu0 0.0
    %6308 = vmatpush2.msra.mxu0 0.0
    %6309 = vmatprep.subr.mxu0 0.0
    %6310 = vmatpush2.msra.mxu0 0.0
    %6311 = vmatprep.subr.mxu0 0.0
    %6312 = vmatpush2.msra.mxu0 0.0
    %6313 = vmatprep.subr.mxu0 0.0
    %6314 = vmatpush2.msra.mxu0 0.0
    %6315 = vmatprep.subr.mxu0 0.0
    %6316 = vmatpush2.msra.mxu0 0.0
    %6317 = vmatprep.subr.mxu0 0.0
    %6318 = vmatpush2.msra.mxu0 0.0
    %6319 = vmatprep.subr.mxu0 0.0
    %6320 = vmatpush2.msra.mxu0 0.0
    %6321 = vmatprep.subr.mxu0 0.0
    %6322 = vmatpush2.msra.mxu0 0.0
    %6323 = vmatprep.subr.mxu0 0.0
    %6324 = vmatpush2.msra.mxu0 0.0
    %6325 = vmatprep.subr.mxu0 0.0
    %6326 = vmatpush2.msra.mxu0 0.0
    %6327 = vmatprep.subr.mxu0 0.0
    %6328 = vmatpush2.msra.mxu0 0.0
    %6329 = vmatprep.subr.mxu0 0.0
    %6330 = vmatpush2.msra.mxu0 0.0
    %6331 = vmatprep.subr.mxu0 0.0
    %6332 = vmatpush2.msra.mxu0 0.0
    %6333 = vmatprep.mubr.f32.mxu0 0.0
    %6334 = vmatmul.mubr.f32.gmra.mxu0 %v6267
    %v6335 = vpop.f32.mrf.mxu0
    %v6336 = vadd.f32 0.0, %v6335
    %v6337 = vpop.f32.mrf.mxu0
    %6338 = vdwg.mxu0
    %v6339 = vsub.f32 %v1519, %v6336
    %v6341 = vrot.slane %v6339, 1
    %6342 = vrot.lane.b32.xlu0 %v6341, 8
    %v6343 = vpop.permute.xlu0 %6342
    %v6345 = vrot.slane %v6339, 2
    %6346 = vrot.lane.b32.xlu0 %v6345, 16
    %v6347 = vpop.permute.xlu0 %6346
    %v6349 = vrot.slane %v6339, 3
    %6350 = vrot.lane.b32.xlu0 %v6349, 24
    %v6351 = vpop.permute.xlu0 %6350
    %v6353 = vrot.slane %v6339, 4
    %6354 = vrot.lane.b32.xlu0 %v6353, 32
    %v6355 = vpop.permute.xlu0 %6354
    %v6357 = vrot.slane %v6339, 5
    %6358 = vrot.lane.b32.xlu0 %v6357, 40
    %v6359 = vpop.permute.xlu0 %6358
    %v6361 = vrot.slane %v6339, 6
    %6362 = vrot.lane.b32.xlu0 %v6361, 48
    %v6363 = vpop.permute.xlu0 %6362
    %v6365 = vrot.slane %v6339, 7
    %6366 = vrot.lane.b32.xlu0 %v6365, 56
    %v6367 = vpop.permute.xlu0 %6366
    %v6369 = vsel %vm1553, %v6339, %v6343
    %v6370 = vsel %vm111, %v6369, %v6347
    %v6371 = vsel %vm1556, %v6370, %v6351
    %v6372 = vsel %vm1558, %v6371, %v6355
    %v6373 = vsel %vm1560, %v6372, %v6359
    %v6374 = vsel %vm1562, %v6373, %v6363
    %v6375 = vsel %vm1564, %v6374, %v6367
    %v6376 = vrot.slane %v2161, 7
    %v6378 = vrot.slane %v2845, 6
    %v6380 = vrot.slane %v3529, 5
    %v6382 = vrot.slane %v4213, 4
    %v6384 = vrot.slane %v4897, 3
    %v6386 = vrot.slane %v5581, 2
    %v6389 = vrot.slane %v6265, 1
    %v6391 = vsel %vm1595, 1.0, %v6376
    %v6392 = vsel %vm1597, %v6391, %v6378
    %v6393 = vsel %vm1599, %v6392, %v6380
    %v6394 = vsel %vm1601, %v6393, %v6382
    %v6395 = vsel %vm1603, %v6394, %v6384
    %v6396 = vsel %vm1605, %v6395, %v6386
    %v6397 = vsel %vm1607, %v6396, %v6389
    %6398 = vst.msk [vmem:[#allocation7] sm:$0xff] %vm1553, %v6397
    %v6400 = vrot.slane %v2271, 7
    %v6403 = vrot.slane %v2955, 6
    %v6406 = vrot.slane %v3639, 5
    %v6409 = vrot.slane %v4323, 4
    %v6412 = vrot.slane %v5007, 3
    %v6415 = vrot.slane %v5691, 2
    %v6418 = vrot.slane %v6375, 1
    %v6420 = vsel %vm1595, %v1565, %v6400
    %v6421 = vsel %vm1597, %v6420, %v6403
    %v6422 = vsel %vm1599, %v6421, %v6406
    %v6423 = vsel %vm1601, %v6422, %v6409
    %v6424 = vsel %vm1603, %v6423, %v6412
    %v6425 = vsel %vm1605, %v6424, %v6415
    %v6426 = vsel %vm1607, %v6425, %v6418
    %vm6427 = vcmask 523264
    %6428 = vst.msk [vmem:[%s10] sm:$0xff] %vm6427, %v6426
    // Predicated region
    $region46: #{stfnet_forward.1} parent=1 // pred_check
      _
    $region47: #{stfnet_forward.1} parent=1 // pred_check_branch
      %6430 = sbr.rel (0) target = $region49
    $region48: #{stfnet_forward.1} parent=1 // pred_region
      %s6432 = ssub.s32 128, 128
      %6433 = vsyncadd [#allocation4], %s6432
      %s6435 = sshll.u32 [#allocation7], 4
      %s6436 = int_to_ptr.vmem [resolvable:$true] %s6435
      %6438 = dma.vmem_to_hbm [thread:$0]  %s6436, 128, %s9, [#allocation4]
    $region49: #{stfnet_forward.1} parent=1 // pred_fallthru
      _
    // Predicated region
    $region50: #{stfnet_forward.1} parent=1 // pred_check
      _
    $region51: #{stfnet_forward.1} parent=1 // pred_check_branch
      %6440 = sbr.rel (0) target = $region53
    $region52: #{stfnet_forward.1} parent=1 // pred_region
      _
    $region53: #{stfnet_forward.1} parent=1 // pred_fallthru
      _
    // Predicated region
    $region54: #{stfnet_forward.1} parent=1 // pred_check
      _
    $region55: #{stfnet_forward.1} parent=1 // pred_check_branch
      %6442 = sbr.rel (0) target = $region57
    $region56: #{stfnet_forward.1} parent=1 // pred_region
      %6443 = dma.done [#allocation4], 128
    $region57: #{stfnet_forward.1} parent=1 // pred_fallthru
      _
    // Predicated region
    $region58: #{stfnet_forward.1} parent=1 // pred_check
      _
    $region59: #{stfnet_forward.1} parent=1 // pred_check_branch
      %6445 = sbr.rel (0) target = $region61
    $region60: #{stfnet_forward.1} parent=1 // pred_region
      _
    $region61: #{stfnet_forward.1} parent=1 // pred_fallthru
      _
    %6446 = vsyncpa [#allocation3], 1
    %6447 = vsyncpa [#allocation4], 1
    %6448 = vsyncpa [#allocation5], 1

</llo_original>
